<compile_context>
chip_gen: v7x
topology: tpu7x:2x2x1
jax: 0.10.0
libtpu: 0.0.40
codegen_flags: <defaults>
</compile_context>

<pallas_src>
import functools

import jax
import jax.numpy as jnp
from jax.experimental import pallas as pl
from jax.experimental.pallas import tpu as pltpu


# ---------------------------------------------------------------------------
# Static tiling helpers
# ---------------------------------------------------------------------------

_VMEM_LIMIT = 48 * 1024 * 1024   # > 16/32 MiB scoped defaults, < v7x physical
_LANE = 128
_SUBLANE = 8
_TB = 16                         # recurrence time chunk (fixed)
_TARGET_ROWS = 1024              # row-tile target for the matmul kernels


def _round_up(n, m):
    return ((n + m - 1) // m) * m


def _tiles(t, b_pad):
    """Fixed tiles + padding (no divisor hunting).  Returns (tt, t_pad):
    tt = timesteps per matmul row tile (multiple of _TB), t_pad = padded T."""
    tt_cap = _round_up(t, _TB)                               # never tile past T
    tt_want = _round_up(max(1, _TARGET_ROWS // b_pad), _TB)  # ~1024-row tiles
    tt = min(tt_cap, tt_want)
    t_pad = _round_up(t, tt)
    return tt, t_pad


# ---------------------------------------------------------------------------
# Pallas kernels
# ---------------------------------------------------------------------------

def _lstm_cell(gates_pre, c_state, h_prev, w_hh_ref):
    """One LSTM cell given precomputed x@W_ih + b.  Gate order [i, f, o | g].
    Gate math and cell state are f32; only the MXU operands use w_hh dtype."""
    h = c_state.shape[-1]
    gates = gates_pre.astype(jnp.float32) + jnp.dot(
        h_prev.astype(w_hh_ref.dtype), w_hh_ref[...],
        preferred_element_type=jnp.float32)
    sig = jax.nn.sigmoid(gates[:, :3 * h])     # one EUP pass for i, f, o
    g = jnp.tanh(gates[:, 3 * h:])             # one EUP pass for g
    i_g = sig[:, 0 * h:1 * h]
    f_g = sig[:, 1 * h:2 * h]
    o_g = sig[:, 2 * h:3 * h]
    c_new = f_g * c_state + i_g * g
    h_new = o_g * jnp.tanh(c_new)
    return h_new, c_new


def bilstm_chunk_kernel(gf_ref, gb_ref, whh_f_ref, whh_b_ref,
                        out_f_ref, out_b_ref,
                        hf_sc, cf_sc, hb_sc, cb_sc, *, tb):
    """Fused bidirectional LSTM recurrence over one time chunk.

    Grid axis 0 walks time chunks in order; the forward direction consumes
    chunk c, the backward direction consumes the mirrored chunk (nchunks-1-c)
    with its timesteps traversed in reverse, so both recurrences advance
    correctly in a single sequential pass.  h/c live in VMEM scratch.
    """
    @pl.when(pl.program_id(0) == 0)
    def _():
        hf_sc[...] = jnp.zeros_like(hf_sc)
        cf_sc[...] = jnp.zeros_like(cf_sc)
        hb_sc[...] = jnp.zeros_like(hb_sc)
        cb_sc[...] = jnp.zeros_like(cb_sc)

    def step(i, carry):
        # forward direction: local timestep i of chunk c
        hf, cf = _lstm_cell(gf_ref[i], cf_sc[...], hf_sc[...], whh_f_ref)
        hf_sc[...] = hf
        cf_sc[...] = cf
        out_f_ref[i] = hf.astype(out_f_ref.dtype)
        # backward direction: local timestep tb-1-i of chunk (nchunks-1-c)
        j = tb - 1 - i
        hb, cb = _lstm_cell(gb_ref[j], cb_sc[...], hb_sc[...], whh_b_ref)
        hb_sc[...] = hb
        cb_sc[...] = cb
        out_b_ref[j] = hb.astype(out_b_ref.dtype)
        return carry

    jax.lax.fori_loop(0, tb, step, 0, unroll=True)


def proj_single_kernel(x_ref, w_ref, b_ref, gf_ref, gb_ref, *,
                       block_rows, mask_rows):
    """Gate pre-activations for both directions: x @ [W_f^T | W_b^T] + b.
    Rows >= mask_rows (padded time rows) are forced to exactly zero."""
    x = x_ref[...].astype(w_ref.dtype)
    g = jnp.dot(x, w_ref[...], preferred_element_type=jnp.float32) + b_ref[...]
    if mask_rows is not None:
        row0 = pl.program_id(0) * block_rows
        rows = row0 + jax.lax.broadcasted_iota(jnp.int32, (block_rows, 1), 0)
        g = jnp.where(rows < mask_rows, g, 0.0)
    g4 = gf_ref.shape[-1]
    gf_ref[...] = g[:, :g4].astype(gf_ref.dtype)
    gb_ref[...] = g[:, g4:].astype(gb_ref.dtype)


def proj_pair_kernel(xf_ref, xb_ref, wf_ref, wb_ref, b_ref, gf_ref, gb_ref, *,
                     block_rows, mask_rows):
    """Same as proj_single_kernel, but the layer input is the (fwd, bwd) pair
    of the previous layer, consumed as two half matmuls (no concat needed)."""
    g = (jnp.dot(xf_ref[...].astype(wf_ref.dtype), wf_ref[...],
                 preferred_element_type=jnp.float32)
         + jnp.dot(xb_ref[...].astype(wb_ref.dtype), wb_ref[...],
                   preferred_element_type=jnp.float32)
         + b_ref[...])
    if mask_rows is not None:
        row0 = pl.program_id(0) * block_rows
        rows = row0 + jax.lax.broadcasted_iota(jnp.int32, (block_rows, 1), 0)
        g = jnp.where(rows < mask_rows, g, 0.0)
    g4 = gf_ref.shape[-1]
    gf_ref[...] = g[:, :g4].astype(gf_ref.dtype)
    gb_ref[...] = g[:, g4:].astype(gb_ref.dtype)


def fc_logsoftmax_kernel(xf_ref, xb_ref, wf_ref, wb_ref, b_ref, out_ref):
    """Linear over concat(fwd, bwd) as two half matmuls, then a stable
    log_softmax.  The output dim is lane-padded to 128; pad columns carry a
    -1e30 bias so the normalizer over real columns is exact."""
    logits = (jnp.dot(xf_ref[...].astype(wf_ref.dtype), wf_ref[...],
                      preferred_element_type=jnp.float32)
              + jnp.dot(xb_ref[...].astype(wb_ref.dtype), wb_ref[...],
                        preferred_element_type=jnp.float32)
              + b_ref[...])
    m = jnp.max(logits, axis=-1, keepdims=True)
    s = logits - m
    lse = jnp.log(jnp.sum(jnp.exp(s), axis=-1, keepdims=True))
    out_ref[...] = (s - lse).astype(out_ref.dtype)


# ---------------------------------------------------------------------------
# pallas_call wrappers (no dtype casts here — weights pre-cast in preprocess)
# ---------------------------------------------------------------------------

def _input_projection_single(x2d, w, b, rt, mask_rows, gate_dtype):
    rows, din = x2d.shape
    g8 = w.shape[1]
    g4 = g8 // 2
    kernel = functools.partial(proj_single_kernel,
                               block_rows=rt, mask_rows=mask_rows)
    return pl.pallas_call(
        kernel,
        out_shape=(jax.ShapeDtypeStruct((rows, g4), gate_dtype),
                   jax.ShapeDtypeStruct((rows, g4), gate_dtype)),
        grid=(rows // rt,),
        in_specs=[
            pl.BlockSpec((rt, din), lambda r: (r, 0)),
            pl.BlockSpec((din, g8), lambda r: (0, 0)),
            pl.BlockSpec((1, g8), lambda r: (0, 0)),
        ],
        out_specs=(
            pl.BlockSpec((rt, g4), lambda r: (r, 0)),
            pl.BlockSpec((rt, g4), lambda r: (r, 0)),
        ),
        compiler_params=pltpu.CompilerParams(
            dimension_semantics=("parallel",),
            vmem_limit_bytes=_VMEM_LIMIT),
    )(x2d, w, b)


def _input_projection_pair(xf2d, xb2d, wf, wb, b, rt, mask_rows, gate_dtype):
    rows, hidden = xf2d.shape
    g8 = wf.shape[1]
    g4 = g8 // 2
    kernel = functools.partial(proj_pair_kernel,
                               block_rows=rt, mask_rows=mask_rows)
    return pl.pallas_call(
        kernel,
        out_shape=(jax.ShapeDtypeStruct((rows, g4), gate_dtype),
                   jax.ShapeDtypeStruct((rows, g4), gate_dtype)),
        grid=(rows // rt,),
        in_specs=[
            pl.BlockSpec((rt, hidden), lambda r: (r, 0)),
            pl.BlockSpec((rt, hidden), lambda r: (r, 0)),
            pl.BlockSpec((hidden, g8), lambda r: (0, 0)),
            pl.BlockSpec((hidden, g8), lambda r: (0, 0)),
            pl.BlockSpec((1, g8), lambda r: (0, 0)),
        ],
        out_specs=(
            pl.BlockSpec((rt, g4), lambda r: (r, 0)),
            pl.BlockSpec((rt, g4), lambda r: (r, 0)),
        ),
        compiler_params=pltpu.CompilerParams(
            dimension_semantics=("parallel",),
            vmem_limit_bytes=_VMEM_LIMIT),
    )(xf2d, xb2d, wf, wb, b)


def _bilstm_recurrence(gf, gb, whh_f, whh_b, t_pad, b_pad, hidden, hid_dtype):
    g4 = 4 * hidden
    nchunks = t_pad // _TB
    kernel = functools.partial(bilstm_chunk_kernel, tb=_TB)
    out_f, out_b = pl.pallas_call(
        kernel,
        out_shape=(jax.ShapeDtypeStruct((t_pad, b_pad, hidden), hid_dtype),
                   jax.ShapeDtypeStruct((t_pad, b_pad, hidden), hid_dtype)),
        grid=(nchunks,),
        in_specs=[
            pl.BlockSpec((_TB, b_pad, g4), lambda c: (c, 0, 0)),
            pl.BlockSpec((_TB, b_pad, g4), lambda c: (nchunks - 1 - c, 0, 0)),
            pl.BlockSpec((hidden, g4), lambda c: (0, 0)),
            pl.BlockSpec((hidden, g4), lambda c: (0, 0)),
        ],
        out_specs=(
            pl.BlockSpec((_TB, b_pad, hidden), lambda c: (c, 0, 0)),
            pl.BlockSpec((_TB, b_pad, hidden),
                         lambda c: (nchunks - 1 - c, 0, 0)),
        ),
        scratch_shapes=[pltpu.VMEM((b_pad, hidden), jnp.float32)] * 4,
        compiler_params=pltpu.CompilerParams(
            dimension_semantics=("arbitrary",),        # sequential recurrence
            vmem_limit_bytes=_VMEM_LIMIT),
    )(gf.reshape(t_pad, b_pad, g4), gb.reshape(t_pad, b_pad, g4), whh_f, whh_b)
    return out_f, out_b


def _fc_log_softmax(xf2d, xb2d, wf, wb, b, rt):
    rows, hidden = xf2d.shape
    out_dim_pad = wf.shape[1]
    return pl.pallas_call(
        fc_logsoftmax_kernel,
        out_shape=jax.ShapeDtypeStruct((rows, out_dim_pad), jnp.float32),
        grid=(rows // rt,),
        in_specs=[
            pl.BlockSpec((rt, hidden), lambda r: (r, 0)),
            pl.BlockSpec((rt, hidden), lambda r: (r, 0)),
            pl.BlockSpec((hidden, out_dim_pad), lambda r: (0, 0)),
            pl.BlockSpec((hidden, out_dim_pad), lambda r: (0, 0)),
            pl.BlockSpec((1, out_dim_pad), lambda r: (0, 0)),
        ],
        out_specs=pl.BlockSpec((rt, out_dim_pad), lambda r: (r, 0)),
        compiler_params=pltpu.CompilerParams(
            dimension_semantics=("parallel",),
            vmem_limit_bytes=_VMEM_LIMIT),
    )(xf2d, xb2d, wf, wb, b)


# ---------------------------------------------------------------------------
# One-time parameter preprocessing (transpose / gate-reorder / cast / pad)
# ---------------------------------------------------------------------------

def _reorder_gates(a, h, axis):
    """PyTorch gate order [i,f,g,o] -> kernel order [i,f,o,g] along `axis`."""
    def take(lo, hi):
        sl = [slice(None)] * a.ndim
        sl[axis] = slice(lo, hi)
        return a[tuple(sl)]
    return jnp.concatenate([take(0, 2 * h), take(3 * h, 4 * h),
                            take(2 * h, 3 * h)], axis=axis)


def preprocess_params(params, matmul_dtype=jnp.bfloat16):
    """Weights are cast once to matmul_dtype here (never per forward call).
    bf16 is recommended (MXU-native on v6e/v7x); gate math stays f32."""
    lstm_layers = params["lstm_layers"]
    h = lstm_layers[0]["fwd"][1].shape[1]
    layers = []
    for li, layer in enumerate(lstm_layers):
        wf_ih, wf_hh, bf_ih, bf_hh = layer["fwd"]
        wr_ih, wr_hh, br_ih, br_hh = layer["bwd"]
        wf_t = _reorder_gates(wf_ih.T, h, axis=1)                 # (Din, 4H)
        wr_t = _reorder_gates(wr_ih.T, h, axis=1)
        w_proj = jnp.concatenate([wf_t, wr_t], axis=1).astype(matmul_dtype)
        b_proj = jnp.concatenate([
            _reorder_gates(bf_ih + bf_hh, h, axis=0),
            _reorder_gates(br_ih + br_hh, h, axis=0),
        ]).reshape(1, -1).astype(jnp.float32)                     # (1, 8H)
        entry = {"b_proj": b_proj,
                 "whh_f": _reorder_gates(wf_hh.T, h, 1).astype(matmul_dtype),
                 "whh_b": _reorder_gates(wr_hh.T, h, 1).astype(matmul_dtype)}
        if li == 0:
            entry["w_proj"] = w_proj                              # (Din, 8H)
        else:
            entry["w_proj_f"] = w_proj[:h]                        # (H, 8H)
            entry["w_proj_b"] = w_proj[h:]                        # (H, 8H)
        layers.append(entry)

    fc_w = params["fc_w"]                                         # (O, 2H)
    o = fc_w.shape[0]
    o_pad = _round_up(max(o, _LANE), _LANE)                       # lane-dense
    pad = o_pad - o
    fc_wf = jnp.pad(fc_w[:, :h].T, ((0, 0), (0, pad))).astype(matmul_dtype)
    fc_wb = jnp.pad(fc_w[:, h:].T, ((0, 0), (0, pad))).astype(matmul_dtype)
    fc_b = jnp.pad(params["fc_b"], (0, pad),
                   constant_values=-1e30).reshape(1, -1).astype(jnp.float32)
    return {"layers": layers, "fc_wf": fc_wf, "fc_wb": fc_wb, "fc_b": fc_b}


# ---------------------------------------------------------------------------
# Full forward pass
# ---------------------------------------------------------------------------

def forced_alignment_ctc_lstm_forward(x_btd, prep, *, out_dim):
    """x_btd: (B, T, input_size), batch-first like the PyTorch module.
    out_dim: original output_size (FC output is lane-padded internally)."""
    b, t, _ = x_btd.shape
    hidden = prep["layers"][0]["whh_f"].shape[0]
    matmul_dtype = prep["layers"][0]["whh_f"].dtype
    b_pad = _round_up(b, _SUBLANE)
    tt, t_pad = _tiles(t, b_pad)
    rt = tt * b_pad                      # rows per matmul tile
    rows_pad = t_pad * b_pad
    real_rows = t * b_pad
    mask_rows = real_rows if real_rows < rows_pad else None

    # (B,T,D) -> (T_pad, b_pad, D).  Padded gate rows are re-zeroed inside the
    # projection kernels so the backward recurrence is exact.
    # TODO(synk): fold this transpose/pad (and the final transpose) into the
    # projection / FC BlockSpecs; x and the logits are the narrowest tensors.
    x = jnp.transpose(x_btd, (1, 0, 2)).astype(jnp.float32)
    x = jnp.pad(x, ((0, t_pad - t), (0, b_pad - b), (0, 0)))

    layers = prep["layers"]
    gf, gb = _input_projection_single(
        x.reshape(rows_pad, -1), layers[0]["w_proj"], layers[0]["b_proj"],
        rt, mask_rows, matmul_dtype)
    out_f, out_b = _bilstm_recurrence(
        gf, gb, layers[0]["whh_f"], layers[0]["whh_b"],
        t_pad, b_pad, hidden, matmul_dtype)

    for layer in layers[1:]:
        gf, gb = _input_projection_pair(
            out_f.reshape(rows_pad, hidden), out_b.reshape(rows_pad, hidden),
            layer["w_proj_f"], layer["w_proj_b"], layer["b_proj"],
            rt, mask_rows, matmul_dtype)
        out_f, out_b = _bilstm_recurrence(
            gf, gb, layer["whh_f"], layer["whh_b"],
            t_pad, b_pad, hidden, matmul_dtype)

    out2d = _fc_log_softmax(
        out_f.reshape(rows_pad, hidden), out_b.reshape(rows_pad, hidden),
        prep["fc_wf"], prep["fc_wb"], prep["fc_b"], rt)
    out = out2d.reshape(t_pad, b_pad, -1)[:t, :b, :out_dim]
    return jnp.transpose(out, (1, 0, 2))                          # (B, T, O)


# ---------------------------------------------------------------------------
# Deterministic parameter init (PyTorch-style uniform(-1/sqrt(H), 1/sqrt(H)))
# ---------------------------------------------------------------------------

def init_params(key, input_size, hidden_size, output_size):
    k = 1.0 / (hidden_size ** 0.5)

    def uni(key, shape):
        return jax.random.uniform(key, shape, jnp.float32, minval=-k, maxval=k)

    layers = []
    in_sz = input_size
    for _ in range(2):                              # num_layers = 2
        dirs = {}
        for name in ("fwd", "bwd"):
            key, k1, k2, k3, k4 = jax.random.split(key, 5)
            dirs[name] = (
                uni(k1, (4 * hidden_size, in_sz)),        # weight_ih
                uni(k2, (4 * hidden_size, hidden_size)),  # weight_hh
                uni(k3, (4 * hidden_size,)),              # bias_ih
                uni(k4, (4 * hidden_size,)),              # bias_hh
            )
        layers.append(dirs)
        in_sz = 2 * hidden_size                     # bidirectional concat

    key, k1, k2 = jax.random.split(key, 3)
    kf = 1.0 / ((2 * hidden_size) ** 0.5)
    fc_w = jax.random.uniform(k1, (output_size, 2 * hidden_size), jnp.float32,
                              minval=-kf, maxval=kf)
    fc_b = jax.random.uniform(k2, (output_size,), jnp.float32,
                              minval=-kf, maxval=kf)
    return {"lstm_layers": layers, "fc_w": fc_w, "fc_b": fc_b}


# ---------------------------------------------------------------------------
# Pure-JAX reference (for correctness check)
# ---------------------------------------------------------------------------

def _ref_lstm_dir(x_tbd, w_ih, w_hh, b_ih, b_hh, reverse):
    xs = x_tbd[::-1] if reverse else x_tbd
    B = x_tbd.shape[1]
    H = w_hh.shape[1]

    def step(carry, x_t):
        h, c = carry
        gates = x_t @ w_ih.T + b_ih + h @ w_hh.T + b_hh
        i, f, g, o = jnp.split(gates, 4, axis=-1)
        i = jax.nn.sigmoid(i); f = jax.nn.sigmoid(f)
        g = jnp.tanh(g); o = jax.nn.sigmoid(o)
        c = f * c + i * g
        h = o * jnp.tanh(c)
        return (h, c), h

    init = (jnp.zeros((B, H), jnp.float32), jnp.zeros((B, H), jnp.float32))
    _, hs = jax.lax.scan(step, init, xs)
    return hs[::-1] if reverse else hs


def reference_forward(x_btd, params):
    x = jnp.transpose(x_btd, (1, 0, 2))
    layer_in = x
    for layer in params["lstm_layers"]:
        fwd = _ref_lstm_dir(layer_in, *layer["fwd"], reverse=False)
        bwd = _ref_lstm_dir(layer_in, *layer["bwd"], reverse=True)
        layer_in = jnp.concatenate([fwd, bwd], axis=-1)
    logits = layer_in @ params["fc_w"].T + params["fc_b"]
    out = jax.nn.log_softmax(logits, axis=-1)
    return jnp.transpose(out, (1, 0, 2))


# ---------------------------------------------------------------------------
# Main
# ---------------------------------------------------------------------------

if __name__ == "__main__":
    B, T = 2, 8
    INPUT_SIZE, HIDDEN_SIZE, OUTPUT_SIZE = 16, 32, 8

    key = jax.random.PRNGKey(0)
    key, pkey, xkey, x2key = jax.random.split(key, 4)
    params = init_params(pkey, INPUT_SIZE, HIDDEN_SIZE, OUTPUT_SIZE)
    x = jax.random.normal(xkey, (B, T, INPUT_SIZE), jnp.float32)

    fwd_fn = jax.jit(forced_alignment_ctc_lstm_forward,
                     static_argnames=("out_dim",))
    ref = jax.block_until_ready(reference_forward(x, params))

    # f32 MXU path: strict parity with the f32 reference.
    prep_f32 = preprocess_params(params, matmul_dtype=jnp.float32)
    out_f32 = jax.block_until_ready(fwd_fn(x, prep_f32, out_dim=OUTPUT_SIZE))
    assert out_f32.shape == (B, T, OUTPUT_SIZE), out_f32.shape
    err = float(jnp.max(jnp.abs(out_f32 - ref)))
    assert jnp.allclose(out_f32, ref, atol=1e-4, rtol=1e-4), \
        f"f32 path max abs err {err}"

    # default bf16 MXU path (gate/cell math stays f32): looser tolerance.
    prep_bf16 = preprocess_params(params)
    out_bf16 = jax.block_until_ready(fwd_fn(x, prep_bf16, out_dim=OUTPUT_SIZE))
    err = float(jnp.max(jnp.abs(out_bf16 - ref)))
    assert jnp.allclose(out_bf16, ref, atol=1e-1, rtol=1e-2), \
        f"bf16 path max abs err {err}"

    # Awkward shapes (prime-ish T, B not a multiple of 8): exercises the
    # fixed-tile + padding path, including padded-time masking.
    B2, T2 = 3, 13
    x2 = jax.random.normal(x2key, (B2, T2, INPUT_SIZE), jnp.float32)
    out2 = jax.block_until_ready(fwd_fn(x2, prep_f32, out_dim=OUTPUT_SIZE))
    ref2 = jax.block_until_ready(reference_forward(x2, params))
    err = float(jnp.max(jnp.abs(out2 - ref2)))
    assert out2.shape == (B2, T2, OUTPUT_SIZE), out2.shape
    assert jnp.allclose(out2, ref2, atol=1e-4, rtol=1e-4), \
        f"padded-shape max abs err {err}"

    print("KERNEL_OK")
</pallas_src>

<mosaic_0001>
module attributes {stable_mosaic.version = 11 : i64} {
  func.func @proj_single_kernel(%arg0: i32, %arg1: memref<128x16xf32, #tpu.memory_space<vmem>>, %arg2: memref<16x256xf32, #tpu.memory_space<vmem>>, %arg3: memref<1x256xf32, #tpu.memory_space<vmem>>, %arg4: memref<128x128xf32, #tpu.memory_space<vmem>>, %arg5: memref<128x128xf32, #tpu.memory_space<vmem>>) attributes {dimension_semantics = [#tpu.dimension_semantics<parallel>], iteration_bounds = array<i64: 1>, scalar_prefetch = 0 : i64, scratch_operands = 0 : i64, tpu.core_type = #tpu.core_type<tc>, window_params = [{transform_indices = @transform_0, window_bounds = array<i64: 128, 16>}, {pipeline_mode = #tpu.pipeline_mode<synchronous>, transform_indices = @transform_1, window_bounds = array<i64: 16, 256>}, {pipeline_mode = #tpu.pipeline_mode<synchronous>, transform_indices = @transform_2, window_bounds = array<i64: 1, 256>}, {transform_indices = @transform_3, window_bounds = array<i64: 128, 128>}, {transform_indices = @transform_4, window_bounds = array<i64: 128, 128>}]} {
    %c0 = arith.constant 0 : index
    %c0_0 = arith.constant 0 : index
    %0 = vector.load %arg1[%c0, %c0_0] : memref<128x16xf32, #tpu.memory_space<vmem>>, vector<128x16xf32>
    %c0_1 = arith.constant 0 : index
    %c0_2 = arith.constant 0 : index
    %1 = vector.load %arg2[%c0_1, %c0_2] : memref<16x256xf32, #tpu.memory_space<vmem>>, vector<16x256xf32>
    %cst = arith.constant dense<0.000000e+00> : vector<128x256xf32>
    %2 = tpu.matmul %0, %1, %cst {dimension_numbers = #tpu.dot_dimension_numbers<[1], [0], [0], [1], [0, 0, 1, 1], [], []>} : vector<128x16xf32>, vector<16x256xf32>, vector<128x256xf32> -> vector<128x256xf32>
    %c0_3 = arith.constant 0 : index
    %c0_4 = arith.constant 0 : index
    %3 = vector.load %arg3[%c0_3, %c0_4] : memref<1x256xf32, #tpu.memory_space<vmem>>, vector<1x256xf32>
    %4 = vector.broadcast %3 : vector<1x256xf32> to vector<128x256xf32>
    %5 = arith.addf %2, %4 : vector<128x256xf32>
    %c128_i32 = arith.constant 128 : i32
    %6 = arith.muli %arg0, %c128_i32 : i32
    %7 = tpu.iota {dimensions = array<i32: 0>} : vector<128x1xi32>
    %8 = vector.broadcast %6 : i32 to vector<128x1xi32>
    %9 = arith.addi %8, %7 : vector<128x1xi32>
    %c64_i32 = arith.constant 64 : i32
    %10 = vector.broadcast %c64_i32 : i32 to vector<128x1xi32>
    %11 = arith.cmpi slt, %9, %10 : vector<128x1xi32>
    %cst_5 = arith.constant 0.000000e+00 : f32
    %12 = vector.shape_cast %11 : vector<128x1xi1> to vector<128x1xi1>
    %13 = vector.broadcast %12 : vector<128x1xi1> to vector<128x256xi1>
    %14 = vector.broadcast %cst_5 : f32 to vector<128x256xf32>
    %15 = arith.select %13, %5, %14 : vector<128x256xi1>, vector<128x256xf32>
    %16 = vector.extract_strided_slice %15 {offsets = [0, 0], sizes = [128, 128], strides = [1, 1]} : vector<128x256xf32> to vector<128x128xf32>
    %c0_6 = arith.constant 0 : index
    %c0_7 = arith.constant 0 : index
    %17 = vector.load %arg4[%c0_6, %c0_7] : memref<128x128xf32, #tpu.memory_space<vmem>>, vector<128x128xf32>
    tpu.vector_store %arg4[%c0_6, %c0_7], %16 {strides = array<i32>} : memref<128x128xf32, #tpu.memory_space<vmem>>, vector<128x128xf32>,
    %18 = vector.extract_strided_slice %15 {offsets = [0, 128], sizes = [128, 128], strides = [1, 1]} : vector<128x256xf32> to vector<128x128xf32>
    %c0_8 = arith.constant 0 : index
    %c0_9 = arith.constant 0 : index
    %19 = vector.load %arg5[%c0_8, %c0_9] : memref<128x128xf32, #tpu.memory_space<vmem>>, vector<128x128xf32>
    tpu.vector_store %arg5[%c0_8, %c0_9], %18 {strides = array<i32>} : memref<128x128xf32, #tpu.memory_space<vmem>>, vector<128x128xf32>,
    return
  }
  func.func @transform_0(%arg0: i32) -> (i32, i32) {
    %c0_i32 = arith.constant 0 : i32
    %c0_i32_0 = arith.constant 0 : i32
    return %arg0, %c0_i32 : i32, i32
  }
  func.func @transform_1(%arg0: i32) -> (i32, i32) {
    %c0_i32 = arith.constant 0 : i32
    %c0_i32_0 = arith.constant 0 : i32
    %c0_i32_1 = arith.constant 0 : i32
    return %c0_i32, %c0_i32_0 : i32, i32
  }
  func.func @transform_2(%arg0: i32) -> (i32, i32) {
    %c0_i32 = arith.constant 0 : i32
    %c0_i32_0 = arith.constant 0 : i32
    %c0_i32_1 = arith.constant 0 : i32
    return %c0_i32, %c0_i32_0 : i32, i32
  }
  func.func @transform_3(%arg0: i32) -> (i32, i32) {
    %c0_i32 = arith.constant 0 : i32
    %c0_i32_0 = arith.constant 0 : i32
    return %arg0, %c0_i32 : i32, i32
  }
  func.func @transform_4(%arg0: i32) -> (i32, i32) {
    %c0_i32 = arith.constant 0 : i32
    %c0_i32_0 = arith.constant 0 : i32
    return %arg0, %c0_i32 : i32, i32
  }
}

module attributes {stable_mosaic.version = 11 : i64} {
  func.func @proj_pair_kernel(%arg0: i32, %arg1: memref<128x32xf32, #tpu.memory_space<vmem>>, %arg2: memref<128x32xf32, #tpu.memory_space<vmem>>, %arg3: memref<32x256xf32, #tpu.memory_space<vmem>>, %arg4: memref<32x256xf32, #tpu.memory_space<vmem>>, %arg5: memref<1x256xf32, #tpu.memory_space<vmem>>, %arg6: memref<128x128xf32, #tpu.memory_space<vmem>>, %arg7: memref<128x128xf32, #tpu.memory_space<vmem>>) attributes {dimension_semantics = [#tpu.dimension_semantics<parallel>], iteration_bounds = array<i64: 1>, scalar_prefetch = 0 : i64, scratch_operands = 0 : i64, tpu.core_type = #tpu.core_type<tc>, window_params = [{transform_indices = @transform_0, window_bounds = array<i64: 128, 32>}, {transform_indices = @transform_1, window_bounds = array<i64: 128, 32>}, {pipeline_mode = #tpu.pipeline_mode<synchronous>, transform_indices = @transform_2, window_bounds = array<i64: 32, 256>}, {pipeline_mode = #tpu.pipeline_mode<synchronous>, transform_indices = @transform_3, window_bounds = array<i64: 32, 256>}, {pipeline_mode = #tpu.pipeline_mode<synchronous>, transform_indices = @transform_4, window_bounds = array<i64: 1, 256>}, {transform_indices = @transform_5, window_bounds = array<i64: 128, 128>}, {transform_indices = @transform_6, window_bounds = array<i64: 128, 128>}]} {
    %c0 = arith.constant 0 : index
    %c0_0 = arith.constant 0 : index
    %0 = vector.load %arg1[%c0, %c0_0] : memref<128x32xf32, #tpu.memory_space<vmem>>, vector<128x32xf32>
    %c0_1 = arith.constant 0 : index
    %c0_2 = arith.constant 0 : index
    %1 = vector.load %arg3[%c0_1, %c0_2] : memref<32x256xf32, #tpu.memory_space<vmem>>, vector<32x256xf32>
    %cst = arith.constant dense<0.000000e+00> : vector<128x256xf32>
    %2 = tpu.matmul %0, %1, %cst {dimension_numbers = #tpu.dot_dimension_numbers<[1], [0], [0], [1], [0, 0, 1, 1], [], []>} : vector<128x32xf32>, vector<32x256xf32>, vector<128x256xf32> -> vector<128x256xf32>
    %c0_3 = arith.constant 0 : index
    %c0_4 = arith.constant 0 : index
    %3 = vector.load %arg2[%c0_3, %c0_4] : memref<128x32xf32, #tpu.memory_space<vmem>>, vector<128x32xf32>
    %c0_5 = arith.constant 0 : index
    %c0_6 = arith.constant 0 : index
    %4 = vector.load %arg4[%c0_5, %c0_6] : memref<32x256xf32, #tpu.memory_space<vmem>>, vector<32x256xf32>
    %cst_7 = arith.constant dense<0.000000e+00> : vector<128x256xf32>
    %5 = tpu.matmul %3, %4, %cst_7 {dimension_numbers = #tpu.dot_dimension_numbers<[1], [0], [0], [1], [0, 0, 1, 1], [], []>} : vector<128x32xf32>, vector<32x256xf32>, vector<128x256xf32> -> vector<128x256xf32>
    %6 = arith.addf %2, %5 : vector<128x256xf32>
    %c0_8 = arith.constant 0 : index
    %c0_9 = arith.constant 0 : index
    %7 = vector.load %arg5[%c0_8, %c0_9] : memref<1x256xf32, #tpu.memory_space<vmem>>, vector<1x256xf32>
    %8 = vector.broadcast %7 : vector<1x256xf32> to vector<128x256xf32>
    %9 = arith.addf %6, %8 : vector<128x256xf32>
    %c128_i32 = arith.constant 128 : i32
    %10 = arith.muli %arg0, %c128_i32 : i32
    %11 = tpu.iota {dimensions = array<i32: 0>} : vector<128x1xi32>
    %12 = vector.broadcast %10 : i32 to vector<128x1xi32>
    %13 = arith.addi %12, %11 : vector<128x1xi32>
    %c64_i32 = arith.constant 64 : i32
    %14 = vector.broadcast %c64_i32 : i32 to vector<128x1xi32>
    %15 = arith.cmpi slt, %13, %14 : vector<128x1xi32>
    %cst_10 = arith.constant 0.000000e+00 : f32
    %16 = vector.shape_cast %15 : vector<128x1xi1> to vector<128x1xi1>
    %17 = vector.broadcast %16 : vector<128x1xi1> to vector<128x256xi1>
    %18 = vector.broadcast %cst_10 : f32 to vector<128x256xf32>
    %19 = arith.select %17, %9, %18 : vector<128x256xi1>, vector<128x256xf32>
    %20 = vector.extract_strided_slice %19 {offsets = [0, 0], sizes = [128, 128], strides = [1, 1]} : vector<128x256xf32> to vector<128x128xf32>
    %c0_11 = arith.constant 0 : index
    %c0_12 = arith.constant 0 : index
    %21 = vector.load %arg6[%c0_11, %c0_12] : memref<128x128xf32, #tpu.memory_space<vmem>>, vector<128x128xf32>
    tpu.vector_store %arg6[%c0_11, %c0_12], %20 {strides = array<i32>} : memref<128x128xf32, #tpu.memory_space<vmem>>, vector<128x128xf32>,
    %22 = vector.extract_strided_slice %19 {offsets = [0, 128], sizes = [128, 128], strides = [1, 1]} : vector<128x256xf32> to vector<128x128xf32>
    %c0_13 = arith.constant 0 : index
    %c0_14 = arith.constant 0 : index
    %23 = vector.load %arg7[%c0_13, %c0_14] : memref<128x128xf32, #tpu.memory_space<vmem>>, vector<128x128xf32>
    tpu.vector_store %arg7[%c0_13, %c0_14], %22 {strides = array<i32>} : memref<128x128xf32, #tpu.memory_space<vmem>>, vector<128x128xf32>,
    return
  }
  func.func @transform_0(%arg0: i32) -> (i32, i32) {
    %c0_i32 = arith.constant 0 : i32
    %c0_i32_0 = arith.constant 0 : i32
    return %arg0, %c0_i32 : i32, i32
  }
  func.func @transform_1(%arg0: i32) -> (i32, i32) {
    %c0_i32 = arith.constant 0 : i32
    %c0_i32_0 = arith.constant 0 : i32
    return %arg0, %c0_i32 : i32, i32
  }
  func.func @transform_2(%arg0: i32) -> (i32, i32) {
    %c0_i32 = arith.constant 0 : i32
    %c0_i32_0 = arith.constant 0 : i32
    %c0_i32_1 = arith.constant 0 : i32
    return %c0_i32, %c0_i32_0 : i32, i32
  }
  func.func @transform_3(%arg0: i32) -> (i32, i32) {
    %c0_i32 = arith.constant 0 : i32
    %c0_i32_0 = arith.constant 0 : i32
    %c0_i32_1 = arith.constant 0 : i32
    return %c0_i32, %c0_i32_0 : i32, i32
  }
  func.func @transform_4(%arg0: i32) -> (i32, i32) {
    %c0_i32 = arith.constant 0 : i32
    %c0_i32_0 = arith.constant 0 : i32
    %c0_i32_1 = arith.constant 0 : i32
    return %c0_i32, %c0_i32_0 : i32, i32
  }
  func.func @transform_5(%arg0: i32) -> (i32, i32) {
    %c0_i32 = arith.constant 0 : i32
    %c0_i32_0 = arith.constant 0 : i32
    return %arg0, %c0_i32 : i32, i32
  }
  func.func @transform_6(%arg0: i32) -> (i32, i32) {
    %c0_i32 = arith.constant 0 : i32
    %c0_i32_0 = arith.constant 0 : i32
    return %arg0, %c0_i32 : i32, i32
  }
}

module attributes {stable_mosaic.version = 11 : i64} {
  func.func @bilstm_chunk_kernel(%arg0: i32, %arg1: memref<16x8x128xf32, #tpu.memory_space<vmem>>, %arg2: memref<16x8x128xf32, #tpu.memory_space<vmem>>, %arg3: memref<32x128xf32, #tpu.memory_space<vmem>>, %arg4: memref<32x128xf32, #tpu.memory_space<vmem>>, %arg5: memref<16x8x32xf32, #tpu.memory_space<vmem>>, %arg6: memref<16x8x32xf32, #tpu.memory_space<vmem>>, %arg7: memref<8x32xf32, #tpu.memory_space<vmem>>, %arg8: memref<8x32xf32, #tpu.memory_space<vmem>>, %arg9: memref<8x32xf32, #tpu.memory_space<vmem>>, %arg10: memref<8x32xf32, #tpu.memory_space<vmem>>) attributes {dimension_semantics = [#tpu.dimension_semantics<arbitrary>], iteration_bounds = array<i64: 1>, scalar_prefetch = 0 : i64, scratch_operands = 4 : i64, tpu.core_type = #tpu.core_type<tc>, window_params = [{transform_indices = @transform_0, window_bounds = array<i64: 16, 8, 128>}, {transform_indices = @transform_1, window_bounds = array<i64: 16, 8, 128>}, {pipeline_mode = #tpu.pipeline_mode<synchronous>, transform_indices = @transform_2, window_bounds = array<i64: 32, 128>}, {pipeline_mode = #tpu.pipeline_mode<synchronous>, transform_indices = @transform_3, window_bounds = array<i64: 32, 128>}, {transform_indices = @transform_4, window_bounds = array<i64: 16, 8, 32>}, {transform_indices = @transform_5, window_bounds = array<i64: 16, 8, 32>}]} {
    %c0_i32 = arith.constant 0 : i32
    %0 = arith.cmpi eq, %arg0, %c0_i32 : i32
    %1 = arith.extui %0 : i1 to i32
    %c0_i32_0 = arith.constant 0 : i32
    %2 = arith.cmpi ne, %1, %c0_i32_0 : i32
    scf.if %2 {
      %cst_528 = arith.constant 0.000000e+00 : f32
      %979 = vector.broadcast %cst_528 : f32 to vector<8x32xf32>
      %c0_529 = arith.constant 0 : index
      %c0_530 = arith.constant 0 : index
      %980 = vector.load %arg7[%c0_529, %c0_530] : memref<8x32xf32, #tpu.memory_space<vmem>>, vector<8x32xf32>
      tpu.vector_store %arg7[%c0_529, %c0_530], %979 {strides = array<i32>} : memref<8x32xf32, #tpu.memory_space<vmem>>, vector<8x32xf32>,
      %cst_531 = arith.constant 0.000000e+00 : f32
      %981 = vector.broadcast %cst_531 : f32 to vector<8x32xf32>
      %c0_532 = arith.constant 0 : index
      %c0_533 = arith.constant 0 : index
      %982 = vector.load %arg8[%c0_532, %c0_533] : memref<8x32xf32, #tpu.memory_space<vmem>>, vector<8x32xf32>
      tpu.vector_store %arg8[%c0_532, %c0_533], %981 {strides = array<i32>} : memref<8x32xf32, #tpu.memory_space<vmem>>, vector<8x32xf32>,
      %cst_534 = arith.constant 0.000000e+00 : f32
      %983 = vector.broadcast %cst_534 : f32 to vector<8x32xf32>
      %c0_535 = arith.constant 0 : index
      %c0_536 = arith.constant 0 : index
      %984 = vector.load %arg9[%c0_535, %c0_536] : memref<8x32xf32, #tpu.memory_space<vmem>>, vector<8x32xf32>
      tpu.vector_store %arg9[%c0_535, %c0_536], %983 {strides = array<i32>} : memref<8x32xf32, #tpu.memory_space<vmem>>, vector<8x32xf32>,
      %cst_537 = arith.constant 0.000000e+00 : f32
      %985 = vector.broadcast %cst_537 : f32 to vector<8x32xf32>
      %c0_538 = arith.constant 0 : index
      %c0_539 = arith.constant 0 : index
      %986 = vector.load %arg10[%c0_538, %c0_539] : memref<8x32xf32, #tpu.memory_space<vmem>>, vector<8x32xf32>
      tpu.vector_store %arg10[%c0_538, %c0_539], %985 {strides = array<i32>} : memref<8x32xf32, #tpu.memory_space<vmem>>, vector<8x32xf32>,
    } else {
    }
    %c0_i32_1 = arith.constant 0 : i32
    %3 = arith.index_cast %c0_i32_1 : i32 to index
    %c0 = arith.constant 0 : index
    %c0_2 = arith.constant 0 : index
    %4 = vector.load %arg1[%3, %c0, %c0_2] : memref<16x8x128xf32, #tpu.memory_space<vmem>>, vector<1x8x128xf32>
    %5 = vector.shape_cast %4 : vector<1x8x128xf32> to vector<8x128xf32>
    %c0_3 = arith.constant 0 : index
    %c0_4 = arith.constant 0 : index
    %6 = vector.load %arg8[%c0_3, %c0_4] : memref<8x32xf32, #tpu.memory_space<vmem>>, vector<8x32xf32>
    %c0_5 = arith.constant 0 : index
    %c0_6 = arith.constant 0 : index
    %7 = vector.load %arg7[%c0_5, %c0_6] : memref<8x32xf32, #tpu.memory_space<vmem>>, vector<8x32xf32>
    %c0_7 = arith.constant 0 : index
    %c0_8 = arith.constant 0 : index
    %8 = vector.load %arg3[%c0_7, %c0_8] : memref<32x128xf32, #tpu.memory_space<vmem>>, vector<32x128xf32>
    %cst = arith.constant dense<0.000000e+00> : vector<8x128xf32>
    %9 = tpu.matmul %7, %8, %cst {dimension_numbers = #tpu.dot_dimension_numbers<[1], [0], [0], [1], [0, 0, 1, 1], [], []>} : vector<8x32xf32>, vector<32x128xf32>, vector<8x128xf32> -> vector<8x128xf32>
    %10 = arith.addf %5, %9 : vector<8x128xf32>
    %11 = vector.extract_strided_slice %10 {offsets = [0, 0], sizes = [8, 96], strides = [1, 1]} : vector<8x128xf32> to vector<8x96xf32>
    %12 = arith.negf %11 : vector<8x96xf32>
    %13 = math.exp %12 : vector<8x96xf32>
    %cst_9 = arith.constant 1.000000e+00 : f32
    %14 = vector.broadcast %cst_9 : f32 to vector<8x96xf32>
    %15 = arith.addf %14, %13 : vector<8x96xf32>
    %16 = arith.divf %14, %15 : vector<8x96xf32>
    %17 = vector.extract_strided_slice %10 {offsets = [0, 96], sizes = [8, 32], strides = [1, 1]} : vector<8x128xf32> to vector<8x32xf32>
    %18 = math.tanh %17 : vector<8x32xf32>
    %19 = vector.extract_strided_slice %16 {offsets = [0, 0], sizes = [8, 32], strides = [1, 1]} : vector<8x96xf32> to vector<8x32xf32>
    %20 = vector.extract_strided_slice %16 {offsets = [0, 32], sizes = [8, 32], strides = [1, 1]} : vector<8x96xf32> to vector<8x32xf32>
    %21 = vector.extract_strided_slice %16 {offsets = [0, 64], sizes = [8, 32], strides = [1, 1]} : vector<8x96xf32> to vector<8x32xf32>
    %22 = arith.mulf %20, %6 : vector<8x32xf32>
    %23 = arith.mulf %19, %18 : vector<8x32xf32>
    %24 = arith.addf %22, %23 : vector<8x32xf32>
    %25 = math.tanh %24 : vector<8x32xf32>
    %26 = arith.mulf %21, %25 : vector<8x32xf32>
    %c0_10 = arith.constant 0 : index
    %c0_11 = arith.constant 0 : index
    %27 = vector.load %arg7[%c0_10, %c0_11] : memref<8x32xf32, #tpu.memory_space<vmem>>, vector<8x32xf32>
    tpu.vector_store %arg7[%c0_10, %c0_11], %26 {strides = array<i32>} : memref<8x32xf32, #tpu.memory_space<vmem>>, vector<8x32xf32>,
    %c0_12 = arith.constant 0 : index
    %c0_13 = arith.constant 0 : index
    %28 = vector.load %arg8[%c0_12, %c0_13] : memref<8x32xf32, #tpu.memory_space<vmem>>, vector<8x32xf32>
    tpu.vector_store %arg8[%c0_12, %c0_13], %24 {strides = array<i32>} : memref<8x32xf32, #tpu.memory_space<vmem>>, vector<8x32xf32>,
    %29 = arith.index_cast %c0_i32_1 : i32 to index
    %c0_14 = arith.constant 0 : index
    %c0_15 = arith.constant 0 : index
    %30 = vector.load %arg5[%29, %c0_14, %c0_15] : memref<16x8x32xf32, #tpu.memory_space<vmem>>, vector<1x8x32xf32>
    %31 = vector.shape_cast %30 : vector<1x8x32xf32> to vector<8x32xf32>
    %32 = vector.shape_cast %26 : vector<8x32xf32> to vector<1x8x32xf32>
    tpu.vector_store %arg5[%29, %c0_14, %c0_15], %32 {strides = array<i32>} : memref<16x8x32xf32, #tpu.memory_space<vmem>>, vector<1x8x32xf32>,
    %c15_i32 = arith.constant 15 : i32
    %33 = arith.subi %c15_i32, %c0_i32_1 : i32
    %34 = arith.index_cast %33 : i32 to index
    %c0_16 = arith.constant 0 : index
    %c0_17 = arith.constant 0 : index
    %35 = vector.load %arg2[%34, %c0_16, %c0_17] : memref<16x8x128xf32, #tpu.memory_space<vmem>>, vector<1x8x128xf32>
    %36 = vector.shape_cast %35 : vector<1x8x128xf32> to vector<8x128xf32>
    %c0_18 = arith.constant 0 : index
    %c0_19 = arith.constant 0 : index
    %37 = vector.load %arg10[%c0_18, %c0_19] : memref<8x32xf32, #tpu.memory_space<vmem>>, vector<8x32xf32>
    %c0_20 = arith.constant 0 : index
    %c0_21 = arith.constant 0 : index
    %38 = vector.load %arg9[%c0_20, %c0_21] : memref<8x32xf32, #tpu.memory_space<vmem>>, vector<8x32xf32>
    %c0_22 = arith.constant 0 : index
    %c0_23 = arith.constant 0 : index
    %39 = vector.load %arg4[%c0_22, %c0_23] : memref<32x128xf32, #tpu.memory_space<vmem>>, vector<32x128xf32>
    %cst_24 = arith.constant dense<0.000000e+00> : vector<8x128xf32>
    %40 = tpu.matmul %38, %39, %cst_24 {dimension_numbers = #tpu.dot_dimension_numbers<[1], [0], [0], [1], [0, 0, 1, 1], [], []>} : vector<8x32xf32>, vector<32x128xf32>, vector<8x128xf32> -> vector<8x128xf32>
    %41 = arith.addf %36, %40 : vector<8x128xf32>
    %42 = vector.extract_strided_slice %41 {offsets = [0, 0], sizes = [8, 96], strides = [1, 1]} : vector<8x128xf32> to vector<8x96xf32>
    %43 = arith.negf %42 : vector<8x96xf32>
    %44 = math.exp %43 : vector<8x96xf32>
    %cst_25 = arith.constant 1.000000e+00 : f32
    %45 = vector.broadcast %cst_25 : f32 to vector<8x96xf32>
    %46 = arith.addf %45, %44 : vector<8x96xf32>
    %47 = arith.divf %45, %46 : vector<8x96xf32>
    %48 = vector.extract_strided_slice %41 {offsets = [0, 96], sizes = [8, 32], strides = [1, 1]} : vector<8x128xf32> to vector<8x32xf32>
    %49 = math.tanh %48 : vector<8x32xf32>
    %50 = vector.extract_strided_slice %47 {offsets = [0, 0], sizes = [8, 32], strides = [1, 1]} : vector<8x96xf32> to vector<8x32xf32>
    %51 = vector.extract_strided_slice %47 {offsets = [0, 32], sizes = [8, 32], strides = [1, 1]} : vector<8x96xf32> to vector<8x32xf32>
    %52 = vector.extract_strided_slice %47 {offsets = [0, 64], sizes = [8, 32], strides = [1, 1]} : vector<8x96xf32> to vector<8x32xf32>
    %53 = arith.mulf %51, %37 : vector<8x32xf32>
    %54 = arith.mulf %50, %49 : vector<8x32xf32>
    %55 = arith.addf %53, %54 : vector<8x32xf32>
    %56 = math.tanh %55 : vector<8x32xf32>
    %57 = arith.mulf %52, %56 : vector<8x32xf32>
    %c0_26 = arith.constant 0 : index
    %c0_27 = arith.constant 0 : index
    %58 = vector.load %arg9[%c0_26, %c0_27] : memref<8x32xf32, #tpu.memory_space<vmem>>, vector<8x32xf32>
    tpu.vector_store %arg9[%c0_26, %c0_27], %57 {strides = array<i32>} : memref<8x32xf32, #tpu.memory_space<vmem>>, vector<8x32xf32>,
    %c0_28 = arith.constant 0 : index
    %c0_29 = arith.constant 0 : index
    %59 = vector.load %arg10[%c0_28, %c0_29] : memref<8x32xf32, #tpu.memory_space<vmem>>, vector<8x32xf32>
    tpu.vector_store %arg10[%c0_28, %c0_29], %55 {strides = array<i32>} : memref<8x32xf32, #tpu.memory_space<vmem>>, vector<8x32xf32>,
    %60 = arith.index_cast %33 : i32 to index
    %c0_30 = arith.constant 0 : index
    %c0_31 = arith.constant 0 : index
    %61 = vector.load %arg6[%60, %c0_30, %c0_31] : memref<16x8x32xf32, #tpu.memory_space<vmem>>, vector<1x8x32xf32>
    %62 = vector.shape_cast %61 : vector<1x8x32xf32> to vector<8x32xf32>
    %63 = vector.shape_cast %57 : vector<8x32xf32> to vector<1x8x32xf32>
    tpu.vector_store %arg6[%60, %c0_30, %c0_31], %63 {strides = array<i32>} : memref<16x8x32xf32, #tpu.memory_space<vmem>>, vector<1x8x32xf32>,
    %c1_i32 = arith.constant 1 : i32
    %64 = arith.index_cast %c1_i32 : i32 to index
    %c0_32 = arith.constant 0 : index
    %c0_33 = arith.constant 0 : index
    %65 = vector.load %arg1[%64, %c0_32, %c0_33] : memref<16x8x128xf32, #tpu.memory_space<vmem>>, vector<1x8x128xf32>
    %66 = vector.shape_cast %65 : vector<1x8x128xf32> to vector<8x128xf32>
    %c0_34 = arith.constant 0 : index
    %c0_35 = arith.constant 0 : index
    %67 = vector.load %arg8[%c0_34, %c0_35] : memref<8x32xf32, #tpu.memory_space<vmem>>, vector<8x32xf32>
    %c0_36 = arith.constant 0 : index
    %c0_37 = arith.constant 0 : index
    %68 = vector.load %arg7[%c0_36, %c0_37] : memref<8x32xf32, #tpu.memory_space<vmem>>, vector<8x32xf32>
    %c0_38 = arith.constant 0 : index
    %c0_39 = arith.constant 0 : index
    %69 = vector.load %arg3[%c0_38, %c0_39] : memref<32x128xf32, #tpu.memory_space<vmem>>, vector<32x128xf32>
    %cst_40 = arith.constant dense<0.000000e+00> : vector<8x128xf32>
    %70 = tpu.matmul %68, %69, %cst_40 {dimension_numbers = #tpu.dot_dimension_numbers<[1], [0], [0], [1], [0, 0, 1, 1], [], []>} : vector<8x32xf32>, vector<32x128xf32>, vector<8x128xf32> -> vector<8x128xf32>
    %71 = arith.addf %66, %70 : vector<8x128xf32>
    %72 = vector.extract_strided_slice %71 {offsets = [0, 0], sizes = [8, 96], strides = [1, 1]} : vector<8x128xf32> to vector<8x96xf32>
    %73 = arith.negf %72 : vector<8x96xf32>
    %74 = math.exp %73 : vector<8x96xf32>
    %cst_41 = arith.constant 1.000000e+00 : f32
    %75 = vector.broadcast %cst_41 : f32 to vector<8x96xf32>
    %76 = arith.addf %75, %74 : vector<8x96xf32>
    %77 = arith.divf %75, %76 : vector<8x96xf32>
    %78 = vector.extract_strided_slice %71 {offsets = [0, 96], sizes = [8, 32], strides = [1, 1]} : vector<8x128xf32> to vector<8x32xf32>
    %79 = math.tanh %78 : vector<8x32xf32>
    %80 = vector.extract_strided_slice %77 {offsets = [0, 0], sizes = [8, 32], strides = [1, 1]} : vector<8x96xf32> to vector<8x32xf32>
    %81 = vector.extract_strided_slice %77 {offsets = [0, 32], sizes = [8, 32], strides = [1, 1]} : vector<8x96xf32> to vector<8x32xf32>
    %82 = vector.extract_strided_slice %77 {offsets = [0, 64], sizes = [8, 32], strides = [1, 1]} : vector<8x96xf32> to vector<8x32xf32>
    %83 = arith.mulf %81, %67 : vector<8x32xf32>
    %84 = arith.mulf %80, %79 : vector<8x32xf32>
    %85 = arith.addf %83, %84 : vector<8x32xf32>
    %86 = math.tanh %85 : vector<8x32xf32>
    %87 = arith.mulf %82, %86 : vector<8x32xf32>
    %c0_42 = arith.constant 0 : index
    %c0_43 = arith.constant 0 : index
    %88 = vector.load %arg7[%c0_42, %c0_43] : memref<8x32xf32, #tpu.memory_space<vmem>>, vector<8x32xf32>
    tpu.vector_store %arg7[%c0_42, %c0_43], %87 {strides = array<i32>} : memref<8x32xf32, #tpu.memory_space<vmem>>, vector<8x32xf32>,
    %c0_44 = arith.constant 0 : index
    %c0_45 = arith.constant 0 : index
    %89 = vector.load %arg8[%c0_44, %c0_45] : memref<8x32xf32, #tpu.memory_space<vmem>>, vector<8x32xf32>
    tpu.vector_store %arg8[%c0_44, %c0_45], %85 {strides = array<i32>} : memref<8x32xf32, #tpu.memory_space<vmem>>, vector<8x32xf32>,
    %90 = arith.index_cast %c1_i32 : i32 to index
    %c0_46 = arith.constant 0 : index
    %c0_47 = arith.constant 0 : index
    %91 = vector.load %arg5[%90, %c0_46, %c0_47] : memref<16x8x32xf32, #tpu.memory_space<vmem>>, vector<1x8x32xf32>
    %92 = vector.shape_cast %91 : vector<1x8x32xf32> to vector<8x32xf32>
    %93 = vector.shape_cast %87 : vector<8x32xf32> to vector<1x8x32xf32>
    tpu.vector_store %arg5[%90, %c0_46, %c0_47], %93 {strides = array<i32>} : memref<16x8x32xf32, #tpu.memory_space<vmem>>, vector<1x8x32xf32>,
    %c15_i32_48 = arith.constant 15 : i32
    %94 = arith.subi %c15_i32_48, %c1_i32 : i32
    %95 = arith.index_cast %94 : i32 to index
    %c0_49 = arith.constant 0 : index
    %c0_50 = arith.constant 0 : index
    %96 = vector.load %arg2[%95, %c0_49, %c0_50] : memref<16x8x128xf32, #tpu.memory_space<vmem>>, vector<1x8x128xf32>
    %97 = vector.shape_cast %96 : vector<1x8x128xf32> to vector<8x128xf32>
    %c0_51 = arith.constant 0 : index
    %c0_52 = arith.constant 0 : index
    %98 = vector.load %arg10[%c0_51, %c0_52] : memref<8x32xf32, #tpu.memory_space<vmem>>, vector<8x32xf32>
    %c0_53 = arith.constant 0 : index
    %c0_54 = arith.constant 0 : index
    %99 = vector.load %arg9[%c0_53, %c0_54] : memref<8x32xf32, #tpu.memory_space<vmem>>, vector<8x32xf32>
    %c0_55 = arith.constant 0 : index
    %c0_56 = arith.constant 0 : index
    %100 = vector.load %arg4[%c0_55, %c0_56] : memref<32x128xf32, #tpu.memory_space<vmem>>, vector<32x128xf32>
    %cst_57 = arith.constant dense<0.000000e+00> : vector<8x128xf32>
    %101 = tpu.matmul %99, %100, %cst_57 {dimension_numbers = #tpu.dot_dimension_numbers<[1], [0], [0], [1], [0, 0, 1, 1], [], []>} : vector<8x32xf32>, vector<32x128xf32>, vector<8x128xf32> -> vector<8x128xf32>
    %102 = arith.addf %97, %101 : vector<8x128xf32>
    %103 = vector.extract_strided_slice %102 {offsets = [0, 0], sizes = [8, 96], strides = [1, 1]} : vector<8x128xf32> to vector<8x96xf32>
    %104 = arith.negf %103 : vector<8x96xf32>
    %105 = math.exp %104 : vector<8x96xf32>
    %cst_58 = arith.constant 1.000000e+00 : f32
    %106 = vector.broadcast %cst_58 : f32 to vector<8x96xf32>
    %107 = arith.addf %106, %105 : vector<8x96xf32>
    %108 = arith.divf %106, %107 : vector<8x96xf32>
    %109 = vector.extract_strided_slice %102 {offsets = [0, 96], sizes = [8, 32], strides = [1, 1]} : vector<8x128xf32> to vector<8x32xf32>
    %110 = math.tanh %109 : vector<8x32xf32>
    %111 = vector.extract_strided_slice %108 {offsets = [0, 0], sizes = [8, 32], strides = [1, 1]} : vector<8x96xf32> to vector<8x32xf32>
    %112 = vector.extract_strided_slice %108 {offsets = [0, 32], sizes = [8, 32], strides = [1, 1]} : vector<8x96xf32> to vector<8x32xf32>
    %113 = vector.extract_strided_slice %108 {offsets = [0, 64], sizes = [8, 32], strides = [1, 1]} : vector<8x96xf32> to vector<8x32xf32>
    %114 = arith.mulf %112, %98 : vector<8x32xf32>
    %115 = arith.mulf %111, %110 : vector<8x32xf32>
    %116 = arith.addf %114, %115 : vector<8x32xf32>
    %117 = math.tanh %116 : vector<8x32xf32>
    %118 = arith.mulf %113, %117 : vector<8x32xf32>
    %c0_59 = arith.constant 0 : index
    %c0_60 = arith.constant 0 : index
    %119 = vector.load %arg9[%c0_59, %c0_60] : memref<8x32xf32, #tpu.memory_space<vmem>>, vector<8x32xf32>
    tpu.vector_store %arg9[%c0_59, %c0_60], %118 {strides = array<i32>} : memref<8x32xf32, #tpu.memory_space<vmem>>, vector<8x32xf32>,
    %c0_61 = arith.constant 0 : index
    %c0_62 = arith.constant 0 : index
    %120 = vector.load %arg10[%c0_61, %c0_62] : memref<8x32xf32, #tpu.memory_space<vmem>>, vector<8x32xf32>
    tpu.vector_store %arg10[%c0_61, %c0_62], %116 {strides = array<i32>} : memref<8x32xf32, #tpu.memory_space<vmem>>, vector<8x32xf32>,
    %121 = arith.index_cast %94 : i32 to index
    %c0_63 = arith.constant 0 : index
    %c0_64 = arith.constant 0 : index
    %122 = vector.load %arg6[%121, %c0_63, %c0_64] : memref<16x8x32xf32, #tpu.memory_space<vmem>>, vector<1x8x32xf32>
    %123 = vector.shape_cast %122 : vector<1x8x32xf32> to vector<8x32xf32>
    %124 = vector.shape_cast %118 : vector<8x32xf32> to vector<1x8x32xf32>
    tpu.vector_store %arg6[%121, %c0_63, %c0_64], %124 {strides = array<i32>} : memref<16x8x32xf32, #tpu.memory_space<vmem>>, vector<1x8x32xf32>,
    %c2_i32 = arith.constant 2 : i32
    %125 = arith.index_cast %c2_i32 : i32 to index
    %c0_65 = arith.constant 0 : index
    %c0_66 = arith.constant 0 : index
    %126 = vector.load %arg1[%125, %c0_65, %c0_66] : memref<16x8x128xf32, #tpu.memory_space<vmem>>, vector<1x8x128xf32>
    %127 = vector.shape_cast %126 : vector<1x8x128xf32> to vector<8x128xf32>
    %c0_67 = arith.constant 0 : index
    %c0_68 = arith.constant 0 : index
    %128 = vector.load %arg8[%c0_67, %c0_68] : memref<8x32xf32, #tpu.memory_space<vmem>>, vector<8x32xf32>
    %c0_69 = arith.constant 0 : index
    %c0_70 = arith.constant 0 : index
    %129 = vector.load %arg7[%c0_69, %c0_70] : memref<8x32xf32, #tpu.memory_space<vmem>>, vector<8x32xf32>
    %c0_71 = arith.constant 0 : index
    %c0_72 = arith.constant 0 : index
    %130 = vector.load %arg3[%c0_71, %c0_72] : memref<32x128xf32, #tpu.memory_space<vmem>>, vector<32x128xf32>
    %cst_73 = arith.constant dense<0.000000e+00> : vector<8x128xf32>
    %131 = tpu.matmul %129, %130, %cst_73 {dimension_numbers = #tpu.dot_dimension_numbers<[1], [0], [0], [1], [0, 0, 1, 1], [], []>} : vector<8x32xf32>, vector<32x128xf32>, vector<8x128xf32> -> vector<8x128xf32>
    %132 = arith.addf %127, %131 : vector<8x128xf32>
    %133 = vector.extract_strided_slice %132 {offsets = [0, 0], sizes = [8, 96], strides = [1, 1]} : vector<8x128xf32> to vector<8x96xf32>
    %134 = arith.negf %133 : vector<8x96xf32>
    %135 = math.exp %134 : vector<8x96xf32>
    %cst_74 = arith.constant 1.000000e+00 : f32
    %136 = vector.broadcast %cst_74 : f32 to vector<8x96xf32>
    %137 = arith.addf %136, %135 : vector<8x96xf32>
    %138 = arith.divf %136, %137 : vector<8x96xf32>
    %139 = vector.extract_strided_slice %132 {offsets = [0, 96], sizes = [8, 32], strides = [1, 1]} : vector<8x128xf32> to vector<8x32xf32>
    %140 = math.tanh %139 : vector<8x32xf32>
    %141 = vector.extract_strided_slice %138 {offsets = [0, 0], sizes = [8, 32], strides = [1, 1]} : vector<8x96xf32> to vector<8x32xf32>
    %142 = vector.extract_strided_slice %138 {offsets = [0, 32], sizes = [8, 32], strides = [1, 1]} : vector<8x96xf32> to vector<8x32xf32>
    %143 = vector.extract_strided_slice %138 {offsets = [0, 64], sizes = [8, 32], strides = [1, 1]} : vector<8x96xf32> to vector<8x32xf32>
    %144 = arith.mulf %142, %128 : vector<8x32xf32>
    %145 = arith.mulf %141, %140 : vector<8x32xf32>
    %146 = arith.addf %144, %145 : vector<8x32xf32>
    %147 = math.tanh %146 : vector<8x32xf32>
    %148 = arith.mulf %143, %147 : vector<8x32xf32>
    %c0_75 = arith.constant 0 : index
    %c0_76 = arith.constant 0 : index
    %149 = vector.load %arg7[%c0_75, %c0_76] : memref<8x32xf32, #tpu.memory_space<vmem>>, vector<8x32xf32>
    tpu.vector_store %arg7[%c0_75, %c0_76], %148 {strides = array<i32>} : memref<8x32xf32, #tpu.memory_space<vmem>>, vector<8x32xf32>,
    %c0_77 = arith.constant 0 : index
    %c0_78 = arith.constant 0 : index
    %150 = vector.load %arg8[%c0_77, %c0_78] : memref<8x32xf32, #tpu.memory_space<vmem>>, vector<8x32xf32>
    tpu.vector_store %arg8[%c0_77, %c0_78], %146 {strides = array<i32>} : memref<8x32xf32, #tpu.memory_space<vmem>>, vector<8x32xf32>,
    %151 = arith.index_cast %c2_i32 : i32 to index
    %c0_79 = arith.constant 0 : index
    %c0_80 = arith.constant 0 : index
    %152 = vector.load %arg5[%151, %c0_79, %c0_80] : memref<16x8x32xf32, #tpu.memory_space<vmem>>, vector<1x8x32xf32>
    %153 = vector.shape_cast %152 : vector<1x8x32xf32> to vector<8x32xf32>
    %154 = vector.shape_cast %148 : vector<8x32xf32> to vector<1x8x32xf32>
    tpu.vector_store %arg5[%151, %c0_79, %c0_80], %154 {strides = array<i32>} : memref<16x8x32xf32, #tpu.memory_space<vmem>>, vector<1x8x32xf32>,
    %c15_i32_81 = arith.constant 15 : i32
    %155 = arith.subi %c15_i32_81, %c2_i32 : i32
    %156 = arith.index_cast %155 : i32 to index
    %c0_82 = arith.constant 0 : index
    %c0_83 = arith.constant 0 : index
    %157 = vector.load %arg2[%156, %c0_82, %c0_83] : memref<16x8x128xf32, #tpu.memory_space<vmem>>, vector<1x8x128xf32>
    %158 = vector.shape_cast %157 : vector<1x8x128xf32> to vector<8x128xf32>
    %c0_84 = arith.constant 0 : index
    %c0_85 = arith.constant 0 : index
    %159 = vector.load %arg10[%c0_84, %c0_85] : memref<8x32xf32, #tpu.memory_space<vmem>>, vector<8x32xf32>
    %c0_86 = arith.constant 0 : index
    %c0_87 = arith.constant 0 : index
    %160 = vector.load %arg9[%c0_86, %c0_87] : memref<8x32xf32, #tpu.memory_space<vmem>>, vector<8x32xf32>
    %c0_88 = arith.constant 0 : index
    %c0_89 = arith.constant 0 : index
    %161 = vector.load %arg4[%c0_88, %c0_89] : memref<32x128xf32, #tpu.memory_space<vmem>>, vector<32x128xf32>
    %cst_90 = arith.constant dense<0.000000e+00> : vector<8x128xf32>
    %162 = tpu.matmul %160, %161, %cst_90 {dimension_numbers = #tpu.dot_dimension_numbers<[1], [0], [0], [1], [0, 0, 1, 1], [], []>} : vector<8x32xf32>, vector<32x128xf32>, vector<8x128xf32> -> vector<8x128xf32>
    %163 = arith.addf %158, %162 : vector<8x128xf32>
    %164 = vector.extract_strided_slice %163 {offsets = [0, 0], sizes = [8, 96], strides = [1, 1]} : vector<8x128xf32> to vector<8x96xf32>
    %165 = arith.negf %164 : vector<8x96xf32>
    %166 = math.exp %165 : vector<8x96xf32>
    %cst_91 = arith.constant 1.000000e+00 : f32
    %167 = vector.broadcast %cst_91 : f32 to vector<8x96xf32>
    %168 = arith.addf %167, %166 : vector<8x96xf32>
    %169 = arith.divf %167, %168 : vector<8x96xf32>
    %170 = vector.extract_strided_slice %163 {offsets = [0, 96], sizes = [8, 32], strides = [1, 1]} : vector<8x128xf32> to vector<8x32xf32>
    %171 = math.tanh %170 : vector<8x32xf32>
    %172 = vector.extract_strided_slice %169 {offsets = [0, 0], sizes = [8, 32], strides = [1, 1]} : vector<8x96xf32> to vector<8x32xf32>
    %173 = vector.extract_strided_slice %169 {offsets = [0, 32], sizes = [8, 32], strides = [1, 1]} : vector<8x96xf32> to vector<8x32xf32>
    %174 = vector.extract_strided_slice %169 {offsets = [0, 64], sizes = [8, 32], strides = [1, 1]} : vector<8x96xf32> to vector<8x32xf32>
    %175 = arith.mulf %173, %159 : vector<8x32xf32>
    %176 = arith.mulf %172, %171 : vector<8x32xf32>
    %177 = arith.addf %175, %176 : vector<8x32xf32>
    %178 = math.tanh %177 : vector<8x32xf32>
    %179 = arith.mulf %174, %178 : vector<8x32xf32>
    %c0_92 = arith.constant 0 : index
    %c0_93 = arith.constant 0 : index
    %180 = vector.load %arg9[%c0_92, %c0_93] : memref<8x32xf32, #tpu.memory_space<vmem>>, vector<8x32xf32>
    tpu.vector_store %arg9[%c0_92, %c0_93], %179 {strides = array<i32>} : memref<8x32xf32, #tpu.memory_space<vmem>>, vector<8x32xf32>,
    %c0_94 = arith.constant 0 : index
    %c0_95 = arith.constant 0 : index
    %181 = vector.load %arg10[%c0_94, %c0_95] : memref<8x32xf32, #tpu.memory_space<vmem>>, vector<8x32xf32>
    tpu.vector_store %arg10[%c0_94, %c0_95], %177 {strides = array<i32>} : memref<8x32xf32, #tpu.memory_space<vmem>>, vector<8x32xf32>,
    %182 = arith.index_cast %155 : i32 to index
    %c0_96 = arith.constant 0 : index
    %c0_97 = arith.constant 0 : index
    %183 = vector.load %arg6[%182, %c0_96, %c0_97] : memref<16x8x32xf32, #tpu.memory_space<vmem>>, vector<1x8x32xf32>
    %184 = vector.shape_cast %183 : vector<1x8x32xf32> to vector<8x32xf32>
    %185 = vector.shape_cast %179 : vector<8x32xf32> to vector<1x8x32xf32>
    tpu.vector_store %arg6[%182, %c0_96, %c0_97], %185 {strides = array<i32>} : memref<16x8x32xf32, #tpu.memory_space<vmem>>, vector<1x8x32xf32>,
    %c3_i32 = arith.constant 3 : i32
    %186 = arith.index_cast %c3_i32 : i32 to index
    %c0_98 = arith.constant 0 : index
    %c0_99 = arith.constant 0 : index
    %187 = vector.load %arg1[%186, %c0_98, %c0_99] : memref<16x8x128xf32, #tpu.memory_space<vmem>>, vector<1x8x128xf32>
    %188 = vector.shape_cast %187 : vector<1x8x128xf32> to vector<8x128xf32>
    %c0_100 = arith.constant 0 : index
    %c0_101 = arith.constant 0 : index
    %189 = vector.load %arg8[%c0_100, %c0_101] : memref<8x32xf32, #tpu.memory_space<vmem>>, vector<8x32xf32>
    %c0_102 = arith.constant 0 : index
    %c0_103 = arith.constant 0 : index
    %190 = vector.load %arg7[%c0_102, %c0_103] : memref<8x32xf32, #tpu.memory_space<vmem>>, vector<8x32xf32>
    %c0_104 = arith.constant 0 : index
    %c0_105 = arith.constant 0 : index
    %191 = vector.load %arg3[%c0_104, %c0_105] : memref<32x128xf32, #tpu.memory_space<vmem>>, vector<32x128xf32>
    %cst_106 = arith.constant dense<0.000000e+00> : vector<8x128xf32>
    %192 = tpu.matmul %190, %191, %cst_106 {dimension_numbers = #tpu.dot_dimension_numbers<[1], [0], [0], [1], [0, 0, 1, 1], [], []>} : vector<8x32xf32>, vector<32x128xf32>, vector<8x128xf32> -> vector<8x128xf32>
    %193 = arith.addf %188, %192 : vector<8x128xf32>
    %194 = vector.extract_strided_slice %193 {offsets = [0, 0], sizes = [8, 96], strides = [1, 1]} : vector<8x128xf32> to vector<8x96xf32>
    %195 = arith.negf %194 : vector<8x96xf32>
    %196 = math.exp %195 : vector<8x96xf32>
    %cst_107 = arith.constant 1.000000e+00 : f32
    %197 = vector.broadcast %cst_107 : f32 to vector<8x96xf32>
    %198 = arith.addf %197, %196 : vector<8x96xf32>
    %199 = arith.divf %197, %198 : vector<8x96xf32>
    %200 = vector.extract_strided_slice %193 {offsets = [0, 96], sizes = [8, 32], strides = [1, 1]} : vector<8x128xf32> to vector<8x32xf32>
    %201 = math.tanh %200 : vector<8x32xf32>
    %202 = vector.extract_strided_slice %199 {offsets = [0, 0], sizes = [8, 32], strides = [1, 1]} : vector<8x96xf32> to vector<8x32xf32>
    %203 = vector.extract_strided_slice %199 {offsets = [0, 32], sizes = [8, 32], strides = [1, 1]} : vector<8x96xf32> to vector<8x32xf32>
    %204 = vector.extract_strided_slice %199 {offsets = [0, 64], sizes = [8, 32], strides = [1, 1]} : vector<8x96xf32> to vector<8x32xf32>
    %205 = arith.mulf %203, %189 : vector<8x32xf32>
    %206 = arith.mulf %202, %201 : vector<8x32xf32>
    %207 = arith.addf %205, %206 : vector<8x32xf32>
    %208 = math.tanh %207 : vector<8x32xf32>
    %209 = arith.mulf %204, %208 : vector<8x32xf32>
    %c0_108 = arith.constant 0 : index
    %c0_109 = arith.constant 0 : index
    %210 = vector.load %arg7[%c0_108, %c0_109] : memref<8x32xf32, #tpu.memory_space<vmem>>, vector<8x32xf32>
    tpu.vector_store %arg7[%c0_108, %c0_109], %209 {strides = array<i32>} : memref<8x32xf32, #tpu.memory_space<vmem>>, vector<8x32xf32>,
    %c0_110 = arith.constant 0 : index
    %c0_111 = arith.constant 0 : index
    %211 = vector.load %arg8[%c0_110, %c0_111] : memref<8x32xf32, #tpu.memory_space<vmem>>, vector<8x32xf32>
    tpu.vector_store %arg8[%c0_110, %c0_111], %207 {strides = array<i32>} : memref<8x32xf32, #tpu.memory_space<vmem>>, vector<8x32xf32>,
    %212 = arith.index_cast %c3_i32 : i32 to index
    %c0_112 = arith.constant 0 : index
    %c0_113 = arith.constant 0 : index
    %213 = vector.load %arg5[%212, %c0_112, %c0_113] : memref<16x8x32xf32, #tpu.memory_space<vmem>>, vector<1x8x32xf32>
    %214 = vector.shape_cast %213 : vector<1x8x32xf32> to vector<8x32xf32>
    %215 = vector.shape_cast %209 : vector<8x32xf32> to vector<1x8x32xf32>
    tpu.vector_store %arg5[%212, %c0_112, %c0_113], %215 {strides = array<i32>} : memref<16x8x32xf32, #tpu.memory_space<vmem>>, vector<1x8x32xf32>,
    %c15_i32_114 = arith.constant 15 : i32
    %216 = arith.subi %c15_i32_114, %c3_i32 : i32
    %217 = arith.index_cast %216 : i32 to index
    %c0_115 = arith.constant 0 : index
    %c0_116 = arith.constant 0 : index
    %218 = vector.load %arg2[%217, %c0_115, %c0_116] : memref<16x8x128xf32, #tpu.memory_space<vmem>>, vector<1x8x128xf32>
    %219 = vector.shape_cast %218 : vector<1x8x128xf32> to vector<8x128xf32>
    %c0_117 = arith.constant 0 : index
    %c0_118 = arith.constant 0 : index
    %220 = vector.load %arg10[%c0_117, %c0_118] : memref<8x32xf32, #tpu.memory_space<vmem>>, vector<8x32xf32>
    %c0_119 = arith.constant 0 : index
    %c0_120 = arith.constant 0 : index
    %221 = vector.load %arg9[%c0_119, %c0_120] : memref<8x32xf32, #tpu.memory_space<vmem>>, vector<8x32xf32>
    %c0_121 = arith.constant 0 : index
    %c0_122 = arith.constant 0 : index
    %222 = vector.load %arg4[%c0_121, %c0_122] : memref<32x128xf32, #tpu.memory_space<vmem>>, vector<32x128xf32>
    %cst_123 = arith.constant dense<0.000000e+00> : vector<8x128xf32>
    %223 = tpu.matmul %221, %222, %cst_123 {dimension_numbers = #tpu.dot_dimension_numbers<[1], [0], [0], [1], [0, 0, 1, 1], [], []>} : vector<8x32xf32>, vector<32x128xf32>, vector<8x128xf32> -> vector<8x128xf32>
    %224 = arith.addf %219, %223 : vector<8x128xf32>
    %225 = vector.extract_strided_slice %224 {offsets = [0, 0], sizes = [8, 96], strides = [1, 1]} : vector<8x128xf32> to vector<8x96xf32>
    %226 = arith.negf %225 : vector<8x96xf32>
    %227 = math.exp %226 : vector<8x96xf32>
    %cst_124 = arith.constant 1.000000e+00 : f32
    %228 = vector.broadcast %cst_124 : f32 to vector<8x96xf32>
    %229 = arith.addf %228, %227 : vector<8x96xf32>
    %230 = arith.divf %228, %229 : vector<8x96xf32>
    %231 = vector.extract_strided_slice %224 {offsets = [0, 96], sizes = [8, 32], strides = [1, 1]} : vector<8x128xf32> to vector<8x32xf32>
    %232 = math.tanh %231 : vector<8x32xf32>
    %233 = vector.extract_strided_slice %230 {offsets = [0, 0], sizes = [8, 32], strides = [1, 1]} : vector<8x96xf32> to vector<8x32xf32>
    %234 = vector.extract_strided_slice %230 {offsets = [0, 32], sizes = [8, 32], strides = [1, 1]} : vector<8x96xf32> to vector<8x32xf32>
    %235 = vector.extract_strided_slice %230 {offsets = [0, 64], sizes = [8, 32], strides = [1, 1]} : vector<8x96xf32> to vector<8x32xf32>
    %236 = arith.mulf %234, %220 : vector<8x32xf32>
    %237 = arith.mulf %233, %232 : vector<8x32xf32>
    %238 = arith.addf %236, %237 : vector<8x32xf32>
    %239 = math.tanh %238 : vector<8x32xf32>
    %240 = arith.mulf %235, %239 : vector<8x32xf32>
    %c0_125 = arith.constant 0 : index
    %c0_126 = arith.constant 0 : index
    %241 = vector.load %arg9[%c0_125, %c0_126] : memref<8x32xf32, #tpu.memory_space<vmem>>, vector<8x32xf32>
    tpu.vector_store %arg9[%c0_125, %c0_126], %240 {strides = array<i32>} : memref<8x32xf32, #tpu.memory_space<vmem>>, vector<8x32xf32>,
    %c0_127 = arith.constant 0 : index
    %c0_128 = arith.constant 0 : index
    %242 = vector.load %arg10[%c0_127, %c0_128] : memref<8x32xf32, #tpu.memory_space<vmem>>, vector<8x32xf32>
    tpu.vector_store %arg10[%c0_127, %c0_128], %238 {strides = array<i32>} : memref<8x32xf32, #tpu.memory_space<vmem>>, vector<8x32xf32>,
    %243 = arith.index_cast %216 : i32 to index
    %c0_129 = arith.constant 0 : index
    %c0_130 = arith.constant 0 : index
    %244 = vector.load %arg6[%243, %c0_129, %c0_130] : memref<16x8x32xf32, #tpu.memory_space<vmem>>, vector<1x8x32xf32>
    %245 = vector.shape_cast %244 : vector<1x8x32xf32> to vector<8x32xf32>
    %246 = vector.shape_cast %240 : vector<8x32xf32> to vector<1x8x32xf32>
    tpu.vector_store %arg6[%243, %c0_129, %c0_130], %246 {strides = array<i32>} : memref<16x8x32xf32, #tpu.memory_space<vmem>>, vector<1x8x32xf32>,
    %c4_i32 = arith.constant 4 : i32
    %247 = arith.index_cast %c4_i32 : i32 to index
    %c0_131 = arith.constant 0 : index
    %c0_132 = arith.constant 0 : index
    %248 = vector.load %arg1[%247, %c0_131, %c0_132] : memref<16x8x128xf32, #tpu.memory_space<vmem>>, vector<1x8x128xf32>
    %249 = vector.shape_cast %248 : vector<1x8x128xf32> to vector<8x128xf32>
    %c0_133 = arith.constant 0 : index
    %c0_134 = arith.constant 0 : index
    %250 = vector.load %arg8[%c0_133, %c0_134] : memref<8x32xf32, #tpu.memory_space<vmem>>, vector<8x32xf32>
    %c0_135 = arith.constant 0 : index
    %c0_136 = arith.constant 0 : index
    %251 = vector.load %arg7[%c0_135, %c0_136] : memref<8x32xf32, #tpu.memory_space<vmem>>, vector<8x32xf32>
    %c0_137 = arith.constant 0 : index
    %c0_138 = arith.constant 0 : index
    %252 = vector.load %arg3[%c0_137, %c0_138] : memref<32x128xf32, #tpu.memory_space<vmem>>, vector<32x128xf32>
    %cst_139 = arith.constant dense<0.000000e+00> : vector<8x128xf32>
    %253 = tpu.matmul %251, %252, %cst_139 {dimension_numbers = #tpu.dot_dimension_numbers<[1], [0], [0], [1], [0, 0, 1, 1], [], []>} : vector<8x32xf32>, vector<32x128xf32>, vector<8x128xf32> -> vector<8x128xf32>
    %254 = arith.addf %249, %253 : vector<8x128xf32>
    %255 = vector.extract_strided_slice %254 {offsets = [0, 0], sizes = [8, 96], strides = [1, 1]} : vector<8x128xf32> to vector<8x96xf32>
    %256 = arith.negf %255 : vector<8x96xf32>
    %257 = math.exp %256 : vector<8x96xf32>
    %cst_140 = arith.constant 1.000000e+00 : f32
    %258 = vector.broadcast %cst_140 : f32 to vector<8x96xf32>
    %259 = arith.addf %258, %257 : vector<8x96xf32>
    %260 = arith.divf %258, %259 : vector<8x96xf32>
    %261 = vector.extract_strided_slice %254 {offsets = [0, 96], sizes = [8, 32], strides = [1, 1]} : vector<8x128xf32> to vector<8x32xf32>
    %262 = math.tanh %261 : vector<8x32xf32>
    %263 = vector.extract_strided_slice %260 {offsets = [0, 0], sizes = [8, 32], strides = [1, 1]} : vector<8x96xf32> to vector<8x32xf32>
    %264 = vector.extract_strided_slice %260 {offsets = [0, 32], sizes = [8, 32], strides = [1, 1]} : vector<8x96xf32> to vector<8x32xf32>
    %265 = vector.extract_strided_slice %260 {offsets = [0, 64], sizes = [8, 32], strides = [1, 1]} : vector<8x96xf32> to vector<8x32xf32>
    %266 = arith.mulf %264, %250 : vector<8x32xf32>
    %267 = arith.mulf %263, %262 : vector<8x32xf32>
    %268 = arith.addf %266, %267 : vector<8x32xf32>
    %269 = math.tanh %268 : vector<8x32xf32>
    %270 = arith.mulf %265, %269 : vector<8x32xf32>
    %c0_141 = arith.constant 0 : index
    %c0_142 = arith.constant 0 : index
    %271 = vector.load %arg7[%c0_141, %c0_142] : memref<8x32xf32, #tpu.memory_space<vmem>>, vector<8x32xf32>
    tpu.vector_store %arg7[%c0_141, %c0_142], %270 {strides = array<i32>} : memref<8x32xf32, #tpu.memory_space<vmem>>, vector<8x32xf32>,
    %c0_143 = arith.constant 0 : index
    %c0_144 = arith.constant 0 : index
    %272 = vector.load %arg8[%c0_143, %c0_144] : memref<8x32xf32, #tpu.memory_space<vmem>>, vector<8x32xf32>
    tpu.vector_store %arg8[%c0_143, %c0_144], %268 {strides = array<i32>} : memref<8x32xf32, #tpu.memory_space<vmem>>, vector<8x32xf32>,
    %273 = arith.index_cast %c4_i32 : i32 to index
    %c0_145 = arith.constant 0 : index
    %c0_146 = arith.constant 0 : index
    %274 = vector.load %arg5[%273, %c0_145, %c0_146] : memref<16x8x32xf32, #tpu.memory_space<vmem>>, vector<1x8x32xf32>
    %275 = vector.shape_cast %274 : vector<1x8x32xf32> to vector<8x32xf32>
    %276 = vector.shape_cast %270 : vector<8x32xf32> to vector<1x8x32xf32>
    tpu.vector_store %arg5[%273, %c0_145, %c0_146], %276 {strides = array<i32>} : memref<16x8x32xf32, #tpu.memory_space<vmem>>, vector<1x8x32xf32>,
    %c15_i32_147 = arith.constant 15 : i32
    %277 = arith.subi %c15_i32_147, %c4_i32 : i32
    %278 = arith.index_cast %277 : i32 to index
    %c0_148 = arith.constant 0 : index
    %c0_149 = arith.constant 0 : index
    %279 = vector.load %arg2[%278, %c0_148, %c0_149] : memref<16x8x128xf32, #tpu.memory_space<vmem>>, vector<1x8x128xf32>
    %280 = vector.shape_cast %279 : vector<1x8x128xf32> to vector<8x128xf32>
    %c0_150 = arith.constant 0 : index
    %c0_151 = arith.constant 0 : index
    %281 = vector.load %arg10[%c0_150, %c0_151] : memref<8x32xf32, #tpu.memory_space<vmem>>, vector<8x32xf32>
    %c0_152 = arith.constant 0 : index
    %c0_153 = arith.constant 0 : index
    %282 = vector.load %arg9[%c0_152, %c0_153] : memref<8x32xf32, #tpu.memory_space<vmem>>, vector<8x32xf32>
    %c0_154 = arith.constant 0 : index
    %c0_155 = arith.constant 0 : index
    %283 = vector.load %arg4[%c0_154, %c0_155] : memref<32x128xf32, #tpu.memory_space<vmem>>, vector<32x128xf32>
    %cst_156 = arith.constant dense<0.000000e+00> : vector<8x128xf32>
    %284 = tpu.matmul %282, %283, %cst_156 {dimension_numbers = #tpu.dot_dimension_numbers<[1], [0], [0], [1], [0, 0, 1, 1], [], []>} : vector<8x32xf32>, vector<32x128xf32>, vector<8x128xf32> -> vector<8x128xf32>
    %285 = arith.addf %280, %284 : vector<8x128xf32>
    %286 = vector.extract_strided_slice %285 {offsets = [0, 0], sizes = [8, 96], strides = [1, 1]} : vector<8x128xf32> to vector<8x96xf32>
    %287 = arith.negf %286 : vector<8x96xf32>
    %288 = math.exp %287 : vector<8x96xf32>
    %cst_157 = arith.constant 1.000000e+00 : f32
    %289 = vector.broadcast %cst_157 : f32 to vector<8x96xf32>
    %290 = arith.addf %289, %288 : vector<8x96xf32>
    %291 = arith.divf %289, %290 : vector<8x96xf32>
    %292 = vector.extract_strided_slice %285 {offsets = [0, 96], sizes = [8, 32], strides = [1, 1]} : vector<8x128xf32> to vector<8x32xf32>
    %293 = math.tanh %292 : vector<8x32xf32>
    %294 = vector.extract_strided_slice %291 {offsets = [0, 0], sizes = [8, 32], strides = [1, 1]} : vector<8x96xf32> to vector<8x32xf32>
    %295 = vector.extract_strided_slice %291 {offsets = [0, 32], sizes = [8, 32], strides = [1, 1]} : vector<8x96xf32> to vector<8x32xf32>
    %296 = vector.extract_strided_slice %291 {offsets = [0, 64], sizes = [8, 32], strides = [1, 1]} : vector<8x96xf32> to vector<8x32xf32>
    %297 = arith.mulf %295, %281 : vector<8x32xf32>
    %298 = arith.mulf %294, %293 : vector<8x32xf32>
    %299 = arith.addf %297, %298 : vector<8x32xf32>
    %300 = math.tanh %299 : vector<8x32xf32>
    %301 = arith.mulf %296, %300 : vector<8x32xf32>
    %c0_158 = arith.constant 0 : index
    %c0_159 = arith.constant 0 : index
    %302 = vector.load %arg9[%c0_158, %c0_159] : memref<8x32xf32, #tpu.memory_space<vmem>>, vector<8x32xf32>
    tpu.vector_store %arg9[%c0_158, %c0_159], %301 {strides = array<i32>} : memref<8x32xf32, #tpu.memory_space<vmem>>, vector<8x32xf32>,
    %c0_160 = arith.constant 0 : index
    %c0_161 = arith.constant 0 : index
    %303 = vector.load %arg10[%c0_160, %c0_161] : memref<8x32xf32, #tpu.memory_space<vmem>>, vector<8x32xf32>
    tpu.vector_store %arg10[%c0_160, %c0_161], %299 {strides = array<i32>} : memref<8x32xf32, #tpu.memory_space<vmem>>, vector<8x32xf32>,
    %304 = arith.index_cast %277 : i32 to index
    %c0_162 = arith.constant 0 : index
    %c0_163 = arith.constant 0 : index
    %305 = vector.load %arg6[%304, %c0_162, %c0_163] : memref<16x8x32xf32, #tpu.memory_space<vmem>>, vector<1x8x32xf32>
    %306 = vector.shape_cast %305 : vector<1x8x32xf32> to vector<8x32xf32>
    %307 = vector.shape_cast %301 : vector<8x32xf32> to vector<1x8x32xf32>
    tpu.vector_store %arg6[%304, %c0_162, %c0_163], %307 {strides = array<i32>} : memref<16x8x32xf32, #tpu.memory_space<vmem>>, vector<1x8x32xf32>,
    %c5_i32 = arith.constant 5 : i32
    %308 = arith.index_cast %c5_i32 : i32 to index
    %c0_164 = arith.constant 0 : index
    %c0_165 = arith.constant 0 : index
    %309 = vector.load %arg1[%308, %c0_164, %c0_165] : memref<16x8x128xf32, #tpu.memory_space<vmem>>, vector<1x8x128xf32>
    %310 = vector.shape_cast %309 : vector<1x8x128xf32> to vector<8x128xf32>
    %c0_166 = arith.constant 0 : index
    %c0_167 = arith.constant 0 : index
    %311 = vector.load %arg8[%c0_166, %c0_167] : memref<8x32xf32, #tpu.memory_space<vmem>>, vector<8x32xf32>
    %c0_168 = arith.constant 0 : index
    %c0_169 = arith.constant 0 : index
    %312 = vector.load %arg7[%c0_168, %c0_169] : memref<8x32xf32, #tpu.memory_space<vmem>>, vector<8x32xf32>
    %c0_170 = arith.constant 0 : index
    %c0_171 = arith.constant 0 : index
    %313 = vector.load %arg3[%c0_170, %c0_171] : memref<32x128xf32, #tpu.memory_space<vmem>>, vector<32x128xf32>
    %cst_172 = arith.constant dense<0.000000e+00> : vector<8x128xf32>
    %314 = tpu.matmul %312, %313, %cst_172 {dimension_numbers = #tpu.dot_dimension_numbers<[1], [0], [0], [1], [0, 0, 1, 1], [], []>} : vector<8x32xf32>, vector<32x128xf32>, vector<8x128xf32> -> vector<8x128xf32>
    %315 = arith.addf %310, %314 : vector<8x128xf32>
    %316 = vector.extract_strided_slice %315 {offsets = [0, 0], sizes = [8, 96], strides = [1, 1]} : vector<8x128xf32> to vector<8x96xf32>
    %317 = arith.negf %316 : vector<8x96xf32>
    %318 = math.exp %317 : vector<8x96xf32>
    %cst_173 = arith.constant 1.000000e+00 : f32
    %319 = vector.broadcast %cst_173 : f32 to vector<8x96xf32>
    %320 = arith.addf %319, %318 : vector<8x96xf32>
    %321 = arith.divf %319, %320 : vector<8x96xf32>
    %322 = vector.extract_strided_slice %315 {offsets = [0, 96], sizes = [8, 32], strides = [1, 1]} : vector<8x128xf32> to vector<8x32xf32>
    %323 = math.tanh %322 : vector<8x32xf32>
    %324 = vector.extract_strided_slice %321 {offsets = [0, 0], sizes = [8, 32], strides = [1, 1]} : vector<8x96xf32> to vector<8x32xf32>
    %325 = vector.extract_strided_slice %321 {offsets = [0, 32], sizes = [8, 32], strides = [1, 1]} : vector<8x96xf32> to vector<8x32xf32>
    %326 = vector.extract_strided_slice %321 {offsets = [0, 64], sizes = [8, 32], strides = [1, 1]} : vector<8x96xf32> to vector<8x32xf32>
    %327 = arith.mulf %325, %311 : vector<8x32xf32>
    %328 = arith.mulf %324, %323 : vector<8x32xf32>
    %329 = arith.addf %327, %328 : vector<8x32xf32>
    %330 = math.tanh %329 : vector<8x32xf32>
    %331 = arith.mulf %326, %330 : vector<8x32xf32>
    %c0_174 = arith.constant 0 : index
    %c0_175 = arith.constant 0 : index
    %332 = vector.load %arg7[%c0_174, %c0_175] : memref<8x32xf32, #tpu.memory_space<vmem>>, vector<8x32xf32>
    tpu.vector_store %arg7[%c0_174, %c0_175], %331 {strides = array<i32>} : memref<8x32xf32, #tpu.memory_space<vmem>>, vector<8x32xf32>,
    %c0_176 = arith.constant 0 : index
    %c0_177 = arith.constant 0 : index
    %333 = vector.load %arg8[%c0_176, %c0_177] : memref<8x32xf32, #tpu.memory_space<vmem>>, vector<8x32xf32>
    tpu.vector_store %arg8[%c0_176, %c0_177], %329 {strides = array<i32>} : memref<8x32xf32, #tpu.memory_space<vmem>>, vector<8x32xf32>,
    %334 = arith.index_cast %c5_i32 : i32 to index
    %c0_178 = arith.constant 0 : index
    %c0_179 = arith.constant 0 : index
    %335 = vector.load %arg5[%334, %c0_178, %c0_179] : memref<16x8x32xf32, #tpu.memory_space<vmem>>, vector<1x8x32xf32>
    %336 = vector.shape_cast %335 : vector<1x8x32xf32> to vector<8x32xf32>
    %337 = vector.shape_cast %331 : vector<8x32xf32> to vector<1x8x32xf32>
    tpu.vector_store %arg5[%334, %c0_178, %c0_179], %337 {strides = array<i32>} : memref<16x8x32xf32, #tpu.memory_space<vmem>>, vector<1x8x32xf32>,
    %c15_i32_180 = arith.constant 15 : i32
    %338 = arith.subi %c15_i32_180, %c5_i32 : i32
    %339 = arith.index_cast %338 : i32 to index
    %c0_181 = arith.constant 0 : index
    %c0_182 = arith.constant 0 : index
    %340 = vector.load %arg2[%339, %c0_181, %c0_182] : memref<16x8x128xf32, #tpu.memory_space<vmem>>, vector<1x8x128xf32>
    %341 = vector.shape_cast %340 : vector<1x8x128xf32> to vector<8x128xf32>
    %c0_183 = arith.constant 0 : index
    %c0_184 = arith.constant 0 : index
    %342 = vector.load %arg10[%c0_183, %c0_184] : memref<8x32xf32, #tpu.memory_space<vmem>>, vector<8x32xf32>
    %c0_185 = arith.constant 0 : index
    %c0_186 = arith.constant 0 : index
    %343 = vector.load %arg9[%c0_185, %c0_186] : memref<8x32xf32, #tpu.memory_space<vmem>>, vector<8x32xf32>
    %c0_187 = arith.constant 0 : index
    %c0_188 = arith.constant 0 : index
    %344 = vector.load %arg4[%c0_187, %c0_188] : memref<32x128xf32, #tpu.memory_space<vmem>>, vector<32x128xf32>
    %cst_189 = arith.constant dense<0.000000e+00> : vector<8x128xf32>
    %345 = tpu.matmul %343, %344, %cst_189 {dimension_numbers = #tpu.dot_dimension_numbers<[1], [0], [0], [1], [0, 0, 1, 1], [], []>} : vector<8x32xf32>, vector<32x128xf32>, vector<8x128xf32> -> vector<8x128xf32>
    %346 = arith.addf %341, %345 : vector<8x128xf32>
    %347 = vector.extract_strided_slice %346 {offsets = [0, 0], sizes = [8, 96], strides = [1, 1]} : vector<8x128xf32> to vector<8x96xf32>
    %348 = arith.negf %347 : vector<8x96xf32>
    %349 = math.exp %348 : vector<8x96xf32>
    %cst_190 = arith.constant 1.000000e+00 : f32
    %350 = vector.broadcast %cst_190 : f32 to vector<8x96xf32>
    %351 = arith.addf %350, %349 : vector<8x96xf32>
    %352 = arith.divf %350, %351 : vector<8x96xf32>
    %353 = vector.extract_strided_slice %346 {offsets = [0, 96], sizes = [8, 32], strides = [1, 1]} : vector<8x128xf32> to vector<8x32xf32>
    %354 = math.tanh %353 : vector<8x32xf32>
    %355 = vector.extract_strided_slice %352 {offsets = [0, 0], sizes = [8, 32], strides = [1, 1]} : vector<8x96xf32> to vector<8x32xf32>
    %356 = vector.extract_strided_slice %352 {offsets = [0, 32], sizes = [8, 32], strides = [1, 1]} : vector<8x96xf32> to vector<8x32xf32>
    %357 = vector.extract_strided_slice %352 {offsets = [0, 64], sizes = [8, 32], strides = [1, 1]} : vector<8x96xf32> to vector<8x32xf32>
    %358 = arith.mulf %356, %342 : vector<8x32xf32>
    %359 = arith.mulf %355, %354 : vector<8x32xf32>
    %360 = arith.addf %358, %359 : vector<8x32xf32>
    %361 = math.tanh %360 : vector<8x32xf32>
    %362 = arith.mulf %357, %361 : vector<8x32xf32>
    %c0_191 = arith.constant 0 : index
    %c0_192 = arith.constant 0 : index
    %363 = vector.load %arg9[%c0_191, %c0_192] : memref<8x32xf32, #tpu.memory_space<vmem>>, vector<8x32xf32>
    tpu.vector_store %arg9[%c0_191, %c0_192], %362 {strides = array<i32>} : memref<8x32xf32, #tpu.memory_space<vmem>>, vector<8x32xf32>,
    %c0_193 = arith.constant 0 : index
    %c0_194 = arith.constant 0 : index
    %364 = vector.load %arg10[%c0_193, %c0_194] : memref<8x32xf32, #tpu.memory_space<vmem>>, vector<8x32xf32>
    tpu.vector_store %arg10[%c0_193, %c0_194], %360 {strides = array<i32>} : memref<8x32xf32, #tpu.memory_space<vmem>>, vector<8x32xf32>,
    %365 = arith.index_cast %338 : i32 to index
    %c0_195 = arith.constant 0 : index
    %c0_196 = arith.constant 0 : index
    %366 = vector.load %arg6[%365, %c0_195, %c0_196] : memref<16x8x32xf32, #tpu.memory_space<vmem>>, vector<1x8x32xf32>
    %367 = vector.shape_cast %366 : vector<1x8x32xf32> to vector<8x32xf32>
    %368 = vector.shape_cast %362 : vector<8x32xf32> to vector<1x8x32xf32>
    tpu.vector_store %arg6[%365, %c0_195, %c0_196], %368 {strides = array<i32>} : memref<16x8x32xf32, #tpu.memory_space<vmem>>, vector<1x8x32xf32>,
    %c6_i32 = arith.constant 6 : i32
    %369 = arith.index_cast %c6_i32 : i32 to index
    %c0_197 = arith.constant 0 : index
    %c0_198 = arith.constant 0 : index
    %370 = vector.load %arg1[%369, %c0_197, %c0_198] : memref<16x8x128xf32, #tpu.memory_space<vmem>>, vector<1x8x128xf32>
    %371 = vector.shape_cast %370 : vector<1x8x128xf32> to vector<8x128xf32>
    %c0_199 = arith.constant 0 : index
    %c0_200 = arith.constant 0 : index
    %372 = vector.load %arg8[%c0_199, %c0_200] : memref<8x32xf32, #tpu.memory_space<vmem>>, vector<8x32xf32>
    %c0_201 = arith.constant 0 : index
    %c0_202 = arith.constant 0 : index
    %373 = vector.load %arg7[%c0_201, %c0_202] : memref<8x32xf32, #tpu.memory_space<vmem>>, vector<8x32xf32>
    %c0_203 = arith.constant 0 : index
    %c0_204 = arith.constant 0 : index
    %374 = vector.load %arg3[%c0_203, %c0_204] : memref<32x128xf32, #tpu.memory_space<vmem>>, vector<32x128xf32>
    %cst_205 = arith.constant dense<0.000000e+00> : vector<8x128xf32>
    %375 = tpu.matmul %373, %374, %cst_205 {dimension_numbers = #tpu.dot_dimension_numbers<[1], [0], [0], [1], [0, 0, 1, 1], [], []>} : vector<8x32xf32>, vector<32x128xf32>, vector<8x128xf32> -> vector<8x128xf32>
    %376 = arith.addf %371, %375 : vector<8x128xf32>
    %377 = vector.extract_strided_slice %376 {offsets = [0, 0], sizes = [8, 96], strides = [1, 1]} : vector<8x128xf32> to vector<8x96xf32>
    %378 = arith.negf %377 : vector<8x96xf32>
    %379 = math.exp %378 : vector<8x96xf32>
    %cst_206 = arith.constant 1.000000e+00 : f32
    %380 = vector.broadcast %cst_206 : f32 to vector<8x96xf32>
    %381 = arith.addf %380, %379 : vector<8x96xf32>
    %382 = arith.divf %380, %381 : vector<8x96xf32>
    %383 = vector.extract_strided_slice %376 {offsets = [0, 96], sizes = [8, 32], strides = [1, 1]} : vector<8x128xf32> to vector<8x32xf32>
    %384 = math.tanh %383 : vector<8x32xf32>
    %385 = vector.extract_strided_slice %382 {offsets = [0, 0], sizes = [8, 32], strides = [1, 1]} : vector<8x96xf32> to vector<8x32xf32>
    %386 = vector.extract_strided_slice %382 {offsets = [0, 32], sizes = [8, 32], strides = [1, 1]} : vector<8x96xf32> to vector<8x32xf32>
    %387 = vector.extract_strided_slice %382 {offsets = [0, 64], sizes = [8, 32], strides = [1, 1]} : vector<8x96xf32> to vector<8x32xf32>
    %388 = arith.mulf %386, %372 : vector<8x32xf32>
    %389 = arith.mulf %385, %384 : vector<8x32xf32>
    %390 = arith.addf %388, %389 : vector<8x32xf32>
    %391 = math.tanh %390 : vector<8x32xf32>
    %392 = arith.mulf %387, %391 : vector<8x32xf32>
    %c0_207 = arith.constant 0 : index
    %c0_208 = arith.constant 0 : index
    %393 = vector.load %arg7[%c0_207, %c0_208] : memref<8x32xf32, #tpu.memory_space<vmem>>, vector<8x32xf32>
    tpu.vector_store %arg7[%c0_207, %c0_208], %392 {strides = array<i32>} : memref<8x32xf32, #tpu.memory_space<vmem>>, vector<8x32xf32>,
    %c0_209 = arith.constant 0 : index
    %c0_210 = arith.constant 0 : index
    %394 = vector.load %arg8[%c0_209, %c0_210] : memref<8x32xf32, #tpu.memory_space<vmem>>, vector<8x32xf32>
    tpu.vector_store %arg8[%c0_209, %c0_210], %390 {strides = array<i32>} : memref<8x32xf32, #tpu.memory_space<vmem>>, vector<8x32xf32>,
    %395 = arith.index_cast %c6_i32 : i32 to index
    %c0_211 = arith.constant 0 : index
    %c0_212 = arith.constant 0 : index
    %396 = vector.load %arg5[%395, %c0_211, %c0_212] : memref<16x8x32xf32, #tpu.memory_space<vmem>>, vector<1x8x32xf32>
    %397 = vector.shape_cast %396 : vector<1x8x32xf32> to vector<8x32xf32>
    %398 = vector.shape_cast %392 : vector<8x32xf32> to vector<1x8x32xf32>
    tpu.vector_store %arg5[%395, %c0_211, %c0_212], %398 {strides = array<i32>} : memref<16x8x32xf32, #tpu.memory_space<vmem>>, vector<1x8x32xf32>,
    %c15_i32_213 = arith.constant 15 : i32
    %399 = arith.subi %c15_i32_213, %c6_i32 : i32
    %400 = arith.index_cast %399 : i32 to index
    %c0_214 = arith.constant 0 : index
    %c0_215 = arith.constant 0 : index
    %401 = vector.load %arg2[%400, %c0_214, %c0_215] : memref<16x8x128xf32, #tpu.memory_space<vmem>>, vector<1x8x128xf32>
    %402 = vector.shape_cast %401 : vector<1x8x128xf32> to vector<8x128xf32>
    %c0_216 = arith.constant 0 : index
    %c0_217 = arith.constant 0 : index
    %403 = vector.load %arg10[%c0_216, %c0_217] : memref<8x32xf32, #tpu.memory_space<vmem>>, vector<8x32xf32>
    %c0_218 = arith.constant 0 : index
    %c0_219 = arith.constant 0 : index
    %404 = vector.load %arg9[%c0_218, %c0_219] : memref<8x32xf32, #tpu.memory_space<vmem>>, vector<8x32xf32>
    %c0_220 = arith.constant 0 : index
    %c0_221 = arith.constant 0 : index
    %405 = vector.load %arg4[%c0_220, %c0_221] : memref<32x128xf32, #tpu.memory_space<vmem>>, vector<32x128xf32>
    %cst_222 = arith.constant dense<0.000000e+00> : vector<8x128xf32>
    %406 = tpu.matmul %404, %405, %cst_222 {dimension_numbers = #tpu.dot_dimension_numbers<[1], [0], [0], [1], [0, 0, 1, 1], [], []>} : vector<8x32xf32>, vector<32x128xf32>, vector<8x128xf32> -> vector<8x128xf32>
    %407 = arith.addf %402, %406 : vector<8x128xf32>
    %408 = vector.extract_strided_slice %407 {offsets = [0, 0], sizes = [8, 96], strides = [1, 1]} : vector<8x128xf32> to vector<8x96xf32>
    %409 = arith.negf %408 : vector<8x96xf32>
    %410 = math.exp %409 : vector<8x96xf32>
    %cst_223 = arith.constant 1.000000e+00 : f32
    %411 = vector.broadcast %cst_223 : f32 to vector<8x96xf32>
    %412 = arith.addf %411, %410 : vector<8x96xf32>
    %413 = arith.divf %411, %412 : vector<8x96xf32>
    %414 = vector.extract_strided_slice %407 {offsets = [0, 96], sizes = [8, 32], strides = [1, 1]} : vector<8x128xf32> to vector<8x32xf32>
    %415 = math.tanh %414 : vector<8x32xf32>
    %416 = vector.extract_strided_slice %413 {offsets = [0, 0], sizes = [8, 32], strides = [1, 1]} : vector<8x96xf32> to vector<8x32xf32>
    %417 = vector.extract_strided_slice %413 {offsets = [0, 32], sizes = [8, 32], strides = [1, 1]} : vector<8x96xf32> to vector<8x32xf32>
    %418 = vector.extract_strided_slice %413 {offsets = [0, 64], sizes = [8, 32], strides = [1, 1]} : vector<8x96xf32> to vector<8x32xf32>
    %419 = arith.mulf %417, %403 : vector<8x32xf32>
    %420 = arith.mulf %416, %415 : vector<8x32xf32>
    %421 = arith.addf %419, %420 : vector<8x32xf32>
    %422 = math.tanh %421 : vector<8x32xf32>
    %423 = arith.mulf %418, %422 : vector<8x32xf32>
    %c0_224 = arith.constant 0 : index
    %c0_225 = arith.constant 0 : index
    %424 = vector.load %arg9[%c0_224, %c0_225] : memref<8x32xf32, #tpu.memory_space<vmem>>, vector<8x32xf32>
    tpu.vector_store %arg9[%c0_224, %c0_225], %423 {strides = array<i32>} : memref<8x32xf32, #tpu.memory_space<vmem>>, vector<8x32xf32>,
    %c0_226 = arith.constant 0 : index
    %c0_227 = arith.constant 0 : index
    %425 = vector.load %arg10[%c0_226, %c0_227] : memref<8x32xf32, #tpu.memory_space<vmem>>, vector<8x32xf32>
    tpu.vector_store %arg10[%c0_226, %c0_227], %421 {strides = array<i32>} : memref<8x32xf32, #tpu.memory_space<vmem>>, vector<8x32xf32>,
    %426 = arith.index_cast %399 : i32 to index
    %c0_228 = arith.constant 0 : index
    %c0_229 = arith.constant 0 : index
    %427 = vector.load %arg6[%426, %c0_228, %c0_229] : memref<16x8x32xf32, #tpu.memory_space<vmem>>, vector<1x8x32xf32>
    %428 = vector.shape_cast %427 : vector<1x8x32xf32> to vector<8x32xf32>
    %429 = vector.shape_cast %423 : vector<8x32xf32> to vector<1x8x32xf32>
    tpu.vector_store %arg6[%426, %c0_228, %c0_229], %429 {strides = array<i32>} : memref<16x8x32xf32, #tpu.memory_space<vmem>>, vector<1x8x32xf32>,
    %c7_i32 = arith.constant 7 : i32
    %430 = arith.index_cast %c7_i32 : i32 to index
    %c0_230 = arith.constant 0 : index
    %c0_231 = arith.constant 0 : index
    %431 = vector.load %arg1[%430, %c0_230, %c0_231] : memref<16x8x128xf32, #tpu.memory_space<vmem>>, vector<1x8x128xf32>
    %432 = vector.shape_cast %431 : vector<1x8x128xf32> to vector<8x128xf32>
    %c0_232 = arith.constant 0 : index
    %c0_233 = arith.constant 0 : index
    %433 = vector.load %arg8[%c0_232, %c0_233] : memref<8x32xf32, #tpu.memory_space<vmem>>, vector<8x32xf32>
    %c0_234 = arith.constant 0 : index
    %c0_235 = arith.constant 0 : index
    %434 = vector.load %arg7[%c0_234, %c0_235] : memref<8x32xf32, #tpu.memory_space<vmem>>, vector<8x32xf32>
    %c0_236 = arith.constant 0 : index
    %c0_237 = arith.constant 0 : index
    %435 = vector.load %arg3[%c0_236, %c0_237] : memref<32x128xf32, #tpu.memory_space<vmem>>, vector<32x128xf32>
    %cst_238 = arith.constant dense<0.000000e+00> : vector<8x128xf32>
    %436 = tpu.matmul %434, %435, %cst_238 {dimension_numbers = #tpu.dot_dimension_numbers<[1], [0], [0], [1], [0, 0, 1, 1], [], []>} : vector<8x32xf32>, vector<32x128xf32>, vector<8x128xf32> -> vector<8x128xf32>
    %437 = arith.addf %432, %436 : vector<8x128xf32>
    %438 = vector.extract_strided_slice %437 {offsets = [0, 0], sizes = [8, 96], strides = [1, 1]} : vector<8x128xf32> to vector<8x96xf32>
    %439 = arith.negf %438 : vector<8x96xf32>
    %440 = math.exp %439 : vector<8x96xf32>
    %cst_239 = arith.constant 1.000000e+00 : f32
    %441 = vector.broadcast %cst_239 : f32 to vector<8x96xf32>
    %442 = arith.addf %441, %440 : vector<8x96xf32>
    %443 = arith.divf %441, %442 : vector<8x96xf32>
    %444 = vector.extract_strided_slice %437 {offsets = [0, 96], sizes = [8, 32], strides = [1, 1]} : vector<8x128xf32> to vector<8x32xf32>
    %445 = math.tanh %444 : vector<8x32xf32>
    %446 = vector.extract_strided_slice %443 {offsets = [0, 0], sizes = [8, 32], strides = [1, 1]} : vector<8x96xf32> to vector<8x32xf32>
    %447 = vector.extract_strided_slice %443 {offsets = [0, 32], sizes = [8, 32], strides = [1, 1]} : vector<8x96xf32> to vector<8x32xf32>
    %448 = vector.extract_strided_slice %443 {offsets = [0, 64], sizes = [8, 32], strides = [1, 1]} : vector<8x96xf32> to vector<8x32xf32>
    %449 = arith.mulf %447, %433 : vector<8x32xf32>
    %450 = arith.mulf %446, %445 : vector<8x32xf32>
    %451 = arith.addf %449, %450 : vector<8x32xf32>
    %452 = math.tanh %451 : vector<8x32xf32>
    %453 = arith.mulf %448, %452 : vector<8x32xf32>
    %c0_240 = arith.constant 0 : index
    %c0_241 = arith.constant 0 : index
    %454 = vector.load %arg7[%c0_240, %c0_241] : memref<8x32xf32, #tpu.memory_space<vmem>>, vector<8x32xf32>
    tpu.vector_store %arg7[%c0_240, %c0_241], %453 {strides = array<i32>} : memref<8x32xf32, #tpu.memory_space<vmem>>, vector<8x32xf32>,
    %c0_242 = arith.constant 0 : index
    %c0_243 = arith.constant 0 : index
    %455 = vector.load %arg8[%c0_242, %c0_243] : memref<8x32xf32, #tpu.memory_space<vmem>>, vector<8x32xf32>
    tpu.vector_store %arg8[%c0_242, %c0_243], %451 {strides = array<i32>} : memref<8x32xf32, #tpu.memory_space<vmem>>, vector<8x32xf32>,
    %456 = arith.index_cast %c7_i32 : i32 to index
    %c0_244 = arith.constant 0 : index
    %c0_245 = arith.constant 0 : index
    %457 = vector.load %arg5[%456, %c0_244, %c0_245] : memref<16x8x32xf32, #tpu.memory_space<vmem>>, vector<1x8x32xf32>
    %458 = vector.shape_cast %457 : vector<1x8x32xf32> to vector<8x32xf32>
    %459 = vector.shape_cast %453 : vector<8x32xf32> to vector<1x8x32xf32>
    tpu.vector_store %arg5[%456, %c0_244, %c0_245], %459 {strides = array<i32>} : memref<16x8x32xf32, #tpu.memory_space<vmem>>, vector<1x8x32xf32>,
    %c15_i32_246 = arith.constant 15 : i32
    %460 = arith.subi %c15_i32_246, %c7_i32 : i32
    %461 = arith.index_cast %460 : i32 to index
    %c0_247 = arith.constant 0 : index
    %c0_248 = arith.constant 0 : index
    %462 = vector.load %arg2[%461, %c0_247, %c0_248] : memref<16x8x128xf32, #tpu.memory_space<vmem>>, vector<1x8x128xf32>
    %463 = vector.shape_cast %462 : vector<1x8x128xf32> to vector<8x128xf32>
    %c0_249 = arith.constant 0 : index
    %c0_250 = arith.constant 0 : index
    %464 = vector.load %arg10[%c0_249, %c0_250] : memref<8x32xf32, #tpu.memory_space<vmem>>, vector<8x32xf32>
    %c0_251 = arith.constant 0 : index
    %c0_252 = arith.constant 0 : index
    %465 = vector.load %arg9[%c0_251, %c0_252] : memref<8x32xf32, #tpu.memory_space<vmem>>, vector<8x32xf32>
    %c0_253 = arith.constant 0 : index
    %c0_254 = arith.constant 0 : index
    %466 = vector.load %arg4[%c0_253, %c0_254] : memref<32x128xf32, #tpu.memory_space<vmem>>, vector<32x128xf32>
    %cst_255 = arith.constant dense<0.000000e+00> : vector<8x128xf32>
    %467 = tpu.matmul %465, %466, %cst_255 {dimension_numbers = #tpu.dot_dimension_numbers<[1], [0], [0], [1], [0, 0, 1, 1], [], []>} : vector<8x32xf32>, vector<32x128xf32>, vector<8x128xf32> -> vector<8x128xf32>
    %468 = arith.addf %463, %467 : vector<8x128xf32>
    %469 = vector.extract_strided_slice %468 {offsets = [0, 0], sizes = [8, 96], strides = [1, 1]} : vector<8x128xf32> to vector<8x96xf32>
    %470 = arith.negf %469 : vector<8x96xf32>
    %471 = math.exp %470 : vector<8x96xf32>
    %cst_256 = arith.constant 1.000000e+00 : f32
    %472 = vector.broadcast %cst_256 : f32 to vector<8x96xf32>
    %473 = arith.addf %472, %471 : vector<8x96xf32>
    %474 = arith.divf %472, %473 : vector<8x96xf32>
    %475 = vector.extract_strided_slice %468 {offsets = [0, 96], sizes = [8, 32], strides = [1, 1]} : vector<8x128xf32> to vector<8x32xf32>
    %476 = math.tanh %475 : vector<8x32xf32>
    %477 = vector.extract_strided_slice %474 {offsets = [0, 0], sizes = [8, 32], strides = [1, 1]} : vector<8x96xf32> to vector<8x32xf32>
    %478 = vector.extract_strided_slice %474 {offsets = [0, 32], sizes = [8, 32], strides = [1, 1]} : vector<8x96xf32> to vector<8x32xf32>
    %479 = vector.extract_strided_slice %474 {offsets = [0, 64], sizes = [8, 32], strides = [1, 1]} : vector<8x96xf32> to vector<8x32xf32>
    %480 = arith.mulf %478, %464 : vector<8x32xf32>
    %481 = arith.mulf %477, %476 : vector<8x32xf32>
    %482 = arith.addf %480, %481 : vector<8x32xf32>
    %483 = math.tanh %482 : vector<8x32xf32>
    %484 = arith.mulf %479, %483 : vector<8x32xf32>
    %c0_257 = arith.constant 0 : index
    %c0_258 = arith.constant 0 : index
    %485 = vector.load %arg9[%c0_257, %c0_258] : memref<8x32xf32, #tpu.memory_space<vmem>>, vector<8x32xf32>
    tpu.vector_store %arg9[%c0_257, %c0_258], %484 {strides = array<i32>} : memref<8x32xf32, #tpu.memory_space<vmem>>, vector<8x32xf32>,
    %c0_259 = arith.constant 0 : index
    %c0_260 = arith.constant 0 : index
    %486 = vector.load %arg10[%c0_259, %c0_260] : memref<8x32xf32, #tpu.memory_space<vmem>>, vector<8x32xf32>
    tpu.vector_store %arg10[%c0_259, %c0_260], %482 {strides = array<i32>} : memref<8x32xf32, #tpu.memory_space<vmem>>, vector<8x32xf32>,
    %487 = arith.index_cast %460 : i32 to index
    %c0_261 = arith.constant 0 : index
    %c0_262 = arith.constant 0 : index
    %488 = vector.load %arg6[%487, %c0_261, %c0_262] : memref<16x8x32xf32, #tpu.memory_space<vmem>>, vector<1x8x32xf32>
    %489 = vector.shape_cast %488 : vector<1x8x32xf32> to vector<8x32xf32>
    %490 = vector.shape_cast %484 : vector<8x32xf32> to vector<1x8x32xf32>
    tpu.vector_store %arg6[%487, %c0_261, %c0_262], %490 {strides = array<i32>} : memref<16x8x32xf32, #tpu.memory_space<vmem>>, vector<1x8x32xf32>,
    %c8_i32 = arith.constant 8 : i32
    %491 = arith.index_cast %c8_i32 : i32 to index
    %c0_263 = arith.constant 0 : index
    %c0_264 = arith.constant 0 : index
    %492 = vector.load %arg1[%491, %c0_263, %c0_264] : memref<16x8x128xf32, #tpu.memory_space<vmem>>, vector<1x8x128xf32>
    %493 = vector.shape_cast %492 : vector<1x8x128xf32> to vector<8x128xf32>
    %c0_265 = arith.constant 0 : index
    %c0_266 = arith.constant 0 : index
    %494 = vector.load %arg8[%c0_265, %c0_266] : memref<8x32xf32, #tpu.memory_space<vmem>>, vector<8x32xf32>
    %c0_267 = arith.constant 0 : index
    %c0_268 = arith.constant 0 : index
    %495 = vector.load %arg7[%c0_267, %c0_268] : memref<8x32xf32, #tpu.memory_space<vmem>>, vector<8x32xf32>
    %c0_269 = arith.constant 0 : index
    %c0_270 = arith.constant 0 : index
    %496 = vector.load %arg3[%c0_269, %c0_270] : memref<32x128xf32, #tpu.memory_space<vmem>>, vector<32x128xf32>
    %cst_271 = arith.constant dense<0.000000e+00> : vector<8x128xf32>
    %497 = tpu.matmul %495, %496, %cst_271 {dimension_numbers = #tpu.dot_dimension_numbers<[1], [0], [0], [1], [0, 0, 1, 1], [], []>} : vector<8x32xf32>, vector<32x128xf32>, vector<8x128xf32> -> vector<8x128xf32>
    %498 = arith.addf %493, %497 : vector<8x128xf32>
    %499 = vector.extract_strided_slice %498 {offsets = [0, 0], sizes = [8, 96], strides = [1, 1]} : vector<8x128xf32> to vector<8x96xf32>
    %500 = arith.negf %499 : vector<8x96xf32>
    %501 = math.exp %500 : vector<8x96xf32>
    %cst_272 = arith.constant 1.000000e+00 : f32
    %502 = vector.broadcast %cst_272 : f32 to vector<8x96xf32>
    %503 = arith.addf %502, %501 : vector<8x96xf32>
    %504 = arith.divf %502, %503 : vector<8x96xf32>
    %505 = vector.extract_strided_slice %498 {offsets = [0, 96], sizes = [8, 32], strides = [1, 1]} : vector<8x128xf32> to vector<8x32xf32>
    %506 = math.tanh %505 : vector<8x32xf32>
    %507 = vector.extract_strided_slice %504 {offsets = [0, 0], sizes = [8, 32], strides = [1, 1]} : vector<8x96xf32> to vector<8x32xf32>
    %508 = vector.extract_strided_slice %504 {offsets = [0, 32], sizes = [8, 32], strides = [1, 1]} : vector<8x96xf32> to vector<8x32xf32>
    %509 = vector.extract_strided_slice %504 {offsets = [0, 64], sizes = [8, 32], strides = [1, 1]} : vector<8x96xf32> to vector<8x32xf32>
    %510 = arith.mulf %508, %494 : vector<8x32xf32>
    %511 = arith.mulf %507, %506 : vector<8x32xf32>
    %512 = arith.addf %510, %511 : vector<8x32xf32>
    %513 = math.tanh %512 : vector<8x32xf32>
    %514 = arith.mulf %509, %513 : vector<8x32xf32>
    %c0_273 = arith.constant 0 : index
    %c0_274 = arith.constant 0 : index
    %515 = vector.load %arg7[%c0_273, %c0_274] : memref<8x32xf32, #tpu.memory_space<vmem>>, vector<8x32xf32>
    tpu.vector_store %arg7[%c0_273, %c0_274], %514 {strides = array<i32>} : memref<8x32xf32, #tpu.memory_space<vmem>>, vector<8x32xf32>,
    %c0_275 = arith.constant 0 : index
    %c0_276 = arith.constant 0 : index
    %516 = vector.load %arg8[%c0_275, %c0_276] : memref<8x32xf32, #tpu.memory_space<vmem>>, vector<8x32xf32>
    tpu.vector_store %arg8[%c0_275, %c0_276], %512 {strides = array<i32>} : memref<8x32xf32, #tpu.memory_space<vmem>>, vector<8x32xf32>,
    %517 = arith.index_cast %c8_i32 : i32 to index
    %c0_277 = arith.constant 0 : index
    %c0_278 = arith.constant 0 : index
    %518 = vector.load %arg5[%517, %c0_277, %c0_278] : memref<16x8x32xf32, #tpu.memory_space<vmem>>, vector<1x8x32xf32>
    %519 = vector.shape_cast %518 : vector<1x8x32xf32> to vector<8x32xf32>
    %520 = vector.shape_cast %514 : vector<8x32xf32> to vector<1x8x32xf32>
    tpu.vector_store %arg5[%517, %c0_277, %c0_278], %520 {strides = array<i32>} : memref<16x8x32xf32, #tpu.memory_space<vmem>>, vector<1x8x32xf32>,
    %c15_i32_279 = arith.constant 15 : i32
    %521 = arith.subi %c15_i32_279, %c8_i32 : i32
    %522 = arith.index_cast %521 : i32 to index
    %c0_280 = arith.constant 0 : index
    %c0_281 = arith.constant 0 : index
    %523 = vector.load %arg2[%522, %c0_280, %c0_281] : memref<16x8x128xf32, #tpu.memory_space<vmem>>, vector<1x8x128xf32>
    %524 = vector.shape_cast %523 : vector<1x8x128xf32> to vector<8x128xf32>
    %c0_282 = arith.constant 0 : index
    %c0_283 = arith.constant 0 : index
    %525 = vector.load %arg10[%c0_282, %c0_283] : memref<8x32xf32, #tpu.memory_space<vmem>>, vector<8x32xf32>
    %c0_284 = arith.constant 0 : index
    %c0_285 = arith.constant 0 : index
    %526 = vector.load %arg9[%c0_284, %c0_285] : memref<8x32xf32, #tpu.memory_space<vmem>>, vector<8x32xf32>
    %c0_286 = arith.constant 0 : index
    %c0_287 = arith.constant 0 : index
    %527 = vector.load %arg4[%c0_286, %c0_287] : memref<32x128xf32, #tpu.memory_space<vmem>>, vector<32x128xf32>
    %cst_288 = arith.constant dense<0.000000e+00> : vector<8x128xf32>
    %528 = tpu.matmul %526, %527, %cst_288 {dimension_numbers = #tpu.dot_dimension_numbers<[1], [0], [0], [1], [0, 0, 1, 1], [], []>} : vector<8x32xf32>, vector<32x128xf32>, vector<8x128xf32> -> vector<8x128xf32>
    %529 = arith.addf %524, %528 : vector<8x128xf32>
    %530 = vector.extract_strided_slice %529 {offsets = [0, 0], sizes = [8, 96], strides = [1, 1]} : vector<8x128xf32> to vector<8x96xf32>
    %531 = arith.negf %530 : vector<8x96xf32>
    %532 = math.exp %531 : vector<8x96xf32>
    %cst_289 = arith.constant 1.000000e+00 : f32
    %533 = vector.broadcast %cst_289 : f32 to vector<8x96xf32>
    %534 = arith.addf %533, %532 : vector<8x96xf32>
    %535 = arith.divf %533, %534 : vector<8x96xf32>
    %536 = vector.extract_strided_slice %529 {offsets = [0, 96], sizes = [8, 32], strides = [1, 1]} : vector<8x128xf32> to vector<8x32xf32>
    %537 = math.tanh %536 : vector<8x32xf32>
    %538 = vector.extract_strided_slice %535 {offsets = [0, 0], sizes = [8, 32], strides = [1, 1]} : vector<8x96xf32> to vector<8x32xf32>
    %539 = vector.extract_strided_slice %535 {offsets = [0, 32], sizes = [8, 32], strides = [1, 1]} : vector<8x96xf32> to vector<8x32xf32>
    %540 = vector.extract_strided_slice %535 {offsets = [0, 64], sizes = [8, 32], strides = [1, 1]} : vector<8x96xf32> to vector<8x32xf32>
    %541 = arith.mulf %539, %525 : vector<8x32xf32>
    %542 = arith.mulf %538, %537 : vector<8x32xf32>
    %543 = arith.addf %541, %542 : vector<8x32xf32>
    %544 = math.tanh %543 : vector<8x32xf32>
    %545 = arith.mulf %540, %544 : vector<8x32xf32>
    %c0_290 = arith.constant 0 : index
    %c0_291 = arith.constant 0 : index
    %546 = vector.load %arg9[%c0_290, %c0_291] : memref<8x32xf32, #tpu.memory_space<vmem>>, vector<8x32xf32>
    tpu.vector_store %arg9[%c0_290, %c0_291], %545 {strides = array<i32>} : memref<8x32xf32, #tpu.memory_space<vmem>>, vector<8x32xf32>,
    %c0_292 = arith.constant 0 : index
    %c0_293 = arith.constant 0 : index
    %547 = vector.load %arg10[%c0_292, %c0_293] : memref<8x32xf32, #tpu.memory_space<vmem>>, vector<8x32xf32>
    tpu.vector_store %arg10[%c0_292, %c0_293], %543 {strides = array<i32>} : memref<8x32xf32, #tpu.memory_space<vmem>>, vector<8x32xf32>,
    %548 = arith.index_cast %521 : i32 to index
    %c0_294 = arith.constant 0 : index
    %c0_295 = arith.constant 0 : index
    %549 = vector.load %arg6[%548, %c0_294, %c0_295] : memref<16x8x32xf32, #tpu.memory_space<vmem>>, vector<1x8x32xf32>
    %550 = vector.shape_cast %549 : vector<1x8x32xf32> to vector<8x32xf32>
    %551 = vector.shape_cast %545 : vector<8x32xf32> to vector<1x8x32xf32>
    tpu.vector_store %arg6[%548, %c0_294, %c0_295], %551 {strides = array<i32>} : memref<16x8x32xf32, #tpu.memory_space<vmem>>, vector<1x8x32xf32>,
    %c9_i32 = arith.constant 9 : i32
    %552 = arith.index_cast %c9_i32 : i32 to index
    %c0_296 = arith.constant 0 : index
    %c0_297 = arith.constant 0 : index
    %553 = vector.load %arg1[%552, %c0_296, %c0_297] : memref<16x8x128xf32, #tpu.memory_space<vmem>>, vector<1x8x128xf32>
    %554 = vector.shape_cast %553 : vector<1x8x128xf32> to vector<8x128xf32>
    %c0_298 = arith.constant 0 : index
    %c0_299 = arith.constant 0 : index
    %555 = vector.load %arg8[%c0_298, %c0_299] : memref<8x32xf32, #tpu.memory_space<vmem>>, vector<8x32xf32>
    %c0_300 = arith.constant 0 : index
    %c0_301 = arith.constant 0 : index
    %556 = vector.load %arg7[%c0_300, %c0_301] : memref<8x32xf32, #tpu.memory_space<vmem>>, vector<8x32xf32>
    %c0_302 = arith.constant 0 : index
    %c0_303 = arith.constant 0 : index
    %557 = vector.load %arg3[%c0_302, %c0_303] : memref<32x128xf32, #tpu.memory_space<vmem>>, vector<32x128xf32>
    %cst_304 = arith.constant dense<0.000000e+00> : vector<8x128xf32>
    %558 = tpu.matmul %556, %557, %cst_304 {dimension_numbers = #tpu.dot_dimension_numbers<[1], [0], [0], [1], [0, 0, 1, 1], [], []>} : vector<8x32xf32>, vector<32x128xf32>, vector<8x128xf32> -> vector<8x128xf32>
    %559 = arith.addf %554, %558 : vector<8x128xf32>
    %560 = vector.extract_strided_slice %559 {offsets = [0, 0], sizes = [8, 96], strides = [1, 1]} : vector<8x128xf32> to vector<8x96xf32>
    %561 = arith.negf %560 : vector<8x96xf32>
    %562 = math.exp %561 : vector<8x96xf32>
    %cst_305 = arith.constant 1.000000e+00 : f32
    %563 = vector.broadcast %cst_305 : f32 to vector<8x96xf32>
    %564 = arith.addf %563, %562 : vector<8x96xf32>
    %565 = arith.divf %563, %564 : vector<8x96xf32>
    %566 = vector.extract_strided_slice %559 {offsets = [0, 96], sizes = [8, 32], strides = [1, 1]} : vector<8x128xf32> to vector<8x32xf32>
    %567 = math.tanh %566 : vector<8x32xf32>
    %568 = vector.extract_strided_slice %565 {offsets = [0, 0], sizes = [8, 32], strides = [1, 1]} : vector<8x96xf32> to vector<8x32xf32>
    %569 = vector.extract_strided_slice %565 {offsets = [0, 32], sizes = [8, 32], strides = [1, 1]} : vector<8x96xf32> to vector<8x32xf32>
    %570 = vector.extract_strided_slice %565 {offsets = [0, 64], sizes = [8, 32], strides = [1, 1]} : vector<8x96xf32> to vector<8x32xf32>
    %571 = arith.mulf %569, %555 : vector<8x32xf32>
    %572 = arith.mulf %568, %567 : vector<8x32xf32>
    %573 = arith.addf %571, %572 : vector<8x32xf32>
    %574 = math.tanh %573 : vector<8x32xf32>
    %575 = arith.mulf %570, %574 : vector<8x32xf32>
    %c0_306 = arith.constant 0 : index
    %c0_307 = arith.constant 0 : index
    %576 = vector.load %arg7[%c0_306, %c0_307] : memref<8x32xf32, #tpu.memory_space<vmem>>, vector<8x32xf32>
    tpu.vector_store %arg7[%c0_306, %c0_307], %575 {strides = array<i32>} : memref<8x32xf32, #tpu.memory_space<vmem>>, vector<8x32xf32>,
    %c0_308 = arith.constant 0 : index
    %c0_309 = arith.constant 0 : index
    %577 = vector.load %arg8[%c0_308, %c0_309] : memref<8x32xf32, #tpu.memory_space<vmem>>, vector<8x32xf32>
    tpu.vector_store %arg8[%c0_308, %c0_309], %573 {strides = array<i32>} : memref<8x32xf32, #tpu.memory_space<vmem>>, vector<8x32xf32>,
    %578 = arith.index_cast %c9_i32 : i32 to index
    %c0_310 = arith.constant 0 : index
    %c0_311 = arith.constant 0 : index
    %579 = vector.load %arg5[%578, %c0_310, %c0_311] : memref<16x8x32xf32, #tpu.memory_space<vmem>>, vector<1x8x32xf32>
    %580 = vector.shape_cast %579 : vector<1x8x32xf32> to vector<8x32xf32>
    %581 = vector.shape_cast %575 : vector<8x32xf32> to vector<1x8x32xf32>
    tpu.vector_store %arg5[%578, %c0_310, %c0_311], %581 {strides = array<i32>} : memref<16x8x32xf32, #tpu.memory_space<vmem>>, vector<1x8x32xf32>,
    %c15_i32_312 = arith.constant 15 : i32
    %582 = arith.subi %c15_i32_312, %c9_i32 : i32
    %583 = arith.index_cast %582 : i32 to index
    %c0_313 = arith.constant 0 : index
    %c0_314 = arith.constant 0 : index
    %584 = vector.load %arg2[%583, %c0_313, %c0_314] : memref<16x8x128xf32, #tpu.memory_space<vmem>>, vector<1x8x128xf32>
    %585 = vector.shape_cast %584 : vector<1x8x128xf32> to vector<8x128xf32>
    %c0_315 = arith.constant 0 : index
    %c0_316 = arith.constant 0 : index
    %586 = vector.load %arg10[%c0_315, %c0_316] : memref<8x32xf32, #tpu.memory_space<vmem>>, vector<8x32xf32>
    %c0_317 = arith.constant 0 : index
    %c0_318 = arith.constant 0 : index
    %587 = vector.load %arg9[%c0_317, %c0_318] : memref<8x32xf32, #tpu.memory_space<vmem>>, vector<8x32xf32>
    %c0_319 = arith.constant 0 : index
    %c0_320 = arith.constant 0 : index
    %588 = vector.load %arg4[%c0_319, %c0_320] : memref<32x128xf32, #tpu.memory_space<vmem>>, vector<32x128xf32>
    %cst_321 = arith.constant dense<0.000000e+00> : vector<8x128xf32>
    %589 = tpu.matmul %587, %588, %cst_321 {dimension_numbers = #tpu.dot_dimension_numbers<[1], [0], [0], [1], [0, 0, 1, 1], [], []>} : vector<8x32xf32>, vector<32x128xf32>, vector<8x128xf32> -> vector<8x128xf32>
    %590 = arith.addf %585, %589 : vector<8x128xf32>
    %591 = vector.extract_strided_slice %590 {offsets = [0, 0], sizes = [8, 96], strides = [1, 1]} : vector<8x128xf32> to vector<8x96xf32>
    %592 = arith.negf %591 : vector<8x96xf32>
    %593 = math.exp %592 : vector<8x96xf32>
    %cst_322 = arith.constant 1.000000e+00 : f32
    %594 = vector.broadcast %cst_322 : f32 to vector<8x96xf32>
    %595 = arith.addf %594, %593 : vector<8x96xf32>
    %596 = arith.divf %594, %595 : vector<8x96xf32>
    %597 = vector.extract_strided_slice %590 {offsets = [0, 96], sizes = [8, 32], strides = [1, 1]} : vector<8x128xf32> to vector<8x32xf32>
    %598 = math.tanh %597 : vector<8x32xf32>
    %599 = vector.extract_strided_slice %596 {offsets = [0, 0], sizes = [8, 32], strides = [1, 1]} : vector<8x96xf32> to vector<8x32xf32>
    %600 = vector.extract_strided_slice %596 {offsets = [0, 32], sizes = [8, 32], strides = [1, 1]} : vector<8x96xf32> to vector<8x32xf32>
    %601 = vector.extract_strided_slice %596 {offsets = [0, 64], sizes = [8, 32], strides = [1, 1]} : vector<8x96xf32> to vector<8x32xf32>
    %602 = arith.mulf %600, %586 : vector<8x32xf32>
    %603 = arith.mulf %599, %598 : vector<8x32xf32>
    %604 = arith.addf %602, %603 : vector<8x32xf32>
    %605 = math.tanh %604 : vector<8x32xf32>
    %606 = arith.mulf %601, %605 : vector<8x32xf32>
    %c0_323 = arith.constant 0 : index
    %c0_324 = arith.constant 0 : index
    %607 = vector.load %arg9[%c0_323, %c0_324] : memref<8x32xf32, #tpu.memory_space<vmem>>, vector<8x32xf32>
    tpu.vector_store %arg9[%c0_323, %c0_324], %606 {strides = array<i32>} : memref<8x32xf32, #tpu.memory_space<vmem>>, vector<8x32xf32>,
    %c0_325 = arith.constant 0 : index
    %c0_326 = arith.constant 0 : index
    %608 = vector.load %arg10[%c0_325, %c0_326] : memref<8x32xf32, #tpu.memory_space<vmem>>, vector<8x32xf32>
    tpu.vector_store %arg10[%c0_325, %c0_326], %604 {strides = array<i32>} : memref<8x32xf32, #tpu.memory_space<vmem>>, vector<8x32xf32>,
    %609 = arith.index_cast %582 : i32 to index
    %c0_327 = arith.constant 0 : index
    %c0_328 = arith.constant 0 : index
    %610 = vector.load %arg6[%609, %c0_327, %c0_328] : memref<16x8x32xf32, #tpu.memory_space<vmem>>, vector<1x8x32xf32>
    %611 = vector.shape_cast %610 : vector<1x8x32xf32> to vector<8x32xf32>
    %612 = vector.shape_cast %606 : vector<8x32xf32> to vector<1x8x32xf32>
    tpu.vector_store %arg6[%609, %c0_327, %c0_328], %612 {strides = array<i32>} : memref<16x8x32xf32, #tpu.memory_space<vmem>>, vector<1x8x32xf32>,
    %c10_i32 = arith.constant 10 : i32
    %613 = arith.index_cast %c10_i32 : i32 to index
    %c0_329 = arith.constant 0 : index
    %c0_330 = arith.constant 0 : index
    %614 = vector.load %arg1[%613, %c0_329, %c0_330] : memref<16x8x128xf32, #tpu.memory_space<vmem>>, vector<1x8x128xf32>
    %615 = vector.shape_cast %614 : vector<1x8x128xf32> to vector<8x128xf32>
    %c0_331 = arith.constant 0 : index
    %c0_332 = arith.constant 0 : index
    %616 = vector.load %arg8[%c0_331, %c0_332] : memref<8x32xf32, #tpu.memory_space<vmem>>, vector<8x32xf32>
    %c0_333 = arith.constant 0 : index
    %c0_334 = arith.constant 0 : index
    %617 = vector.load %arg7[%c0_333, %c0_334] : memref<8x32xf32, #tpu.memory_space<vmem>>, vector<8x32xf32>
    %c0_335 = arith.constant 0 : index
    %c0_336 = arith.constant 0 : index
    %618 = vector.load %arg3[%c0_335, %c0_336] : memref<32x128xf32, #tpu.memory_space<vmem>>, vector<32x128xf32>
    %cst_337 = arith.constant dense<0.000000e+00> : vector<8x128xf32>
    %619 = tpu.matmul %617, %618, %cst_337 {dimension_numbers = #tpu.dot_dimension_numbers<[1], [0], [0], [1], [0, 0, 1, 1], [], []>} : vector<8x32xf32>, vector<32x128xf32>, vector<8x128xf32> -> vector<8x128xf32>
    %620 = arith.addf %615, %619 : vector<8x128xf32>
    %621 = vector.extract_strided_slice %620 {offsets = [0, 0], sizes = [8, 96], strides = [1, 1]} : vector<8x128xf32> to vector<8x96xf32>
    %622 = arith.negf %621 : vector<8x96xf32>
    %623 = math.exp %622 : vector<8x96xf32>
    %cst_338 = arith.constant 1.000000e+00 : f32
    %624 = vector.broadcast %cst_338 : f32 to vector<8x96xf32>
    %625 = arith.addf %624, %623 : vector<8x96xf32>
    %626 = arith.divf %624, %625 : vector<8x96xf32>
    %627 = vector.extract_strided_slice %620 {offsets = [0, 96], sizes = [8, 32], strides = [1, 1]} : vector<8x128xf32> to vector<8x32xf32>
    %628 = math.tanh %627 : vector<8x32xf32>
    %629 = vector.extract_strided_slice %626 {offsets = [0, 0], sizes = [8, 32], strides = [1, 1]} : vector<8x96xf32> to vector<8x32xf32>
    %630 = vector.extract_strided_slice %626 {offsets = [0, 32], sizes = [8, 32], strides = [1, 1]} : vector<8x96xf32> to vector<8x32xf32>
    %631 = vector.extract_strided_slice %626 {offsets = [0, 64], sizes = [8, 32], strides = [1, 1]} : vector<8x96xf32> to vector<8x32xf32>
    %632 = arith.mulf %630, %616 : vector<8x32xf32>
    %633 = arith.mulf %629, %628 : vector<8x32xf32>
    %634 = arith.addf %632, %633 : vector<8x32xf32>
    %635 = math.tanh %634 : vector<8x32xf32>
    %636 = arith.mulf %631, %635 : vector<8x32xf32>
    %c0_339 = arith.constant 0 : index
    %c0_340 = arith.constant 0 : index
    %637 = vector.load %arg7[%c0_339, %c0_340] : memref<8x32xf32, #tpu.memory_space<vmem>>, vector<8x32xf32>
    tpu.vector_store %arg7[%c0_339, %c0_340], %636 {strides = array<i32>} : memref<8x32xf32, #tpu.memory_space<vmem>>, vector<8x32xf32>,
    %c0_341 = arith.constant 0 : index
    %c0_342 = arith.constant 0 : index
    %638 = vector.load %arg8[%c0_341, %c0_342] : memref<8x32xf32, #tpu.memory_space<vmem>>, vector<8x32xf32>
    tpu.vector_store %arg8[%c0_341, %c0_342], %634 {strides = array<i32>} : memref<8x32xf32, #tpu.memory_space<vmem>>, vector<8x32xf32>,
    %639 = arith.index_cast %c10_i32 : i32 to index
    %c0_343 = arith.constant 0 : index
    %c0_344 = arith.constant 0 : index
    %640 = vector.load %arg5[%639, %c0_343, %c0_344] : memref<16x8x32xf32, #tpu.memory_space<vmem>>, vector<1x8x32xf32>
    %641 = vector.shape_cast %640 : vector<1x8x32xf32> to vector<8x32xf32>
    %642 = vector.shape_cast %636 : vector<8x32xf32> to vector<1x8x32xf32>
    tpu.vector_store %arg5[%639, %c0_343, %c0_344], %642 {strides = array<i32>} : memref<16x8x32xf32, #tpu.memory_space<vmem>>, vector<1x8x32xf32>,
    %c15_i32_345 = arith.constant 15 : i32
    %643 = arith.subi %c15_i32_345, %c10_i32 : i32
    %644 = arith.index_cast %643 : i32 to index
    %c0_346 = arith.constant 0 : index
    %c0_347 = arith.constant 0 : index
    %645 = vector.load %arg2[%644, %c0_346, %c0_347] : memref<16x8x128xf32, #tpu.memory_space<vmem>>, vector<1x8x128xf32>
    %646 = vector.shape_cast %645 : vector<1x8x128xf32> to vector<8x128xf32>
    %c0_348 = arith.constant 0 : index
    %c0_349 = arith.constant 0 : index
    %647 = vector.load %arg10[%c0_348, %c0_349] : memref<8x32xf32, #tpu.memory_space<vmem>>, vector<8x32xf32>
    %c0_350 = arith.constant 0 : index
    %c0_351 = arith.constant 0 : index
    %648 = vector.load %arg9[%c0_350, %c0_351] : memref<8x32xf32, #tpu.memory_space<vmem>>, vector<8x32xf32>
    %c0_352 = arith.constant 0 : index
    %c0_353 = arith.constant 0 : index
    %649 = vector.load %arg4[%c0_352, %c0_353] : memref<32x128xf32, #tpu.memory_space<vmem>>, vector<32x128xf32>
    %cst_354 = arith.constant dense<0.000000e+00> : vector<8x128xf32>
    %650 = tpu.matmul %648, %649, %cst_354 {dimension_numbers = #tpu.dot_dimension_numbers<[1], [0], [0], [1], [0, 0, 1, 1], [], []>} : vector<8x32xf32>, vector<32x128xf32>, vector<8x128xf32> -> vector<8x128xf32>
    %651 = arith.addf %646, %650 : vector<8x128xf32>
    %652 = vector.extract_strided_slice %651 {offsets = [0, 0], sizes = [8, 96], strides = [1, 1]} : vector<8x128xf32> to vector<8x96xf32>
    %653 = arith.negf %652 : vector<8x96xf32>
    %654 = math.exp %653 : vector<8x96xf32>
    %cst_355 = arith.constant 1.000000e+00 : f32
    %655 = vector.broadcast %cst_355 : f32 to vector<8x96xf32>
    %656 = arith.addf %655, %654 : vector<8x96xf32>
    %657 = arith.divf %655, %656 : vector<8x96xf32>
    %658 = vector.extract_strided_slice %651 {offsets = [0, 96], sizes = [8, 32], strides = [1, 1]} : vector<8x128xf32> to vector<8x32xf32>
    %659 = math.tanh %658 : vector<8x32xf32>
    %660 = vector.extract_strided_slice %657 {offsets = [0, 0], sizes = [8, 32], strides = [1, 1]} : vector<8x96xf32> to vector<8x32xf32>
    %661 = vector.extract_strided_slice %657 {offsets = [0, 32], sizes = [8, 32], strides = [1, 1]} : vector<8x96xf32> to vector<8x32xf32>
    %662 = vector.extract_strided_slice %657 {offsets = [0, 64], sizes = [8, 32], strides = [1, 1]} : vector<8x96xf32> to vector<8x32xf32>
    %663 = arith.mulf %661, %647 : vector<8x32xf32>
    %664 = arith.mulf %660, %659 : vector<8x32xf32>
    %665 = arith.addf %663, %664 : vector<8x32xf32>
    %666 = math.tanh %665 : vector<8x32xf32>
    %667 = arith.mulf %662, %666 : vector<8x32xf32>
    %c0_356 = arith.constant 0 : index
    %c0_357 = arith.constant 0 : index
    %668 = vector.load %arg9[%c0_356, %c0_357] : memref<8x32xf32, #tpu.memory_space<vmem>>, vector<8x32xf32>
    tpu.vector_store %arg9[%c0_356, %c0_357], %667 {strides = array<i32>} : memref<8x32xf32, #tpu.memory_space<vmem>>, vector<8x32xf32>,
    %c0_358 = arith.constant 0 : index
    %c0_359 = arith.constant 0 : index
    %669 = vector.load %arg10[%c0_358, %c0_359] : memref<8x32xf32, #tpu.memory_space<vmem>>, vector<8x32xf32>
    tpu.vector_store %arg10[%c0_358, %c0_359], %665 {strides = array<i32>} : memref<8x32xf32, #tpu.memory_space<vmem>>, vector<8x32xf32>,
    %670 = arith.index_cast %643 : i32 to index
    %c0_360 = arith.constant 0 : index
    %c0_361 = arith.constant 0 : index
    %671 = vector.load %arg6[%670, %c0_360, %c0_361] : memref<16x8x32xf32, #tpu.memory_space<vmem>>, vector<1x8x32xf32>
    %672 = vector.shape_cast %671 : vector<1x8x32xf32> to vector<8x32xf32>
    %673 = vector.shape_cast %667 : vector<8x32xf32> to vector<1x8x32xf32>
    tpu.vector_store %arg6[%670, %c0_360, %c0_361], %673 {strides = array<i32>} : memref<16x8x32xf32, #tpu.memory_space<vmem>>, vector<1x8x32xf32>,
    %c11_i32 = arith.constant 11 : i32
    %674 = arith.index_cast %c11_i32 : i32 to index
    %c0_362 = arith.constant 0 : index
    %c0_363 = arith.constant 0 : index
    %675 = vector.load %arg1[%674, %c0_362, %c0_363] : memref<16x8x128xf32, #tpu.memory_space<vmem>>, vector<1x8x128xf32>
    %676 = vector.shape_cast %675 : vector<1x8x128xf32> to vector<8x128xf32>
    %c0_364 = arith.constant 0 : index
    %c0_365 = arith.constant 0 : index
    %677 = vector.load %arg8[%c0_364, %c0_365] : memref<8x32xf32, #tpu.memory_space<vmem>>, vector<8x32xf32>
    %c0_366 = arith.constant 0 : index
    %c0_367 = arith.constant 0 : index
    %678 = vector.load %arg7[%c0_366, %c0_367] : memref<8x32xf32, #tpu.memory_space<vmem>>, vector<8x32xf32>
    %c0_368 = arith.constant 0 : index
    %c0_369 = arith.constant 0 : index
    %679 = vector.load %arg3[%c0_368, %c0_369] : memref<32x128xf32, #tpu.memory_space<vmem>>, vector<32x128xf32>
    %cst_370 = arith.constant dense<0.000000e+00> : vector<8x128xf32>
    %680 = tpu.matmul %678, %679, %cst_370 {dimension_numbers = #tpu.dot_dimension_numbers<[1], [0], [0], [1], [0, 0, 1, 1], [], []>} : vector<8x32xf32>, vector<32x128xf32>, vector<8x128xf32> -> vector<8x128xf32>
    %681 = arith.addf %676, %680 : vector<8x128xf32>
    %682 = vector.extract_strided_slice %681 {offsets = [0, 0], sizes = [8, 96], strides = [1, 1]} : vector<8x128xf32> to vector<8x96xf32>
    %683 = arith.negf %682 : vector<8x96xf32>
    %684 = math.exp %683 : vector<8x96xf32>
    %cst_371 = arith.constant 1.000000e+00 : f32
    %685 = vector.broadcast %cst_371 : f32 to vector<8x96xf32>
    %686 = arith.addf %685, %684 : vector<8x96xf32>
    %687 = arith.divf %685, %686 : vector<8x96xf32>
    %688 = vector.extract_strided_slice %681 {offsets = [0, 96], sizes = [8, 32], strides = [1, 1]} : vector<8x128xf32> to vector<8x32xf32>
    %689 = math.tanh %688 : vector<8x32xf32>
    %690 = vector.extract_strided_slice %687 {offsets = [0, 0], sizes = [8, 32], strides = [1, 1]} : vector<8x96xf32> to vector<8x32xf32>
    %691 = vector.extract_strided_slice %687 {offsets = [0, 32], sizes = [8, 32], strides = [1, 1]} : vector<8x96xf32> to vector<8x32xf32>
    %692 = vector.extract_strided_slice %687 {offsets = [0, 64], sizes = [8, 32], strides = [1, 1]} : vector<8x96xf32> to vector<8x32xf32>
    %693 = arith.mulf %691, %677 : vector<8x32xf32>
    %694 = arith.mulf %690, %689 : vector<8x32xf32>
    %695 = arith.addf %693, %694 : vector<8x32xf32>
    %696 = math.tanh %695 : vector<8x32xf32>
    %697 = arith.mulf %692, %696 : vector<8x32xf32>
    %c0_372 = arith.constant 0 : index
    %c0_373 = arith.constant 0 : index
    %698 = vector.load %arg7[%c0_372, %c0_373] : memref<8x32xf32, #tpu.memory_space<vmem>>, vector<8x32xf32>
    tpu.vector_store %arg7[%c0_372, %c0_373], %697 {strides = array<i32>} : memref<8x32xf32, #tpu.memory_space<vmem>>, vector<8x32xf32>,
    %c0_374 = arith.constant 0 : index
    %c0_375 = arith.constant 0 : index
    %699 = vector.load %arg8[%c0_374, %c0_375] : memref<8x32xf32, #tpu.memory_space<vmem>>, vector<8x32xf32>
    tpu.vector_store %arg8[%c0_374, %c0_375], %695 {strides = array<i32>} : memref<8x32xf32, #tpu.memory_space<vmem>>, vector<8x32xf32>,
    %700 = arith.index_cast %c11_i32 : i32 to index
    %c0_376 = arith.constant 0 : index
    %c0_377 = arith.constant 0 : index
    %701 = vector.load %arg5[%700, %c0_376, %c0_377] : memref<16x8x32xf32, #tpu.memory_space<vmem>>, vector<1x8x32xf32>
    %702 = vector.shape_cast %701 : vector<1x8x32xf32> to vector<8x32xf32>
    %703 = vector.shape_cast %697 : vector<8x32xf32> to vector<1x8x32xf32>
    tpu.vector_store %arg5[%700, %c0_376, %c0_377], %703 {strides = array<i32>} : memref<16x8x32xf32, #tpu.memory_space<vmem>>, vector<1x8x32xf32>,
    %c15_i32_378 = arith.constant 15 : i32
    %704 = arith.subi %c15_i32_378, %c11_i32 : i32
    %705 = arith.index_cast %704 : i32 to index
    %c0_379 = arith.constant 0 : index
    %c0_380 = arith.constant 0 : index
    %706 = vector.load %arg2[%705, %c0_379, %c0_380] : memref<16x8x128xf32, #tpu.memory_space<vmem>>, vector<1x8x128xf32>
    %707 = vector.shape_cast %706 : vector<1x8x128xf32> to vector<8x128xf32>
    %c0_381 = arith.constant 0 : index
    %c0_382 = arith.constant 0 : index
    %708 = vector.load %arg10[%c0_381, %c0_382] : memref<8x32xf32, #tpu.memory_space<vmem>>, vector<8x32xf32>
    %c0_383 = arith.constant 0 : index
    %c0_384 = arith.constant 0 : index
    %709 = vector.load %arg9[%c0_383, %c0_384] : memref<8x32xf32, #tpu.memory_space<vmem>>, vector<8x32xf32>
    %c0_385 = arith.constant 0 : index
    %c0_386 = arith.constant 0 : index
    %710 = vector.load %arg4[%c0_385, %c0_386] : memref<32x128xf32, #tpu.memory_space<vmem>>, vector<32x128xf32>
    %cst_387 = arith.constant dense<0.000000e+00> : vector<8x128xf32>
    %711 = tpu.matmul %709, %710, %cst_387 {dimension_numbers = #tpu.dot_dimension_numbers<[1], [0], [0], [1], [0, 0, 1, 1], [], []>} : vector<8x32xf32>, vector<32x128xf32>, vector<8x128xf32> -> vector<8x128xf32>
    %712 = arith.addf %707, %711 : vector<8x128xf32>
    %713 = vector.extract_strided_slice %712 {offsets = [0, 0], sizes = [8, 96], strides = [1, 1]} : vector<8x128xf32> to vector<8x96xf32>
    %714 = arith.negf %713 : vector<8x96xf32>
    %715 = math.exp %714 : vector<8x96xf32>
    %cst_388 = arith.constant 1.000000e+00 : f32
    %716 = vector.broadcast %cst_388 : f32 to vector<8x96xf32>
    %717 = arith.addf %716, %715 : vector<8x96xf32>
    %718 = arith.divf %716, %717 : vector<8x96xf32>
    %719 = vector.extract_strided_slice %712 {offsets = [0, 96], sizes = [8, 32], strides = [1, 1]} : vector<8x128xf32> to vector<8x32xf32>
    %720 = math.tanh %719 : vector<8x32xf32>
    %721 = vector.extract_strided_slice %718 {offsets = [0, 0], sizes = [8, 32], strides = [1, 1]} : vector<8x96xf32> to vector<8x32xf32>
    %722 = vector.extract_strided_slice %718 {offsets = [0, 32], sizes = [8, 32], strides = [1, 1]} : vector<8x96xf32> to vector<8x32xf32>
    %723 = vector.extract_strided_slice %718 {offsets = [0, 64], sizes = [8, 32], strides = [1, 1]} : vector<8x96xf32> to vector<8x32xf32>
    %724 = arith.mulf %722, %708 : vector<8x32xf32>
    %725 = arith.mulf %721, %720 : vector<8x32xf32>
    %726 = arith.addf %724, %725 : vector<8x32xf32>
    %727 = math.tanh %726 : vector<8x32xf32>
    %728 = arith.mulf %723, %727 : vector<8x32xf32>
    %c0_389 = arith.constant 0 : index
    %c0_390 = arith.constant 0 : index
    %729 = vector.load %arg9[%c0_389, %c0_390] : memref<8x32xf32, #tpu.memory_space<vmem>>, vector<8x32xf32>
    tpu.vector_store %arg9[%c0_389, %c0_390], %728 {strides = array<i32>} : memref<8x32xf32, #tpu.memory_space<vmem>>, vector<8x32xf32>,
    %c0_391 = arith.constant 0 : index
    %c0_392 = arith.constant 0 : index
    %730 = vector.load %arg10[%c0_391, %c0_392] : memref<8x32xf32, #tpu.memory_space<vmem>>, vector<8x32xf32>
    tpu.vector_store %arg10[%c0_391, %c0_392], %726 {strides = array<i32>} : memref<8x32xf32, #tpu.memory_space<vmem>>, vector<8x32xf32>,
    %731 = arith.index_cast %704 : i32 to index
    %c0_393 = arith.constant 0 : index
    %c0_394 = arith.constant 0 : index
    %732 = vector.load %arg6[%731, %c0_393, %c0_394] : memref<16x8x32xf32, #tpu.memory_space<vmem>>, vector<1x8x32xf32>
    %733 = vector.shape_cast %732 : vector<1x8x32xf32> to vector<8x32xf32>
    %734 = vector.shape_cast %728 : vector<8x32xf32> to vector<1x8x32xf32>
    tpu.vector_store %arg6[%731, %c0_393, %c0_394], %734 {strides = array<i32>} : memref<16x8x32xf32, #tpu.memory_space<vmem>>, vector<1x8x32xf32>,
    %c12_i32 = arith.constant 12 : i32
    %735 = arith.index_cast %c12_i32 : i32 to index
    %c0_395 = arith.constant 0 : index
    %c0_396 = arith.constant 0 : index
    %736 = vector.load %arg1[%735, %c0_395, %c0_396] : memref<16x8x128xf32, #tpu.memory_space<vmem>>, vector<1x8x128xf32>
    %737 = vector.shape_cast %736 : vector<1x8x128xf32> to vector<8x128xf32>
    %c0_397 = arith.constant 0 : index
    %c0_398 = arith.constant 0 : index
    %738 = vector.load %arg8[%c0_397, %c0_398] : memref<8x32xf32, #tpu.memory_space<vmem>>, vector<8x32xf32>
    %c0_399 = arith.constant 0 : index
    %c0_400 = arith.constant 0 : index
    %739 = vector.load %arg7[%c0_399, %c0_400] : memref<8x32xf32, #tpu.memory_space<vmem>>, vector<8x32xf32>
    %c0_401 = arith.constant 0 : index
    %c0_402 = arith.constant 0 : index
    %740 = vector.load %arg3[%c0_401, %c0_402] : memref<32x128xf32, #tpu.memory_space<vmem>>, vector<32x128xf32>
    %cst_403 = arith.constant dense<0.000000e+00> : vector<8x128xf32>
    %741 = tpu.matmul %739, %740, %cst_403 {dimension_numbers = #tpu.dot_dimension_numbers<[1], [0], [0], [1], [0, 0, 1, 1], [], []>} : vector<8x32xf32>, vector<32x128xf32>, vector<8x128xf32> -> vector<8x128xf32>
    %742 = arith.addf %737, %741 : vector<8x128xf32>
    %743 = vector.extract_strided_slice %742 {offsets = [0, 0], sizes = [8, 96], strides = [1, 1]} : vector<8x128xf32> to vector<8x96xf32>
    %744 = arith.negf %743 : vector<8x96xf32>
    %745 = math.exp %744 : vector<8x96xf32>
    %cst_404 = arith.constant 1.000000e+00 : f32
    %746 = vector.broadcast %cst_404 : f32 to vector<8x96xf32>
    %747 = arith.addf %746, %745 : vector<8x96xf32>
    %748 = arith.divf %746, %747 : vector<8x96xf32>
    %749 = vector.extract_strided_slice %742 {offsets = [0, 96], sizes = [8, 32], strides = [1, 1]} : vector<8x128xf32> to vector<8x32xf32>
    %750 = math.tanh %749 : vector<8x32xf32>
    %751 = vector.extract_strided_slice %748 {offsets = [0, 0], sizes = [8, 32], strides = [1, 1]} : vector<8x96xf32> to vector<8x32xf32>
    %752 = vector.extract_strided_slice %748 {offsets = [0, 32], sizes = [8, 32], strides = [1, 1]} : vector<8x96xf32> to vector<8x32xf32>
    %753 = vector.extract_strided_slice %748 {offsets = [0, 64], sizes = [8, 32], strides = [1, 1]} : vector<8x96xf32> to vector<8x32xf32>
    %754 = arith.mulf %752, %738 : vector<8x32xf32>
    %755 = arith.mulf %751, %750 : vector<8x32xf32>
    %756 = arith.addf %754, %755 : vector<8x32xf32>
    %757 = math.tanh %756 : vector<8x32xf32>
    %758 = arith.mulf %753, %757 : vector<8x32xf32>
    %c0_405 = arith.constant 0 : index
    %c0_406 = arith.constant 0 : index
    %759 = vector.load %arg7[%c0_405, %c0_406] : memref<8x32xf32, #tpu.memory_space<vmem>>, vector<8x32xf32>
    tpu.vector_store %arg7[%c0_405, %c0_406], %758 {strides = array<i32>} : memref<8x32xf32, #tpu.memory_space<vmem>>, vector<8x32xf32>,
    %c0_407 = arith.constant 0 : index
    %c0_408 = arith.constant 0 : index
    %760 = vector.load %arg8[%c0_407, %c0_408] : memref<8x32xf32, #tpu.memory_space<vmem>>, vector<8x32xf32>
    tpu.vector_store %arg8[%c0_407, %c0_408], %756 {strides = array<i32>} : memref<8x32xf32, #tpu.memory_space<vmem>>, vector<8x32xf32>,
    %761 = arith.index_cast %c12_i32 : i32 to index
    %c0_409 = arith.constant 0 : index
    %c0_410 = arith.constant 0 : index
    %762 = vector.load %arg5[%761, %c0_409, %c0_410] : memref<16x8x32xf32, #tpu.memory_space<vmem>>, vector<1x8x32xf32>
    %763 = vector.shape_cast %762 : vector<1x8x32xf32> to vector<8x32xf32>
    %764 = vector.shape_cast %758 : vector<8x32xf32> to vector<1x8x32xf32>
    tpu.vector_store %arg5[%761, %c0_409, %c0_410], %764 {strides = array<i32>} : memref<16x8x32xf32, #tpu.memory_space<vmem>>, vector<1x8x32xf32>,
    %c15_i32_411 = arith.constant 15 : i32
    %765 = arith.subi %c15_i32_411, %c12_i32 : i32
    %766 = arith.index_cast %765 : i32 to index
    %c0_412 = arith.constant 0 : index
    %c0_413 = arith.constant 0 : index
    %767 = vector.load %arg2[%766, %c0_412, %c0_413] : memref<16x8x128xf32, #tpu.memory_space<vmem>>, vector<1x8x128xf32>
    %768 = vector.shape_cast %767 : vector<1x8x128xf32> to vector<8x128xf32>
    %c0_414 = arith.constant 0 : index
    %c0_415 = arith.constant 0 : index
    %769 = vector.load %arg10[%c0_414, %c0_415] : memref<8x32xf32, #tpu.memory_space<vmem>>, vector<8x32xf32>
    %c0_416 = arith.constant 0 : index
    %c0_417 = arith.constant 0 : index
    %770 = vector.load %arg9[%c0_416, %c0_417] : memref<8x32xf32, #tpu.memory_space<vmem>>, vector<8x32xf32>
    %c0_418 = arith.constant 0 : index
    %c0_419 = arith.constant 0 : index
    %771 = vector.load %arg4[%c0_418, %c0_419] : memref<32x128xf32, #tpu.memory_space<vmem>>, vector<32x128xf32>
    %cst_420 = arith.constant dense<0.000000e+00> : vector<8x128xf32>
    %772 = tpu.matmul %770, %771, %cst_420 {dimension_numbers = #tpu.dot_dimension_numbers<[1], [0], [0], [1], [0, 0, 1, 1], [], []>} : vector<8x32xf32>, vector<32x128xf32>, vector<8x128xf32> -> vector<8x128xf32>
    %773 = arith.addf %768, %772 : vector<8x128xf32>
    %774 = vector.extract_strided_slice %773 {offsets = [0, 0], sizes = [8, 96], strides = [1, 1]} : vector<8x128xf32> to vector<8x96xf32>
    %775 = arith.negf %774 : vector<8x96xf32>
    %776 = math.exp %775 : vector<8x96xf32>
    %cst_421 = arith.constant 1.000000e+00 : f32
    %777 = vector.broadcast %cst_421 : f32 to vector<8x96xf32>
    %778 = arith.addf %777, %776 : vector<8x96xf32>
    %779 = arith.divf %777, %778 : vector<8x96xf32>
    %780 = vector.extract_strided_slice %773 {offsets = [0, 96], sizes = [8, 32], strides = [1, 1]} : vector<8x128xf32> to vector<8x32xf32>
    %781 = math.tanh %780 : vector<8x32xf32>
    %782 = vector.extract_strided_slice %779 {offsets = [0, 0], sizes = [8, 32], strides = [1, 1]} : vector<8x96xf32> to vector<8x32xf32>
    %783 = vector.extract_strided_slice %779 {offsets = [0, 32], sizes = [8, 32], strides = [1, 1]} : vector<8x96xf32> to vector<8x32xf32>
    %784 = vector.extract_strided_slice %779 {offsets = [0, 64], sizes = [8, 32], strides = [1, 1]} : vector<8x96xf32> to vector<8x32xf32>
    %785 = arith.mulf %783, %769 : vector<8x32xf32>
    %786 = arith.mulf %782, %781 : vector<8x32xf32>
    %787 = arith.addf %785, %786 : vector<8x32xf32>
    %788 = math.tanh %787 : vector<8x32xf32>
    %789 = arith.mulf %784, %788 : vector<8x32xf32>
    %c0_422 = arith.constant 0 : index
    %c0_423 = arith.constant 0 : index
    %790 = vector.load %arg9[%c0_422, %c0_423] : memref<8x32xf32, #tpu.memory_space<vmem>>, vector<8x32xf32>
    tpu.vector_store %arg9[%c0_422, %c0_423], %789 {strides = array<i32>} : memref<8x32xf32, #tpu.memory_space<vmem>>, vector<8x32xf32>,
    %c0_424 = arith.constant 0 : index
    %c0_425 = arith.constant 0 : index
    %791 = vector.load %arg10[%c0_424, %c0_425] : memref<8x32xf32, #tpu.memory_space<vmem>>, vector<8x32xf32>
    tpu.vector_store %arg10[%c0_424, %c0_425], %787 {strides = array<i32>} : memref<8x32xf32, #tpu.memory_space<vmem>>, vector<8x32xf32>,
    %792 = arith.index_cast %765 : i32 to index
    %c0_426 = arith.constant 0 : index
    %c0_427 = arith.constant 0 : index
    %793 = vector.load %arg6[%792, %c0_426, %c0_427] : memref<16x8x32xf32, #tpu.memory_space<vmem>>, vector<1x8x32xf32>
    %794 = vector.shape_cast %793 : vector<1x8x32xf32> to vector<8x32xf32>
    %795 = vector.shape_cast %789 : vector<8x32xf32> to vector<1x8x32xf32>
    tpu.vector_store %arg6[%792, %c0_426, %c0_427], %795 {strides = array<i32>} : memref<16x8x32xf32, #tpu.memory_space<vmem>>, vector<1x8x32xf32>,
    %c13_i32 = arith.constant 13 : i32
    %796 = arith.index_cast %c13_i32 : i32 to index
    %c0_428 = arith.constant 0 : index
    %c0_429 = arith.constant 0 : index
    %797 = vector.load %arg1[%796, %c0_428, %c0_429] : memref<16x8x128xf32, #tpu.memory_space<vmem>>, vector<1x8x128xf32>
    %798 = vector.shape_cast %797 : vector<1x8x128xf32> to vector<8x128xf32>
    %c0_430 = arith.constant 0 : index
    %c0_431 = arith.constant 0 : index
    %799 = vector.load %arg8[%c0_430, %c0_431] : memref<8x32xf32, #tpu.memory_space<vmem>>, vector<8x32xf32>
    %c0_432 = arith.constant 0 : index
    %c0_433 = arith.constant 0 : index
    %800 = vector.load %arg7[%c0_432, %c0_433] : memref<8x32xf32, #tpu.memory_space<vmem>>, vector<8x32xf32>
    %c0_434 = arith.constant 0 : index
    %c0_435 = arith.constant 0 : index
    %801 = vector.load %arg3[%c0_434, %c0_435] : memref<32x128xf32, #tpu.memory_space<vmem>>, vector<32x128xf32>
    %cst_436 = arith.constant dense<0.000000e+00> : vector<8x128xf32>
    %802 = tpu.matmul %800, %801, %cst_436 {dimension_numbers = #tpu.dot_dimension_numbers<[1], [0], [0], [1], [0, 0, 1, 1], [], []>} : vector<8x32xf32>, vector<32x128xf32>, vector<8x128xf32> -> vector<8x128xf32>
    %803 = arith.addf %798, %802 : vector<8x128xf32>
    %804 = vector.extract_strided_slice %803 {offsets = [0, 0], sizes = [8, 96], strides = [1, 1]} : vector<8x128xf32> to vector<8x96xf32>
    %805 = arith.negf %804 : vector<8x96xf32>
    %806 = math.exp %805 : vector<8x96xf32>
    %cst_437 = arith.constant 1.000000e+00 : f32
    %807 = vector.broadcast %cst_437 : f32 to vector<8x96xf32>
    %808 = arith.addf %807, %806 : vector<8x96xf32>
    %809 = arith.divf %807, %808 : vector<8x96xf32>
    %810 = vector.extract_strided_slice %803 {offsets = [0, 96], sizes = [8, 32], strides = [1, 1]} : vector<8x128xf32> to vector<8x32xf32>
    %811 = math.tanh %810 : vector<8x32xf32>
    %812 = vector.extract_strided_slice %809 {offsets = [0, 0], sizes = [8, 32], strides = [1, 1]} : vector<8x96xf32> to vector<8x32xf32>
    %813 = vector.extract_strided_slice %809 {offsets = [0, 32], sizes = [8, 32], strides = [1, 1]} : vector<8x96xf32> to vector<8x32xf32>
    %814 = vector.extract_strided_slice %809 {offsets = [0, 64], sizes = [8, 32], strides = [1, 1]} : vector<8x96xf32> to vector<8x32xf32>
    %815 = arith.mulf %813, %799 : vector<8x32xf32>
    %816 = arith.mulf %812, %811 : vector<8x32xf32>
    %817 = arith.addf %815, %816 : vector<8x32xf32>
    %818 = math.tanh %817 : vector<8x32xf32>
    %819 = arith.mulf %814, %818 : vector<8x32xf32>
    %c0_438 = arith.constant 0 : index
    %c0_439 = arith.constant 0 : index
    %820 = vector.load %arg7[%c0_438, %c0_439] : memref<8x32xf32, #tpu.memory_space<vmem>>, vector<8x32xf32>
    tpu.vector_store %arg7[%c0_438, %c0_439], %819 {strides = array<i32>} : memref<8x32xf32, #tpu.memory_space<vmem>>, vector<8x32xf32>,
    %c0_440 = arith.constant 0 : index
    %c0_441 = arith.constant 0 : index
    %821 = vector.load %arg8[%c0_440, %c0_441] : memref<8x32xf32, #tpu.memory_space<vmem>>, vector<8x32xf32>
    tpu.vector_store %arg8[%c0_440, %c0_441], %817 {strides = array<i32>} : memref<8x32xf32, #tpu.memory_space<vmem>>, vector<8x32xf32>,
    %822 = arith.index_cast %c13_i32 : i32 to index
    %c0_442 = arith.constant 0 : index
    %c0_443 = arith.constant 0 : index
    %823 = vector.load %arg5[%822, %c0_442, %c0_443] : memref<16x8x32xf32, #tpu.memory_space<vmem>>, vector<1x8x32xf32>
    %824 = vector.shape_cast %823 : vector<1x8x32xf32> to vector<8x32xf32>
    %825 = vector.shape_cast %819 : vector<8x32xf32> to vector<1x8x32xf32>
    tpu.vector_store %arg5[%822, %c0_442, %c0_443], %825 {strides = array<i32>} : memref<16x8x32xf32, #tpu.memory_space<vmem>>, vector<1x8x32xf32>,
    %c15_i32_444 = arith.constant 15 : i32
    %826 = arith.subi %c15_i32_444, %c13_i32 : i32
    %827 = arith.index_cast %826 : i32 to index
    %c0_445 = arith.constant 0 : index
    %c0_446 = arith.constant 0 : index
    %828 = vector.load %arg2[%827, %c0_445, %c0_446] : memref<16x8x128xf32, #tpu.memory_space<vmem>>, vector<1x8x128xf32>
    %829 = vector.shape_cast %828 : vector<1x8x128xf32> to vector<8x128xf32>
    %c0_447 = arith.constant 0 : index
    %c0_448 = arith.constant 0 : index
    %830 = vector.load %arg10[%c0_447, %c0_448] : memref<8x32xf32, #tpu.memory_space<vmem>>, vector<8x32xf32>
    %c0_449 = arith.constant 0 : index
    %c0_450 = arith.constant 0 : index
    %831 = vector.load %arg9[%c0_449, %c0_450] : memref<8x32xf32, #tpu.memory_space<vmem>>, vector<8x32xf32>
    %c0_451 = arith.constant 0 : index
    %c0_452 = arith.constant 0 : index
    %832 = vector.load %arg4[%c0_451, %c0_452] : memref<32x128xf32, #tpu.memory_space<vmem>>, vector<32x128xf32>
    %cst_453 = arith.constant dense<0.000000e+00> : vector<8x128xf32>
    %833 = tpu.matmul %831, %832, %cst_453 {dimension_numbers = #tpu.dot_dimension_numbers<[1], [0], [0], [1], [0, 0, 1, 1], [], []>} : vector<8x32xf32>, vector<32x128xf32>, vector<8x128xf32> -> vector<8x128xf32>
    %834 = arith.addf %829, %833 : vector<8x128xf32>
    %835 = vector.extract_strided_slice %834 {offsets = [0, 0], sizes = [8, 96], strides = [1, 1]} : vector<8x128xf32> to vector<8x96xf32>
    %836 = arith.negf %835 : vector<8x96xf32>
    %837 = math.exp %836 : vector<8x96xf32>
    %cst_454 = arith.constant 1.000000e+00 : f32
    %838 = vector.broadcast %cst_454 : f32 to vector<8x96xf32>
    %839 = arith.addf %838, %837 : vector<8x96xf32>
    %840 = arith.divf %838, %839 : vector<8x96xf32>
    %841 = vector.extract_strided_slice %834 {offsets = [0, 96], sizes = [8, 32], strides = [1, 1]} : vector<8x128xf32> to vector<8x32xf32>
    %842 = math.tanh %841 : vector<8x32xf32>
    %843 = vector.extract_strided_slice %840 {offsets = [0, 0], sizes = [8, 32], strides = [1, 1]} : vector<8x96xf32> to vector<8x32xf32>
    %844 = vector.extract_strided_slice %840 {offsets = [0, 32], sizes = [8, 32], strides = [1, 1]} : vector<8x96xf32> to vector<8x32xf32>
    %845 = vector.extract_strided_slice %840 {offsets = [0, 64], sizes = [8, 32], strides = [1, 1]} : vector<8x96xf32> to vector<8x32xf32>
    %846 = arith.mulf %844, %830 : vector<8x32xf32>
    %847 = arith.mulf %843, %842 : vector<8x32xf32>
    %848 = arith.addf %846, %847 : vector<8x32xf32>
    %849 = math.tanh %848 : vector<8x32xf32>
    %850 = arith.mulf %845, %849 : vector<8x32xf32>
    %c0_455 = arith.constant 0 : index
    %c0_456 = arith.constant 0 : index
    %851 = vector.load %arg9[%c0_455, %c0_456] : memref<8x32xf32, #tpu.memory_space<vmem>>, vector<8x32xf32>
    tpu.vector_store %arg9[%c0_455, %c0_456], %850 {strides = array<i32>} : memref<8x32xf32, #tpu.memory_space<vmem>>, vector<8x32xf32>,
    %c0_457 = arith.constant 0 : index
    %c0_458 = arith.constant 0 : index
    %852 = vector.load %arg10[%c0_457, %c0_458] : memref<8x32xf32, #tpu.memory_space<vmem>>, vector<8x32xf32>
    tpu.vector_store %arg10[%c0_457, %c0_458], %848 {strides = array<i32>} : memref<8x32xf32, #tpu.memory_space<vmem>>, vector<8x32xf32>,
    %853 = arith.index_cast %826 : i32 to index
    %c0_459 = arith.constant 0 : index
    %c0_460 = arith.constant 0 : index
    %854 = vector.load %arg6[%853, %c0_459, %c0_460] : memref<16x8x32xf32, #tpu.memory_space<vmem>>, vector<1x8x32xf32>
    %855 = vector.shape_cast %854 : vector<1x8x32xf32> to vector<8x32xf32>
    %856 = vector.shape_cast %850 : vector<8x32xf32> to vector<1x8x32xf32>
    tpu.vector_store %arg6[%853, %c0_459, %c0_460], %856 {strides = array<i32>} : memref<16x8x32xf32, #tpu.memory_space<vmem>>, vector<1x8x32xf32>,
    %c14_i32 = arith.constant 14 : i32
    %857 = arith.index_cast %c14_i32 : i32 to index
    %c0_461 = arith.constant 0 : index
    %c0_462 = arith.constant 0 : index
    %858 = vector.load %arg1[%857, %c0_461, %c0_462] : memref<16x8x128xf32, #tpu.memory_space<vmem>>, vector<1x8x128xf32>
    %859 = vector.shape_cast %858 : vector<1x8x128xf32> to vector<8x128xf32>
    %c0_463 = arith.constant 0 : index
    %c0_464 = arith.constant 0 : index
    %860 = vector.load %arg8[%c0_463, %c0_464] : memref<8x32xf32, #tpu.memory_space<vmem>>, vector<8x32xf32>
    %c0_465 = arith.constant 0 : index
    %c0_466 = arith.constant 0 : index
    %861 = vector.load %arg7[%c0_465, %c0_466] : memref<8x32xf32, #tpu.memory_space<vmem>>, vector<8x32xf32>
    %c0_467 = arith.constant 0 : index
    %c0_468 = arith.constant 0 : index
    %862 = vector.load %arg3[%c0_467, %c0_468] : memref<32x128xf32, #tpu.memory_space<vmem>>, vector<32x128xf32>
    %cst_469 = arith.constant dense<0.000000e+00> : vector<8x128xf32>
    %863 = tpu.matmul %861, %862, %cst_469 {dimension_numbers = #tpu.dot_dimension_numbers<[1], [0], [0], [1], [0, 0, 1, 1], [], []>} : vector<8x32xf32>, vector<32x128xf32>, vector<8x128xf32> -> vector<8x128xf32>
    %864 = arith.addf %859, %863 : vector<8x128xf32>
    %865 = vector.extract_strided_slice %864 {offsets = [0, 0], sizes = [8, 96], strides = [1, 1]} : vector<8x128xf32> to vector<8x96xf32>
    %866 = arith.negf %865 : vector<8x96xf32>
    %867 = math.exp %866 : vector<8x96xf32>
    %cst_470 = arith.constant 1.000000e+00 : f32
    %868 = vector.broadcast %cst_470 : f32 to vector<8x96xf32>
    %869 = arith.addf %868, %867 : vector<8x96xf32>
    %870 = arith.divf %868, %869 : vector<8x96xf32>
    %871 = vector.extract_strided_slice %864 {offsets = [0, 96], sizes = [8, 32], strides = [1, 1]} : vector<8x128xf32> to vector<8x32xf32>
    %872 = math.tanh %871 : vector<8x32xf32>
    %873 = vector.extract_strided_slice %870 {offsets = [0, 0], sizes = [8, 32], strides = [1, 1]} : vector<8x96xf32> to vector<8x32xf32>
    %874 = vector.extract_strided_slice %870 {offsets = [0, 32], sizes = [8, 32], strides = [1, 1]} : vector<8x96xf32> to vector<8x32xf32>
    %875 = vector.extract_strided_slice %870 {offsets = [0, 64], sizes = [8, 32], strides = [1, 1]} : vector<8x96xf32> to vector<8x32xf32>
    %876 = arith.mulf %874, %860 : vector<8x32xf32>
    %877 = arith.mulf %873, %872 : vector<8x32xf32>
    %878 = arith.addf %876, %877 : vector<8x32xf32>
    %879 = math.tanh %878 : vector<8x32xf32>
    %880 = arith.mulf %875, %879 : vector<8x32xf32>
    %c0_471 = arith.constant 0 : index
    %c0_472 = arith.constant 0 : index
    %881 = vector.load %arg7[%c0_471, %c0_472] : memref<8x32xf32, #tpu.memory_space<vmem>>, vector<8x32xf32>
    tpu.vector_store %arg7[%c0_471, %c0_472], %880 {strides = array<i32>} : memref<8x32xf32, #tpu.memory_space<vmem>>, vector<8x32xf32>,
    %c0_473 = arith.constant 0 : index
    %c0_474 = arith.constant 0 : index
    %882 = vector.load %arg8[%c0_473, %c0_474] : memref<8x32xf32, #tpu.memory_space<vmem>>, vector<8x32xf32>
    tpu.vector_store %arg8[%c0_473, %c0_474], %878 {strides = array<i32>} : memref<8x32xf32, #tpu.memory_space<vmem>>, vector<8x32xf32>,
    %883 = arith.index_cast %c14_i32 : i32 to index
    %c0_475 = arith.constant 0 : index
    %c0_476 = arith.constant 0 : index
    %884 = vector.load %arg5[%883, %c0_475, %c0_476] : memref<16x8x32xf32, #tpu.memory_space<vmem>>, vector<1x8x32xf32>
    %885 = vector.shape_cast %884 : vector<1x8x32xf32> to vector<8x32xf32>
    %886 = vector.shape_cast %880 : vector<8x32xf32> to vector<1x8x32xf32>
    tpu.vector_store %arg5[%883, %c0_475, %c0_476], %886 {strides = array<i32>} : memref<16x8x32xf32, #tpu.memory_space<vmem>>, vector<1x8x32xf32>,
    %c15_i32_477 = arith.constant 15 : i32
    %887 = arith.subi %c15_i32_477, %c14_i32 : i32
    %888 = arith.index_cast %887 : i32 to index
    %c0_478 = arith.constant 0 : index
    %c0_479 = arith.constant 0 : index
    %889 = vector.load %arg2[%888, %c0_478, %c0_479] : memref<16x8x128xf32, #tpu.memory_space<vmem>>, vector<1x8x128xf32>
    %890 = vector.shape_cast %889 : vector<1x8x128xf32> to vector<8x128xf32>
    %c0_480 = arith.constant 0 : index
    %c0_481 = arith.constant 0 : index
    %891 = vector.load %arg10[%c0_480, %c0_481] : memref<8x32xf32, #tpu.memory_space<vmem>>, vector<8x32xf32>
    %c0_482 = arith.constant 0 : index
    %c0_483 = arith.constant 0 : index
    %892 = vector.load %arg9[%c0_482, %c0_483] : memref<8x32xf32, #tpu.memory_space<vmem>>, vector<8x32xf32>
    %c0_484 = arith.constant 0 : index
    %c0_485 = arith.constant 0 : index
    %893 = vector.load %arg4[%c0_484, %c0_485] : memref<32x128xf32, #tpu.memory_space<vmem>>, vector<32x128xf32>
    %cst_486 = arith.constant dense<0.000000e+00> : vector<8x128xf32>
    %894 = tpu.matmul %892, %893, %cst_486 {dimension_numbers = #tpu.dot_dimension_numbers<[1], [0], [0], [1], [0, 0, 1, 1], [], []>} : vector<8x32xf32>, vector<32x128xf32>, vector<8x128xf32> -> vector<8x128xf32>
    %895 = arith.addf %890, %894 : vector<8x128xf32>
    %896 = vector.extract_strided_slice %895 {offsets = [0, 0], sizes = [8, 96], strides = [1, 1]} : vector<8x128xf32> to vector<8x96xf32>
    %897 = arith.negf %896 : vector<8x96xf32>
    %898 = math.exp %897 : vector<8x96xf32>
    %cst_487 = arith.constant 1.000000e+00 : f32
    %899 = vector.broadcast %cst_487 : f32 to vector<8x96xf32>
    %900 = arith.addf %899, %898 : vector<8x96xf32>
    %901 = arith.divf %899, %900 : vector<8x96xf32>
    %902 = vector.extract_strided_slice %895 {offsets = [0, 96], sizes = [8, 32], strides = [1, 1]} : vector<8x128xf32> to vector<8x32xf32>
    %903 = math.tanh %902 : vector<8x32xf32>
    %904 = vector.extract_strided_slice %901 {offsets = [0, 0], sizes = [8, 32], strides = [1, 1]} : vector<8x96xf32> to vector<8x32xf32>
    %905 = vector.extract_strided_slice %901 {offsets = [0, 32], sizes = [8, 32], strides = [1, 1]} : vector<8x96xf32> to vector<8x32xf32>
    %906 = vector.extract_strided_slice %901 {offsets = [0, 64], sizes = [8, 32], strides = [1, 1]} : vector<8x96xf32> to vector<8x32xf32>
    %907 = arith.mulf %905, %891 : vector<8x32xf32>
    %908 = arith.mulf %904, %903 : vector<8x32xf32>
    %909 = arith.addf %907, %908 : vector<8x32xf32>
    %910 = math.tanh %909 : vector<8x32xf32>
    %911 = arith.mulf %906, %910 : vector<8x32xf32>
    %c0_488 = arith.constant 0 : index
    %c0_489 = arith.constant 0 : index
    %912 = vector.load %arg9[%c0_488, %c0_489] : memref<8x32xf32, #tpu.memory_space<vmem>>, vector<8x32xf32>
    tpu.vector_store %arg9[%c0_488, %c0_489], %911 {strides = array<i32>} : memref<8x32xf32, #tpu.memory_space<vmem>>, vector<8x32xf32>,
    %c0_490 = arith.constant 0 : index
    %c0_491 = arith.constant 0 : index
    %913 = vector.load %arg10[%c0_490, %c0_491] : memref<8x32xf32, #tpu.memory_space<vmem>>, vector<8x32xf32>
    tpu.vector_store %arg10[%c0_490, %c0_491], %909 {strides = array<i32>} : memref<8x32xf32, #tpu.memory_space<vmem>>, vector<8x32xf32>,
    %914 = arith.index_cast %887 : i32 to index
    %c0_492 = arith.constant 0 : index
    %c0_493 = arith.constant 0 : index
    %915 = vector.load %arg6[%914, %c0_492, %c0_493] : memref<16x8x32xf32, #tpu.memory_space<vmem>>, vector<1x8x32xf32>
    %916 = vector.shape_cast %915 : vector<1x8x32xf32> to vector<8x32xf32>
    %917 = vector.shape_cast %911 : vector<8x32xf32> to vector<1x8x32xf32>
    tpu.vector_store %arg6[%914, %c0_492, %c0_493], %917 {strides = array<i32>} : memref<16x8x32xf32, #tpu.memory_space<vmem>>, vector<1x8x32xf32>,
    %c15_i32_494 = arith.constant 15 : i32
    %918 = arith.index_cast %c15_i32_494 : i32 to index
    %c0_495 = arith.constant 0 : index
    %c0_496 = arith.constant 0 : index
    %919 = vector.load %arg1[%918, %c0_495, %c0_496] : memref<16x8x128xf32, #tpu.memory_space<vmem>>, vector<1x8x128xf32>
    %920 = vector.shape_cast %919 : vector<1x8x128xf32> to vector<8x128xf32>
    %c0_497 = arith.constant 0 : index
    %c0_498 = arith.constant 0 : index
    %921 = vector.load %arg8[%c0_497, %c0_498] : memref<8x32xf32, #tpu.memory_space<vmem>>, vector<8x32xf32>
    %c0_499 = arith.constant 0 : index
    %c0_500 = arith.constant 0 : index
    %922 = vector.load %arg7[%c0_499, %c0_500] : memref<8x32xf32, #tpu.memory_space<vmem>>, vector<8x32xf32>
    %c0_501 = arith.constant 0 : index
    %c0_502 = arith.constant 0 : index
    %923 = vector.load %arg3[%c0_501, %c0_502] : memref<32x128xf32, #tpu.memory_space<vmem>>, vector<32x128xf32>
    %cst_503 = arith.constant dense<0.000000e+00> : vector<8x128xf32>
    %924 = tpu.matmul %922, %923, %cst_503 {dimension_numbers = #tpu.dot_dimension_numbers<[1], [0], [0], [1], [0, 0, 1, 1], [], []>} : vector<8x32xf32>, vector<32x128xf32>, vector<8x128xf32> -> vector<8x128xf32>
    %925 = arith.addf %920, %924 : vector<8x128xf32>
    %926 = vector.extract_strided_slice %925 {offsets = [0, 0], sizes = [8, 96], strides = [1, 1]} : vector<8x128xf32> to vector<8x96xf32>
    %927 = arith.negf %926 : vector<8x96xf32>
    %928 = math.exp %927 : vector<8x96xf32>
    %cst_504 = arith.constant 1.000000e+00 : f32
    %929 = vector.broadcast %cst_504 : f32 to vector<8x96xf32>
    %930 = arith.addf %929, %928 : vector<8x96xf32>
    %931 = arith.divf %929, %930 : vector<8x96xf32>
    %932 = vector.extract_strided_slice %925 {offsets = [0, 96], sizes = [8, 32], strides = [1, 1]} : vector<8x128xf32> to vector<8x32xf32>
    %933 = math.tanh %932 : vector<8x32xf32>
    %934 = vector.extract_strided_slice %931 {offsets = [0, 0], sizes = [8, 32], strides = [1, 1]} : vector<8x96xf32> to vector<8x32xf32>
    %935 = vector.extract_strided_slice %931 {offsets = [0, 32], sizes = [8, 32], strides = [1, 1]} : vector<8x96xf32> to vector<8x32xf32>
    %936 = vector.extract_strided_slice %931 {offsets = [0, 64], sizes = [8, 32], strides = [1, 1]} : vector<8x96xf32> to vector<8x32xf32>
    %937 = arith.mulf %935, %921 : vector<8x32xf32>
    %938 = arith.mulf %934, %933 : vector<8x32xf32>
    %939 = arith.addf %937, %938 : vector<8x32xf32>
    %940 = math.tanh %939 : vector<8x32xf32>
    %941 = arith.mulf %936, %940 : vector<8x32xf32>
    %c0_505 = arith.constant 0 : index
    %c0_506 = arith.constant 0 : index
    %942 = vector.load %arg7[%c0_505, %c0_506] : memref<8x32xf32, #tpu.memory_space<vmem>>, vector<8x32xf32>
    tpu.vector_store %arg7[%c0_505, %c0_506], %941 {strides = array<i32>} : memref<8x32xf32, #tpu.memory_space<vmem>>, vector<8x32xf32>,
    %c0_507 = arith.constant 0 : index
    %c0_508 = arith.constant 0 : index
    %943 = vector.load %arg8[%c0_507, %c0_508] : memref<8x32xf32, #tpu.memory_space<vmem>>, vector<8x32xf32>
    tpu.vector_store %arg8[%c0_507, %c0_508], %939 {strides = array<i32>} : memref<8x32xf32, #tpu.memory_space<vmem>>, vector<8x32xf32>,
    %944 = arith.index_cast %c15_i32_494 : i32 to index
    %c0_509 = arith.constant 0 : index
    %c0_510 = arith.constant 0 : index
    %945 = vector.load %arg5[%944, %c0_509, %c0_510] : memref<16x8x32xf32, #tpu.memory_space<vmem>>, vector<1x8x32xf32>
    %946 = vector.shape_cast %945 : vector<1x8x32xf32> to vector<8x32xf32>
    %947 = vector.shape_cast %941 : vector<8x32xf32> to vector<1x8x32xf32>
    tpu.vector_store %arg5[%944, %c0_509, %c0_510], %947 {strides = array<i32>} : memref<16x8x32xf32, #tpu.memory_space<vmem>>, vector<1x8x32xf32>,
    %c15_i32_511 = arith.constant 15 : i32
    %948 = arith.subi %c15_i32_511, %c15_i32_494 : i32
    %949 = arith.index_cast %948 : i32 to index
    %c0_512 = arith.constant 0 : index
    %c0_513 = arith.constant 0 : index
    %950 = vector.load %arg2[%949, %c0_512, %c0_513] : memref<16x8x128xf32, #tpu.memory_space<vmem>>, vector<1x8x128xf32>
    %951 = vector.shape_cast %950 : vector<1x8x128xf32> to vector<8x128xf32>
    %c0_514 = arith.constant 0 : index
    %c0_515 = arith.constant 0 : index
    %952 = vector.load %arg10[%c0_514, %c0_515] : memref<8x32xf32, #tpu.memory_space<vmem>>, vector<8x32xf32>
    %c0_516 = arith.constant 0 : index
    %c0_517 = arith.constant 0 : index
    %953 = vector.load %arg9[%c0_516, %c0_517] : memref<8x32xf32, #tpu.memory_space<vmem>>, vector<8x32xf32>
    %c0_518 = arith.constant 0 : index
    %c0_519 = arith.constant 0 : index
    %954 = vector.load %arg4[%c0_518, %c0_519] : memref<32x128xf32, #tpu.memory_space<vmem>>, vector<32x128xf32>
    %cst_520 = arith.constant dense<0.000000e+00> : vector<8x128xf32>
    %955 = tpu.matmul %953, %954, %cst_520 {dimension_numbers = #tpu.dot_dimension_numbers<[1], [0], [0], [1], [0, 0, 1, 1], [], []>} : vector<8x32xf32>, vector<32x128xf32>, vector<8x128xf32> -> vector<8x128xf32>
    %956 = arith.addf %951, %955 : vector<8x128xf32>
    %957 = vector.extract_strided_slice %956 {offsets = [0, 0], sizes = [8, 96], strides = [1, 1]} : vector<8x128xf32> to vector<8x96xf32>
    %958 = arith.negf %957 : vector<8x96xf32>
    %959 = math.exp %958 : vector<8x96xf32>
    %cst_521 = arith.constant 1.000000e+00 : f32
    %960 = vector.broadcast %cst_521 : f32 to vector<8x96xf32>
    %961 = arith.addf %960, %959 : vector<8x96xf32>
    %962 = arith.divf %960, %961 : vector<8x96xf32>
    %963 = vector.extract_strided_slice %956 {offsets = [0, 96], sizes = [8, 32], strides = [1, 1]} : vector<8x128xf32> to vector<8x32xf32>
    %964 = math.tanh %963 : vector<8x32xf32>
    %965 = vector.extract_strided_slice %962 {offsets = [0, 0], sizes = [8, 32], strides = [1, 1]} : vector<8x96xf32> to vector<8x32xf32>
    %966 = vector.extract_strided_slice %962 {offsets = [0, 32], sizes = [8, 32], strides = [1, 1]} : vector<8x96xf32> to vector<8x32xf32>
    %967 = vector.extract_strided_slice %962 {offsets = [0, 64], sizes = [8, 32], strides = [1, 1]} : vector<8x96xf32> to vector<8x32xf32>
    %968 = arith.mulf %966, %952 : vector<8x32xf32>
    %969 = arith.mulf %965, %964 : vector<8x32xf32>
    %970 = arith.addf %968, %969 : vector<8x32xf32>
    %971 = math.tanh %970 : vector<8x32xf32>
    %972 = arith.mulf %967, %971 : vector<8x32xf32>
    %c0_522 = arith.constant 0 : index
    %c0_523 = arith.constant 0 : index
    %973 = vector.load %arg9[%c0_522, %c0_523] : memref<8x32xf32, #tpu.memory_space<vmem>>, vector<8x32xf32>
    tpu.vector_store %arg9[%c0_522, %c0_523], %972 {strides = array<i32>} : memref<8x32xf32, #tpu.memory_space<vmem>>, vector<8x32xf32>,
    %c0_524 = arith.constant 0 : index
    %c0_525 = arith.constant 0 : index
    %974 = vector.load %arg10[%c0_524, %c0_525] : memref<8x32xf32, #tpu.memory_space<vmem>>, vector<8x32xf32>
    tpu.vector_store %arg10[%c0_524, %c0_525], %970 {strides = array<i32>} : memref<8x32xf32, #tpu.memory_space<vmem>>, vector<8x32xf32>,
    %975 = arith.index_cast %948 : i32 to index
    %c0_526 = arith.constant 0 : index
    %c0_527 = arith.constant 0 : index
    %976 = vector.load %arg6[%975, %c0_526, %c0_527] : memref<16x8x32xf32, #tpu.memory_space<vmem>>, vector<1x8x32xf32>
    %977 = vector.shape_cast %976 : vector<1x8x32xf32> to vector<8x32xf32>
    %978 = vector.shape_cast %972 : vector<8x32xf32> to vector<1x8x32xf32>
    tpu.vector_store %arg6[%975, %c0_526, %c0_527], %978 {strides = array<i32>} : memref<16x8x32xf32, #tpu.memory_space<vmem>>, vector<1x8x32xf32>,
    %c16_i32 = arith.constant 16 : i32
    return
  }
  func.func @transform_0(%arg0: i32) -> (i32, i32, i32) {
    %c0_i32 = arith.constant 0 : i32
    %c0_i32_0 = arith.constant 0 : i32
    %c0_i32_1 = arith.constant 0 : i32
    return %arg0, %c0_i32, %c0_i32_0 : i32, i32, i32
  }
  func.func @transform_1(%arg0: i32) -> (i32, i32, i32) {
    %c0_i32 = arith.constant 0 : i32
    %0 = arith.subi %c0_i32, %arg0 : i32
    %c0_i32_0 = arith.constant 0 : i32
    %c0_i32_1 = arith.constant 0 : i32
    %c0_i32_2 = arith.constant 0 : i32
    return %0, %c0_i32_0, %c0_i32_1 : i32, i32, i32
  }
  func.func @transform_2(%arg0: i32) -> (i32, i32) {
    %c0_i32 = arith.constant 0 : i32
    %c0_i32_0 = arith.constant 0 : i32
    %c0_i32_1 = arith.constant 0 : i32
    return %c0_i32, %c0_i32_0 : i32, i32
  }
  func.func @transform_3(%arg0: i32) -> (i32, i32) {
    %c0_i32 = arith.constant 0 : i32
    %c0_i32_0 = arith.constant 0 : i32
    %c0_i32_1 = arith.constant 0 : i32
    return %c0_i32, %c0_i32_0 : i32, i32
  }
  func.func @transform_4(%arg0: i32) -> (i32, i32, i32) {
    %c0_i32 = arith.constant 0 : i32
    %c0_i32_0 = arith.constant 0 : i32
    %c0_i32_1 = arith.constant 0 : i32
    return %arg0, %c0_i32, %c0_i32_0 : i32, i32, i32
  }
  func.func @transform_5(%arg0: i32) -> (i32, i32, i32) {
    %c0_i32 = arith.constant 0 : i32
    %0 = arith.subi %c0_i32, %arg0 : i32
    %c0_i32_0 = arith.constant 0 : i32
    %c0_i32_1 = arith.constant 0 : i32
    %c0_i32_2 = arith.constant 0 : i32
    return %0, %c0_i32_0, %c0_i32_1 : i32, i32, i32
  }
}

module attributes {stable_mosaic.version = 11 : i64} {
  func.func @fc_logsoftmax_kernel(%arg0: i32, %arg1: memref<128x32xf32, #tpu.memory_space<vmem>>, %arg2: memref<128x32xf32, #tpu.memory_space<vmem>>, %arg3: memref<32x128xf32, #tpu.memory_space<vmem>>, %arg4: memref<32x128xf32, #tpu.memory_space<vmem>>, %arg5: memref<1x128xf32, #tpu.memory_space<vmem>>, %arg6: memref<128x128xf32, #tpu.memory_space<vmem>>) attributes {dimension_semantics = [#tpu.dimension_semantics<parallel>], iteration_bounds = array<i64: 1>, scalar_prefetch = 0 : i64, scratch_operands = 0 : i64, tpu.core_type = #tpu.core_type<tc>, window_params = [{transform_indices = @transform_0, window_bounds = array<i64: 128, 32>}, {transform_indices = @transform_1, window_bounds = array<i64: 128, 32>}, {pipeline_mode = #tpu.pipeline_mode<synchronous>, transform_indices = @transform_2, window_bounds = array<i64: 32, 128>}, {pipeline_mode = #tpu.pipeline_mode<synchronous>, transform_indices = @transform_3, window_bounds = array<i64: 32, 128>}, {pipeline_mode = #tpu.pipeline_mode<synchronous>, transform_indices = @transform_4, window_bounds = array<i64: 1, 128>}, {transform_indices = @transform_5, window_bounds = array<i64: 128, 128>}]} {
    %c0 = arith.constant 0 : index
    %c0_0 = arith.constant 0 : index
    %0 = vector.load %arg1[%c0, %c0_0] : memref<128x32xf32, #tpu.memory_space<vmem>>, vector<128x32xf32>
    %c0_1 = arith.constant 0 : index
    %c0_2 = arith.constant 0 : index
    %1 = vector.load %arg3[%c0_1, %c0_2] : memref<32x128xf32, #tpu.memory_space<vmem>>, vector<32x128xf32>
    %cst = arith.constant dense<0.000000e+00> : vector<128x128xf32>
    %2 = tpu.matmul %0, %1, %cst {dimension_numbers = #tpu.dot_dimension_numbers<[1], [0], [0], [1], [0, 0, 1, 1], [], []>} : vector<128x32xf32>, vector<32x128xf32>, vector<128x128xf32> -> vector<128x128xf32>
    %c0_3 = arith.constant 0 : index
    %c0_4 = arith.constant 0 : index
    %3 = vector.load %arg2[%c0_3, %c0_4] : memref<128x32xf32, #tpu.memory_space<vmem>>, vector<128x32xf32>
    %c0_5 = arith.constant 0 : index
    %c0_6 = arith.constant 0 : index
    %4 = vector.load %arg4[%c0_5, %c0_6] : memref<32x128xf32, #tpu.memory_space<vmem>>, vector<32x128xf32>
    %cst_7 = arith.constant dense<0.000000e+00> : vector<128x128xf32>
    %5 = tpu.matmul %3, %4, %cst_7 {dimension_numbers = #tpu.dot_dimension_numbers<[1], [0], [0], [1], [0, 0, 1, 1], [], []>} : vector<128x32xf32>, vector<32x128xf32>, vector<128x128xf32> -> vector<128x128xf32>
    %6 = arith.addf %2, %5 : vector<128x128xf32>
    %c0_8 = arith.constant 0 : index
    %c0_9 = arith.constant 0 : index
    %7 = vector.load %arg5[%c0_8, %c0_9] : memref<1x128xf32, #tpu.memory_space<vmem>>, vector<1x128xf32>
    %8 = vector.broadcast %7 : vector<1x128xf32> to vector<128x128xf32>
    %9 = arith.addf %6, %8 : vector<128x128xf32>
    %cst_10 = arith.constant dense<0xFF800000> : vector<128xf32>
    %10 = vector.multi_reduction <maximumf>, %9, %cst_10 [1] : vector<128x128xf32> to vector<128xf32>
    %11 = vector.shape_cast %10 : vector<128xf32> to vector<128x1xf32>
    %12 = vector.broadcast %11 : vector<128x1xf32> to vector<128x128xf32>
    %13 = arith.subf %9, %12 : vector<128x128xf32>
    %14 = math.exp %13 : vector<128x128xf32>
    %cst_11 = arith.constant dense<0.000000e+00> : vector<128xf32>
    %15 = vector.multi_reduction <add>, %14, %cst_11 [1] : vector<128x128xf32> to vector<128xf32>
    %16 = vector.shape_cast %15 : vector<128xf32> to vector<128x1xf32>
    %17 = math.log %16 : vector<128x1xf32>
    %18 = vector.broadcast %17 : vector<128x1xf32> to vector<128x128xf32>
    %19 = arith.subf %13, %18 : vector<128x128xf32>
    %c0_12 = arith.constant 0 : index
    %c0_13 = arith.constant 0 : index
    %20 = vector.load %arg6[%c0_12, %c0_13] : memref<128x128xf32, #tpu.memory_space<vmem>>, vector<128x128xf32>
    tpu.vector_store %arg6[%c0_12, %c0_13], %19 {strides = array<i32>} : memref<128x128xf32, #tpu.memory_space<vmem>>, vector<128x128xf32>,
    return
  }
  func.func @transform_0(%arg0: i32) -> (i32, i32) {
    %c0_i32 = arith.constant 0 : i32
    %c0_i32_0 = arith.constant 0 : i32
    return %arg0, %c0_i32 : i32, i32
  }
  func.func @transform_1(%arg0: i32) -> (i32, i32) {
    %c0_i32 = arith.constant 0 : i32
    %c0_i32_0 = arith.constant 0 : i32
    return %arg0, %c0_i32 : i32, i32
  }
  func.func @transform_2(%arg0: i32) -> (i32, i32) {
    %c0_i32 = arith.constant 0 : i32
    %c0_i32_0 = arith.constant 0 : i32
    %c0_i32_1 = arith.constant 0 : i32
    return %c0_i32, %c0_i32_0 : i32, i32
  }
  func.func @transform_3(%arg0: i32) -> (i32, i32) {
    %c0_i32 = arith.constant 0 : i32
    %c0_i32_0 = arith.constant 0 : i32
    %c0_i32_1 = arith.constant 0 : i32
    return %c0_i32, %c0_i32_0 : i32, i32
  }
  func.func @transform_4(%arg0: i32) -> (i32, i32) {
    %c0_i32 = arith.constant 0 : i32
    %c0_i32_0 = arith.constant 0 : i32
    %c0_i32_1 = arith.constant 0 : i32
    return %c0_i32, %c0_i32_0 : i32, i32
  }
  func.func @transform_5(%arg0: i32) -> (i32, i32) {
    %c0_i32 = arith.constant 0 : i32
    %c0_i32_0 = arith.constant 0 : i32
    return %arg0, %c0_i32 : i32, i32
  }
}

</mosaic_0001>

<llo_original>
// kernel: forced_alignment_ctc_lstm_forward.5
$region0: #{forced_alignment_ctc_lstm_forward.5}
  #allocation0 [shape = 'u32[]', space=smem, size = 0x4, offset = 0x4, fixed_abs, tag = 'smem constant byte address 0x4 - core index']
  #allocation1 [shape = 'u32[144,128]{1,0:T(1,128)}', space=vmem, size = 0x12000, scoped, tag = 'internal scratch']
  %s0 = inlined_call_operand.vmem [shape: f32[128,16], index: 0, kind: input, shape index: {}]
  %s1 = inlined_call_operand.vmem [shape: f32[16,256], index: 1, kind: input, shape index: {}]
  %s2 = inlined_call_operand.vmem [shape: f32[1,256], index: 2, kind: input, shape index: {}]
  %s3 = inlined_call_operand.vmem [shape: f32[128,128], index: 3, kind: output, shape index: {0}]
  %s4 = inlined_call_operand.vmem [shape: f32[128,128], index: 4, kind: output, shape index: {1}]
  %5 = xla_tuple %s3, %s4
  %s6 = sld [smem:[#allocation0]]
  $region30: #{forced_alignment_ctc_lstm_forward.5} parent=0
    _
  %s8 = ssub.s32 1, %s6
  %s9 = scalar_select 0, %s8, %s6
  // Predicated region
  $region2: #{forced_alignment_ctc_lstm_forward.5} parent=0 // pred_check
    _
  $region3: #{forced_alignment_ctc_lstm_forward.5} parent=0 // pred_check_branch
    %11 = sbr.rel (0) target = $region5
  $region4: #{forced_alignment_ctc_lstm_forward.5} parent=0 // pred_region
    _
  $region5: #{forced_alignment_ctc_lstm_forward.5} parent=0 // pred_fallthru
    _
  // Predicated region
  $region6: #{forced_alignment_ctc_lstm_forward.5} parent=0 // pred_check
    _
  $region7: #{forced_alignment_ctc_lstm_forward.5} parent=0 // pred_check_branch
    %13 = sbr.rel (0) target = $region9
  $region8: #{forced_alignment_ctc_lstm_forward.5} parent=0 // pred_region
    _
  $region9: #{forced_alignment_ctc_lstm_forward.5} parent=0 // pred_fallthru
    _
  // Predicated region
  $region10: #{forced_alignment_ctc_lstm_forward.5} parent=0 // pred_check
    _
  $region11: #{forced_alignment_ctc_lstm_forward.5} parent=0 // pred_check_branch
    %15 = sbr.rel (0) target = $region13
  $region12: #{forced_alignment_ctc_lstm_forward.5} parent=0 // pred_region
    _
  $region13: #{forced_alignment_ctc_lstm_forward.5} parent=0 // pred_fallthru
    _
  %v16 = vld [vmem:[%s0] sm:$0xff]
  %v17 = vld [vmem:[%s0 + $0x8] sm:$0xff]
  %v18 = vld [vmem:[%s0 + $0x10] sm:$0xff]
  %v19 = vld [vmem:[%s0 + $0x18] sm:$0xff]
  %v20 = vld [vmem:[%s0 + $0x20] sm:$0xff]
  %v21 = vld [vmem:[%s0 + $0x28] sm:$0xff]
  %v22 = vld [vmem:[%s0 + $0x30] sm:$0xff]
  %v23 = vld [vmem:[%s0 + $0x38] sm:$0xff]
  %v24 = vld [vmem:[%s0 + $0x40] sm:$0xff]
  %v25 = vld [vmem:[%s0 + $0x48] sm:$0xff]
  %v26 = vld [vmem:[%s0 + $0x50] sm:$0xff]
  %v27 = vld [vmem:[%s0 + $0x58] sm:$0xff]
  %v28 = vld [vmem:[%s0 + $0x60] sm:$0xff]
  %v29 = vld [vmem:[%s0 + $0x68] sm:$0xff]
  %v30 = vld [vmem:[%s0 + $0x70] sm:$0xff]
  %v31 = vld [vmem:[%s0 + $0x78] sm:$0xff]
  %v32 = vld [vmem:[%s1] sm:$0xff]
  %v33 = vld [vmem:[%s1 + $0x8] sm:$0xff]
  %v34 = vld [vmem:[%s1 + $0x10] sm:$0xff]
  %v35 = vld [vmem:[%s1 + $0x18] sm:$0xff]
  %v36 = vld [vmem:[%s2] sm:$0x3]
  %v38 = vlaneseq
  %v39 = vshrl.u32 %v38, 7
  %v40 = vsub.s32 0, %v39
  %v41 = vrot.slane %v36, %v40
  %v42 = vlaneseq
  %v43 = vshrl.u32 %v42, 7
  %v44 = vsub.s32 1, %v43
  %v45 = vrot.slane %v36, %v44
  %vm48 = vcmask 130048
  %v50 = vsel %vm48, %v16, 0
  %v53 = vsel %vm48, %v17, 0
  %v56 = vsel %vm48, %v18, 0
  %v59 = vsel %vm48, %v19, 0
  %v62 = vsel %vm48, %v20, 0
  %v65 = vsel %vm48, %v21, 0
  %v68 = vsel %vm48, %v22, 0
  %v71 = vsel %vm48, %v23, 0
  %v74 = vsel %vm48, %v24, 0
  %v77 = vsel %vm48, %v25, 0
  %v80 = vsel %vm48, %v26, 0
  %v83 = vsel %vm48, %v27, 0
  %v86 = vsel %vm48, %v28, 0
  %v89 = vsel %vm48, %v29, 0
  %v92 = vsel %vm48, %v30, 0
  %v95 = vsel %vm48, %v31, 0
  %97 = vmatprep.subr.mxu0 %v33
  %98 = vmatpush1.msra.mxu0 %v32
  %99 = vmatprep.subr.mxu0 %v35
  %100 = vmatpush1.msra.mxu0 %v34
  %101 = vmatprep.subr.mxu0 0.0
  %102 = vmatpush1.msra.mxu0 0.0
  %103 = vmatprep.subr.mxu0 0.0
  %104 = vmatpush1.msra.mxu0 0.0
  %105 = vmatprep.subr.mxu0 0.0
  %106 = vmatpush1.msra.mxu0 0.0
  %107 = vmatprep.subr.mxu0 0.0
  %108 = vmatpush1.msra.mxu0 0.0
  %109 = vmatprep.subr.mxu0 0.0
  %110 = vmatpush1.msra.mxu0 0.0
  %111 = vmatprep.subr.mxu0 0.0
  %112 = vmatpush1.msra.mxu0 0.0
  %113 = vmatprep.subr.mxu0 0.0
  %114 = vmatpush1.msra.mxu0 0.0
  %115 = vmatprep.subr.mxu0 0.0
  %116 = vmatpush1.msra.mxu0 0.0
  %117 = vmatprep.subr.mxu0 0.0
  %118 = vmatpush1.msra.mxu0 0.0
  %119 = vmatprep.subr.mxu0 0.0
  %120 = vmatpush1.msra.mxu0 0.0
  %121 = vmatprep.subr.mxu0 0.0
  %122 = vmatpush1.msra.mxu0 0.0
  %123 = vmatprep.subr.mxu0 0.0
  %124 = vmatpush1.msra.mxu0 0.0
  %125 = vmatprep.subr.mxu0 0.0
  %126 = vmatpush1.msra.mxu0 0.0
  %127 = vmatprep.subr.mxu0 0.0
  %128 = vmatpush1.msra.mxu0 0.0
  %129 = vmatprep.subr.mxu0 0.0
  %130 = vmatpush1.msra.mxu0 0.0
  %131 = vmatprep.subr.mxu0 0.0
  %132 = vmatpush1.msra.mxu0 0.0
  %133 = vmatprep.subr.mxu0 0.0
  %134 = vmatpush1.msra.mxu0 0.0
  %135 = vmatprep.subr.mxu0 0.0
  %136 = vmatpush1.msra.mxu0 0.0
  %137 = vmatprep.subr.mxu0 0.0
  %138 = vmatpush1.msra.mxu0 0.0
  %139 = vmatprep.subr.mxu0 0.0
  %140 = vmatpush1.msra.mxu0 0.0
  %141 = vmatprep.subr.mxu0 0.0
  %142 = vmatpush1.msra.mxu0 0.0
  %143 = vmatprep.subr.mxu0 0.0
  %144 = vmatpush1.msra.mxu0 0.0
  %145 = vmatprep.subr.mxu0 0.0
  %146 = vmatpush1.msra.mxu0 0.0
  %147 = vmatprep.subr.mxu0 0.0
  %148 = vmatpush1.msra.mxu0 0.0
  %149 = vmatprep.subr.mxu0 0.0
  %150 = vmatpush1.msra.mxu0 0.0
  %151 = vmatprep.subr.mxu0 0.0
  %152 = vmatpush1.msra.mxu0 0.0
  %153 = vmatprep.subr.mxu0 0.0
  %154 = vmatpush1.msra.mxu0 0.0
  %155 = vmatprep.subr.mxu0 0.0
  %156 = vmatpush1.msra.mxu0 0.0
  %157 = vmatprep.subr.mxu0 0.0
  %158 = vmatpush1.msra.mxu0 0.0
  %159 = vmatprep.subr.mxu0 0.0
  %160 = vmatpush1.msra.mxu0 0.0
  %161 = vmatprep.mubr.f32.mxu0 0.0
  %162 = vmatmul.mubr.f32.gmra.mrb[0].mxu0 %v50
  %v163 = vpop.f32.mrb[0].mxu0
  %v164 = vadd.f32 %v41, %v163
  %v165 = vpop.f32.mrb[0].mxu0
  %v166 = vadd.f32 %v45, %v165
  %167 = vmatprep.mubr.f32.mxu0 0.0
  %168 = vmatmul.mubr.f32.gmra.mrb[0].mxu0 %v53
  %v169 = vpop.f32.mrb[0].mxu0
  %v170 = vadd.f32 %v41, %v169
  %v171 = vpop.f32.mrb[0].mxu0
  %v172 = vadd.f32 %v45, %v171
  %173 = vmatprep.mubr.f32.mxu0 0.0
  %174 = vmatmul.mubr.f32.gmra.mrb[0].mxu0 %v56
  %v175 = vpop.f32.mrb[0].mxu0
  %v176 = vadd.f32 %v41, %v175
  %v177 = vpop.f32.mrb[0].mxu0
  %v178 = vadd.f32 %v45, %v177
  %179 = vmatprep.mubr.f32.mxu0 0.0
  %180 = vmatmul.mubr.f32.gmra.mrb[0].mxu0 %v59
  %v181 = vpop.f32.mrb[0].mxu0
  %v182 = vadd.f32 %v41, %v181
  %v183 = vpop.f32.mrb[0].mxu0
  %v184 = vadd.f32 %v45, %v183
  %185 = vmatprep.mubr.f32.mxu0 0.0
  %186 = vmatmul.mubr.f32.gmra.mrb[0].mxu0 %v62
  %v187 = vpop.f32.mrb[0].mxu0
  %v188 = vadd.f32 %v41, %v187
  %v189 = vpop.f32.mrb[0].mxu0
  %v190 = vadd.f32 %v45, %v189
  %191 = vmatprep.mubr.f32.mxu0 0.0
  %192 = vmatmul.mubr.f32.gmra.mrb[0].mxu0 %v65
  %v193 = vpop.f32.mrb[0].mxu0
  %v194 = vadd.f32 %v41, %v193
  %v195 = vpop.f32.mrb[0].mxu0
  %v196 = vadd.f32 %v45, %v195
  %197 = vmatprep.mubr.f32.mxu0 0.0
  %198 = vmatmul.mubr.f32.gmra.mrb[0].mxu0 %v68
  %v199 = vpop.f32.mrb[0].mxu0
  %v200 = vadd.f32 %v41, %v199
  %v201 = vpop.f32.mrb[0].mxu0
  %v202 = vadd.f32 %v45, %v201
  %203 = vmatprep.mubr.f32.mxu0 0.0
  %204 = vmatmul.mubr.f32.gmra.mrb[0].mxu0 %v71
  %v205 = vpop.f32.mrb[0].mxu0
  %v206 = vadd.f32 %v41, %v205
  %v207 = vpop.f32.mrb[0].mxu0
  %v208 = vadd.f32 %v45, %v207
  %209 = vmatprep.mubr.f32.mxu0 0.0
  %210 = vmatmul.mubr.f32.gmra.mrb[0].mxu0 %v74
  %v211 = vpop.f32.mrb[0].mxu0
  %v212 = vadd.f32 %v41, %v211
  %v213 = vpop.f32.mrb[0].mxu0
  %v214 = vadd.f32 %v45, %v213
  %215 = vmatprep.mubr.f32.mxu0 0.0
  %216 = vmatmul.mubr.f32.gmra.mrb[0].mxu0 %v77
  %v217 = vpop.f32.mrb[0].mxu0
  %v218 = vadd.f32 %v41, %v217
  %v219 = vpop.f32.mrb[0].mxu0
  %v220 = vadd.f32 %v45, %v219
  %221 = vmatprep.mubr.f32.mxu0 0.0
  %222 = vmatmul.mubr.f32.gmra.mrb[0].mxu0 %v80
  %v223 = vpop.f32.mrb[0].mxu0
  %v224 = vadd.f32 %v41, %v223
  %v225 = vpop.f32.mrb[0].mxu0
  %v226 = vadd.f32 %v45, %v225
  %227 = vmatprep.mubr.f32.mxu0 0.0
  %228 = vmatmul.mubr.f32.gmra.mrb[0].mxu0 %v83
  %v229 = vpop.f32.mrb[0].mxu0
  %v230 = vadd.f32 %v41, %v229
  %v231 = vpop.f32.mrb[0].mxu0
  %v232 = vadd.f32 %v45, %v231
  %233 = vmatprep.mubr.f32.mxu0 0.0
  %234 = vmatmul.mubr.f32.gmra.mrb[0].mxu0 %v86
  %v235 = vpop.f32.mrb[0].mxu0
  %v236 = vadd.f32 %v41, %v235
  %v237 = vpop.f32.mrb[0].mxu0
  %v238 = vadd.f32 %v45, %v237
  %239 = vmatprep.mubr.f32.mxu0 0.0
  %240 = vmatmul.mubr.f32.gmra.mrb[0].mxu0 %v89
  %v241 = vpop.f32.mrb[0].mxu0
  %v242 = vadd.f32 %v41, %v241
  %v243 = vpop.f32.mrb[0].mxu0
  %v244 = vadd.f32 %v45, %v243
  %245 = vmatprep.mubr.f32.mxu0 0.0
  %246 = vmatmul.mubr.f32.gmra.mrb[0].mxu0 %v92
  %v247 = vpop.f32.mrb[0].mxu0
  %v248 = vadd.f32 %v41, %v247
  %v249 = vpop.f32.mrb[0].mxu0
  %v250 = vadd.f32 %v45, %v249
  %251 = vmatprep.mubr.f32.mxu0 0.0
  %252 = vmatmul.mubr.f32.gmra.mrb[0].mxu0 %v95
  %v253 = vpop.f32.mrb[0].mxu0
  %v254 = vadd.f32 %v41, %v253
  %v255 = vpop.f32.mrb[0].mxu0
  %v256 = vadd.f32 %v45, %v255
  %257 = vdwg.mxu0
  %s258 = smul.u32 0, 128
  %v259 = vlaneseq
  %v260 = vshrl.u32 %v259, 7
  %v261 = vadd.s32 %v260, 8
  %v262 = vadd.s32 %v260, 16
  %v263 = vadd.s32 %v260, 24
  %v264 = vadd.s32 %v260, 32
  %v265 = vadd.s32 %v260, 40
  %v266 = vadd.s32 %v260, 48
  %v267 = vadd.s32 %v260, 56
  %v268 = vadd.s32 %v260, 64
  %v269 = vadd.s32 %v260, 72
  %v270 = vadd.s32 %v260, 80
  %v271 = vadd.s32 %v260, 88
  %v272 = vadd.s32 %v260, 96
  %v273 = vadd.s32 %v260, 104
  %v274 = vadd.s32 %v260, 112
  %v275 = vadd.s32 %v260, 120
  %v276 = vstv %s258
  %v277 = vadd.s32 %v276, %v260
  %v278 = vadd.s32 %v276, %v261
  %v279 = vadd.s32 %v276, %v262
  %v280 = vadd.s32 %v276, %v263
  %v281 = vadd.s32 %v276, %v264
  %v282 = vadd.s32 %v276, %v265
  %v283 = vadd.s32 %v276, %v266
  %v284 = vadd.s32 %v276, %v267
  %v285 = vadd.s32 %v276, %v268
  %v286 = vadd.s32 %v276, %v269
  %v287 = vadd.s32 %v276, %v270
  %v288 = vadd.s32 %v276, %v271
  %v289 = vadd.s32 %v276, %v272
  %v290 = vadd.s32 %v276, %v273
  %v291 = vadd.s32 %v276, %v274
  %v292 = vadd.s32 %v276, %v275
  %vm293 = vcmp.lt.s32.totalorder %v277, 64
  %vm294 = vcmp.lt.s32.totalorder %v278, 64
  %vm295 = vcmp.lt.s32.totalorder %v279, 64
  %vm296 = vcmp.lt.s32.totalorder %v280, 64
  %vm297 = vcmp.lt.s32.totalorder %v281, 64
  %vm298 = vcmp.lt.s32.totalorder %v282, 64
  %vm299 = vcmp.lt.s32.totalorder %v283, 64
  %vm300 = vcmp.lt.s32.totalorder %v284, 64
  %vm301 = vcmp.lt.s32.totalorder %v285, 64
  %vm302 = vcmp.lt.s32.totalorder %v286, 64
  %vm303 = vcmp.lt.s32.totalorder %v287, 64
  %vm304 = vcmp.lt.s32.totalorder %v288, 64
  %vm305 = vcmp.lt.s32.totalorder %v289, 64
  %vm306 = vcmp.lt.s32.totalorder %v290, 64
  %vm307 = vcmp.lt.s32.totalorder %v291, 64
  %vm308 = vcmp.lt.s32.totalorder %v292, 64
  %v309 = vsel %vm293, 1, 0
  %v310 = vsel %vm294, 1, 0
  %v311 = vsel %vm295, 1, 0
  %v312 = vsel %vm296, 1, 0
  %v313 = vsel %vm297, 1, 0
  %v314 = vsel %vm298, 1, 0
  %v315 = vsel %vm299, 1, 0
  %v316 = vsel %vm300, 1, 0
  %v317 = vsel %vm301, 1, 0
  %v318 = vsel %vm302, 1, 0
  %v319 = vsel %vm303, 1, 0
  %v320 = vsel %vm304, 1, 0
  %v321 = vsel %vm305, 1, 0
  %v322 = vsel %vm306, 1, 0
  %v323 = vsel %vm307, 1, 0
  %v324 = vsel %vm308, 1, 0
  %vm325 = vcmp.eq.s32.totalorder %v309, 1
  %vm326 = vcmp.eq.s32.totalorder %v310, 1
  %vm327 = vcmp.eq.s32.totalorder %v311, 1
  %vm328 = vcmp.eq.s32.totalorder %v312, 1
  %vm329 = vcmp.eq.s32.totalorder %v313, 1
  %vm330 = vcmp.eq.s32.totalorder %v314, 1
  %vm331 = vcmp.eq.s32.totalorder %v315, 1
  %vm332 = vcmp.eq.s32.totalorder %v316, 1
  %vm333 = vcmp.eq.s32.totalorder %v317, 1
  %vm334 = vcmp.eq.s32.totalorder %v318, 1
  %vm335 = vcmp.eq.s32.totalorder %v319, 1
  %vm336 = vcmp.eq.s32.totalorder %v320, 1
  %vm337 = vcmp.eq.s32.totalorder %v321, 1
  %vm338 = vcmp.eq.s32.totalorder %v322, 1
  %vm339 = vcmp.eq.s32.totalorder %v323, 1
  %vm340 = vcmp.eq.s32.totalorder %v324, 1
  %v341 = vsel %vm325, %v164, 0.0
  %v342 = vsel %vm325, %v166, 0.0
  %v343 = vsel %vm326, %v170, 0.0
  %v344 = vsel %vm326, %v172, 0.0
  %v345 = vsel %vm327, %v176, 0.0
  %v346 = vsel %vm327, %v178, 0.0
  %v347 = vsel %vm328, %v182, 0.0
  %v348 = vsel %vm328, %v184, 0.0
  %v349 = vsel %vm329, %v188, 0.0
  %v350 = vsel %vm329, %v190, 0.0
  %v351 = vsel %vm330, %v194, 0.0
  %v352 = vsel %vm330, %v196, 0.0
  %v353 = vsel %vm331, %v200, 0.0
  %v354 = vsel %vm331, %v202, 0.0
  %v355 = vsel %vm332, %v206, 0.0
  %v356 = vsel %vm332, %v208, 0.0
  %v357 = vsel %vm333, %v212, 0.0
  %v358 = vsel %vm333, %v214, 0.0
  %v359 = vsel %vm334, %v218, 0.0
  %v360 = vsel %vm334, %v220, 0.0
  %v361 = vsel %vm335, %v224, 0.0
  %v362 = vsel %vm335, %v226, 0.0
  %v363 = vsel %vm336, %v230, 0.0
  %v364 = vsel %vm336, %v232, 0.0
  %v365 = vsel %vm337, %v236, 0.0
  %v366 = vsel %vm337, %v238, 0.0
  %v367 = vsel %vm338, %v242, 0.0
  %v368 = vsel %vm338, %v244, 0.0
  %v369 = vsel %vm339, %v248, 0.0
  %v370 = vsel %vm339, %v250, 0.0
  %v371 = vsel %vm340, %v254, 0.0
  %v372 = vsel %vm340, %v256, 0.0
  %373 = vst [vmem:[%s3] sm:$0xff] %v341
  %374 = vst [vmem:[%s3 + $0x8] sm:$0xff] %v343
  %375 = vst [vmem:[%s3 + $0x10] sm:$0xff] %v345
  %376 = vst [vmem:[%s3 + $0x18] sm:$0xff] %v347
  %377 = vst [vmem:[%s3 + $0x20] sm:$0xff] %v349
  %378 = vst [vmem:[%s3 + $0x28] sm:$0xff] %v351
  %379 = vst [vmem:[%s3 + $0x30] sm:$0xff] %v353
  %380 = vst [vmem:[%s3 + $0x38] sm:$0xff] %v355
  %381 = vst [vmem:[%s3 + $0x40] sm:$0xff] %v357
  %382 = vst [vmem:[%s3 + $0x48] sm:$0xff] %v359
  %383 = vst [vmem:[%s3 + $0x50] sm:$0xff] %v361
  %384 = vst [vmem:[%s3 + $0x58] sm:$0xff] %v363
  %385 = vst [vmem:[%s3 + $0x60] sm:$0xff] %v365
  %386 = vst [vmem:[%s3 + $0x68] sm:$0xff] %v367
  %387 = vst [vmem:[%s3 + $0x70] sm:$0xff] %v369
  %388 = vst [vmem:[%s3 + $0x78] sm:$0xff] %v371
  %389 = vst [vmem:[%s4] sm:$0xff] %v342
  %390 = vst [vmem:[%s4 + $0x8] sm:$0xff] %v344
  %391 = vst [vmem:[%s4 + $0x10] sm:$0xff] %v346
  %392 = vst [vmem:[%s4 + $0x18] sm:$0xff] %v348
  %393 = vst [vmem:[%s4 + $0x20] sm:$0xff] %v350
  %394 = vst [vmem:[%s4 + $0x28] sm:$0xff] %v352
  %395 = vst [vmem:[%s4 + $0x30] sm:$0xff] %v354
  %396 = vst [vmem:[%s4 + $0x38] sm:$0xff] %v356
  %397 = vst [vmem:[%s4 + $0x40] sm:$0xff] %v358
  %398 = vst [vmem:[%s4 + $0x48] sm:$0xff] %v360
  %399 = vst [vmem:[%s4 + $0x50] sm:$0xff] %v362
  %400 = vst [vmem:[%s4 + $0x58] sm:$0xff] %v364
  %401 = vst [vmem:[%s4 + $0x60] sm:$0xff] %v366
  %402 = vst [vmem:[%s4 + $0x68] sm:$0xff] %v368
  %403 = vst [vmem:[%s4 + $0x70] sm:$0xff] %v370
  %404 = vst [vmem:[%s4 + $0x78] sm:$0xff] %v372
  // Predicated region
  $region14: #{forced_alignment_ctc_lstm_forward.5} parent=0 // pred_check
    _
  $region15: #{forced_alignment_ctc_lstm_forward.5} parent=0 // pred_check_branch
    %406 = sbr.rel (0) target = $region17
  $region16: #{forced_alignment_ctc_lstm_forward.5} parent=0 // pred_region
    _
  $region17: #{forced_alignment_ctc_lstm_forward.5} parent=0 // pred_fallthru
    _
  // Predicated region
  $region18: #{forced_alignment_ctc_lstm_forward.5} parent=0 // pred_check
    _
  $region19: #{forced_alignment_ctc_lstm_forward.5} parent=0 // pred_check_branch
    %408 = sbr.rel (0) target = $region21
  $region20: #{forced_alignment_ctc_lstm_forward.5} parent=0 // pred_region
    _
  $region21: #{forced_alignment_ctc_lstm_forward.5} parent=0 // pred_fallthru
    _
  // Predicated region
  $region22: #{forced_alignment_ctc_lstm_forward.5} parent=0 // pred_check
    _
  $region23: #{forced_alignment_ctc_lstm_forward.5} parent=0 // pred_check_branch
    %410 = sbr.rel (0) target = $region25
  $region24: #{forced_alignment_ctc_lstm_forward.5} parent=0 // pred_region
    _
  $region25: #{forced_alignment_ctc_lstm_forward.5} parent=0 // pred_fallthru
    _
  // Predicated region
  $region26: #{forced_alignment_ctc_lstm_forward.5} parent=0 // pred_check
    _
  $region27: #{forced_alignment_ctc_lstm_forward.5} parent=0 // pred_check_branch
    %412 = sbr.rel (0) target = $region29
  $region28: #{forced_alignment_ctc_lstm_forward.5} parent=0 // pred_region
    _
  $region29: #{forced_alignment_ctc_lstm_forward.5} parent=0 // pred_fallthru
    _

// kernel: forced_alignment_ctc_lstm_forward.7
$region0: #{forced_alignment_ctc_lstm_forward.7}
  #allocation0 [shape = 'u32[]', space=smem, size = 0x4, offset = 0x4, fixed_abs, tag = 'smem constant byte address 0x4 - core index']
  #allocation1 [shape = 'u32[144,128]{1,0:T(1,128)}', space=vmem, size = 0x12000, scoped, tag = 'internal scratch']
  %s0 = inlined_call_operand.vmem [shape: f32[128,32], index: 0, kind: input, shape index: {}]
  %s1 = inlined_call_operand.vmem [shape: f32[128,32], index: 1, kind: input, shape index: {}]
  %s2 = inlined_call_operand.vmem [shape: f32[32,256], index: 2, kind: input, shape index: {}]
  %s3 = inlined_call_operand.vmem [shape: f32[32,256], index: 3, kind: input, shape index: {}]
  %s4 = inlined_call_operand.vmem [shape: f32[1,256], index: 4, kind: input, shape index: {}]
  %s5 = inlined_call_operand.vmem [shape: f32[128,128], index: 5, kind: output, shape index: {0}]
  %s6 = inlined_call_operand.vmem [shape: f32[128,128], index: 6, kind: output, shape index: {1}]
  %7 = xla_tuple %s5, %s6
  %s8 = sld [smem:[#allocation0]]
  $region38: #{forced_alignment_ctc_lstm_forward.7} parent=0
    _
  %s10 = ssub.s32 1, %s8
  %s11 = scalar_select 0, %s10, %s8
  // Predicated region
  $region2: #{forced_alignment_ctc_lstm_forward.7} parent=0 // pred_check
    _
  $region3: #{forced_alignment_ctc_lstm_forward.7} parent=0 // pred_check_branch
    %13 = sbr.rel (0) target = $region5
  $region4: #{forced_alignment_ctc_lstm_forward.7} parent=0 // pred_region
    _
  $region5: #{forced_alignment_ctc_lstm_forward.7} parent=0 // pred_fallthru
    _
  // Predicated region
  $region6: #{forced_alignment_ctc_lstm_forward.7} parent=0 // pred_check
    _
  $region7: #{forced_alignment_ctc_lstm_forward.7} parent=0 // pred_check_branch
    %15 = sbr.rel (0) target = $region9
  $region8: #{forced_alignment_ctc_lstm_forward.7} parent=0 // pred_region
    _
  $region9: #{forced_alignment_ctc_lstm_forward.7} parent=0 // pred_fallthru
    _
  // Predicated region
  $region10: #{forced_alignment_ctc_lstm_forward.7} parent=0 // pred_check
    _
  $region11: #{forced_alignment_ctc_lstm_forward.7} parent=0 // pred_check_branch
    %17 = sbr.rel (0) target = $region13
  $region12: #{forced_alignment_ctc_lstm_forward.7} parent=0 // pred_region
    _
  $region13: #{forced_alignment_ctc_lstm_forward.7} parent=0 // pred_fallthru
    _
  // Predicated region
  $region14: #{forced_alignment_ctc_lstm_forward.7} parent=0 // pred_check
    _
  $region15: #{forced_alignment_ctc_lstm_forward.7} parent=0 // pred_check_branch
    %19 = sbr.rel (0) target = $region17
  $region16: #{forced_alignment_ctc_lstm_forward.7} parent=0 // pred_region
    _
  $region17: #{forced_alignment_ctc_lstm_forward.7} parent=0 // pred_fallthru
    _
  // Predicated region
  $region18: #{forced_alignment_ctc_lstm_forward.7} parent=0 // pred_check
    _
  $region19: #{forced_alignment_ctc_lstm_forward.7} parent=0 // pred_check_branch
    %21 = sbr.rel (0) target = $region21
  $region20: #{forced_alignment_ctc_lstm_forward.7} parent=0 // pred_region
    _
  $region21: #{forced_alignment_ctc_lstm_forward.7} parent=0 // pred_fallthru
    _
  %v22 = vld [vmem:[%s0] sm:$0xff]
  %v23 = vld [vmem:[%s0 + $0x8] sm:$0xff]
  %v24 = vld [vmem:[%s0 + $0x10] sm:$0xff]
  %v25 = vld [vmem:[%s0 + $0x18] sm:$0xff]
  %v26 = vld [vmem:[%s0 + $0x20] sm:$0xff]
  %v27 = vld [vmem:[%s0 + $0x28] sm:$0xff]
  %v28 = vld [vmem:[%s0 + $0x30] sm:$0xff]
  %v29 = vld [vmem:[%s0 + $0x38] sm:$0xff]
  %v30 = vld [vmem:[%s0 + $0x40] sm:$0xff]
  %v31 = vld [vmem:[%s0 + $0x48] sm:$0xff]
  %v32 = vld [vmem:[%s0 + $0x50] sm:$0xff]
  %v33 = vld [vmem:[%s0 + $0x58] sm:$0xff]
  %v34 = vld [vmem:[%s0 + $0x60] sm:$0xff]
  %v35 = vld [vmem:[%s0 + $0x68] sm:$0xff]
  %v36 = vld [vmem:[%s0 + $0x70] sm:$0xff]
  %v37 = vld [vmem:[%s0 + $0x78] sm:$0xff]
  %v38 = vld [vmem:[%s2] sm:$0xff]
  %v39 = vld [vmem:[%s2 + $0x8] sm:$0xff]
  %v40 = vld [vmem:[%s2 + $0x10] sm:$0xff]
  %v41 = vld [vmem:[%s2 + $0x18] sm:$0xff]
  %v42 = vld [vmem:[%s2 + $0x20] sm:$0xff]
  %v43 = vld [vmem:[%s2 + $0x28] sm:$0xff]
  %v44 = vld [vmem:[%s2 + $0x30] sm:$0xff]
  %v45 = vld [vmem:[%s2 + $0x38] sm:$0xff]
  %v46 = vld [vmem:[%s1] sm:$0xff]
  %v47 = vld [vmem:[%s1 + $0x8] sm:$0xff]
  %v48 = vld [vmem:[%s1 + $0x10] sm:$0xff]
  %v49 = vld [vmem:[%s1 + $0x18] sm:$0xff]
  %v50 = vld [vmem:[%s1 + $0x20] sm:$0xff]
  %v51 = vld [vmem:[%s1 + $0x28] sm:$0xff]
  %v52 = vld [vmem:[%s1 + $0x30] sm:$0xff]
  %v53 = vld [vmem:[%s1 + $0x38] sm:$0xff]
  %v54 = vld [vmem:[%s1 + $0x40] sm:$0xff]
  %v55 = vld [vmem:[%s1 + $0x48] sm:$0xff]
  %v56 = vld [vmem:[%s1 + $0x50] sm:$0xff]
  %v57 = vld [vmem:[%s1 + $0x58] sm:$0xff]
  %v58 = vld [vmem:[%s1 + $0x60] sm:$0xff]
  %v59 = vld [vmem:[%s1 + $0x68] sm:$0xff]
  %v60 = vld [vmem:[%s1 + $0x70] sm:$0xff]
  %v61 = vld [vmem:[%s1 + $0x78] sm:$0xff]
  %v62 = vld [vmem:[%s3] sm:$0xff]
  %v63 = vld [vmem:[%s3 + $0x8] sm:$0xff]
  %v64 = vld [vmem:[%s3 + $0x10] sm:$0xff]
  %v65 = vld [vmem:[%s3 + $0x18] sm:$0xff]
  %v66 = vld [vmem:[%s3 + $0x20] sm:$0xff]
  %v67 = vld [vmem:[%s3 + $0x28] sm:$0xff]
  %v68 = vld [vmem:[%s3 + $0x30] sm:$0xff]
  %v69 = vld [vmem:[%s3 + $0x38] sm:$0xff]
  %vm70 = vcmask 261120
  %v72 = vsel %vm70, %v46, 0
  %v75 = vsel %vm70, %v47, 0
  %v78 = vsel %vm70, %v48, 0
  %v81 = vsel %vm70, %v49, 0
  %v84 = vsel %vm70, %v50, 0
  %v87 = vsel %vm70, %v51, 0
  %v90 = vsel %vm70, %v52, 0
  %v93 = vsel %vm70, %v53, 0
  %v96 = vsel %vm70, %v54, 0
  %v99 = vsel %vm70, %v55, 0
  %v102 = vsel %vm70, %v56, 0
  %v105 = vsel %vm70, %v57, 0
  %v108 = vsel %vm70, %v58, 0
  %v111 = vsel %vm70, %v59, 0
  %v114 = vsel %vm70, %v60, 0
  %v117 = vsel %vm70, %v61, 0
  %119 = vmatprep.subr.mxu0 %v63
  %120 = vmatpush1.msra.mxu0 %v62
  %121 = vmatprep.subr.mxu0 %v65
  %122 = vmatpush1.msra.mxu0 %v64
  %123 = vmatprep.subr.mxu0 %v67
  %124 = vmatpush1.msra.mxu0 %v66
  %125 = vmatprep.subr.mxu0 %v69
  %126 = vmatpush1.msra.mxu0 %v68
  %127 = vmatprep.subr.mxu0 0.0
  %128 = vmatpush1.msra.mxu0 0.0
  %129 = vmatprep.subr.mxu0 0.0
  %130 = vmatpush1.msra.mxu0 0.0
  %131 = vmatprep.subr.mxu0 0.0
  %132 = vmatpush1.msra.mxu0 0.0
  %133 = vmatprep.subr.mxu0 0.0
  %134 = vmatpush1.msra.mxu0 0.0
  %135 = vmatprep.subr.mxu0 0.0
  %136 = vmatpush1.msra.mxu0 0.0
  %137 = vmatprep.subr.mxu0 0.0
  %138 = vmatpush1.msra.mxu0 0.0
  %139 = vmatprep.subr.mxu0 0.0
  %140 = vmatpush1.msra.mxu0 0.0
  %141 = vmatprep.subr.mxu0 0.0
  %142 = vmatpush1.msra.mxu0 0.0
  %143 = vmatprep.subr.mxu0 0.0
  %144 = vmatpush1.msra.mxu0 0.0
  %145 = vmatprep.subr.mxu0 0.0
  %146 = vmatpush1.msra.mxu0 0.0
  %147 = vmatprep.subr.mxu0 0.0
  %148 = vmatpush1.msra.mxu0 0.0
  %149 = vmatprep.subr.mxu0 0.0
  %150 = vmatpush1.msra.mxu0 0.0
  %151 = vmatprep.subr.mxu0 0.0
  %152 = vmatpush1.msra.mxu0 0.0
  %153 = vmatprep.subr.mxu0 0.0
  %154 = vmatpush1.msra.mxu0 0.0
  %155 = vmatprep.subr.mxu0 0.0
  %156 = vmatpush1.msra.mxu0 0.0
  %157 = vmatprep.subr.mxu0 0.0
  %158 = vmatpush1.msra.mxu0 0.0
  %159 = vmatprep.subr.mxu0 0.0
  %160 = vmatpush1.msra.mxu0 0.0
  %161 = vmatprep.subr.mxu0 0.0
  %162 = vmatpush1.msra.mxu0 0.0
  %163 = vmatprep.subr.mxu0 0.0
  %164 = vmatpush1.msra.mxu0 0.0
  %165 = vmatprep.subr.mxu0 0.0
  %166 = vmatpush1.msra.mxu0 0.0
  %167 = vmatprep.subr.mxu0 0.0
  %168 = vmatpush1.msra.mxu0 0.0
  %169 = vmatprep.subr.mxu0 0.0
  %170 = vmatpush1.msra.mxu0 0.0
  %171 = vmatprep.subr.mxu0 0.0
  %172 = vmatpush1.msra.mxu0 0.0
  %173 = vmatprep.subr.mxu0 0.0
  %174 = vmatpush1.msra.mxu0 0.0
  %175 = vmatprep.subr.mxu0 0.0
  %176 = vmatpush1.msra.mxu0 0.0
  %177 = vmatprep.subr.mxu0 0.0
  %178 = vmatpush1.msra.mxu0 0.0
  %179 = vmatprep.subr.mxu0 0.0
  %180 = vmatpush1.msra.mxu0 0.0
  %181 = vmatprep.subr.mxu0 0.0
  %182 = vmatpush1.msra.mxu0 0.0
  %183 = vmatprep.mubr.f32.mxu0 0.0
  %184 = vmatmul.mubr.f32.gmra.mrb[0].mxu0 %v72
  %v185 = vpop.f32.mrb[0].mxu0
  %v186 = vadd.f32 0.0, %v185
  %v187 = vpop.f32.mrb[0].mxu0
  %v188 = vadd.f32 0.0, %v187
  %189 = vmatprep.mubr.f32.mxu0 0.0
  %190 = vmatmul.mubr.f32.gmra.mrb[0].mxu0 %v75
  %v191 = vpop.f32.mrb[0].mxu0
  %v192 = vadd.f32 0.0, %v191
  %v193 = vpop.f32.mrb[0].mxu0
  %v194 = vadd.f32 0.0, %v193
  %195 = vmatprep.mubr.f32.mxu0 0.0
  %196 = vmatmul.mubr.f32.gmra.mrb[0].mxu0 %v78
  %v197 = vpop.f32.mrb[0].mxu0
  %v198 = vadd.f32 0.0, %v197
  %v199 = vpop.f32.mrb[0].mxu0
  %v200 = vadd.f32 0.0, %v199
  %201 = vmatprep.mubr.f32.mxu0 0.0
  %202 = vmatmul.mubr.f32.gmra.mrb[0].mxu0 %v81
  %v203 = vpop.f32.mrb[0].mxu0
  %v204 = vadd.f32 0.0, %v203
  %v205 = vpop.f32.mrb[0].mxu0
  %v206 = vadd.f32 0.0, %v205
  %207 = vmatprep.mubr.f32.mxu0 0.0
  %208 = vmatmul.mubr.f32.gmra.mrb[0].mxu0 %v84
  %v209 = vpop.f32.mrb[0].mxu0
  %v210 = vadd.f32 0.0, %v209
  %v211 = vpop.f32.mrb[0].mxu0
  %v212 = vadd.f32 0.0, %v211
  %213 = vmatprep.mubr.f32.mxu0 0.0
  %214 = vmatmul.mubr.f32.gmra.mrb[0].mxu0 %v87
  %v215 = vpop.f32.mrb[0].mxu0
  %v216 = vadd.f32 0.0, %v215
  %v217 = vpop.f32.mrb[0].mxu0
  %v218 = vadd.f32 0.0, %v217
  %219 = vmatprep.mubr.f32.mxu0 0.0
  %220 = vmatmul.mubr.f32.gmra.mrb[0].mxu0 %v90
  %v221 = vpop.f32.mrb[0].mxu0
  %v222 = vadd.f32 0.0, %v221
  %v223 = vpop.f32.mrb[0].mxu0
  %v224 = vadd.f32 0.0, %v223
  %225 = vmatprep.mubr.f32.mxu0 0.0
  %226 = vmatmul.mubr.f32.gmra.mrb[0].mxu0 %v93
  %v227 = vpop.f32.mrb[0].mxu0
  %v228 = vadd.f32 0.0, %v227
  %v229 = vpop.f32.mrb[0].mxu0
  %v230 = vadd.f32 0.0, %v229
  %231 = vmatprep.mubr.f32.mxu0 0.0
  %232 = vmatmul.mubr.f32.gmra.mrb[0].mxu0 %v96
  %v233 = vpop.f32.mrb[0].mxu0
  %v234 = vadd.f32 0.0, %v233
  %v235 = vpop.f32.mrb[0].mxu0
  %v236 = vadd.f32 0.0, %v235
  %237 = vmatprep.mubr.f32.mxu0 0.0
  %238 = vmatmul.mubr.f32.gmra.mrb[0].mxu0 %v99
  %v239 = vpop.f32.mrb[0].mxu0
  %v240 = vadd.f32 0.0, %v239
  %v241 = vpop.f32.mrb[0].mxu0
  %v242 = vadd.f32 0.0, %v241
  %243 = vmatprep.mubr.f32.mxu0 0.0
  %244 = vmatmul.mubr.f32.gmra.mrb[0].mxu0 %v102
  %v245 = vpop.f32.mrb[0].mxu0
  %v246 = vadd.f32 0.0, %v245
  %v247 = vpop.f32.mrb[0].mxu0
  %v248 = vadd.f32 0.0, %v247
  %249 = vmatprep.mubr.f32.mxu0 0.0
  %250 = vmatmul.mubr.f32.gmra.mrb[0].mxu0 %v105
  %v251 = vpop.f32.mrb[0].mxu0
  %v252 = vadd.f32 0.0, %v251
  %v253 = vpop.f32.mrb[0].mxu0
  %v254 = vadd.f32 0.0, %v253
  %255 = vmatprep.mubr.f32.mxu0 0.0
  %256 = vmatmul.mubr.f32.gmra.mrb[0].mxu0 %v108
  %v257 = vpop.f32.mrb[0].mxu0
  %v258 = vadd.f32 0.0, %v257
  %v259 = vpop.f32.mrb[0].mxu0
  %v260 = vadd.f32 0.0, %v259
  %261 = vmatprep.mubr.f32.mxu0 0.0
  %262 = vmatmul.mubr.f32.gmra.mrb[0].mxu0 %v111
  %v263 = vpop.f32.mrb[0].mxu0
  %v264 = vadd.f32 0.0, %v263
  %v265 = vpop.f32.mrb[0].mxu0
  %v266 = vadd.f32 0.0, %v265
  %267 = vmatprep.mubr.f32.mxu0 0.0
  %268 = vmatmul.mubr.f32.gmra.mrb[0].mxu0 %v114
  %v269 = vpop.f32.mrb[0].mxu0
  %v270 = vadd.f32 0.0, %v269
  %v271 = vpop.f32.mrb[0].mxu0
  %v272 = vadd.f32 0.0, %v271
  %273 = vmatprep.mubr.f32.mxu0 0.0
  %274 = vmatmul.mubr.f32.gmra.mrb[0].mxu0 %v117
  %v275 = vpop.f32.mrb[0].mxu0
  %v276 = vadd.f32 0.0, %v275
  %v277 = vpop.f32.mrb[0].mxu0
  %v278 = vadd.f32 0.0, %v277
  %279 = vdwg.mxu0
  %v281 = vsel %vm70, %v22, 0
  %v284 = vsel %vm70, %v23, 0
  %v287 = vsel %vm70, %v24, 0
  %v290 = vsel %vm70, %v25, 0
  %v293 = vsel %vm70, %v26, 0
  %v296 = vsel %vm70, %v27, 0
  %v299 = vsel %vm70, %v28, 0
  %v302 = vsel %vm70, %v29, 0
  %v305 = vsel %vm70, %v30, 0
  %v308 = vsel %vm70, %v31, 0
  %v311 = vsel %vm70, %v32, 0
  %v314 = vsel %vm70, %v33, 0
  %v317 = vsel %vm70, %v34, 0
  %v320 = vsel %vm70, %v35, 0
  %v323 = vsel %vm70, %v36, 0
  %v326 = vsel %vm70, %v37, 0
  %328 = vmatprep.subr.mxu0 %v39
  %329 = vmatpush1.msra.mxu0 %v38
  %330 = vmatprep.subr.mxu0 %v41
  %331 = vmatpush1.msra.mxu0 %v40
  %332 = vmatprep.subr.mxu0 %v43
  %333 = vmatpush1.msra.mxu0 %v42
  %334 = vmatprep.subr.mxu0 %v45
  %335 = vmatpush1.msra.mxu0 %v44
  %336 = vmatprep.subr.mxu0 0.0
  %337 = vmatpush1.msra.mxu0 0.0
  %338 = vmatprep.subr.mxu0 0.0
  %339 = vmatpush1.msra.mxu0 0.0
  %340 = vmatprep.subr.mxu0 0.0
  %341 = vmatpush1.msra.mxu0 0.0
  %342 = vmatprep.subr.mxu0 0.0
  %343 = vmatpush1.msra.mxu0 0.0
  %344 = vmatprep.subr.mxu0 0.0
  %345 = vmatpush1.msra.mxu0 0.0
  %346 = vmatprep.subr.mxu0 0.0
  %347 = vmatpush1.msra.mxu0 0.0
  %348 = vmatprep.subr.mxu0 0.0
  %349 = vmatpush1.msra.mxu0 0.0
  %350 = vmatprep.subr.mxu0 0.0
  %351 = vmatpush1.msra.mxu0 0.0
  %352 = vmatprep.subr.mxu0 0.0
  %353 = vmatpush1.msra.mxu0 0.0
  %354 = vmatprep.subr.mxu0 0.0
  %355 = vmatpush1.msra.mxu0 0.0
  %356 = vmatprep.subr.mxu0 0.0
  %357 = vmatpush1.msra.mxu0 0.0
  %358 = vmatprep.subr.mxu0 0.0
  %359 = vmatpush1.msra.mxu0 0.0
  %360 = vmatprep.subr.mxu0 0.0
  %361 = vmatpush1.msra.mxu0 0.0
  %362 = vmatprep.subr.mxu0 0.0
  %363 = vmatpush1.msra.mxu0 0.0
  %364 = vmatprep.subr.mxu0 0.0
  %365 = vmatpush1.msra.mxu0 0.0
  %366 = vmatprep.subr.mxu0 0.0
  %367 = vmatpush1.msra.mxu0 0.0
  %368 = vmatprep.subr.mxu0 0.0
  %369 = vmatpush1.msra.mxu0 0.0
  %370 = vmatprep.subr.mxu0 0.0
  %371 = vmatpush1.msra.mxu0 0.0
  %372 = vmatprep.subr.mxu0 0.0
  %373 = vmatpush1.msra.mxu0 0.0
  %374 = vmatprep.subr.mxu0 0.0
  %375 = vmatpush1.msra.mxu0 0.0
  %376 = vmatprep.subr.mxu0 0.0
  %377 = vmatpush1.msra.mxu0 0.0
  %378 = vmatprep.subr.mxu0 0.0
  %379 = vmatpush1.msra.mxu0 0.0
  %380 = vmatprep.subr.mxu0 0.0
  %381 = vmatpush1.msra.mxu0 0.0
  %382 = vmatprep.subr.mxu0 0.0
  %383 = vmatpush1.msra.mxu0 0.0
  %384 = vmatprep.subr.mxu0 0.0
  %385 = vmatpush1.msra.mxu0 0.0
  %386 = vmatprep.subr.mxu0 0.0
  %387 = vmatpush1.msra.mxu0 0.0
  %388 = vmatprep.subr.mxu0 0.0
  %389 = vmatpush1.msra.mxu0 0.0
  %390 = vmatprep.subr.mxu0 0.0
  %391 = vmatpush1.msra.mxu0 0.0
  %392 = vmatprep.mubr.f32.mxu0 0.0
  %393 = vmatmul.mubr.f32.gmra.mrb[0].mxu0 %v281
  %v394 = vpop.f32.mrb[0].mxu0
  %v395 = vadd.f32 %v186, %v394
  %v396 = vpop.f32.mrb[0].mxu0
  %v397 = vadd.f32 %v188, %v396
  %398 = vmatprep.mubr.f32.mxu0 0.0
  %399 = vmatmul.mubr.f32.gmra.mrb[0].mxu0 %v284
  %v400 = vpop.f32.mrb[0].mxu0
  %v401 = vadd.f32 %v192, %v400
  %v402 = vpop.f32.mrb[0].mxu0
  %v403 = vadd.f32 %v194, %v402
  %404 = vmatprep.mubr.f32.mxu0 0.0
  %405 = vmatmul.mubr.f32.gmra.mrb[0].mxu0 %v287
  %v406 = vpop.f32.mrb[0].mxu0
  %v407 = vadd.f32 %v198, %v406
  %v408 = vpop.f32.mrb[0].mxu0
  %v409 = vadd.f32 %v200, %v408
  %410 = vmatprep.mubr.f32.mxu0 0.0
  %411 = vmatmul.mubr.f32.gmra.mrb[0].mxu0 %v290
  %v412 = vpop.f32.mrb[0].mxu0
  %v413 = vadd.f32 %v204, %v412
  %v414 = vpop.f32.mrb[0].mxu0
  %v415 = vadd.f32 %v206, %v414
  %416 = vmatprep.mubr.f32.mxu0 0.0
  %417 = vmatmul.mubr.f32.gmra.mrb[0].mxu0 %v293
  %v418 = vpop.f32.mrb[0].mxu0
  %v419 = vadd.f32 %v210, %v418
  %v420 = vpop.f32.mrb[0].mxu0
  %v421 = vadd.f32 %v212, %v420
  %422 = vmatprep.mubr.f32.mxu0 0.0
  %423 = vmatmul.mubr.f32.gmra.mrb[0].mxu0 %v296
  %v424 = vpop.f32.mrb[0].mxu0
  %v425 = vadd.f32 %v216, %v424
  %v426 = vpop.f32.mrb[0].mxu0
  %v427 = vadd.f32 %v218, %v426
  %428 = vmatprep.mubr.f32.mxu0 0.0
  %429 = vmatmul.mubr.f32.gmra.mrb[0].mxu0 %v299
  %v430 = vpop.f32.mrb[0].mxu0
  %v431 = vadd.f32 %v222, %v430
  %v432 = vpop.f32.mrb[0].mxu0
  %v433 = vadd.f32 %v224, %v432
  %434 = vmatprep.mubr.f32.mxu0 0.0
  %435 = vmatmul.mubr.f32.gmra.mrb[0].mxu0 %v302
  %v436 = vpop.f32.mrb[0].mxu0
  %v437 = vadd.f32 %v228, %v436
  %v438 = vpop.f32.mrb[0].mxu0
  %v439 = vadd.f32 %v230, %v438
  %440 = vmatprep.mubr.f32.mxu0 0.0
  %441 = vmatmul.mubr.f32.gmra.mrb[0].mxu0 %v305
  %v442 = vpop.f32.mrb[0].mxu0
  %v443 = vadd.f32 %v234, %v442
  %v444 = vpop.f32.mrb[0].mxu0
  %v445 = vadd.f32 %v236, %v444
  %446 = vmatprep.mubr.f32.mxu0 0.0
  %447 = vmatmul.mubr.f32.gmra.mrb[0].mxu0 %v308
  %v448 = vpop.f32.mrb[0].mxu0
  %v449 = vadd.f32 %v240, %v448
  %v450 = vpop.f32.mrb[0].mxu0
  %v451 = vadd.f32 %v242, %v450
  %452 = vmatprep.mubr.f32.mxu0 0.0
  %453 = vmatmul.mubr.f32.gmra.mrb[0].mxu0 %v311
  %v454 = vpop.f32.mrb[0].mxu0
  %v455 = vadd.f32 %v246, %v454
  %v456 = vpop.f32.mrb[0].mxu0
  %v457 = vadd.f32 %v248, %v456
  %458 = vmatprep.mubr.f32.mxu0 0.0
  %459 = vmatmul.mubr.f32.gmra.mrb[0].mxu0 %v314
  %v460 = vpop.f32.mrb[0].mxu0
  %v461 = vadd.f32 %v252, %v460
  %v462 = vpop.f32.mrb[0].mxu0
  %v463 = vadd.f32 %v254, %v462
  %464 = vmatprep.mubr.f32.mxu0 0.0
  %465 = vmatmul.mubr.f32.gmra.mrb[0].mxu0 %v317
  %v466 = vpop.f32.mrb[0].mxu0
  %v467 = vadd.f32 %v258, %v466
  %v468 = vpop.f32.mrb[0].mxu0
  %v469 = vadd.f32 %v260, %v468
  %470 = vmatprep.mubr.f32.mxu0 0.0
  %471 = vmatmul.mubr.f32.gmra.mrb[0].mxu0 %v320
  %v472 = vpop.f32.mrb[0].mxu0
  %v473 = vadd.f32 %v264, %v472
  %v474 = vpop.f32.mrb[0].mxu0
  %v475 = vadd.f32 %v266, %v474
  %476 = vmatprep.mubr.f32.mxu0 0.0
  %477 = vmatmul.mubr.f32.gmra.mrb[0].mxu0 %v323
  %v478 = vpop.f32.mrb[0].mxu0
  %v479 = vadd.f32 %v270, %v478
  %v480 = vpop.f32.mrb[0].mxu0
  %v481 = vadd.f32 %v272, %v480
  %482 = vmatprep.mubr.f32.mxu0 0.0
  %483 = vmatmul.mubr.f32.gmra.mrb[0].mxu0 %v326
  %v484 = vpop.f32.mrb[0].mxu0
  %v485 = vadd.f32 %v276, %v484
  %v486 = vpop.f32.mrb[0].mxu0
  %v487 = vadd.f32 %v278, %v486
  %488 = vdwg.mxu0
  %v489 = vld [vmem:[%s4] sm:$0x3]
  %v491 = vlaneseq
  %v492 = vshrl.u32 %v491, 7
  %v493 = vsub.s32 0, %v492
  %v494 = vrot.slane %v489, %v493
  %v495 = vlaneseq
  %v496 = vshrl.u32 %v495, 7
  %v497 = vsub.s32 1, %v496
  %v498 = vrot.slane %v489, %v497
  %v501 = vadd.f32 %v395, %v494
  %v502 = vadd.f32 %v397, %v498
  %v503 = vadd.f32 %v401, %v494
  %v504 = vadd.f32 %v403, %v498
  %v505 = vadd.f32 %v407, %v494
  %v506 = vadd.f32 %v409, %v498
  %v507 = vadd.f32 %v413, %v494
  %v508 = vadd.f32 %v415, %v498
  %v509 = vadd.f32 %v419, %v494
  %v510 = vadd.f32 %v421, %v498
  %v511 = vadd.f32 %v425, %v494
  %v512 = vadd.f32 %v427, %v498
  %v513 = vadd.f32 %v431, %v494
  %v514 = vadd.f32 %v433, %v498
  %v515 = vadd.f32 %v437, %v494
  %v516 = vadd.f32 %v439, %v498
  %v517 = vadd.f32 %v443, %v494
  %v518 = vadd.f32 %v445, %v498
  %v519 = vadd.f32 %v449, %v494
  %v520 = vadd.f32 %v451, %v498
  %v521 = vadd.f32 %v455, %v494
  %v522 = vadd.f32 %v457, %v498
  %v523 = vadd.f32 %v461, %v494
  %v524 = vadd.f32 %v463, %v498
  %v525 = vadd.f32 %v467, %v494
  %v526 = vadd.f32 %v469, %v498
  %v527 = vadd.f32 %v473, %v494
  %v528 = vadd.f32 %v475, %v498
  %v529 = vadd.f32 %v479, %v494
  %v530 = vadd.f32 %v481, %v498
  %v531 = vadd.f32 %v485, %v494
  %v532 = vadd.f32 %v487, %v498
  %s533 = smul.u32 0, 128
  %v534 = vlaneseq
  %v535 = vshrl.u32 %v534, 7
  %v536 = vadd.s32 %v535, 8
  %v537 = vadd.s32 %v535, 16
  %v538 = vadd.s32 %v535, 24
  %v539 = vadd.s32 %v535, 32
  %v540 = vadd.s32 %v535, 40
  %v541 = vadd.s32 %v535, 48
  %v542 = vadd.s32 %v535, 56
  %v543 = vadd.s32 %v535, 64
  %v544 = vadd.s32 %v535, 72
  %v545 = vadd.s32 %v535, 80
  %v546 = vadd.s32 %v535, 88
  %v547 = vadd.s32 %v535, 96
  %v548 = vadd.s32 %v535, 104
  %v549 = vadd.s32 %v535, 112
  %v550 = vadd.s32 %v535, 120
  %v551 = vstv %s533
  %v552 = vadd.s32 %v551, %v535
  %v553 = vadd.s32 %v551, %v536
  %v554 = vadd.s32 %v551, %v537
  %v555 = vadd.s32 %v551, %v538
  %v556 = vadd.s32 %v551, %v539
  %v557 = vadd.s32 %v551, %v540
  %v558 = vadd.s32 %v551, %v541
  %v559 = vadd.s32 %v551, %v542
  %v560 = vadd.s32 %v551, %v543
  %v561 = vadd.s32 %v551, %v544
  %v562 = vadd.s32 %v551, %v545
  %v563 = vadd.s32 %v551, %v546
  %v564 = vadd.s32 %v551, %v547
  %v565 = vadd.s32 %v551, %v548
  %v566 = vadd.s32 %v551, %v549
  %v567 = vadd.s32 %v551, %v550
  %vm568 = vcmp.lt.s32.totalorder %v552, 64
  %vm569 = vcmp.lt.s32.totalorder %v553, 64
  %vm570 = vcmp.lt.s32.totalorder %v554, 64
  %vm571 = vcmp.lt.s32.totalorder %v555, 64
  %vm572 = vcmp.lt.s32.totalorder %v556, 64
  %vm573 = vcmp.lt.s32.totalorder %v557, 64
  %vm574 = vcmp.lt.s32.totalorder %v558, 64
  %vm575 = vcmp.lt.s32.totalorder %v559, 64
  %vm576 = vcmp.lt.s32.totalorder %v560, 64
  %vm577 = vcmp.lt.s32.totalorder %v561, 64
  %vm578 = vcmp.lt.s32.totalorder %v562, 64
  %vm579 = vcmp.lt.s32.totalorder %v563, 64
  %vm580 = vcmp.lt.s32.totalorder %v564, 64
  %vm581 = vcmp.lt.s32.totalorder %v565, 64
  %vm582 = vcmp.lt.s32.totalorder %v566, 64
  %vm583 = vcmp.lt.s32.totalorder %v567, 64
  %v584 = vsel %vm568, 1, 0
  %v585 = vsel %vm569, 1, 0
  %v586 = vsel %vm570, 1, 0
  %v587 = vsel %vm571, 1, 0
  %v588 = vsel %vm572, 1, 0
  %v589 = vsel %vm573, 1, 0
  %v590 = vsel %vm574, 1, 0
  %v591 = vsel %vm575, 1, 0
  %v592 = vsel %vm576, 1, 0
  %v593 = vsel %vm577, 1, 0
  %v594 = vsel %vm578, 1, 0
  %v595 = vsel %vm579, 1, 0
  %v596 = vsel %vm580, 1, 0
  %v597 = vsel %vm581, 1, 0
  %v598 = vsel %vm582, 1, 0
  %v599 = vsel %vm583, 1, 0
  %vm600 = vcmp.eq.s32.totalorder %v584, 1
  %vm601 = vcmp.eq.s32.totalorder %v585, 1
  %vm602 = vcmp.eq.s32.totalorder %v586, 1
  %vm603 = vcmp.eq.s32.totalorder %v587, 1
  %vm604 = vcmp.eq.s32.totalorder %v588, 1
  %vm605 = vcmp.eq.s32.totalorder %v589, 1
  %vm606 = vcmp.eq.s32.totalorder %v590, 1
  %vm607 = vcmp.eq.s32.totalorder %v591, 1
  %vm608 = vcmp.eq.s32.totalorder %v592, 1
  %vm609 = vcmp.eq.s32.totalorder %v593, 1
  %vm610 = vcmp.eq.s32.totalorder %v594, 1
  %vm611 = vcmp.eq.s32.totalorder %v595, 1
  %vm612 = vcmp.eq.s32.totalorder %v596, 1
  %vm613 = vcmp.eq.s32.totalorder %v597, 1
  %vm614 = vcmp.eq.s32.totalorder %v598, 1
  %vm615 = vcmp.eq.s32.totalorder %v599, 1
  %v616 = vsel %vm600, %v501, 0.0
  %v617 = vsel %vm600, %v502, 0.0
  %v618 = vsel %vm601, %v503, 0.0
  %v619 = vsel %vm601, %v504, 0.0
  %v620 = vsel %vm602, %v505, 0.0
  %v621 = vsel %vm602, %v506, 0.0
  %v622 = vsel %vm603, %v507, 0.0
  %v623 = vsel %vm603, %v508, 0.0
  %v624 = vsel %vm604, %v509, 0.0
  %v625 = vsel %vm604, %v510, 0.0
  %v626 = vsel %vm605, %v511, 0.0
  %v627 = vsel %vm605, %v512, 0.0
  %v628 = vsel %vm606, %v513, 0.0
  %v629 = vsel %vm606, %v514, 0.0
  %v630 = vsel %vm607, %v515, 0.0
  %v631 = vsel %vm607, %v516, 0.0
  %v632 = vsel %vm608, %v517, 0.0
  %v633 = vsel %vm608, %v518, 0.0
  %v634 = vsel %vm609, %v519, 0.0
  %v635 = vsel %vm609, %v520, 0.0
  %v636 = vsel %vm610, %v521, 0.0
  %v637 = vsel %vm610, %v522, 0.0
  %v638 = vsel %vm611, %v523, 0.0
  %v639 = vsel %vm611, %v524, 0.0
  %v640 = vsel %vm612, %v525, 0.0
  %v641 = vsel %vm612, %v526, 0.0
  %v642 = vsel %vm613, %v527, 0.0
  %v643 = vsel %vm613, %v528, 0.0
  %v644 = vsel %vm614, %v529, 0.0
  %v645 = vsel %vm614, %v530, 0.0
  %v646 = vsel %vm615, %v531, 0.0
  %v647 = vsel %vm615, %v532, 0.0
  %648 = vst [vmem:[%s5] sm:$0xff] %v616
  %649 = vst [vmem:[%s5 + $0x8] sm:$0xff] %v618
  %650 = vst [vmem:[%s5 + $0x10] sm:$0xff] %v620
  %651 = vst [vmem:[%s5 + $0x18] sm:$0xff] %v622
  %652 = vst [vmem:[%s5 + $0x20] sm:$0xff] %v624
  %653 = vst [vmem:[%s5 + $0x28] sm:$0xff] %v626
  %654 = vst [vmem:[%s5 + $0x30] sm:$0xff] %v628
  %655 = vst [vmem:[%s5 + $0x38] sm:$0xff] %v630
  %656 = vst [vmem:[%s5 + $0x40] sm:$0xff] %v632
  %657 = vst [vmem:[%s5 + $0x48] sm:$0xff] %v634
  %658 = vst [vmem:[%s5 + $0x50] sm:$0xff] %v636
  %659 = vst [vmem:[%s5 + $0x58] sm:$0xff] %v638
  %660 = vst [vmem:[%s5 + $0x60] sm:$0xff] %v640
  %661 = vst [vmem:[%s5 + $0x68] sm:$0xff] %v642
  %662 = vst [vmem:[%s5 + $0x70] sm:$0xff] %v644
  %663 = vst [vmem:[%s5 + $0x78] sm:$0xff] %v646
  %664 = vst [vmem:[%s6] sm:$0xff] %v617
  %665 = vst [vmem:[%s6 + $0x8] sm:$0xff] %v619
  %666 = vst [vmem:[%s6 + $0x10] sm:$0xff] %v621
  %667 = vst [vmem:[%s6 + $0x18] sm:$0xff] %v623
  %668 = vst [vmem:[%s6 + $0x20] sm:$0xff] %v625
  %669 = vst [vmem:[%s6 + $0x28] sm:$0xff] %v627
  %670 = vst [vmem:[%s6 + $0x30] sm:$0xff] %v629
  %671 = vst [vmem:[%s6 + $0x38] sm:$0xff] %v631
  %672 = vst [vmem:[%s6 + $0x40] sm:$0xff] %v633
  %673 = vst [vmem:[%s6 + $0x48] sm:$0xff] %v635
  %674 = vst [vmem:[%s6 + $0x50] sm:$0xff] %v637
  %675 = vst [vmem:[%s6 + $0x58] sm:$0xff] %v639
  %676 = vst [vmem:[%s6 + $0x60] sm:$0xff] %v641
  %677 = vst [vmem:[%s6 + $0x68] sm:$0xff] %v643
  %678 = vst [vmem:[%s6 + $0x70] sm:$0xff] %v645
  %679 = vst [vmem:[%s6 + $0x78] sm:$0xff] %v647
  // Predicated region
  $region22: #{forced_alignment_ctc_lstm_forward.7} parent=0 // pred_check
    _
  $region23: #{forced_alignment_ctc_lstm_forward.7} parent=0 // pred_check_branch
    %681 = sbr.rel (0) target = $region25
  $region24: #{forced_alignment_ctc_lstm_forward.7} parent=0 // pred_region
    _
  $region25: #{forced_alignment_ctc_lstm_forward.7} parent=0 // pred_fallthru
    _
  // Predicated region
  $region26: #{forced_alignment_ctc_lstm_forward.7} parent=0 // pred_check
    _
  $region27: #{forced_alignment_ctc_lstm_forward.7} parent=0 // pred_check_branch
    %683 = sbr.rel (0) target = $region29
  $region28: #{forced_alignment_ctc_lstm_forward.7} parent=0 // pred_region
    _
  $region29: #{forced_alignment_ctc_lstm_forward.7} parent=0 // pred_fallthru
    _
  // Predicated region
  $region30: #{forced_alignment_ctc_lstm_forward.7} parent=0 // pred_check
    _
  $region31: #{forced_alignment_ctc_lstm_forward.7} parent=0 // pred_check_branch
    %685 = sbr.rel (0) target = $region33
  $region32: #{forced_alignment_ctc_lstm_forward.7} parent=0 // pred_region
    _
  $region33: #{forced_alignment_ctc_lstm_forward.7} parent=0 // pred_fallthru
    _
  // Predicated region
  $region34: #{forced_alignment_ctc_lstm_forward.7} parent=0 // pred_check
    _
  $region35: #{forced_alignment_ctc_lstm_forward.7} parent=0 // pred_check_branch
    %687 = sbr.rel (0) target = $region37
  $region36: #{forced_alignment_ctc_lstm_forward.7} parent=0 // pred_region
    _
  $region37: #{forced_alignment_ctc_lstm_forward.7} parent=0 // pred_fallthru
    _

// kernel: forced_alignment_ctc_lstm_forward.9
$region0: #{forced_alignment_ctc_lstm_forward.9}
  #allocation0 [shape = 'u32[]', space=smem, size = 0x4, offset = 0x4, fixed_abs, tag = 'smem constant byte address 0x4 - core index']
  #allocation1 [shape = 'u32[144,128]{1,0:T(1,128)}', space=vmem, size = 0x12000, scoped, tag = 'internal scratch']
  %s0 = inlined_call_operand.vmem [shape: f32[128,32], index: 0, kind: input, shape index: {}]
  %s1 = inlined_call_operand.vmem [shape: f32[128,32], index: 1, kind: input, shape index: {}]
  %s2 = inlined_call_operand.vmem [shape: f32[32,128], index: 2, kind: input, shape index: {}]
  %s3 = inlined_call_operand.vmem [shape: f32[32,128], index: 3, kind: input, shape index: {}]
  %s4 = inlined_call_operand.vmem [shape: f32[1,128], index: 4, kind: input, shape index: {}]
  %s5 = inlined_call_operand.vmem [shape: f32[128,128], index: 5, kind: output, shape index: {}]
  %s6 = sld [smem:[#allocation0]]
  $region30: #{forced_alignment_ctc_lstm_forward.9} parent=0
    _
  %s8 = ssub.s32 1, %s6
  %s9 = scalar_select 0, %s8, %s6
  // Predicated region
  $region2: #{forced_alignment_ctc_lstm_forward.9} parent=0 // pred_check
    _
  $region3: #{forced_alignment_ctc_lstm_forward.9} parent=0 // pred_check_branch
    %11 = sbr.rel (0) target = $region5
  $region4: #{forced_alignment_ctc_lstm_forward.9} parent=0 // pred_region
    _
  $region5: #{forced_alignment_ctc_lstm_forward.9} parent=0 // pred_fallthru
    _
  // Predicated region
  $region6: #{forced_alignment_ctc_lstm_forward.9} parent=0 // pred_check
    _
  $region7: #{forced_alignment_ctc_lstm_forward.9} parent=0 // pred_check_branch
    %13 = sbr.rel (0) target = $region9
  $region8: #{forced_alignment_ctc_lstm_forward.9} parent=0 // pred_region
    _
  $region9: #{forced_alignment_ctc_lstm_forward.9} parent=0 // pred_fallthru
    _
  // Predicated region
  $region10: #{forced_alignment_ctc_lstm_forward.9} parent=0 // pred_check
    _
  $region11: #{forced_alignment_ctc_lstm_forward.9} parent=0 // pred_check_branch
    %15 = sbr.rel (0) target = $region13
  $region12: #{forced_alignment_ctc_lstm_forward.9} parent=0 // pred_region
    _
  $region13: #{forced_alignment_ctc_lstm_forward.9} parent=0 // pred_fallthru
    _
  // Predicated region
  $region14: #{forced_alignment_ctc_lstm_forward.9} parent=0 // pred_check
    _
  $region15: #{forced_alignment_ctc_lstm_forward.9} parent=0 // pred_check_branch
    %17 = sbr.rel (0) target = $region17
  $region16: #{forced_alignment_ctc_lstm_forward.9} parent=0 // pred_region
    _
  $region17: #{forced_alignment_ctc_lstm_forward.9} parent=0 // pred_fallthru
    _
  // Predicated region
  $region18: #{forced_alignment_ctc_lstm_forward.9} parent=0 // pred_check
    _
  $region19: #{forced_alignment_ctc_lstm_forward.9} parent=0 // pred_check_branch
    %19 = sbr.rel (0) target = $region21
  $region20: #{forced_alignment_ctc_lstm_forward.9} parent=0 // pred_region
    _
  $region21: #{forced_alignment_ctc_lstm_forward.9} parent=0 // pred_fallthru
    _
  %v20 = vld [vmem:[%s0] sm:$0xff]
  %v21 = vld [vmem:[%s0 + $0x8] sm:$0xff]
  %v22 = vld [vmem:[%s0 + $0x10] sm:$0xff]
  %v23 = vld [vmem:[%s0 + $0x18] sm:$0xff]
  %v24 = vld [vmem:[%s0 + $0x20] sm:$0xff]
  %v25 = vld [vmem:[%s0 + $0x28] sm:$0xff]
  %v26 = vld [vmem:[%s0 + $0x30] sm:$0xff]
  %v27 = vld [vmem:[%s0 + $0x38] sm:$0xff]
  %v28 = vld [vmem:[%s0 + $0x40] sm:$0xff]
  %v29 = vld [vmem:[%s0 + $0x48] sm:$0xff]
  %v30 = vld [vmem:[%s0 + $0x50] sm:$0xff]
  %v31 = vld [vmem:[%s0 + $0x58] sm:$0xff]
  %v32 = vld [vmem:[%s0 + $0x60] sm:$0xff]
  %v33 = vld [vmem:[%s0 + $0x68] sm:$0xff]
  %v34 = vld [vmem:[%s0 + $0x70] sm:$0xff]
  %v35 = vld [vmem:[%s0 + $0x78] sm:$0xff]
  %v36 = vld [vmem:[%s2] sm:$0xff]
  %v37 = vld [vmem:[%s2 + $0x8] sm:$0xff]
  %v38 = vld [vmem:[%s2 + $0x10] sm:$0xff]
  %v39 = vld [vmem:[%s2 + $0x18] sm:$0xff]
  %v40 = vld [vmem:[%s1] sm:$0xff]
  %v41 = vld [vmem:[%s1 + $0x8] sm:$0xff]
  %v42 = vld [vmem:[%s1 + $0x10] sm:$0xff]
  %v43 = vld [vmem:[%s1 + $0x18] sm:$0xff]
  %v44 = vld [vmem:[%s1 + $0x20] sm:$0xff]
  %v45 = vld [vmem:[%s1 + $0x28] sm:$0xff]
  %v46 = vld [vmem:[%s1 + $0x30] sm:$0xff]
  %v47 = vld [vmem:[%s1 + $0x38] sm:$0xff]
  %v48 = vld [vmem:[%s1 + $0x40] sm:$0xff]
  %v49 = vld [vmem:[%s1 + $0x48] sm:$0xff]
  %v50 = vld [vmem:[%s1 + $0x50] sm:$0xff]
  %v51 = vld [vmem:[%s1 + $0x58] sm:$0xff]
  %v52 = vld [vmem:[%s1 + $0x60] sm:$0xff]
  %v53 = vld [vmem:[%s1 + $0x68] sm:$0xff]
  %v54 = vld [vmem:[%s1 + $0x70] sm:$0xff]
  %v55 = vld [vmem:[%s1 + $0x78] sm:$0xff]
  %v56 = vld [vmem:[%s3] sm:$0xff]
  %v57 = vld [vmem:[%s3 + $0x8] sm:$0xff]
  %v58 = vld [vmem:[%s3 + $0x10] sm:$0xff]
  %v59 = vld [vmem:[%s3 + $0x18] sm:$0xff]
  %vm60 = vcmask 261120
  %v62 = vsel %vm60, %v40, 0
  %v65 = vsel %vm60, %v41, 0
  %v68 = vsel %vm60, %v42, 0
  %v71 = vsel %vm60, %v43, 0
  %v74 = vsel %vm60, %v44, 0
  %v77 = vsel %vm60, %v45, 0
  %v80 = vsel %vm60, %v46, 0
  %v83 = vsel %vm60, %v47, 0
  %v86 = vsel %vm60, %v48, 0
  %v89 = vsel %vm60, %v49, 0
  %v92 = vsel %vm60, %v50, 0
  %v95 = vsel %vm60, %v51, 0
  %v98 = vsel %vm60, %v52, 0
  %v101 = vsel %vm60, %v53, 0
  %v104 = vsel %vm60, %v54, 0
  %v107 = vsel %vm60, %v55, 0
  %109 = vmatprep.subr.mxu0 0.0
  %110 = vmatpush1.msra.mxu0 %v56
  %111 = vmatprep.subr.mxu0 0.0
  %112 = vmatpush1.msra.mxu0 %v57
  %113 = vmatprep.subr.mxu0 0.0
  %114 = vmatpush1.msra.mxu0 %v58
  %115 = vmatprep.subr.mxu0 0.0
  %116 = vmatpush1.msra.mxu0 %v59
  %117 = vmatprep.subr.mxu0 0.0
  %118 = vmatpush1.msra.mxu0 0.0
  %119 = vmatprep.subr.mxu0 0.0
  %120 = vmatpush1.msra.mxu0 0.0
  %121 = vmatprep.subr.mxu0 0.0
  %122 = vmatpush1.msra.mxu0 0.0
  %123 = vmatprep.subr.mxu0 0.0
  %124 = vmatpush1.msra.mxu0 0.0
  %125 = vmatprep.subr.mxu0 0.0
  %126 = vmatpush1.msra.mxu0 0.0
  %127 = vmatprep.subr.mxu0 0.0
  %128 = vmatpush1.msra.mxu0 0.0
  %129 = vmatprep.subr.mxu0 0.0
  %130 = vmatpush1.msra.mxu0 0.0
  %131 = vmatprep.subr.mxu0 0.0
  %132 = vmatpush1.msra.mxu0 0.0
  %133 = vmatprep.subr.mxu0 0.0
  %134 = vmatpush1.msra.mxu0 0.0
  %135 = vmatprep.subr.mxu0 0.0
  %136 = vmatpush1.msra.mxu0 0.0
  %137 = vmatprep.subr.mxu0 0.0
  %138 = vmatpush1.msra.mxu0 0.0
  %139 = vmatprep.subr.mxu0 0.0
  %140 = vmatpush1.msra.mxu0 0.0
  %141 = vmatprep.subr.mxu0 0.0
  %142 = vmatpush1.msra.mxu0 0.0
  %143 = vmatprep.subr.mxu0 0.0
  %144 = vmatpush1.msra.mxu0 0.0
  %145 = vmatprep.subr.mxu0 0.0
  %146 = vmatpush1.msra.mxu0 0.0
  %147 = vmatprep.subr.mxu0 0.0
  %148 = vmatpush1.msra.mxu0 0.0
  %149 = vmatprep.subr.mxu0 0.0
  %150 = vmatpush1.msra.mxu0 0.0
  %151 = vmatprep.subr.mxu0 0.0
  %152 = vmatpush1.msra.mxu0 0.0
  %153 = vmatprep.subr.mxu0 0.0
  %154 = vmatpush1.msra.mxu0 0.0
  %155 = vmatprep.subr.mxu0 0.0
  %156 = vmatpush1.msra.mxu0 0.0
  %157 = vmatprep.subr.mxu0 0.0
  %158 = vmatpush1.msra.mxu0 0.0
  %159 = vmatprep.subr.mxu0 0.0
  %160 = vmatpush1.msra.mxu0 0.0
  %161 = vmatprep.subr.mxu0 0.0
  %162 = vmatpush1.msra.mxu0 0.0
  %163 = vmatprep.subr.mxu0 0.0
  %164 = vmatpush1.msra.mxu0 0.0
  %165 = vmatprep.subr.mxu0 0.0
  %166 = vmatpush1.msra.mxu0 0.0
  %167 = vmatprep.subr.mxu0 0.0
  %168 = vmatpush1.msra.mxu0 0.0
  %169 = vmatprep.subr.mxu0 0.0
  %170 = vmatpush1.msra.mxu0 0.0
  %171 = vmatprep.subr.mxu0 0.0
  %172 = vmatpush1.msra.mxu0 0.0
  %173 = vmatprep.mubr.f32.mxu0 0.0
  %174 = vmatmul.mubr.f32.gmra.mrb[0].mxu0 %v62
  %v175 = vpop.f32.mrb[0].mxu0
  %v176 = vadd.f32 0.0, %v175
  %v177 = vpop.f32.mrb[0].mxu0
  %178 = vmatprep.mubr.f32.mxu0 0.0
  %179 = vmatmul.mubr.f32.gmra.mrb[0].mxu0 %v65
  %v180 = vpop.f32.mrb[0].mxu0
  %v181 = vadd.f32 0.0, %v180
  %v182 = vpop.f32.mrb[0].mxu0
  %183 = vmatprep.mubr.f32.mxu0 0.0
  %184 = vmatmul.mubr.f32.gmra.mrb[0].mxu0 %v68
  %v185 = vpop.f32.mrb[0].mxu0
  %v186 = vadd.f32 0.0, %v185
  %v187 = vpop.f32.mrb[0].mxu0
  %188 = vmatprep.mubr.f32.mxu0 0.0
  %189 = vmatmul.mubr.f32.gmra.mrb[0].mxu0 %v71
  %v190 = vpop.f32.mrb[0].mxu0
  %v191 = vadd.f32 0.0, %v190
  %v192 = vpop.f32.mrb[0].mxu0
  %193 = vmatprep.mubr.f32.mxu0 0.0
  %194 = vmatmul.mubr.f32.gmra.mrb[0].mxu0 %v74
  %v195 = vpop.f32.mrb[0].mxu0
  %v196 = vadd.f32 0.0, %v195
  %v197 = vpop.f32.mrb[0].mxu0
  %198 = vmatprep.mubr.f32.mxu0 0.0
  %199 = vmatmul.mubr.f32.gmra.mrb[0].mxu0 %v77
  %v200 = vpop.f32.mrb[0].mxu0
  %v201 = vadd.f32 0.0, %v200
  %v202 = vpop.f32.mrb[0].mxu0
  %203 = vmatprep.mubr.f32.mxu0 0.0
  %204 = vmatmul.mubr.f32.gmra.mrb[0].mxu0 %v80
  %v205 = vpop.f32.mrb[0].mxu0
  %v206 = vadd.f32 0.0, %v205
  %v207 = vpop.f32.mrb[0].mxu0
  %208 = vmatprep.mubr.f32.mxu0 0.0
  %209 = vmatmul.mubr.f32.gmra.mrb[0].mxu0 %v83
  %v210 = vpop.f32.mrb[0].mxu0
  %v211 = vadd.f32 0.0, %v210
  %v212 = vpop.f32.mrb[0].mxu0
  %213 = vmatprep.mubr.f32.mxu0 0.0
  %214 = vmatmul.mubr.f32.gmra.mrb[0].mxu0 %v86
  %v215 = vpop.f32.mrb[0].mxu0
  %v216 = vadd.f32 0.0, %v215
  %v217 = vpop.f32.mrb[0].mxu0
  %218 = vmatprep.mubr.f32.mxu0 0.0
  %219 = vmatmul.mubr.f32.gmra.mrb[0].mxu0 %v89
  %v220 = vpop.f32.mrb[0].mxu0
  %v221 = vadd.f32 0.0, %v220
  %v222 = vpop.f32.mrb[0].mxu0
  %223 = vmatprep.mubr.f32.mxu0 0.0
  %224 = vmatmul.mubr.f32.gmra.mrb[0].mxu0 %v92
  %v225 = vpop.f32.mrb[0].mxu0
  %v226 = vadd.f32 0.0, %v225
  %v227 = vpop.f32.mrb[0].mxu0
  %228 = vmatprep.mubr.f32.mxu0 0.0
  %229 = vmatmul.mubr.f32.gmra.mrb[0].mxu0 %v95
  %v230 = vpop.f32.mrb[0].mxu0
  %v231 = vadd.f32 0.0, %v230
  %v232 = vpop.f32.mrb[0].mxu0
  %233 = vmatprep.mubr.f32.mxu0 0.0
  %234 = vmatmul.mubr.f32.gmra.mrb[0].mxu0 %v98
  %v235 = vpop.f32.mrb[0].mxu0
  %v236 = vadd.f32 0.0, %v235
  %v237 = vpop.f32.mrb[0].mxu0
  %238 = vmatprep.mubr.f32.mxu0 0.0
  %239 = vmatmul.mubr.f32.gmra.mrb[0].mxu0 %v101
  %v240 = vpop.f32.mrb[0].mxu0
  %v241 = vadd.f32 0.0, %v240
  %v242 = vpop.f32.mrb[0].mxu0
  %243 = vmatprep.mubr.f32.mxu0 0.0
  %244 = vmatmul.mubr.f32.gmra.mrb[0].mxu0 %v104
  %v245 = vpop.f32.mrb[0].mxu0
  %v246 = vadd.f32 0.0, %v245
  %v247 = vpop.f32.mrb[0].mxu0
  %248 = vmatprep.mubr.f32.mxu0 0.0
  %249 = vmatmul.mubr.f32.gmra.mrb[0].mxu0 %v107
  %v250 = vpop.f32.mrb[0].mxu0
  %v251 = vadd.f32 0.0, %v250
  %v252 = vpop.f32.mrb[0].mxu0
  %253 = vdwg.mxu0
  %v255 = vsel %vm60, %v20, 0
  %v258 = vsel %vm60, %v21, 0
  %v261 = vsel %vm60, %v22, 0
  %v264 = vsel %vm60, %v23, 0
  %v267 = vsel %vm60, %v24, 0
  %v270 = vsel %vm60, %v25, 0
  %v273 = vsel %vm60, %v26, 0
  %v276 = vsel %vm60, %v27, 0
  %v279 = vsel %vm60, %v28, 0
  %v282 = vsel %vm60, %v29, 0
  %v285 = vsel %vm60, %v30, 0
  %v288 = vsel %vm60, %v31, 0
  %v291 = vsel %vm60, %v32, 0
  %v294 = vsel %vm60, %v33, 0
  %v297 = vsel %vm60, %v34, 0
  %v300 = vsel %vm60, %v35, 0
  %302 = vmatprep.subr.mxu0 0.0
  %303 = vmatpush1.msra.mxu0 %v36
  %304 = vmatprep.subr.mxu0 0.0
  %305 = vmatpush1.msra.mxu0 %v37
  %306 = vmatprep.subr.mxu0 0.0
  %307 = vmatpush1.msra.mxu0 %v38
  %308 = vmatprep.subr.mxu0 0.0
  %309 = vmatpush1.msra.mxu0 %v39
  %310 = vmatprep.subr.mxu0 0.0
  %311 = vmatpush1.msra.mxu0 0.0
  %312 = vmatprep.subr.mxu0 0.0
  %313 = vmatpush1.msra.mxu0 0.0
  %314 = vmatprep.subr.mxu0 0.0
  %315 = vmatpush1.msra.mxu0 0.0
  %316 = vmatprep.subr.mxu0 0.0
  %317 = vmatpush1.msra.mxu0 0.0
  %318 = vmatprep.subr.mxu0 0.0
  %319 = vmatpush1.msra.mxu0 0.0
  %320 = vmatprep.subr.mxu0 0.0
  %321 = vmatpush1.msra.mxu0 0.0
  %322 = vmatprep.subr.mxu0 0.0
  %323 = vmatpush1.msra.mxu0 0.0
  %324 = vmatprep.subr.mxu0 0.0
  %325 = vmatpush1.msra.mxu0 0.0
  %326 = vmatprep.subr.mxu0 0.0
  %327 = vmatpush1.msra.mxu0 0.0
  %328 = vmatprep.subr.mxu0 0.0
  %329 = vmatpush1.msra.mxu0 0.0
  %330 = vmatprep.subr.mxu0 0.0
  %331 = vmatpush1.msra.mxu0 0.0
  %332 = vmatprep.subr.mxu0 0.0
  %333 = vmatpush1.msra.mxu0 0.0
  %334 = vmatprep.subr.mxu0 0.0
  %335 = vmatpush1.msra.mxu0 0.0
  %336 = vmatprep.subr.mxu0 0.0
  %337 = vmatpush1.msra.mxu0 0.0
  %338 = vmatprep.subr.mxu0 0.0
  %339 = vmatpush1.msra.mxu0 0.0
  %340 = vmatprep.subr.mxu0 0.0
  %341 = vmatpush1.msra.mxu0 0.0
  %342 = vmatprep.subr.mxu0 0.0
  %343 = vmatpush1.msra.mxu0 0.0
  %344 = vmatprep.subr.mxu0 0.0
  %345 = vmatpush1.msra.mxu0 0.0
  %346 = vmatprep.subr.mxu0 0.0
  %347 = vmatpush1.msra.mxu0 0.0
  %348 = vmatprep.subr.mxu0 0.0
  %349 = vmatpush1.msra.mxu0 0.0
  %350 = vmatprep.subr.mxu0 0.0
  %351 = vmatpush1.msra.mxu0 0.0
  %352 = vmatprep.subr.mxu0 0.0
  %353 = vmatpush1.msra.mxu0 0.0
  %354 = vmatprep.subr.mxu0 0.0
  %355 = vmatpush1.msra.mxu0 0.0
  %356 = vmatprep.subr.mxu0 0.0
  %357 = vmatpush1.msra.mxu0 0.0
  %358 = vmatprep.subr.mxu0 0.0
  %359 = vmatpush1.msra.mxu0 0.0
  %360 = vmatprep.subr.mxu0 0.0
  %361 = vmatpush1.msra.mxu0 0.0
  %362 = vmatprep.subr.mxu0 0.0
  %363 = vmatpush1.msra.mxu0 0.0
  %364 = vmatprep.subr.mxu0 0.0
  %365 = vmatpush1.msra.mxu0 0.0
  %366 = vmatprep.mubr.f32.mxu0 0.0
  %367 = vmatmul.mubr.f32.gmra.mrb[0].mxu0 %v255
  %v368 = vpop.f32.mrb[0].mxu0
  %v369 = vadd.f32 %v176, %v368
  %v370 = vpop.f32.mrb[0].mxu0
  %371 = vmatprep.mubr.f32.mxu0 0.0
  %372 = vmatmul.mubr.f32.gmra.mrb[0].mxu0 %v258
  %v373 = vpop.f32.mrb[0].mxu0
  %v374 = vadd.f32 %v181, %v373
  %v375 = vpop.f32.mrb[0].mxu0
  %376 = vmatprep.mubr.f32.mxu0 0.0
  %377 = vmatmul.mubr.f32.gmra.mrb[0].mxu0 %v261
  %v378 = vpop.f32.mrb[0].mxu0
  %v379 = vadd.f32 %v186, %v378
  %v380 = vpop.f32.mrb[0].mxu0
  %381 = vmatprep.mubr.f32.mxu0 0.0
  %382 = vmatmul.mubr.f32.gmra.mrb[0].mxu0 %v264
  %v383 = vpop.f32.mrb[0].mxu0
  %v384 = vadd.f32 %v191, %v383
  %v385 = vpop.f32.mrb[0].mxu0
  %386 = vmatprep.mubr.f32.mxu0 0.0
  %387 = vmatmul.mubr.f32.gmra.mrb[0].mxu0 %v267
  %v388 = vpop.f32.mrb[0].mxu0
  %v389 = vadd.f32 %v196, %v388
  %v390 = vpop.f32.mrb[0].mxu0
  %391 = vmatprep.mubr.f32.mxu0 0.0
  %392 = vmatmul.mubr.f32.gmra.mrb[0].mxu0 %v270
  %v393 = vpop.f32.mrb[0].mxu0
  %v394 = vadd.f32 %v201, %v393
  %v395 = vpop.f32.mrb[0].mxu0
  %396 = vmatprep.mubr.f32.mxu0 0.0
  %397 = vmatmul.mubr.f32.gmra.mrb[0].mxu0 %v273
  %v398 = vpop.f32.mrb[0].mxu0
  %v399 = vadd.f32 %v206, %v398
  %v400 = vpop.f32.mrb[0].mxu0
  %401 = vmatprep.mubr.f32.mxu0 0.0
  %402 = vmatmul.mubr.f32.gmra.mrb[0].mxu0 %v276
  %v403 = vpop.f32.mrb[0].mxu0
  %v404 = vadd.f32 %v211, %v403
  %v405 = vpop.f32.mrb[0].mxu0
  %406 = vmatprep.mubr.f32.mxu0 0.0
  %407 = vmatmul.mubr.f32.gmra.mrb[0].mxu0 %v279
  %v408 = vpop.f32.mrb[0].mxu0
  %v409 = vadd.f32 %v216, %v408
  %v410 = vpop.f32.mrb[0].mxu0
  %411 = vmatprep.mubr.f32.mxu0 0.0
  %412 = vmatmul.mubr.f32.gmra.mrb[0].mxu0 %v282
  %v413 = vpop.f32.mrb[0].mxu0
  %v414 = vadd.f32 %v221, %v413
  %v415 = vpop.f32.mrb[0].mxu0
  %416 = vmatprep.mubr.f32.mxu0 0.0
  %417 = vmatmul.mubr.f32.gmra.mrb[0].mxu0 %v285
  %v418 = vpop.f32.mrb[0].mxu0
  %v419 = vadd.f32 %v226, %v418
  %v420 = vpop.f32.mrb[0].mxu0
  %421 = vmatprep.mubr.f32.mxu0 0.0
  %422 = vmatmul.mubr.f32.gmra.mrb[0].mxu0 %v288
  %v423 = vpop.f32.mrb[0].mxu0
  %v424 = vadd.f32 %v231, %v423
  %v425 = vpop.f32.mrb[0].mxu0
  %426 = vmatprep.mubr.f32.mxu0 0.0
  %427 = vmatmul.mubr.f32.gmra.mrb[0].mxu0 %v291
  %v428 = vpop.f32.mrb[0].mxu0
  %v429 = vadd.f32 %v236, %v428
  %v430 = vpop.f32.mrb[0].mxu0
  %431 = vmatprep.mubr.f32.mxu0 0.0
  %432 = vmatmul.mubr.f32.gmra.mrb[0].mxu0 %v294
  %v433 = vpop.f32.mrb[0].mxu0
  %v434 = vadd.f32 %v241, %v433
  %v435 = vpop.f32.mrb[0].mxu0
  %436 = vmatprep.mubr.f32.mxu0 0.0
  %437 = vmatmul.mubr.f32.gmra.mrb[0].mxu0 %v297
  %v438 = vpop.f32.mrb[0].mxu0
  %v439 = vadd.f32 %v246, %v438
  %v440 = vpop.f32.mrb[0].mxu0
  %441 = vmatprep.mubr.f32.mxu0 0.0
  %442 = vmatmul.mubr.f32.gmra.mrb[0].mxu0 %v300
  %v443 = vpop.f32.mrb[0].mxu0
  %v444 = vadd.f32 %v251, %v443
  %v445 = vpop.f32.mrb[0].mxu0
  %446 = vdwg.mxu0
  %v447 = vld [vmem:[%s4] sm:$0x1]
  %v449 = vlaneseq
  %v450 = vshrl.u32 %v449, 7
  %v451 = vsub.s32 0, %v450
  %v452 = vrot.slane %v447, %v451
  %v454 = vadd.f32 %v369, %v452
  %v455 = vadd.f32 %v374, %v452
  %v456 = vadd.f32 %v379, %v452
  %v457 = vadd.f32 %v384, %v452
  %v458 = vadd.f32 %v389, %v452
  %v459 = vadd.f32 %v394, %v452
  %v460 = vadd.f32 %v399, %v452
  %v461 = vadd.f32 %v404, %v452
  %v462 = vadd.f32 %v409, %v452
  %v463 = vadd.f32 %v414, %v452
  %v464 = vadd.f32 %v419, %v452
  %v465 = vadd.f32 %v424, %v452
  %v466 = vadd.f32 %v429, %v452
  %v467 = vadd.f32 %v434, %v452
  %v468 = vadd.f32 %v439, %v452
  %v469 = vadd.f32 %v444, %v452
  %470 = vmax.xlane.f32.xlu0 %v454
  %v471 = vpop.xlane.xlu0 %470
  %472 = vmax.xlane.f32.xlu0 %v455
  %v473 = vpop.xlane.xlu0 %472
  %474 = vmax.xlane.f32.xlu0 %v456
  %v475 = vpop.xlane.xlu0 %474
  %476 = vmax.xlane.f32.xlu0 %v457
  %v477 = vpop.xlane.xlu0 %476
  %478 = vmax.xlane.f32.xlu0 %v458
  %v479 = vpop.xlane.xlu0 %478
  %480 = vmax.xlane.f32.xlu0 %v459
  %v481 = vpop.xlane.xlu0 %480
  %482 = vmax.xlane.f32.xlu0 %v460
  %v483 = vpop.xlane.xlu0 %482
  %484 = vmax.xlane.f32.xlu0 %v461
  %v485 = vpop.xlane.xlu0 %484
  %486 = vmax.xlane.f32.xlu0 %v462
  %v487 = vpop.xlane.xlu0 %486
  %488 = vmax.xlane.f32.xlu0 %v463
  %v489 = vpop.xlane.xlu0 %488
  %490 = vmax.xlane.f32.xlu0 %v464
  %v491 = vpop.xlane.xlu0 %490
  %492 = vmax.xlane.f32.xlu0 %v465
  %v493 = vpop.xlane.xlu0 %492
  %494 = vmax.xlane.f32.xlu0 %v466
  %v495 = vpop.xlane.xlu0 %494
  %496 = vmax.xlane.f32.xlu0 %v467
  %v497 = vpop.xlane.xlu0 %496
  %498 = vmax.xlane.f32.xlu0 %v468
  %v499 = vpop.xlane.xlu0 %498
  %500 = vmax.xlane.f32.xlu0 %v469
  %v501 = vpop.xlane.xlu0 %500
  %v502 = vsub.f32 %v454, %v471
  %v503 = vsub.f32 %v455, %v473
  %v504 = vsub.f32 %v456, %v475
  %v505 = vsub.f32 %v457, %v477
  %v506 = vsub.f32 %v458, %v479
  %v507 = vsub.f32 %v459, %v481
  %v508 = vsub.f32 %v460, %v483
  %v509 = vsub.f32 %v461, %v485
  %v510 = vsub.f32 %v462, %v487
  %v511 = vsub.f32 %v463, %v489
  %v512 = vsub.f32 %v464, %v491
  %v513 = vsub.f32 %v465, %v493
  %v514 = vsub.f32 %v466, %v495
  %v515 = vsub.f32 %v467, %v497
  %v516 = vsub.f32 %v468, %v499
  %v517 = vsub.f32 %v469, %v501
  %v518 = vmul.f32 %v502, 1.442695
  %v519 = vpow.pop %v518
  %v520 = vmul.f32 %v503, 1.442695
  %v521 = vpow.pop %v520
  %v522 = vmul.f32 %v504, 1.442695
  %v523 = vpow.pop %v522
  %v524 = vmul.f32 %v505, 1.442695
  %v525 = vpow.pop %v524
  %v526 = vmul.f32 %v506, 1.442695
  %v527 = vpow.pop %v526
  %v528 = vmul.f32 %v507, 1.442695
  %v529 = vpow.pop %v528
  %v530 = vmul.f32 %v508, 1.442695
  %v531 = vpow.pop %v530
  %v532 = vmul.f32 %v509, 1.442695
  %v533 = vpow.pop %v532
  %v534 = vmul.f32 %v510, 1.442695
  %v535 = vpow.pop %v534
  %v536 = vmul.f32 %v511, 1.442695
  %v537 = vpow.pop %v536
  %v538 = vmul.f32 %v512, 1.442695
  %v539 = vpow.pop %v538
  %v540 = vmul.f32 %v513, 1.442695
  %v541 = vpow.pop %v540
  %v542 = vmul.f32 %v514, 1.442695
  %v543 = vpow.pop %v542
  %v544 = vmul.f32 %v515, 1.442695
  %v545 = vpow.pop %v544
  %v546 = vmul.f32 %v516, 1.442695
  %v547 = vpow.pop %v546
  %v548 = vmul.f32 %v517, 1.442695
  %v549 = vpow.pop %v548
  %550 = vadd.xlane.f32.xlu0 %v519
  %v551 = vpop.xlane.xlu0 %550
  %552 = vadd.xlane.f32.xlu0 %v521
  %v553 = vpop.xlane.xlu0 %552
  %554 = vadd.xlane.f32.xlu0 %v523
  %v555 = vpop.xlane.xlu0 %554
  %556 = vadd.xlane.f32.xlu0 %v525
  %v557 = vpop.xlane.xlu0 %556
  %558 = vadd.xlane.f32.xlu0 %v527
  %v559 = vpop.xlane.xlu0 %558
  %560 = vadd.xlane.f32.xlu0 %v529
  %v561 = vpop.xlane.xlu0 %560
  %562 = vadd.xlane.f32.xlu0 %v531
  %v563 = vpop.xlane.xlu0 %562
  %564 = vadd.xlane.f32.xlu0 %v533
  %v565 = vpop.xlane.xlu0 %564
  %566 = vadd.xlane.f32.xlu0 %v535
  %v567 = vpop.xlane.xlu0 %566
  %568 = vadd.xlane.f32.xlu0 %v537
  %v569 = vpop.xlane.xlu0 %568
  %570 = vadd.xlane.f32.xlu0 %v539
  %v571 = vpop.xlane.xlu0 %570
  %572 = vadd.xlane.f32.xlu0 %v541
  %v573 = vpop.xlane.xlu0 %572
  %574 = vadd.xlane.f32.xlu0 %v543
  %v575 = vpop.xlane.xlu0 %574
  %576 = vadd.xlane.f32.xlu0 %v545
  %v577 = vpop.xlane.xlu0 %576
  %578 = vadd.xlane.f32.xlu0 %v547
  %v579 = vpop.xlane.xlu0 %578
  %580 = vadd.xlane.f32.xlu0 %v549
  %v581 = vpop.xlane.xlu0 %580
  %v582 = vlog2.pop %v551
  %v583 = vmul.f32 %v582, 0.6931472
  %v584 = vlog2.pop %v553
  %v585 = vmul.f32 %v584, 0.6931472
  %v586 = vlog2.pop %v555
  %v587 = vmul.f32 %v586, 0.6931472
  %v588 = vlog2.pop %v557
  %v589 = vmul.f32 %v588, 0.6931472
  %v590 = vlog2.pop %v559
  %v591 = vmul.f32 %v590, 0.6931472
  %v592 = vlog2.pop %v561
  %v593 = vmul.f32 %v592, 0.6931472
  %v594 = vlog2.pop %v563
  %v595 = vmul.f32 %v594, 0.6931472
  %v596 = vlog2.pop %v565
  %v597 = vmul.f32 %v596, 0.6931472
  %v598 = vlog2.pop %v567
  %v599 = vmul.f32 %v598, 0.6931472
  %v600 = vlog2.pop %v569
  %v601 = vmul.f32 %v600, 0.6931472
  %v602 = vlog2.pop %v571
  %v603 = vmul.f32 %v602, 0.6931472
  %v604 = vlog2.pop %v573
  %v605 = vmul.f32 %v604, 0.6931472
  %v606 = vlog2.pop %v575
  %v607 = vmul.f32 %v606, 0.6931472
  %v608 = vlog2.pop %v577
  %v609 = vmul.f32 %v608, 0.6931472
  %v610 = vlog2.pop %v579
  %v611 = vmul.f32 %v610, 0.6931472
  %v612 = vlog2.pop %v581
  %v613 = vmul.f32 %v612, 0.6931472
  %v614 = vsub.f32 %v502, %v583
  %v615 = vsub.f32 %v503, %v585
  %v616 = vsub.f32 %v504, %v587
  %v617 = vsub.f32 %v505, %v589
  %v618 = vsub.f32 %v506, %v591
  %v619 = vsub.f32 %v507, %v593
  %v620 = vsub.f32 %v508, %v595
  %v621 = vsub.f32 %v509, %v597
  %v622 = vsub.f32 %v510, %v599
  %v623 = vsub.f32 %v511, %v601
  %v624 = vsub.f32 %v512, %v603
  %v625 = vsub.f32 %v513, %v605
  %v626 = vsub.f32 %v514, %v607
  %v627 = vsub.f32 %v515, %v609
  %v628 = vsub.f32 %v516, %v611
  %v629 = vsub.f32 %v517, %v613
  %630 = vst [vmem:[%s5] sm:$0xff] %v614
  %631 = vst [vmem:[%s5 + $0x8] sm:$0xff] %v615
  %632 = vst [vmem:[%s5 + $0x10] sm:$0xff] %v616
  %633 = vst [vmem:[%s5 + $0x18] sm:$0xff] %v617
  %634 = vst [vmem:[%s5 + $0x20] sm:$0xff] %v618
  %635 = vst [vmem:[%s5 + $0x28] sm:$0xff] %v619
  %636 = vst [vmem:[%s5 + $0x30] sm:$0xff] %v620
  %637 = vst [vmem:[%s5 + $0x38] sm:$0xff] %v621
  %638 = vst [vmem:[%s5 + $0x40] sm:$0xff] %v622
  %639 = vst [vmem:[%s5 + $0x48] sm:$0xff] %v623
  %640 = vst [vmem:[%s5 + $0x50] sm:$0xff] %v624
  %641 = vst [vmem:[%s5 + $0x58] sm:$0xff] %v625
  %642 = vst [vmem:[%s5 + $0x60] sm:$0xff] %v626
  %643 = vst [vmem:[%s5 + $0x68] sm:$0xff] %v627
  %644 = vst [vmem:[%s5 + $0x70] sm:$0xff] %v628
  %645 = vst [vmem:[%s5 + $0x78] sm:$0xff] %v629
  // Predicated region
  $region22: #{forced_alignment_ctc_lstm_forward.9} parent=0 // pred_check
    _
  $region23: #{forced_alignment_ctc_lstm_forward.9} parent=0 // pred_check_branch
    %647 = sbr.rel (0) target = $region25
  $region24: #{forced_alignment_ctc_lstm_forward.9} parent=0 // pred_region
    _
  $region25: #{forced_alignment_ctc_lstm_forward.9} parent=0 // pred_fallthru
    _
  // Predicated region
  $region26: #{forced_alignment_ctc_lstm_forward.9} parent=0 // pred_check
    _
  $region27: #{forced_alignment_ctc_lstm_forward.9} parent=0 // pred_check_branch
    %649 = sbr.rel (0) target = $region29
  $region28: #{forced_alignment_ctc_lstm_forward.9} parent=0 // pred_region
    _
  $region29: #{forced_alignment_ctc_lstm_forward.9} parent=0 // pred_fallthru
    _

// kernel: forced_alignment_ctc_lstm_forward.6
$region0: #{forced_alignment_ctc_lstm_forward.6}
  #allocation0 [shape = 'u32[]', space=smem, size = 0x4, offset = 0x4, fixed_abs, tag = 'smem constant byte address 0x4 - core index']
  #allocation1 [shape = 'u32[144,128]{1,0:T(1,128)}', space=vmem, size = 0x12000, scoped, tag = 'internal scratch']
  #allocation2 [shape = 'f32[8,32]{1,0:T(8,128)}', space=vmem, size = 0x1000, scoped, tag = 'scratch operand']
  #allocation3 [shape = 'f32[8,32]{1,0:T(8,128)}', space=vmem, size = 0x1000, scoped, tag = 'scratch operand']
  #allocation4 [shape = 'f32[8,32]{1,0:T(8,128)}', space=vmem, size = 0x1000, scoped, tag = 'scratch operand']
  #allocation5 [shape = 'f32[8,32]{1,0:T(8,128)}', space=vmem, size = 0x1000, scoped, tag = 'scratch operand']
  %s0 = inlined_call_operand.vmem [shape: f32[16,8,128], index: 0, kind: input, shape index: {}]
  %s1 = inlined_call_operand.vmem [shape: f32[16,8,128], index: 1, kind: input, shape index: {}]
  %s2 = inlined_call_operand.vmem [shape: f32[32,128], index: 2, kind: input, shape index: {}]
  %s3 = inlined_call_operand.vmem [shape: f32[32,128], index: 3, kind: input, shape index: {}]
  %s4 = inlined_call_operand.vmem [shape: f32[16,8,32], index: 4, kind: output, shape index: {0}]
  %s5 = inlined_call_operand.vmem [shape: f32[16,8,32], index: 5, kind: output, shape index: {1}]
  %6 = xla_tuple %s4, %s5
  %s7 = sld [smem:[#allocation0]]
  $region38: #{forced_alignment_ctc_lstm_forward.6} parent=0
    _
  %s9 = ssub.s32 1, %s7
  %s10 = scalar_select 0, %s9, %s7
  // Predicated region
  $region2: #{forced_alignment_ctc_lstm_forward.6} parent=0 // pred_check
    _
  $region3: #{forced_alignment_ctc_lstm_forward.6} parent=0 // pred_check_branch
    %12 = sbr.rel (0) target = $region5
  $region4: #{forced_alignment_ctc_lstm_forward.6} parent=0 // pred_region
    _
  $region5: #{forced_alignment_ctc_lstm_forward.6} parent=0 // pred_fallthru
    _
  // Predicated region
  $region6: #{forced_alignment_ctc_lstm_forward.6} parent=0 // pred_check
    _
  $region7: #{forced_alignment_ctc_lstm_forward.6} parent=0 // pred_check_branch
    %14 = sbr.rel (0) target = $region9
  $region8: #{forced_alignment_ctc_lstm_forward.6} parent=0 // pred_region
    %s15 = ssub.s32 0, 0
    %s16 = smul.u32 16, %s15
    %p17 = scmp.lt.s32.totalorder %s16, 15
    %s18 = scalar_select %p17, %s16, 15
    %s19 = smul.addr %s18, 8
    %s20 = scalar_lea.vmem %s1, %s19
    %s21 = ssub.s32 0, 0
    %s22 = smul.u32 16, %s21
  $region9: #{forced_alignment_ctc_lstm_forward.6} parent=0 // pred_fallthru
    _
  // Predicated region
  $region10: #{forced_alignment_ctc_lstm_forward.6} parent=0 // pred_check
    _
  $region11: #{forced_alignment_ctc_lstm_forward.6} parent=0 // pred_check_branch
    %24 = sbr.rel (0) target = $region13
  $region12: #{forced_alignment_ctc_lstm_forward.6} parent=0 // pred_region
    _
  $region13: #{forced_alignment_ctc_lstm_forward.6} parent=0 // pred_fallthru
    _
  // Predicated region
  $region14: #{forced_alignment_ctc_lstm_forward.6} parent=0 // pred_check
    _
  $region15: #{forced_alignment_ctc_lstm_forward.6} parent=0 // pred_check_branch
    %26 = sbr.rel (0) target = $region17
  $region16: #{forced_alignment_ctc_lstm_forward.6} parent=0 // pred_region
    _
  $region17: #{forced_alignment_ctc_lstm_forward.6} parent=0 // pred_fallthru
    _
  %s27 = ssub.s32 0, 0
  %s28 = smul.u32 16, %s27
  %p29 = scmp.lt.s32.totalorder %s28, 15
  %s30 = scalar_select %p29, %s28, 15
  %s31 = smul.addr %s30, 8
  %s32 = scalar_lea.vmem %s1, %s31
  %s33 = ssub.s32 0, 0
  %s34 = smul.u32 16, %s33
  %p35 = scmp.lt.s32.totalorder %s34, 15
  %s36 = scalar_select %p35, %s34, 15
  %s37 = smul.addr %s36, 8
  %s38 = scalar_lea.vmem %s5, %s37
  %s39 = ssub.s32 0, 0
  %s40 = smul.u32 16, %s39
  %p41 = scmp.lt.s32.totalorder %s40, 15
  %s42 = scalar_select %p41, %s40, 15
  %s43 = smul.addr %s42, 8
  %s44 = scalar_lea.vmem %s1, %s43
  %s45 = ssub.s32 0, 0
  %s46 = smul.u32 16, %s45
  %s47 = ssub.s32 0, 0
  %s48 = smul.u32 16, %s47
  %p49 = scmp.lt.s32.totalorder %s48, 15
  %s50 = scalar_select %p49, %s48, 15
  %s51 = smul.addr %s50, 8
  %s52 = scalar_lea.vmem %s5, %s51
  %s53 = ssub.s32 0, 0
  %s54 = smul.u32 16, %s53
  %p55 = scmp.eq.s32.totalorder 0, 0
  // Predicated region
  $region18: #{forced_alignment_ctc_lstm_forward.6} parent=0 // pred_check
    %p56 = pneg %p55
  $region19: #{forced_alignment_ctc_lstm_forward.6} parent=0 // pred_check_branch
    %58 = sbr.rel (%p56) target = $region21
  $region20: #{forced_alignment_ctc_lstm_forward.6} parent=0 // pred_region
    %vm59 = vcmask 261120
    %60 = vst.msk [vmem:[#allocation2] sm:$0xff] %vm59, 0.0
    %61 = vst.msk [vmem:[#allocation3] sm:$0xff] %vm59, 0.0
    %62 = vst.msk [vmem:[#allocation4] sm:$0xff] %vm59, 0.0
    %63 = vst.msk [vmem:[#allocation5] sm:$0xff] %vm59, 0.0
  $region21: #{forced_alignment_ctc_lstm_forward.6} parent=0 // pred_fallthru
    _
  %v64 = vld [vmem:[%s0] sm:$0xff]
  %v65 = vld [vmem:[#allocation3] sm:$0xff]
  %v66 = vld [vmem:[#allocation2] sm:$0xff]
  %v67 = vld [vmem:[%s2] sm:$0xff]
  %v68 = vld [vmem:[%s2 + $0x8] sm:$0xff]
  %v69 = vld [vmem:[%s2 + $0x10] sm:$0xff]
  %v70 = vld [vmem:[%s2 + $0x18] sm:$0xff]
  %vm71 = vcmask 261120
  %v73 = vsel %vm71, %v66, 0
  %75 = vmatprep.subr.mxu0 0.0
  %76 = vmatpush1.msra.mxu0 %v67
  %77 = vmatprep.subr.mxu0 0.0
  %78 = vmatpush1.msra.mxu0 %v68
  %79 = vmatprep.subr.mxu0 0.0
  %80 = vmatpush1.msra.mxu0 %v69
  %81 = vmatprep.subr.mxu0 0.0
  %82 = vmatpush1.msra.mxu0 %v70
  %83 = vmatprep.subr.mxu0 0.0
  %84 = vmatpush1.msra.mxu0 0.0
  %85 = vmatprep.subr.mxu0 0.0
  %86 = vmatpush1.msra.mxu0 0.0
  %87 = vmatprep.subr.mxu0 0.0
  %88 = vmatpush1.msra.mxu0 0.0
  %89 = vmatprep.subr.mxu0 0.0
  %90 = vmatpush1.msra.mxu0 0.0
  %91 = vmatprep.subr.mxu0 0.0
  %92 = vmatpush1.msra.mxu0 0.0
  %93 = vmatprep.subr.mxu0 0.0
  %94 = vmatpush1.msra.mxu0 0.0
  %95 = vmatprep.subr.mxu0 0.0
  %96 = vmatpush1.msra.mxu0 0.0
  %97 = vmatprep.subr.mxu0 0.0
  %98 = vmatpush1.msra.mxu0 0.0
  %99 = vmatprep.subr.mxu0 0.0
  %100 = vmatpush1.msra.mxu0 0.0
  %101 = vmatprep.subr.mxu0 0.0
  %102 = vmatpush1.msra.mxu0 0.0
  %103 = vmatprep.subr.mxu0 0.0
  %104 = vmatpush1.msra.mxu0 0.0
  %105 = vmatprep.subr.mxu0 0.0
  %106 = vmatpush1.msra.mxu0 0.0
  %107 = vmatprep.subr.mxu0 0.0
  %108 = vmatpush1.msra.mxu0 0.0
  %109 = vmatprep.subr.mxu0 0.0
  %110 = vmatpush1.msra.mxu0 0.0
  %111 = vmatprep.subr.mxu0 0.0
  %112 = vmatpush1.msra.mxu0 0.0
  %113 = vmatprep.subr.mxu0 0.0
  %114 = vmatpush1.msra.mxu0 0.0
  %115 = vmatprep.subr.mxu0 0.0
  %116 = vmatpush1.msra.mxu0 0.0
  %117 = vmatprep.subr.mxu0 0.0
  %118 = vmatpush1.msra.mxu0 0.0
  %119 = vmatprep.subr.mxu0 0.0
  %120 = vmatpush1.msra.mxu0 0.0
  %121 = vmatprep.subr.mxu0 0.0
  %122 = vmatpush1.msra.mxu0 0.0
  %123 = vmatprep.subr.mxu0 0.0
  %124 = vmatpush1.msra.mxu0 0.0
  %125 = vmatprep.subr.mxu0 0.0
  %126 = vmatpush1.msra.mxu0 0.0
  %127 = vmatprep.subr.mxu0 0.0
  %128 = vmatpush1.msra.mxu0 0.0
  %129 = vmatprep.subr.mxu0 0.0
  %130 = vmatpush1.msra.mxu0 0.0
  %131 = vmatprep.subr.mxu0 0.0
  %132 = vmatpush1.msra.mxu0 0.0
  %133 = vmatprep.subr.mxu0 0.0
  %134 = vmatpush1.msra.mxu0 0.0
  %135 = vmatprep.subr.mxu0 0.0
  %136 = vmatpush1.msra.mxu0 0.0
  %137 = vmatprep.subr.mxu0 0.0
  %138 = vmatpush1.msra.mxu0 0.0
  %139 = vmatprep.mubr.f32.mxu0 0.0
  %140 = vmatmul.mubr.f32.gmra.mrb[0].mxu0 %v73
  %v141 = vpop.f32.mrb[0].mxu0
  %v142 = vadd.f32 0.0, %v141
  %v143 = vpop.f32.mrb[0].mxu0
  %144 = vdwg.mxu0
  %v145 = vadd.f32 %v64, %v142
  %v146 = vxor.u32 %v145, 2147483648
  %v147 = vmul.f32 %v146, 1.442695
  %v148 = vpow.pop %v147
  %v149 = vadd.f32 %v148, 1.0
  %v150 = vrcp.pop %v149
  %v151 = vmul.f32 1.0, %v150
  %v152 = vtanh.pop %v145
  %154 = vrot.lane.b32.xlu0 %v65, 32
  %v155 = vpop.permute.xlu0 %154
  %v157 = vmul.f32 %v151, %v155
  %159 = vrot.lane.b32.xlu0 %v152, 32
  %v160 = vpop.permute.xlu0 %159
  %v162 = vmul.f32 %v151, %v160
  %164 = vrot.lane.b32.xlu0 %v162, 32
  %v165 = vpop.permute.xlu0 %164
  %v167 = vadd.f32 %v157, %v165
  %v168 = vtanh.pop %v167
  %170 = vrot.lane.b32.xlu0 %v168, 32
  %v171 = vpop.permute.xlu0 %170
  %v173 = vmul.f32 %v151, %v171
  %175 = vrot.lane.b32.xlu0 %v173, 64
  %v176 = vpop.permute.xlu0 %175
  %178 = vst.msk [vmem:[#allocation2] sm:$0xff] %vm71, %v176
  %180 = vrot.lane.b32.xlu0 %v167, 96
  %v181 = vpop.permute.xlu0 %180
  %183 = vst.msk [vmem:[#allocation3] sm:$0xff] %vm71, %v181
  %184 = vst.msk [vmem:[%s4] sm:$0xff] %vm71, %v176
  %s185 = scalar_lea.vmem %s44, 120
  %v186 = vld [vmem:[%s185] sm:$0xff]
  %v187 = vld [vmem:[#allocation5] sm:$0xff]
  %v188 = vld [vmem:[#allocation4] sm:$0xff]
  %v189 = vld [vmem:[%s3] sm:$0xff]
  %v190 = vld [vmem:[%s3 + $0x8] sm:$0xff]
  %v191 = vld [vmem:[%s3 + $0x10] sm:$0xff]
  %v192 = vld [vmem:[%s3 + $0x18] sm:$0xff]
  %v194 = vsel %vm71, %v188, 0
  %196 = vmatprep.subr.mxu0 0.0
  %197 = vmatpush1.msra.mxu0 %v189
  %198 = vmatprep.subr.mxu0 0.0
  %199 = vmatpush1.msra.mxu0 %v190
  %200 = vmatprep.subr.mxu0 0.0
  %201 = vmatpush1.msra.mxu0 %v191
  %202 = vmatprep.subr.mxu0 0.0
  %203 = vmatpush1.msra.mxu0 %v192
  %204 = vmatprep.subr.mxu0 0.0
  %205 = vmatpush1.msra.mxu0 0.0
  %206 = vmatprep.subr.mxu0 0.0
  %207 = vmatpush1.msra.mxu0 0.0
  %208 = vmatprep.subr.mxu0 0.0
  %209 = vmatpush1.msra.mxu0 0.0
  %210 = vmatprep.subr.mxu0 0.0
  %211 = vmatpush1.msra.mxu0 0.0
  %212 = vmatprep.subr.mxu0 0.0
  %213 = vmatpush1.msra.mxu0 0.0
  %214 = vmatprep.subr.mxu0 0.0
  %215 = vmatpush1.msra.mxu0 0.0
  %216 = vmatprep.subr.mxu0 0.0
  %217 = vmatpush1.msra.mxu0 0.0
  %218 = vmatprep.subr.mxu0 0.0
  %219 = vmatpush1.msra.mxu0 0.0
  %220 = vmatprep.subr.mxu0 0.0
  %221 = vmatpush1.msra.mxu0 0.0
  %222 = vmatprep.subr.mxu0 0.0
  %223 = vmatpush1.msra.mxu0 0.0
  %224 = vmatprep.subr.mxu0 0.0
  %225 = vmatpush1.msra.mxu0 0.0
  %226 = vmatprep.subr.mxu0 0.0
  %227 = vmatpush1.msra.mxu0 0.0
  %228 = vmatprep.subr.mxu0 0.0
  %229 = vmatpush1.msra.mxu0 0.0
  %230 = vmatprep.subr.mxu0 0.0
  %231 = vmatpush1.msra.mxu0 0.0
  %232 = vmatprep.subr.mxu0 0.0
  %233 = vmatpush1.msra.mxu0 0.0
  %234 = vmatprep.subr.mxu0 0.0
  %235 = vmatpush1.msra.mxu0 0.0
  %236 = vmatprep.subr.mxu0 0.0
  %237 = vmatpush1.msra.mxu0 0.0
  %238 = vmatprep.subr.mxu0 0.0
  %239 = vmatpush1.msra.mxu0 0.0
  %240 = vmatprep.subr.mxu0 0.0
  %241 = vmatpush1.msra.mxu0 0.0
  %242 = vmatprep.subr.mxu0 0.0
  %243 = vmatpush1.msra.mxu0 0.0
  %244 = vmatprep.subr.mxu0 0.0
  %245 = vmatpush1.msra.mxu0 0.0
  %246 = vmatprep.subr.mxu0 0.0
  %247 = vmatpush1.msra.mxu0 0.0
  %248 = vmatprep.subr.mxu0 0.0
  %249 = vmatpush1.msra.mxu0 0.0
  %250 = vmatprep.subr.mxu0 0.0
  %251 = vmatpush1.msra.mxu0 0.0
  %252 = vmatprep.subr.mxu0 0.0
  %253 = vmatpush1.msra.mxu0 0.0
  %254 = vmatprep.subr.mxu0 0.0
  %255 = vmatpush1.msra.mxu0 0.0
  %256 = vmatprep.subr.mxu0 0.0
  %257 = vmatpush1.msra.mxu0 0.0
  %258 = vmatprep.subr.mxu0 0.0
  %259 = vmatpush1.msra.mxu0 0.0
  %260 = vmatprep.mubr.f32.mxu0 0.0
  %261 = vmatmul.mubr.f32.gmra.mrb[0].mxu0 %v194
  %v262 = vpop.f32.mrb[0].mxu0
  %v263 = vadd.f32 0.0, %v262
  %v264 = vpop.f32.mrb[0].mxu0
  %265 = vdwg.mxu0
  %v266 = vadd.f32 %v186, %v263
  %v267 = vxor.u32 %v266, 2147483648
  %v268 = vmul.f32 %v267, 1.442695
  %v269 = vpow.pop %v268
  %v270 = vadd.f32 %v269, 1.0
  %v271 = vrcp.pop %v270
  %v272 = vmul.f32 1.0, %v271
  %v273 = vtanh.pop %v266
  %275 = vrot.lane.b32.xlu0 %v187, 32
  %v276 = vpop.permute.xlu0 %275
  %v278 = vmul.f32 %v272, %v276
  %280 = vrot.lane.b32.xlu0 %v273, 32
  %v281 = vpop.permute.xlu0 %280
  %v283 = vmul.f32 %v272, %v281
  %285 = vrot.lane.b32.xlu0 %v283, 32
  %v286 = vpop.permute.xlu0 %285
  %v288 = vadd.f32 %v278, %v286
  %v289 = vtanh.pop %v288
  %291 = vrot.lane.b32.xlu0 %v289, 32
  %v292 = vpop.permute.xlu0 %291
  %v294 = vmul.f32 %v272, %v292
  %296 = vrot.lane.b32.xlu0 %v294, 64
  %v297 = vpop.permute.xlu0 %296
  %299 = vst.msk [vmem:[#allocation4] sm:$0xff] %vm71, %v297
  %301 = vrot.lane.b32.xlu0 %v288, 96
  %v302 = vpop.permute.xlu0 %301
  %304 = vst.msk [vmem:[#allocation5] sm:$0xff] %vm71, %v302
  %s305 = scalar_lea.vmem %s52, 120
  %306 = vst.msk [vmem:[%s305] sm:$0xff] %vm71, %v297
  %s307 = scalar_lea.vmem %s0, 8
  %v308 = vld [vmem:[%s307] sm:$0xff]
  %v309 = vld [vmem:[#allocation3] sm:$0xff]
  %v310 = vld [vmem:[#allocation2] sm:$0xff]
  %v311 = vld [vmem:[%s2] sm:$0xff]
  %v312 = vld [vmem:[%s2 + $0x8] sm:$0xff]
  %v313 = vld [vmem:[%s2 + $0x10] sm:$0xff]
  %v314 = vld [vmem:[%s2 + $0x18] sm:$0xff]
  %v316 = vsel %vm71, %v310, 0
  %318 = vmatprep.subr.mxu0 0.0
  %319 = vmatpush1.msra.mxu0 %v311
  %320 = vmatprep.subr.mxu0 0.0
  %321 = vmatpush1.msra.mxu0 %v312
  %322 = vmatprep.subr.mxu0 0.0
  %323 = vmatpush1.msra.mxu0 %v313
  %324 = vmatprep.subr.mxu0 0.0
  %325 = vmatpush1.msra.mxu0 %v314
  %326 = vmatprep.subr.mxu0 0.0
  %327 = vmatpush1.msra.mxu0 0.0
  %328 = vmatprep.subr.mxu0 0.0
  %329 = vmatpush1.msra.mxu0 0.0
  %330 = vmatprep.subr.mxu0 0.0
  %331 = vmatpush1.msra.mxu0 0.0
  %332 = vmatprep.subr.mxu0 0.0
  %333 = vmatpush1.msra.mxu0 0.0
  %334 = vmatprep.subr.mxu0 0.0
  %335 = vmatpush1.msra.mxu0 0.0
  %336 = vmatprep.subr.mxu0 0.0
  %337 = vmatpush1.msra.mxu0 0.0
  %338 = vmatprep.subr.mxu0 0.0
  %339 = vmatpush1.msra.mxu0 0.0
  %340 = vmatprep.subr.mxu0 0.0
  %341 = vmatpush1.msra.mxu0 0.0
  %342 = vmatprep.subr.mxu0 0.0
  %343 = vmatpush1.msra.mxu0 0.0
  %344 = vmatprep.subr.mxu0 0.0
  %345 = vmatpush1.msra.mxu0 0.0
  %346 = vmatprep.subr.mxu0 0.0
  %347 = vmatpush1.msra.mxu0 0.0
  %348 = vmatprep.subr.mxu0 0.0
  %349 = vmatpush1.msra.mxu0 0.0
  %350 = vmatprep.subr.mxu0 0.0
  %351 = vmatpush1.msra.mxu0 0.0
  %352 = vmatprep.subr.mxu0 0.0
  %353 = vmatpush1.msra.mxu0 0.0
  %354 = vmatprep.subr.mxu0 0.0
  %355 = vmatpush1.msra.mxu0 0.0
  %356 = vmatprep.subr.mxu0 0.0
  %357 = vmatpush1.msra.mxu0 0.0
  %358 = vmatprep.subr.mxu0 0.0
  %359 = vmatpush1.msra.mxu0 0.0
  %360 = vmatprep.subr.mxu0 0.0
  %361 = vmatpush1.msra.mxu0 0.0
  %362 = vmatprep.subr.mxu0 0.0
  %363 = vmatpush1.msra.mxu0 0.0
  %364 = vmatprep.subr.mxu0 0.0
  %365 = vmatpush1.msra.mxu0 0.0
  %366 = vmatprep.subr.mxu0 0.0
  %367 = vmatpush1.msra.mxu0 0.0
  %368 = vmatprep.subr.mxu0 0.0
  %369 = vmatpush1.msra.mxu0 0.0
  %370 = vmatprep.subr.mxu0 0.0
  %371 = vmatpush1.msra.mxu0 0.0
  %372 = vmatprep.subr.mxu0 0.0
  %373 = vmatpush1.msra.mxu0 0.0
  %374 = vmatprep.subr.mxu0 0.0
  %375 = vmatpush1.msra.mxu0 0.0
  %376 = vmatprep.subr.mxu0 0.0
  %377 = vmatpush1.msra.mxu0 0.0
  %378 = vmatprep.subr.mxu0 0.0
  %379 = vmatpush1.msra.mxu0 0.0
  %380 = vmatprep.subr.mxu0 0.0
  %381 = vmatpush1.msra.mxu0 0.0
  %382 = vmatprep.mubr.f32.mxu0 0.0
  %383 = vmatmul.mubr.f32.gmra.mrb[0].mxu0 %v316
  %v384 = vpop.f32.mrb[0].mxu0
  %v385 = vadd.f32 0.0, %v384
  %v386 = vpop.f32.mrb[0].mxu0
  %387 = vdwg.mxu0
  %v388 = vadd.f32 %v308, %v385
  %v389 = vxor.u32 %v388, 2147483648
  %v390 = vmul.f32 %v389, 1.442695
  %v391 = vpow.pop %v390
  %v392 = vadd.f32 %v391, 1.0
  %v393 = vrcp.pop %v392
  %v394 = vmul.f32 1.0, %v393
  %v395 = vtanh.pop %v388
  %397 = vrot.lane.b32.xlu0 %v309, 32
  %v398 = vpop.permute.xlu0 %397
  %v400 = vmul.f32 %v394, %v398
  %402 = vrot.lane.b32.xlu0 %v395, 32
  %v403 = vpop.permute.xlu0 %402
  %v405 = vmul.f32 %v394, %v403
  %407 = vrot.lane.b32.xlu0 %v405, 32
  %v408 = vpop.permute.xlu0 %407
  %v410 = vadd.f32 %v400, %v408
  %v411 = vtanh.pop %v410
  %413 = vrot.lane.b32.xlu0 %v411, 32
  %v414 = vpop.permute.xlu0 %413
  %v416 = vmul.f32 %v394, %v414
  %418 = vrot.lane.b32.xlu0 %v416, 64
  %v419 = vpop.permute.xlu0 %418
  %421 = vst.msk [vmem:[#allocation2] sm:$0xff] %vm71, %v419
  %423 = vrot.lane.b32.xlu0 %v410, 96
  %v424 = vpop.permute.xlu0 %423
  %426 = vst.msk [vmem:[#allocation3] sm:$0xff] %vm71, %v424
  %s427 = scalar_lea.vmem %s4, 8
  %428 = vst.msk [vmem:[%s427] sm:$0xff] %vm71, %v419
  %s429 = scalar_lea.vmem %s44, 112
  %v430 = vld [vmem:[%s429] sm:$0xff]
  %v431 = vld [vmem:[#allocation5] sm:$0xff]
  %v432 = vld [vmem:[#allocation4] sm:$0xff]
  %v433 = vld [vmem:[%s3] sm:$0xff]
  %v434 = vld [vmem:[%s3 + $0x8] sm:$0xff]
  %v435 = vld [vmem:[%s3 + $0x10] sm:$0xff]
  %v436 = vld [vmem:[%s3 + $0x18] sm:$0xff]
  %v438 = vsel %vm71, %v432, 0
  %440 = vmatprep.subr.mxu0 0.0
  %441 = vmatpush1.msra.mxu0 %v433
  %442 = vmatprep.subr.mxu0 0.0
  %443 = vmatpush1.msra.mxu0 %v434
  %444 = vmatprep.subr.mxu0 0.0
  %445 = vmatpush1.msra.mxu0 %v435
  %446 = vmatprep.subr.mxu0 0.0
  %447 = vmatpush1.msra.mxu0 %v436
  %448 = vmatprep.subr.mxu0 0.0
  %449 = vmatpush1.msra.mxu0 0.0
  %450 = vmatprep.subr.mxu0 0.0
  %451 = vmatpush1.msra.mxu0 0.0
  %452 = vmatprep.subr.mxu0 0.0
  %453 = vmatpush1.msra.mxu0 0.0
  %454 = vmatprep.subr.mxu0 0.0
  %455 = vmatpush1.msra.mxu0 0.0
  %456 = vmatprep.subr.mxu0 0.0
  %457 = vmatpush1.msra.mxu0 0.0
  %458 = vmatprep.subr.mxu0 0.0
  %459 = vmatpush1.msra.mxu0 0.0
  %460 = vmatprep.subr.mxu0 0.0
  %461 = vmatpush1.msra.mxu0 0.0
  %462 = vmatprep.subr.mxu0 0.0
  %463 = vmatpush1.msra.mxu0 0.0
  %464 = vmatprep.subr.mxu0 0.0
  %465 = vmatpush1.msra.mxu0 0.0
  %466 = vmatprep.subr.mxu0 0.0
  %467 = vmatpush1.msra.mxu0 0.0
  %468 = vmatprep.subr.mxu0 0.0
  %469 = vmatpush1.msra.mxu0 0.0
  %470 = vmatprep.subr.mxu0 0.0
  %471 = vmatpush1.msra.mxu0 0.0
  %472 = vmatprep.subr.mxu0 0.0
  %473 = vmatpush1.msra.mxu0 0.0
  %474 = vmatprep.subr.mxu0 0.0
  %475 = vmatpush1.msra.mxu0 0.0
  %476 = vmatprep.subr.mxu0 0.0
  %477 = vmatpush1.msra.mxu0 0.0
  %478 = vmatprep.subr.mxu0 0.0
  %479 = vmatpush1.msra.mxu0 0.0
  %480 = vmatprep.subr.mxu0 0.0
  %481 = vmatpush1.msra.mxu0 0.0
  %482 = vmatprep.subr.mxu0 0.0
  %483 = vmatpush1.msra.mxu0 0.0
  %484 = vmatprep.subr.mxu0 0.0
  %485 = vmatpush1.msra.mxu0 0.0
  %486 = vmatprep.subr.mxu0 0.0
  %487 = vmatpush1.msra.mxu0 0.0
  %488 = vmatprep.subr.mxu0 0.0
  %489 = vmatpush1.msra.mxu0 0.0
  %490 = vmatprep.subr.mxu0 0.0
  %491 = vmatpush1.msra.mxu0 0.0
  %492 = vmatprep.subr.mxu0 0.0
  %493 = vmatpush1.msra.mxu0 0.0
  %494 = vmatprep.subr.mxu0 0.0
  %495 = vmatpush1.msra.mxu0 0.0
  %496 = vmatprep.subr.mxu0 0.0
  %497 = vmatpush1.msra.mxu0 0.0
  %498 = vmatprep.subr.mxu0 0.0
  %499 = vmatpush1.msra.mxu0 0.0
  %500 = vmatprep.subr.mxu0 0.0
  %501 = vmatpush1.msra.mxu0 0.0
  %502 = vmatprep.subr.mxu0 0.0
  %503 = vmatpush1.msra.mxu0 0.0
  %504 = vmatprep.mubr.f32.mxu0 0.0
  %505 = vmatmul.mubr.f32.gmra.mrb[0].mxu0 %v438
  %v506 = vpop.f32.mrb[0].mxu0
  %v507 = vadd.f32 0.0, %v506
  %v508 = vpop.f32.mrb[0].mxu0
  %509 = vdwg.mxu0
  %v510 = vadd.f32 %v430, %v507
  %v511 = vxor.u32 %v510, 2147483648
  %v512 = vmul.f32 %v511, 1.442695
  %v513 = vpow.pop %v512
  %v514 = vadd.f32 %v513, 1.0
  %v515 = vrcp.pop %v514
  %v516 = vmul.f32 1.0, %v515
  %v517 = vtanh.pop %v510
  %519 = vrot.lane.b32.xlu0 %v431, 32
  %v520 = vpop.permute.xlu0 %519
  %v522 = vmul.f32 %v516, %v520
  %524 = vrot.lane.b32.xlu0 %v517, 32
  %v525 = vpop.permute.xlu0 %524
  %v527 = vmul.f32 %v516, %v525
  %529 = vrot.lane.b32.xlu0 %v527, 32
  %v530 = vpop.permute.xlu0 %529
  %v532 = vadd.f32 %v522, %v530
  %v533 = vtanh.pop %v532
  %535 = vrot.lane.b32.xlu0 %v533, 32
  %v536 = vpop.permute.xlu0 %535
  %v538 = vmul.f32 %v516, %v536
  %540 = vrot.lane.b32.xlu0 %v538, 64
  %v541 = vpop.permute.xlu0 %540
  %543 = vst.msk [vmem:[#allocation4] sm:$0xff] %vm71, %v541
  %545 = vrot.lane.b32.xlu0 %v532, 96
  %v546 = vpop.permute.xlu0 %545
  %548 = vst.msk [vmem:[#allocation5] sm:$0xff] %vm71, %v546
  %s549 = scalar_lea.vmem %s52, 112
  %550 = vst.msk [vmem:[%s549] sm:$0xff] %vm71, %v541
  %s551 = scalar_lea.vmem %s0, 16
  %v552 = vld [vmem:[%s551] sm:$0xff]
  %v553 = vld [vmem:[#allocation3] sm:$0xff]
  %v554 = vld [vmem:[#allocation2] sm:$0xff]
  %v555 = vld [vmem:[%s2] sm:$0xff]
  %v556 = vld [vmem:[%s2 + $0x8] sm:$0xff]
  %v557 = vld [vmem:[%s2 + $0x10] sm:$0xff]
  %v558 = vld [vmem:[%s2 + $0x18] sm:$0xff]
  %v560 = vsel %vm71, %v554, 0
  %562 = vmatprep.subr.mxu0 0.0
  %563 = vmatpush1.msra.mxu0 %v555
  %564 = vmatprep.subr.mxu0 0.0
  %565 = vmatpush1.msra.mxu0 %v556
  %566 = vmatprep.subr.mxu0 0.0
  %567 = vmatpush1.msra.mxu0 %v557
  %568 = vmatprep.subr.mxu0 0.0
  %569 = vmatpush1.msra.mxu0 %v558
  %570 = vmatprep.subr.mxu0 0.0
  %571 = vmatpush1.msra.mxu0 0.0
  %572 = vmatprep.subr.mxu0 0.0
  %573 = vmatpush1.msra.mxu0 0.0
  %574 = vmatprep.subr.mxu0 0.0
  %575 = vmatpush1.msra.mxu0 0.0
  %576 = vmatprep.subr.mxu0 0.0
  %577 = vmatpush1.msra.mxu0 0.0
  %578 = vmatprep.subr.mxu0 0.0
  %579 = vmatpush1.msra.mxu0 0.0
  %580 = vmatprep.subr.mxu0 0.0
  %581 = vmatpush1.msra.mxu0 0.0
  %582 = vmatprep.subr.mxu0 0.0
  %583 = vmatpush1.msra.mxu0 0.0
  %584 = vmatprep.subr.mxu0 0.0
  %585 = vmatpush1.msra.mxu0 0.0
  %586 = vmatprep.subr.mxu0 0.0
  %587 = vmatpush1.msra.mxu0 0.0
  %588 = vmatprep.subr.mxu0 0.0
  %589 = vmatpush1.msra.mxu0 0.0
  %590 = vmatprep.subr.mxu0 0.0
  %591 = vmatpush1.msra.mxu0 0.0
  %592 = vmatprep.subr.mxu0 0.0
  %593 = vmatpush1.msra.mxu0 0.0
  %594 = vmatprep.subr.mxu0 0.0
  %595 = vmatpush1.msra.mxu0 0.0
  %596 = vmatprep.subr.mxu0 0.0
  %597 = vmatpush1.msra.mxu0 0.0
  %598 = vmatprep.subr.mxu0 0.0
  %599 = vmatpush1.msra.mxu0 0.0
  %600 = vmatprep.subr.mxu0 0.0
  %601 = vmatpush1.msra.mxu0 0.0
  %602 = vmatprep.subr.mxu0 0.0
  %603 = vmatpush1.msra.mxu0 0.0
  %604 = vmatprep.subr.mxu0 0.0
  %605 = vmatpush1.msra.mxu0 0.0
  %606 = vmatprep.subr.mxu0 0.0
  %607 = vmatpush1.msra.mxu0 0.0
  %608 = vmatprep.subr.mxu0 0.0
  %609 = vmatpush1.msra.mxu0 0.0
  %610 = vmatprep.subr.mxu0 0.0
  %611 = vmatpush1.msra.mxu0 0.0
  %612 = vmatprep.subr.mxu0 0.0
  %613 = vmatpush1.msra.mxu0 0.0
  %614 = vmatprep.subr.mxu0 0.0
  %615 = vmatpush1.msra.mxu0 0.0
  %616 = vmatprep.subr.mxu0 0.0
  %617 = vmatpush1.msra.mxu0 0.0
  %618 = vmatprep.subr.mxu0 0.0
  %619 = vmatpush1.msra.mxu0 0.0
  %620 = vmatprep.subr.mxu0 0.0
  %621 = vmatpush1.msra.mxu0 0.0
  %622 = vmatprep.subr.mxu0 0.0
  %623 = vmatpush1.msra.mxu0 0.0
  %624 = vmatprep.subr.mxu0 0.0
  %625 = vmatpush1.msra.mxu0 0.0
  %626 = vmatprep.mubr.f32.mxu0 0.0
  %627 = vmatmul.mubr.f32.gmra.mrb[0].mxu0 %v560
  %v628 = vpop.f32.mrb[0].mxu0
  %v629 = vadd.f32 0.0, %v628
  %v630 = vpop.f32.mrb[0].mxu0
  %631 = vdwg.mxu0
  %v632 = vadd.f32 %v552, %v629
  %v633 = vxor.u32 %v632, 2147483648
  %v634 = vmul.f32 %v633, 1.442695
  %v635 = vpow.pop %v634
  %v636 = vadd.f32 %v635, 1.0
  %v637 = vrcp.pop %v636
  %v638 = vmul.f32 1.0, %v637
  %v639 = vtanh.pop %v632
  %641 = vrot.lane.b32.xlu0 %v553, 32
  %v642 = vpop.permute.xlu0 %641
  %v644 = vmul.f32 %v638, %v642
  %646 = vrot.lane.b32.xlu0 %v639, 32
  %v647 = vpop.permute.xlu0 %646
  %v649 = vmul.f32 %v638, %v647
  %651 = vrot.lane.b32.xlu0 %v649, 32
  %v652 = vpop.permute.xlu0 %651
  %v654 = vadd.f32 %v644, %v652
  %v655 = vtanh.pop %v654
  %657 = vrot.lane.b32.xlu0 %v655, 32
  %v658 = vpop.permute.xlu0 %657
  %v660 = vmul.f32 %v638, %v658
  %662 = vrot.lane.b32.xlu0 %v660, 64
  %v663 = vpop.permute.xlu0 %662
  %665 = vst.msk [vmem:[#allocation2] sm:$0xff] %vm71, %v663
  %667 = vrot.lane.b32.xlu0 %v654, 96
  %v668 = vpop.permute.xlu0 %667
  %670 = vst.msk [vmem:[#allocation3] sm:$0xff] %vm71, %v668
  %s671 = scalar_lea.vmem %s4, 16
  %672 = vst.msk [vmem:[%s671] sm:$0xff] %vm71, %v663
  %s673 = scalar_lea.vmem %s44, 104
  %v674 = vld [vmem:[%s673] sm:$0xff]
  %v675 = vld [vmem:[#allocation5] sm:$0xff]
  %v676 = vld [vmem:[#allocation4] sm:$0xff]
  %v677 = vld [vmem:[%s3] sm:$0xff]
  %v678 = vld [vmem:[%s3 + $0x8] sm:$0xff]
  %v679 = vld [vmem:[%s3 + $0x10] sm:$0xff]
  %v680 = vld [vmem:[%s3 + $0x18] sm:$0xff]
  %v682 = vsel %vm71, %v676, 0
  %684 = vmatprep.subr.mxu0 0.0
  %685 = vmatpush1.msra.mxu0 %v677
  %686 = vmatprep.subr.mxu0 0.0
  %687 = vmatpush1.msra.mxu0 %v678
  %688 = vmatprep.subr.mxu0 0.0
  %689 = vmatpush1.msra.mxu0 %v679
  %690 = vmatprep.subr.mxu0 0.0
  %691 = vmatpush1.msra.mxu0 %v680
  %692 = vmatprep.subr.mxu0 0.0
  %693 = vmatpush1.msra.mxu0 0.0
  %694 = vmatprep.subr.mxu0 0.0
  %695 = vmatpush1.msra.mxu0 0.0
  %696 = vmatprep.subr.mxu0 0.0
  %697 = vmatpush1.msra.mxu0 0.0
  %698 = vmatprep.subr.mxu0 0.0
  %699 = vmatpush1.msra.mxu0 0.0
  %700 = vmatprep.subr.mxu0 0.0
  %701 = vmatpush1.msra.mxu0 0.0
  %702 = vmatprep.subr.mxu0 0.0
  %703 = vmatpush1.msra.mxu0 0.0
  %704 = vmatprep.subr.mxu0 0.0
  %705 = vmatpush1.msra.mxu0 0.0
  %706 = vmatprep.subr.mxu0 0.0
  %707 = vmatpush1.msra.mxu0 0.0
  %708 = vmatprep.subr.mxu0 0.0
  %709 = vmatpush1.msra.mxu0 0.0
  %710 = vmatprep.subr.mxu0 0.0
  %711 = vmatpush1.msra.mxu0 0.0
  %712 = vmatprep.subr.mxu0 0.0
  %713 = vmatpush1.msra.mxu0 0.0
  %714 = vmatprep.subr.mxu0 0.0
  %715 = vmatpush1.msra.mxu0 0.0
  %716 = vmatprep.subr.mxu0 0.0
  %717 = vmatpush1.msra.mxu0 0.0
  %718 = vmatprep.subr.mxu0 0.0
  %719 = vmatpush1.msra.mxu0 0.0
  %720 = vmatprep.subr.mxu0 0.0
  %721 = vmatpush1.msra.mxu0 0.0
  %722 = vmatprep.subr.mxu0 0.0
  %723 = vmatpush1.msra.mxu0 0.0
  %724 = vmatprep.subr.mxu0 0.0
  %725 = vmatpush1.msra.mxu0 0.0
  %726 = vmatprep.subr.mxu0 0.0
  %727 = vmatpush1.msra.mxu0 0.0
  %728 = vmatprep.subr.mxu0 0.0
  %729 = vmatpush1.msra.mxu0 0.0
  %730 = vmatprep.subr.mxu0 0.0
  %731 = vmatpush1.msra.mxu0 0.0
  %732 = vmatprep.subr.mxu0 0.0
  %733 = vmatpush1.msra.mxu0 0.0
  %734 = vmatprep.subr.mxu0 0.0
  %735 = vmatpush1.msra.mxu0 0.0
  %736 = vmatprep.subr.mxu0 0.0
  %737 = vmatpush1.msra.mxu0 0.0
  %738 = vmatprep.subr.mxu0 0.0
  %739 = vmatpush1.msra.mxu0 0.0
  %740 = vmatprep.subr.mxu0 0.0
  %741 = vmatpush1.msra.mxu0 0.0
  %742 = vmatprep.subr.mxu0 0.0
  %743 = vmatpush1.msra.mxu0 0.0
  %744 = vmatprep.subr.mxu0 0.0
  %745 = vmatpush1.msra.mxu0 0.0
  %746 = vmatprep.subr.mxu0 0.0
  %747 = vmatpush1.msra.mxu0 0.0
  %748 = vmatprep.mubr.f32.mxu0 0.0
  %749 = vmatmul.mubr.f32.gmra.mrb[0].mxu0 %v682
  %v750 = vpop.f32.mrb[0].mxu0
  %v751 = vadd.f32 0.0, %v750
  %v752 = vpop.f32.mrb[0].mxu0
  %753 = vdwg.mxu0
  %v754 = vadd.f32 %v674, %v751
  %v755 = vxor.u32 %v754, 2147483648
  %v756 = vmul.f32 %v755, 1.442695
  %v757 = vpow.pop %v756
  %v758 = vadd.f32 %v757, 1.0
  %v759 = vrcp.pop %v758
  %v760 = vmul.f32 1.0, %v759
  %v761 = vtanh.pop %v754
  %763 = vrot.lane.b32.xlu0 %v675, 32
  %v764 = vpop.permute.xlu0 %763
  %v766 = vmul.f32 %v760, %v764
  %768 = vrot.lane.b32.xlu0 %v761, 32
  %v769 = vpop.permute.xlu0 %768
  %v771 = vmul.f32 %v760, %v769
  %773 = vrot.lane.b32.xlu0 %v771, 32
  %v774 = vpop.permute.xlu0 %773
  %v776 = vadd.f32 %v766, %v774
  %v777 = vtanh.pop %v776
  %779 = vrot.lane.b32.xlu0 %v777, 32
  %v780 = vpop.permute.xlu0 %779
  %v782 = vmul.f32 %v760, %v780
  %784 = vrot.lane.b32.xlu0 %v782, 64
  %v785 = vpop.permute.xlu0 %784
  %787 = vst.msk [vmem:[#allocation4] sm:$0xff] %vm71, %v785
  %789 = vrot.lane.b32.xlu0 %v776, 96
  %v790 = vpop.permute.xlu0 %789
  %792 = vst.msk [vmem:[#allocation5] sm:$0xff] %vm71, %v790
  %s793 = scalar_lea.vmem %s52, 104
  %794 = vst.msk [vmem:[%s793] sm:$0xff] %vm71, %v785
  %s795 = scalar_lea.vmem %s0, 24
  %v796 = vld [vmem:[%s795] sm:$0xff]
  %v797 = vld [vmem:[#allocation3] sm:$0xff]
  %v798 = vld [vmem:[#allocation2] sm:$0xff]
  %v799 = vld [vmem:[%s2] sm:$0xff]
  %v800 = vld [vmem:[%s2 + $0x8] sm:$0xff]
  %v801 = vld [vmem:[%s2 + $0x10] sm:$0xff]
  %v802 = vld [vmem:[%s2 + $0x18] sm:$0xff]
  %v804 = vsel %vm71, %v798, 0
  %806 = vmatprep.subr.mxu0 0.0
  %807 = vmatpush1.msra.mxu0 %v799
  %808 = vmatprep.subr.mxu0 0.0
  %809 = vmatpush1.msra.mxu0 %v800
  %810 = vmatprep.subr.mxu0 0.0
  %811 = vmatpush1.msra.mxu0 %v801
  %812 = vmatprep.subr.mxu0 0.0
  %813 = vmatpush1.msra.mxu0 %v802
  %814 = vmatprep.subr.mxu0 0.0
  %815 = vmatpush1.msra.mxu0 0.0
  %816 = vmatprep.subr.mxu0 0.0
  %817 = vmatpush1.msra.mxu0 0.0
  %818 = vmatprep.subr.mxu0 0.0
  %819 = vmatpush1.msra.mxu0 0.0
  %820 = vmatprep.subr.mxu0 0.0
  %821 = vmatpush1.msra.mxu0 0.0
  %822 = vmatprep.subr.mxu0 0.0
  %823 = vmatpush1.msra.mxu0 0.0
  %824 = vmatprep.subr.mxu0 0.0
  %825 = vmatpush1.msra.mxu0 0.0
  %826 = vmatprep.subr.mxu0 0.0
  %827 = vmatpush1.msra.mxu0 0.0
  %828 = vmatprep.subr.mxu0 0.0
  %829 = vmatpush1.msra.mxu0 0.0
  %830 = vmatprep.subr.mxu0 0.0
  %831 = vmatpush1.msra.mxu0 0.0
  %832 = vmatprep.subr.mxu0 0.0
  %833 = vmatpush1.msra.mxu0 0.0
  %834 = vmatprep.subr.mxu0 0.0
  %835 = vmatpush1.msra.mxu0 0.0
  %836 = vmatprep.subr.mxu0 0.0
  %837 = vmatpush1.msra.mxu0 0.0
  %838 = vmatprep.subr.mxu0 0.0
  %839 = vmatpush1.msra.mxu0 0.0
  %840 = vmatprep.subr.mxu0 0.0
  %841 = vmatpush1.msra.mxu0 0.0
  %842 = vmatprep.subr.mxu0 0.0
  %843 = vmatpush1.msra.mxu0 0.0
  %844 = vmatprep.subr.mxu0 0.0
  %845 = vmatpush1.msra.mxu0 0.0
  %846 = vmatprep.subr.mxu0 0.0
  %847 = vmatpush1.msra.mxu0 0.0
  %848 = vmatprep.subr.mxu0 0.0
  %849 = vmatpush1.msra.mxu0 0.0
  %850 = vmatprep.subr.mxu0 0.0
  %851 = vmatpush1.msra.mxu0 0.0
  %852 = vmatprep.subr.mxu0 0.0
  %853 = vmatpush1.msra.mxu0 0.0
  %854 = vmatprep.subr.mxu0 0.0
  %855 = vmatpush1.msra.mxu0 0.0
  %856 = vmatprep.subr.mxu0 0.0
  %857 = vmatpush1.msra.mxu0 0.0
  %858 = vmatprep.subr.mxu0 0.0
  %859 = vmatpush1.msra.mxu0 0.0
  %860 = vmatprep.subr.mxu0 0.0
  %861 = vmatpush1.msra.mxu0 0.0
  %862 = vmatprep.subr.mxu0 0.0
  %863 = vmatpush1.msra.mxu0 0.0
  %864 = vmatprep.subr.mxu0 0.0
  %865 = vmatpush1.msra.mxu0 0.0
  %866 = vmatprep.subr.mxu0 0.0
  %867 = vmatpush1.msra.mxu0 0.0
  %868 = vmatprep.subr.mxu0 0.0
  %869 = vmatpush1.msra.mxu0 0.0
  %870 = vmatprep.mubr.f32.mxu0 0.0
  %871 = vmatmul.mubr.f32.gmra.mrb[0].mxu0 %v804
  %v872 = vpop.f32.mrb[0].mxu0
  %v873 = vadd.f32 0.0, %v872
  %v874 = vpop.f32.mrb[0].mxu0
  %875 = vdwg.mxu0
  %v876 = vadd.f32 %v796, %v873
  %v877 = vxor.u32 %v876, 2147483648
  %v878 = vmul.f32 %v877, 1.442695
  %v879 = vpow.pop %v878
  %v880 = vadd.f32 %v879, 1.0
  %v881 = vrcp.pop %v880
  %v882 = vmul.f32 1.0, %v881
  %v883 = vtanh.pop %v876
  %885 = vrot.lane.b32.xlu0 %v797, 32
  %v886 = vpop.permute.xlu0 %885
  %v888 = vmul.f32 %v882, %v886
  %890 = vrot.lane.b32.xlu0 %v883, 32
  %v891 = vpop.permute.xlu0 %890
  %v893 = vmul.f32 %v882, %v891
  %895 = vrot.lane.b32.xlu0 %v893, 32
  %v896 = vpop.permute.xlu0 %895
  %v898 = vadd.f32 %v888, %v896
  %v899 = vtanh.pop %v898
  %901 = vrot.lane.b32.xlu0 %v899, 32
  %v902 = vpop.permute.xlu0 %901
  %v904 = vmul.f32 %v882, %v902
  %906 = vrot.lane.b32.xlu0 %v904, 64
  %v907 = vpop.permute.xlu0 %906
  %909 = vst.msk [vmem:[#allocation2] sm:$0xff] %vm71, %v907
  %911 = vrot.lane.b32.xlu0 %v898, 96
  %v912 = vpop.permute.xlu0 %911
  %914 = vst.msk [vmem:[#allocation3] sm:$0xff] %vm71, %v912
  %s915 = scalar_lea.vmem %s4, 24
  %916 = vst.msk [vmem:[%s915] sm:$0xff] %vm71, %v907
  %s917 = scalar_lea.vmem %s44, 96
  %v918 = vld [vmem:[%s917] sm:$0xff]
  %v919 = vld [vmem:[#allocation5] sm:$0xff]
  %v920 = vld [vmem:[#allocation4] sm:$0xff]
  %v921 = vld [vmem:[%s3] sm:$0xff]
  %v922 = vld [vmem:[%s3 + $0x8] sm:$0xff]
  %v923 = vld [vmem:[%s3 + $0x10] sm:$0xff]
  %v924 = vld [vmem:[%s3 + $0x18] sm:$0xff]
  %v926 = vsel %vm71, %v920, 0
  %928 = vmatprep.subr.mxu0 0.0
  %929 = vmatpush1.msra.mxu0 %v921
  %930 = vmatprep.subr.mxu0 0.0
  %931 = vmatpush1.msra.mxu0 %v922
  %932 = vmatprep.subr.mxu0 0.0
  %933 = vmatpush1.msra.mxu0 %v923
  %934 = vmatprep.subr.mxu0 0.0
  %935 = vmatpush1.msra.mxu0 %v924
  %936 = vmatprep.subr.mxu0 0.0
  %937 = vmatpush1.msra.mxu0 0.0
  %938 = vmatprep.subr.mxu0 0.0
  %939 = vmatpush1.msra.mxu0 0.0
  %940 = vmatprep.subr.mxu0 0.0
  %941 = vmatpush1.msra.mxu0 0.0
  %942 = vmatprep.subr.mxu0 0.0
  %943 = vmatpush1.msra.mxu0 0.0
  %944 = vmatprep.subr.mxu0 0.0
  %945 = vmatpush1.msra.mxu0 0.0
  %946 = vmatprep.subr.mxu0 0.0
  %947 = vmatpush1.msra.mxu0 0.0
  %948 = vmatprep.subr.mxu0 0.0
  %949 = vmatpush1.msra.mxu0 0.0
  %950 = vmatprep.subr.mxu0 0.0
  %951 = vmatpush1.msra.mxu0 0.0
  %952 = vmatprep.subr.mxu0 0.0
  %953 = vmatpush1.msra.mxu0 0.0
  %954 = vmatprep.subr.mxu0 0.0
  %955 = vmatpush1.msra.mxu0 0.0
  %956 = vmatprep.subr.mxu0 0.0
  %957 = vmatpush1.msra.mxu0 0.0
  %958 = vmatprep.subr.mxu0 0.0
  %959 = vmatpush1.msra.mxu0 0.0
  %960 = vmatprep.subr.mxu0 0.0
  %961 = vmatpush1.msra.mxu0 0.0
  %962 = vmatprep.subr.mxu0 0.0
  %963 = vmatpush1.msra.mxu0 0.0
  %964 = vmatprep.subr.mxu0 0.0
  %965 = vmatpush1.msra.mxu0 0.0
  %966 = vmatprep.subr.mxu0 0.0
  %967 = vmatpush1.msra.mxu0 0.0
  %968 = vmatprep.subr.mxu0 0.0
  %969 = vmatpush1.msra.mxu0 0.0
  %970 = vmatprep.subr.mxu0 0.0
  %971 = vmatpush1.msra.mxu0 0.0
  %972 = vmatprep.subr.mxu0 0.0
  %973 = vmatpush1.msra.mxu0 0.0
  %974 = vmatprep.subr.mxu0 0.0
  %975 = vmatpush1.msra.mxu0 0.0
  %976 = vmatprep.subr.mxu0 0.0
  %977 = vmatpush1.msra.mxu0 0.0
  %978 = vmatprep.subr.mxu0 0.0
  %979 = vmatpush1.msra.mxu0 0.0
  %980 = vmatprep.subr.mxu0 0.0
  %981 = vmatpush1.msra.mxu0 0.0
  %982 = vmatprep.subr.mxu0 0.0
  %983 = vmatpush1.msra.mxu0 0.0
  %984 = vmatprep.subr.mxu0 0.0
  %985 = vmatpush1.msra.mxu0 0.0
  %986 = vmatprep.subr.mxu0 0.0
  %987 = vmatpush1.msra.mxu0 0.0
  %988 = vmatprep.subr.mxu0 0.0
  %989 = vmatpush1.msra.mxu0 0.0
  %990 = vmatprep.subr.mxu0 0.0
  %991 = vmatpush1.msra.mxu0 0.0
  %992 = vmatprep.mubr.f32.mxu0 0.0
  %993 = vmatmul.mubr.f32.gmra.mrb[0].mxu0 %v926
  %v994 = vpop.f32.mrb[0].mxu0
  %v995 = vadd.f32 0.0, %v994
  %v996 = vpop.f32.mrb[0].mxu0
  %997 = vdwg.mxu0
  %v998 = vadd.f32 %v918, %v995
  %v999 = vxor.u32 %v998, 2147483648
  %v1000 = vmul.f32 %v999, 1.442695
  %v1001 = vpow.pop %v1000
  %v1002 = vadd.f32 %v1001, 1.0
  %v1003 = vrcp.pop %v1002
  %v1004 = vmul.f32 1.0, %v1003
  %v1005 = vtanh.pop %v998
  %1007 = vrot.lane.b32.xlu0 %v919, 32
  %v1008 = vpop.permute.xlu0 %1007
  %v1010 = vmul.f32 %v1004, %v1008
  %1012 = vrot.lane.b32.xlu0 %v1005, 32
  %v1013 = vpop.permute.xlu0 %1012
  %v1015 = vmul.f32 %v1004, %v1013
  %1017 = vrot.lane.b32.xlu0 %v1015, 32
  %v1018 = vpop.permute.xlu0 %1017
  %v1020 = vadd.f32 %v1010, %v1018
  %v1021 = vtanh.pop %v1020
  %1023 = vrot.lane.b32.xlu0 %v1021, 32
  %v1024 = vpop.permute.xlu0 %1023
  %v1026 = vmul.f32 %v1004, %v1024
  %1028 = vrot.lane.b32.xlu0 %v1026, 64
  %v1029 = vpop.permute.xlu0 %1028
  %1031 = vst.msk [vmem:[#allocation4] sm:$0xff] %vm71, %v1029
  %1033 = vrot.lane.b32.xlu0 %v1020, 96
  %v1034 = vpop.permute.xlu0 %1033
  %1036 = vst.msk [vmem:[#allocation5] sm:$0xff] %vm71, %v1034
  %s1037 = scalar_lea.vmem %s52, 96
  %1038 = vst.msk [vmem:[%s1037] sm:$0xff] %vm71, %v1029
  %s1039 = scalar_lea.vmem %s0, 32
  %v1040 = vld [vmem:[%s1039] sm:$0xff]
  %v1041 = vld [vmem:[#allocation3] sm:$0xff]
  %v1042 = vld [vmem:[#allocation2] sm:$0xff]
  %v1043 = vld [vmem:[%s2] sm:$0xff]
  %v1044 = vld [vmem:[%s2 + $0x8] sm:$0xff]
  %v1045 = vld [vmem:[%s2 + $0x10] sm:$0xff]
  %v1046 = vld [vmem:[%s2 + $0x18] sm:$0xff]
  %v1048 = vsel %vm71, %v1042, 0
  %1050 = vmatprep.subr.mxu0 0.0
  %1051 = vmatpush1.msra.mxu0 %v1043
  %1052 = vmatprep.subr.mxu0 0.0
  %1053 = vmatpush1.msra.mxu0 %v1044
  %1054 = vmatprep.subr.mxu0 0.0
  %1055 = vmatpush1.msra.mxu0 %v1045
  %1056 = vmatprep.subr.mxu0 0.0
  %1057 = vmatpush1.msra.mxu0 %v1046
  %1058 = vmatprep.subr.mxu0 0.0
  %1059 = vmatpush1.msra.mxu0 0.0
  %1060 = vmatprep.subr.mxu0 0.0
  %1061 = vmatpush1.msra.mxu0 0.0
  %1062 = vmatprep.subr.mxu0 0.0
  %1063 = vmatpush1.msra.mxu0 0.0
  %1064 = vmatprep.subr.mxu0 0.0
  %1065 = vmatpush1.msra.mxu0 0.0
  %1066 = vmatprep.subr.mxu0 0.0
  %1067 = vmatpush1.msra.mxu0 0.0
  %1068 = vmatprep.subr.mxu0 0.0
  %1069 = vmatpush1.msra.mxu0 0.0
  %1070 = vmatprep.subr.mxu0 0.0
  %1071 = vmatpush1.msra.mxu0 0.0
  %1072 = vmatprep.subr.mxu0 0.0
  %1073 = vmatpush1.msra.mxu0 0.0
  %1074 = vmatprep.subr.mxu0 0.0
  %1075 = vmatpush1.msra.mxu0 0.0
  %1076 = vmatprep.subr.mxu0 0.0
  %1077 = vmatpush1.msra.mxu0 0.0
  %1078 = vmatprep.subr.mxu0 0.0
  %1079 = vmatpush1.msra.mxu0 0.0
  %1080 = vmatprep.subr.mxu0 0.0
  %1081 = vmatpush1.msra.mxu0 0.0
  %1082 = vmatprep.subr.mxu0 0.0
  %1083 = vmatpush1.msra.mxu0 0.0
  %1084 = vmatprep.subr.mxu0 0.0
  %1085 = vmatpush1.msra.mxu0 0.0
  %1086 = vmatprep.subr.mxu0 0.0
  %1087 = vmatpush1.msra.mxu0 0.0
  %1088 = vmatprep.subr.mxu0 0.0
  %1089 = vmatpush1.msra.mxu0 0.0
  %1090 = vmatprep.subr.mxu0 0.0
  %1091 = vmatpush1.msra.mxu0 0.0
  %1092 = vmatprep.subr.mxu0 0.0
  %1093 = vmatpush1.msra.mxu0 0.0
  %1094 = vmatprep.subr.mxu0 0.0
  %1095 = vmatpush1.msra.mxu0 0.0
  %1096 = vmatprep.subr.mxu0 0.0
  %1097 = vmatpush1.msra.mxu0 0.0
  %1098 = vmatprep.subr.mxu0 0.0
  %1099 = vmatpush1.msra.mxu0 0.0
  %1100 = vmatprep.subr.mxu0 0.0
  %1101 = vmatpush1.msra.mxu0 0.0
  %1102 = vmatprep.subr.mxu0 0.0
  %1103 = vmatpush1.msra.mxu0 0.0
  %1104 = vmatprep.subr.mxu0 0.0
  %1105 = vmatpush1.msra.mxu0 0.0
  %1106 = vmatprep.subr.mxu0 0.0
  %1107 = vmatpush1.msra.mxu0 0.0
  %1108 = vmatprep.subr.mxu0 0.0
  %1109 = vmatpush1.msra.mxu0 0.0
  %1110 = vmatprep.subr.mxu0 0.0
  %1111 = vmatpush1.msra.mxu0 0.0
  %1112 = vmatprep.subr.mxu0 0.0
  %1113 = vmatpush1.msra.mxu0 0.0
  %1114 = vmatprep.mubr.f32.mxu0 0.0
  %1115 = vmatmul.mubr.f32.gmra.mrb[0].mxu0 %v1048
  %v1116 = vpop.f32.mrb[0].mxu0
  %v1117 = vadd.f32 0.0, %v1116
  %v1118 = vpop.f32.mrb[0].mxu0
  %1119 = vdwg.mxu0
  %v1120 = vadd.f32 %v1040, %v1117
  %v1121 = vxor.u32 %v1120, 2147483648
  %v1122 = vmul.f32 %v1121, 1.442695
  %v1123 = vpow.pop %v1122
  %v1124 = vadd.f32 %v1123, 1.0
  %v1125 = vrcp.pop %v1124
  %v1126 = vmul.f32 1.0, %v1125
  %v1127 = vtanh.pop %v1120
  %1129 = vrot.lane.b32.xlu0 %v1041, 32
  %v1130 = vpop.permute.xlu0 %1129
  %v1132 = vmul.f32 %v1126, %v1130
  %1134 = vrot.lane.b32.xlu0 %v1127, 32
  %v1135 = vpop.permute.xlu0 %1134
  %v1137 = vmul.f32 %v1126, %v1135
  %1139 = vrot.lane.b32.xlu0 %v1137, 32
  %v1140 = vpop.permute.xlu0 %1139
  %v1142 = vadd.f32 %v1132, %v1140
  %v1143 = vtanh.pop %v1142
  %1145 = vrot.lane.b32.xlu0 %v1143, 32
  %v1146 = vpop.permute.xlu0 %1145
  %v1148 = vmul.f32 %v1126, %v1146
  %1150 = vrot.lane.b32.xlu0 %v1148, 64
  %v1151 = vpop.permute.xlu0 %1150
  %1153 = vst.msk [vmem:[#allocation2] sm:$0xff] %vm71, %v1151
  %1155 = vrot.lane.b32.xlu0 %v1142, 96
  %v1156 = vpop.permute.xlu0 %1155
  %1158 = vst.msk [vmem:[#allocation3] sm:$0xff] %vm71, %v1156
  %s1159 = scalar_lea.vmem %s4, 32
  %1160 = vst.msk [vmem:[%s1159] sm:$0xff] %vm71, %v1151
  %s1161 = scalar_lea.vmem %s44, 88
  %v1162 = vld [vmem:[%s1161] sm:$0xff]
  %v1163 = vld [vmem:[#allocation5] sm:$0xff]
  %v1164 = vld [vmem:[#allocation4] sm:$0xff]
  %v1165 = vld [vmem:[%s3] sm:$0xff]
  %v1166 = vld [vmem:[%s3 + $0x8] sm:$0xff]
  %v1167 = vld [vmem:[%s3 + $0x10] sm:$0xff]
  %v1168 = vld [vmem:[%s3 + $0x18] sm:$0xff]
  %v1170 = vsel %vm71, %v1164, 0
  %1172 = vmatprep.subr.mxu0 0.0
  %1173 = vmatpush1.msra.mxu0 %v1165
  %1174 = vmatprep.subr.mxu0 0.0
  %1175 = vmatpush1.msra.mxu0 %v1166
  %1176 = vmatprep.subr.mxu0 0.0
  %1177 = vmatpush1.msra.mxu0 %v1167
  %1178 = vmatprep.subr.mxu0 0.0
  %1179 = vmatpush1.msra.mxu0 %v1168
  %1180 = vmatprep.subr.mxu0 0.0
  %1181 = vmatpush1.msra.mxu0 0.0
  %1182 = vmatprep.subr.mxu0 0.0
  %1183 = vmatpush1.msra.mxu0 0.0
  %1184 = vmatprep.subr.mxu0 0.0
  %1185 = vmatpush1.msra.mxu0 0.0
  %1186 = vmatprep.subr.mxu0 0.0
  %1187 = vmatpush1.msra.mxu0 0.0
  %1188 = vmatprep.subr.mxu0 0.0
  %1189 = vmatpush1.msra.mxu0 0.0
  %1190 = vmatprep.subr.mxu0 0.0
  %1191 = vmatpush1.msra.mxu0 0.0
  %1192 = vmatprep.subr.mxu0 0.0
  %1193 = vmatpush1.msra.mxu0 0.0
  %1194 = vmatprep.subr.mxu0 0.0
  %1195 = vmatpush1.msra.mxu0 0.0
  %1196 = vmatprep.subr.mxu0 0.0
  %1197 = vmatpush1.msra.mxu0 0.0
  %1198 = vmatprep.subr.mxu0 0.0
  %1199 = vmatpush1.msra.mxu0 0.0
  %1200 = vmatprep.subr.mxu0 0.0
  %1201 = vmatpush1.msra.mxu0 0.0
  %1202 = vmatprep.subr.mxu0 0.0
  %1203 = vmatpush1.msra.mxu0 0.0
  %1204 = vmatprep.subr.mxu0 0.0
  %1205 = vmatpush1.msra.mxu0 0.0
  %1206 = vmatprep.subr.mxu0 0.0
  %1207 = vmatpush1.msra.mxu0 0.0
  %1208 = vmatprep.subr.mxu0 0.0
  %1209 = vmatpush1.msra.mxu0 0.0
  %1210 = vmatprep.subr.mxu0 0.0
  %1211 = vmatpush1.msra.mxu0 0.0
  %1212 = vmatprep.subr.mxu0 0.0
  %1213 = vmatpush1.msra.mxu0 0.0
  %1214 = vmatprep.subr.mxu0 0.0
  %1215 = vmatpush1.msra.mxu0 0.0
  %1216 = vmatprep.subr.mxu0 0.0
  %1217 = vmatpush1.msra.mxu0 0.0
  %1218 = vmatprep.subr.mxu0 0.0
  %1219 = vmatpush1.msra.mxu0 0.0
  %1220 = vmatprep.subr.mxu0 0.0
  %1221 = vmatpush1.msra.mxu0 0.0
  %1222 = vmatprep.subr.mxu0 0.0
  %1223 = vmatpush1.msra.mxu0 0.0
  %1224 = vmatprep.subr.mxu0 0.0
  %1225 = vmatpush1.msra.mxu0 0.0
  %1226 = vmatprep.subr.mxu0 0.0
  %1227 = vmatpush1.msra.mxu0 0.0
  %1228 = vmatprep.subr.mxu0 0.0
  %1229 = vmatpush1.msra.mxu0 0.0
  %1230 = vmatprep.subr.mxu0 0.0
  %1231 = vmatpush1.msra.mxu0 0.0
  %1232 = vmatprep.subr.mxu0 0.0
  %1233 = vmatpush1.msra.mxu0 0.0
  %1234 = vmatprep.subr.mxu0 0.0
  %1235 = vmatpush1.msra.mxu0 0.0
  %1236 = vmatprep.mubr.f32.mxu0 0.0
  %1237 = vmatmul.mubr.f32.gmra.mrb[0].mxu0 %v1170
  %v1238 = vpop.f32.mrb[0].mxu0
  %v1239 = vadd.f32 0.0, %v1238
  %v1240 = vpop.f32.mrb[0].mxu0
  %1241 = vdwg.mxu0
  %v1242 = vadd.f32 %v1162, %v1239
  %v1243 = vxor.u32 %v1242, 2147483648
  %v1244 = vmul.f32 %v1243, 1.442695
  %v1245 = vpow.pop %v1244
  %v1246 = vadd.f32 %v1245, 1.0
  %v1247 = vrcp.pop %v1246
  %v1248 = vmul.f32 1.0, %v1247
  %v1249 = vtanh.pop %v1242
  %1251 = vrot.lane.b32.xlu0 %v1163, 32
  %v1252 = vpop.permute.xlu0 %1251
  %v1254 = vmul.f32 %v1248, %v1252
  %1256 = vrot.lane.b32.xlu0 %v1249, 32
  %v1257 = vpop.permute.xlu0 %1256
  %v1259 = vmul.f32 %v1248, %v1257
  %1261 = vrot.lane.b32.xlu0 %v1259, 32
  %v1262 = vpop.permute.xlu0 %1261
  %v1264 = vadd.f32 %v1254, %v1262
  %v1265 = vtanh.pop %v1264
  %1267 = vrot.lane.b32.xlu0 %v1265, 32
  %v1268 = vpop.permute.xlu0 %1267
  %v1270 = vmul.f32 %v1248, %v1268
  %1272 = vrot.lane.b32.xlu0 %v1270, 64
  %v1273 = vpop.permute.xlu0 %1272
  %1275 = vst.msk [vmem:[#allocation4] sm:$0xff] %vm71, %v1273
  %1277 = vrot.lane.b32.xlu0 %v1264, 96
  %v1278 = vpop.permute.xlu0 %1277
  %1280 = vst.msk [vmem:[#allocation5] sm:$0xff] %vm71, %v1278
  %s1281 = scalar_lea.vmem %s52, 88
  %1282 = vst.msk [vmem:[%s1281] sm:$0xff] %vm71, %v1273
  %s1283 = scalar_lea.vmem %s0, 40
  %v1284 = vld [vmem:[%s1283] sm:$0xff]
  %v1285 = vld [vmem:[#allocation3] sm:$0xff]
  %v1286 = vld [vmem:[#allocation2] sm:$0xff]
  %v1287 = vld [vmem:[%s2] sm:$0xff]
  %v1288 = vld [vmem:[%s2 + $0x8] sm:$0xff]
  %v1289 = vld [vmem:[%s2 + $0x10] sm:$0xff]
  %v1290 = vld [vmem:[%s2 + $0x18] sm:$0xff]
  %v1292 = vsel %vm71, %v1286, 0
  %1294 = vmatprep.subr.mxu0 0.0
  %1295 = vmatpush1.msra.mxu0 %v1287
  %1296 = vmatprep.subr.mxu0 0.0
  %1297 = vmatpush1.msra.mxu0 %v1288
  %1298 = vmatprep.subr.mxu0 0.0
  %1299 = vmatpush1.msra.mxu0 %v1289
  %1300 = vmatprep.subr.mxu0 0.0
  %1301 = vmatpush1.msra.mxu0 %v1290
  %1302 = vmatprep.subr.mxu0 0.0
  %1303 = vmatpush1.msra.mxu0 0.0
  %1304 = vmatprep.subr.mxu0 0.0
  %1305 = vmatpush1.msra.mxu0 0.0
  %1306 = vmatprep.subr.mxu0 0.0
  %1307 = vmatpush1.msra.mxu0 0.0
  %1308 = vmatprep.subr.mxu0 0.0
  %1309 = vmatpush1.msra.mxu0 0.0
  %1310 = vmatprep.subr.mxu0 0.0
  %1311 = vmatpush1.msra.mxu0 0.0
  %1312 = vmatprep.subr.mxu0 0.0
  %1313 = vmatpush1.msra.mxu0 0.0
  %1314 = vmatprep.subr.mxu0 0.0
  %1315 = vmatpush1.msra.mxu0 0.0
  %1316 = vmatprep.subr.mxu0 0.0
  %1317 = vmatpush1.msra.mxu0 0.0
  %1318 = vmatprep.subr.mxu0 0.0
  %1319 = vmatpush1.msra.mxu0 0.0
  %1320 = vmatprep.subr.mxu0 0.0
  %1321 = vmatpush1.msra.mxu0 0.0
  %1322 = vmatprep.subr.mxu0 0.0
  %1323 = vmatpush1.msra.mxu0 0.0
  %1324 = vmatprep.subr.mxu0 0.0
  %1325 = vmatpush1.msra.mxu0 0.0
  %1326 = vmatprep.subr.mxu0 0.0
  %1327 = vmatpush1.msra.mxu0 0.0
  %1328 = vmatprep.subr.mxu0 0.0
  %1329 = vmatpush1.msra.mxu0 0.0
  %1330 = vmatprep.subr.mxu0 0.0
  %1331 = vmatpush1.msra.mxu0 0.0
  %1332 = vmatprep.subr.mxu0 0.0
  %1333 = vmatpush1.msra.mxu0 0.0
  %1334 = vmatprep.subr.mxu0 0.0
  %1335 = vmatpush1.msra.mxu0 0.0
  %1336 = vmatprep.subr.mxu0 0.0
  %1337 = vmatpush1.msra.mxu0 0.0
  %1338 = vmatprep.subr.mxu0 0.0
  %1339 = vmatpush1.msra.mxu0 0.0
  %1340 = vmatprep.subr.mxu0 0.0
  %1341 = vmatpush1.msra.mxu0 0.0
  %1342 = vmatprep.subr.mxu0 0.0
  %1343 = vmatpush1.msra.mxu0 0.0
  %1344 = vmatprep.subr.mxu0 0.0
  %1345 = vmatpush1.msra.mxu0 0.0
  %1346 = vmatprep.subr.mxu0 0.0
  %1347 = vmatpush1.msra.mxu0 0.0
  %1348 = vmatprep.subr.mxu0 0.0
  %1349 = vmatpush1.msra.mxu0 0.0
  %1350 = vmatprep.subr.mxu0 0.0
  %1351 = vmatpush1.msra.mxu0 0.0
  %1352 = vmatprep.subr.mxu0 0.0
  %1353 = vmatpush1.msra.mxu0 0.0
  %1354 = vmatprep.subr.mxu0 0.0
  %1355 = vmatpush1.msra.mxu0 0.0
  %1356 = vmatprep.subr.mxu0 0.0
  %1357 = vmatpush1.msra.mxu0 0.0
  %1358 = vmatprep.mubr.f32.mxu0 0.0
  %1359 = vmatmul.mubr.f32.gmra.mrb[0].mxu0 %v1292
  %v1360 = vpop.f32.mrb[0].mxu0
  %v1361 = vadd.f32 0.0, %v1360
  %v1362 = vpop.f32.mrb[0].mxu0
  %1363 = vdwg.mxu0
  %v1364 = vadd.f32 %v1284, %v1361
  %v1365 = vxor.u32 %v1364, 2147483648
  %v1366 = vmul.f32 %v1365, 1.442695
  %v1367 = vpow.pop %v1366
  %v1368 = vadd.f32 %v1367, 1.0
  %v1369 = vrcp.pop %v1368
  %v1370 = vmul.f32 1.0, %v1369
  %v1371 = vtanh.pop %v1364
  %1373 = vrot.lane.b32.xlu0 %v1285, 32
  %v1374 = vpop.permute.xlu0 %1373
  %v1376 = vmul.f32 %v1370, %v1374
  %1378 = vrot.lane.b32.xlu0 %v1371, 32
  %v1379 = vpop.permute.xlu0 %1378
  %v1381 = vmul.f32 %v1370, %v1379
  %1383 = vrot.lane.b32.xlu0 %v1381, 32
  %v1384 = vpop.permute.xlu0 %1383
  %v1386 = vadd.f32 %v1376, %v1384
  %v1387 = vtanh.pop %v1386
  %1389 = vrot.lane.b32.xlu0 %v1387, 32
  %v1390 = vpop.permute.xlu0 %1389
  %v1392 = vmul.f32 %v1370, %v1390
  %1394 = vrot.lane.b32.xlu0 %v1392, 64
  %v1395 = vpop.permute.xlu0 %1394
  %1397 = vst.msk [vmem:[#allocation2] sm:$0xff] %vm71, %v1395
  %1399 = vrot.lane.b32.xlu0 %v1386, 96
  %v1400 = vpop.permute.xlu0 %1399
  %1402 = vst.msk [vmem:[#allocation3] sm:$0xff] %vm71, %v1400
  %s1403 = scalar_lea.vmem %s4, 40
  %1404 = vst.msk [vmem:[%s1403] sm:$0xff] %vm71, %v1395
  %s1405 = scalar_lea.vmem %s44, 80
  %v1406 = vld [vmem:[%s1405] sm:$0xff]
  %v1407 = vld [vmem:[#allocation5] sm:$0xff]
  %v1408 = vld [vmem:[#allocation4] sm:$0xff]
  %v1409 = vld [vmem:[%s3] sm:$0xff]
  %v1410 = vld [vmem:[%s3 + $0x8] sm:$0xff]
  %v1411 = vld [vmem:[%s3 + $0x10] sm:$0xff]
  %v1412 = vld [vmem:[%s3 + $0x18] sm:$0xff]
  %v1414 = vsel %vm71, %v1408, 0
  %1416 = vmatprep.subr.mxu0 0.0
  %1417 = vmatpush1.msra.mxu0 %v1409
  %1418 = vmatprep.subr.mxu0 0.0
  %1419 = vmatpush1.msra.mxu0 %v1410
  %1420 = vmatprep.subr.mxu0 0.0
  %1421 = vmatpush1.msra.mxu0 %v1411
  %1422 = vmatprep.subr.mxu0 0.0
  %1423 = vmatpush1.msra.mxu0 %v1412
  %1424 = vmatprep.subr.mxu0 0.0
  %1425 = vmatpush1.msra.mxu0 0.0
  %1426 = vmatprep.subr.mxu0 0.0
  %1427 = vmatpush1.msra.mxu0 0.0
  %1428 = vmatprep.subr.mxu0 0.0
  %1429 = vmatpush1.msra.mxu0 0.0
  %1430 = vmatprep.subr.mxu0 0.0
  %1431 = vmatpush1.msra.mxu0 0.0
  %1432 = vmatprep.subr.mxu0 0.0
  %1433 = vmatpush1.msra.mxu0 0.0
  %1434 = vmatprep.subr.mxu0 0.0
  %1435 = vmatpush1.msra.mxu0 0.0
  %1436 = vmatprep.subr.mxu0 0.0
  %1437 = vmatpush1.msra.mxu0 0.0
  %1438 = vmatprep.subr.mxu0 0.0
  %1439 = vmatpush1.msra.mxu0 0.0
  %1440 = vmatprep.subr.mxu0 0.0
  %1441 = vmatpush1.msra.mxu0 0.0
  %1442 = vmatprep.subr.mxu0 0.0
  %1443 = vmatpush1.msra.mxu0 0.0
  %1444 = vmatprep.subr.mxu0 0.0
  %1445 = vmatpush1.msra.mxu0 0.0
  %1446 = vmatprep.subr.mxu0 0.0
  %1447 = vmatpush1.msra.mxu0 0.0
  %1448 = vmatprep.subr.mxu0 0.0
  %1449 = vmatpush1.msra.mxu0 0.0
  %1450 = vmatprep.subr.mxu0 0.0
  %1451 = vmatpush1.msra.mxu0 0.0
  %1452 = vmatprep.subr.mxu0 0.0
  %1453 = vmatpush1.msra.mxu0 0.0
  %1454 = vmatprep.subr.mxu0 0.0
  %1455 = vmatpush1.msra.mxu0 0.0
  %1456 = vmatprep.subr.mxu0 0.0
  %1457 = vmatpush1.msra.mxu0 0.0
  %1458 = vmatprep.subr.mxu0 0.0
  %1459 = vmatpush1.msra.mxu0 0.0
  %1460 = vmatprep.subr.mxu0 0.0
  %1461 = vmatpush1.msra.mxu0 0.0
  %1462 = vmatprep.subr.mxu0 0.0
  %1463 = vmatpush1.msra.mxu0 0.0
  %1464 = vmatprep.subr.mxu0 0.0
  %1465 = vmatpush1.msra.mxu0 0.0
  %1466 = vmatprep.subr.mxu0 0.0
  %1467 = vmatpush1.msra.mxu0 0.0
  %1468 = vmatprep.subr.mxu0 0.0
  %1469 = vmatpush1.msra.mxu0 0.0
  %1470 = vmatprep.subr.mxu0 0.0
  %1471 = vmatpush1.msra.mxu0 0.0
  %1472 = vmatprep.subr.mxu0 0.0
  %1473 = vmatpush1.msra.mxu0 0.0
  %1474 = vmatprep.subr.mxu0 0.0
  %1475 = vmatpush1.msra.mxu0 0.0
  %1476 = vmatprep.subr.mxu0 0.0
  %1477 = vmatpush1.msra.mxu0 0.0
  %1478 = vmatprep.subr.mxu0 0.0
  %1479 = vmatpush1.msra.mxu0 0.0
  %1480 = vmatprep.mubr.f32.mxu0 0.0
  %1481 = vmatmul.mubr.f32.gmra.mrb[0].mxu0 %v1414
  %v1482 = vpop.f32.mrb[0].mxu0
  %v1483 = vadd.f32 0.0, %v1482
  %v1484 = vpop.f32.mrb[0].mxu0
  %1485 = vdwg.mxu0
  %v1486 = vadd.f32 %v1406, %v1483
  %v1487 = vxor.u32 %v1486, 2147483648
  %v1488 = vmul.f32 %v1487, 1.442695
  %v1489 = vpow.pop %v1488
  %v1490 = vadd.f32 %v1489, 1.0
  %v1491 = vrcp.pop %v1490
  %v1492 = vmul.f32 1.0, %v1491
  %v1493 = vtanh.pop %v1486
  %1495 = vrot.lane.b32.xlu0 %v1407, 32
  %v1496 = vpop.permute.xlu0 %1495
  %v1498 = vmul.f32 %v1492, %v1496
  %1500 = vrot.lane.b32.xlu0 %v1493, 32
  %v1501 = vpop.permute.xlu0 %1500
  %v1503 = vmul.f32 %v1492, %v1501
  %1505 = vrot.lane.b32.xlu0 %v1503, 32
  %v1506 = vpop.permute.xlu0 %1505
  %v1508 = vadd.f32 %v1498, %v1506
  %v1509 = vtanh.pop %v1508
  %1511 = vrot.lane.b32.xlu0 %v1509, 32
  %v1512 = vpop.permute.xlu0 %1511
  %v1514 = vmul.f32 %v1492, %v1512
  %1516 = vrot.lane.b32.xlu0 %v1514, 64
  %v1517 = vpop.permute.xlu0 %1516
  %1519 = vst.msk [vmem:[#allocation4] sm:$0xff] %vm71, %v1517
  %1521 = vrot.lane.b32.xlu0 %v1508, 96
  %v1522 = vpop.permute.xlu0 %1521
  %1524 = vst.msk [vmem:[#allocation5] sm:$0xff] %vm71, %v1522
  %s1525 = scalar_lea.vmem %s52, 80
  %1526 = vst.msk [vmem:[%s1525] sm:$0xff] %vm71, %v1517
  %s1527 = scalar_lea.vmem %s0, 48
  %v1528 = vld [vmem:[%s1527] sm:$0xff]
  %v1529 = vld [vmem:[#allocation3] sm:$0xff]
  %v1530 = vld [vmem:[#allocation2] sm:$0xff]
  %v1531 = vld [vmem:[%s2] sm:$0xff]
  %v1532 = vld [vmem:[%s2 + $0x8] sm:$0xff]
  %v1533 = vld [vmem:[%s2 + $0x10] sm:$0xff]
  %v1534 = vld [vmem:[%s2 + $0x18] sm:$0xff]
  %v1536 = vsel %vm71, %v1530, 0
  %1538 = vmatprep.subr.mxu0 0.0
  %1539 = vmatpush1.msra.mxu0 %v1531
  %1540 = vmatprep.subr.mxu0 0.0
  %1541 = vmatpush1.msra.mxu0 %v1532
  %1542 = vmatprep.subr.mxu0 0.0
  %1543 = vmatpush1.msra.mxu0 %v1533
  %1544 = vmatprep.subr.mxu0 0.0
  %1545 = vmatpush1.msra.mxu0 %v1534
  %1546 = vmatprep.subr.mxu0 0.0
  %1547 = vmatpush1.msra.mxu0 0.0
  %1548 = vmatprep.subr.mxu0 0.0
  %1549 = vmatpush1.msra.mxu0 0.0
  %1550 = vmatprep.subr.mxu0 0.0
  %1551 = vmatpush1.msra.mxu0 0.0
  %1552 = vmatprep.subr.mxu0 0.0
  %1553 = vmatpush1.msra.mxu0 0.0
  %1554 = vmatprep.subr.mxu0 0.0
  %1555 = vmatpush1.msra.mxu0 0.0
  %1556 = vmatprep.subr.mxu0 0.0
  %1557 = vmatpush1.msra.mxu0 0.0
  %1558 = vmatprep.subr.mxu0 0.0
  %1559 = vmatpush1.msra.mxu0 0.0
  %1560 = vmatprep.subr.mxu0 0.0
  %1561 = vmatpush1.msra.mxu0 0.0
  %1562 = vmatprep.subr.mxu0 0.0
  %1563 = vmatpush1.msra.mxu0 0.0
  %1564 = vmatprep.subr.mxu0 0.0
  %1565 = vmatpush1.msra.mxu0 0.0
  %1566 = vmatprep.subr.mxu0 0.0
  %1567 = vmatpush1.msra.mxu0 0.0
  %1568 = vmatprep.subr.mxu0 0.0
  %1569 = vmatpush1.msra.mxu0 0.0
  %1570 = vmatprep.subr.mxu0 0.0
  %1571 = vmatpush1.msra.mxu0 0.0
  %1572 = vmatprep.subr.mxu0 0.0
  %1573 = vmatpush1.msra.mxu0 0.0
  %1574 = vmatprep.subr.mxu0 0.0
  %1575 = vmatpush1.msra.mxu0 0.0
  %1576 = vmatprep.subr.mxu0 0.0
  %1577 = vmatpush1.msra.mxu0 0.0
  %1578 = vmatprep.subr.mxu0 0.0
  %1579 = vmatpush1.msra.mxu0 0.0
  %1580 = vmatprep.subr.mxu0 0.0
  %1581 = vmatpush1.msra.mxu0 0.0
  %1582 = vmatprep.subr.mxu0 0.0
  %1583 = vmatpush1.msra.mxu0 0.0
  %1584 = vmatprep.subr.mxu0 0.0
  %1585 = vmatpush1.msra.mxu0 0.0
  %1586 = vmatprep.subr.mxu0 0.0
  %1587 = vmatpush1.msra.mxu0 0.0
  %1588 = vmatprep.subr.mxu0 0.0
  %1589 = vmatpush1.msra.mxu0 0.0
  %1590 = vmatprep.subr.mxu0 0.0
  %1591 = vmatpush1.msra.mxu0 0.0
  %1592 = vmatprep.subr.mxu0 0.0
  %1593 = vmatpush1.msra.mxu0 0.0
  %1594 = vmatprep.subr.mxu0 0.0
  %1595 = vmatpush1.msra.mxu0 0.0
  %1596 = vmatprep.subr.mxu0 0.0
  %1597 = vmatpush1.msra.mxu0 0.0
  %1598 = vmatprep.subr.mxu0 0.0
  %1599 = vmatpush1.msra.mxu0 0.0
  %1600 = vmatprep.subr.mxu0 0.0
  %1601 = vmatpush1.msra.mxu0 0.0
  %1602 = vmatprep.mubr.f32.mxu0 0.0
  %1603 = vmatmul.mubr.f32.gmra.mrb[0].mxu0 %v1536
  %v1604 = vpop.f32.mrb[0].mxu0
  %v1605 = vadd.f32 0.0, %v1604
  %v1606 = vpop.f32.mrb[0].mxu0
  %1607 = vdwg.mxu0
  %v1608 = vadd.f32 %v1528, %v1605
  %v1609 = vxor.u32 %v1608, 2147483648
  %v1610 = vmul.f32 %v1609, 1.442695
  %v1611 = vpow.pop %v1610
  %v1612 = vadd.f32 %v1611, 1.0
  %v1613 = vrcp.pop %v1612
  %v1614 = vmul.f32 1.0, %v1613
  %v1615 = vtanh.pop %v1608
  %1617 = vrot.lane.b32.xlu0 %v1529, 32
  %v1618 = vpop.permute.xlu0 %1617
  %v1620 = vmul.f32 %v1614, %v1618
  %1622 = vrot.lane.b32.xlu0 %v1615, 32
  %v1623 = vpop.permute.xlu0 %1622
  %v1625 = vmul.f32 %v1614, %v1623
  %1627 = vrot.lane.b32.xlu0 %v1625, 32
  %v1628 = vpop.permute.xlu0 %1627
  %v1630 = vadd.f32 %v1620, %v1628
  %v1631 = vtanh.pop %v1630
  %1633 = vrot.lane.b32.xlu0 %v1631, 32
  %v1634 = vpop.permute.xlu0 %1633
  %v1636 = vmul.f32 %v1614, %v1634
  %1638 = vrot.lane.b32.xlu0 %v1636, 64
  %v1639 = vpop.permute.xlu0 %1638
  %1641 = vst.msk [vmem:[#allocation2] sm:$0xff] %vm71, %v1639
  %1643 = vrot.lane.b32.xlu0 %v1630, 96
  %v1644 = vpop.permute.xlu0 %1643
  %1646 = vst.msk [vmem:[#allocation3] sm:$0xff] %vm71, %v1644
  %s1647 = scalar_lea.vmem %s4, 48
  %1648 = vst.msk [vmem:[%s1647] sm:$0xff] %vm71, %v1639
  %s1649 = scalar_lea.vmem %s44, 72
  %v1650 = vld [vmem:[%s1649] sm:$0xff]
  %v1651 = vld [vmem:[#allocation5] sm:$0xff]
  %v1652 = vld [vmem:[#allocation4] sm:$0xff]
  %v1653 = vld [vmem:[%s3] sm:$0xff]
  %v1654 = vld [vmem:[%s3 + $0x8] sm:$0xff]
  %v1655 = vld [vmem:[%s3 + $0x10] sm:$0xff]
  %v1656 = vld [vmem:[%s3 + $0x18] sm:$0xff]
  %v1658 = vsel %vm71, %v1652, 0
  %1660 = vmatprep.subr.mxu0 0.0
  %1661 = vmatpush1.msra.mxu0 %v1653
  %1662 = vmatprep.subr.mxu0 0.0
  %1663 = vmatpush1.msra.mxu0 %v1654
  %1664 = vmatprep.subr.mxu0 0.0
  %1665 = vmatpush1.msra.mxu0 %v1655
  %1666 = vmatprep.subr.mxu0 0.0
  %1667 = vmatpush1.msra.mxu0 %v1656
  %1668 = vmatprep.subr.mxu0 0.0
  %1669 = vmatpush1.msra.mxu0 0.0
  %1670 = vmatprep.subr.mxu0 0.0
  %1671 = vmatpush1.msra.mxu0 0.0
  %1672 = vmatprep.subr.mxu0 0.0
  %1673 = vmatpush1.msra.mxu0 0.0
  %1674 = vmatprep.subr.mxu0 0.0
  %1675 = vmatpush1.msra.mxu0 0.0
  %1676 = vmatprep.subr.mxu0 0.0
  %1677 = vmatpush1.msra.mxu0 0.0
  %1678 = vmatprep.subr.mxu0 0.0
  %1679 = vmatpush1.msra.mxu0 0.0
  %1680 = vmatprep.subr.mxu0 0.0
  %1681 = vmatpush1.msra.mxu0 0.0
  %1682 = vmatprep.subr.mxu0 0.0
  %1683 = vmatpush1.msra.mxu0 0.0
  %1684 = vmatprep.subr.mxu0 0.0
  %1685 = vmatpush1.msra.mxu0 0.0
  %1686 = vmatprep.subr.mxu0 0.0
  %1687 = vmatpush1.msra.mxu0 0.0
  %1688 = vmatprep.subr.mxu0 0.0
  %1689 = vmatpush1.msra.mxu0 0.0
  %1690 = vmatprep.subr.mxu0 0.0
  %1691 = vmatpush1.msra.mxu0 0.0
  %1692 = vmatprep.subr.mxu0 0.0
  %1693 = vmatpush1.msra.mxu0 0.0
  %1694 = vmatprep.subr.mxu0 0.0
  %1695 = vmatpush1.msra.mxu0 0.0
  %1696 = vmatprep.subr.mxu0 0.0
  %1697 = vmatpush1.msra.mxu0 0.0
  %1698 = vmatprep.subr.mxu0 0.0
  %1699 = vmatpush1.msra.mxu0 0.0
  %1700 = vmatprep.subr.mxu0 0.0
  %1701 = vmatpush1.msra.mxu0 0.0
  %1702 = vmatprep.subr.mxu0 0.0
  %1703 = vmatpush1.msra.mxu0 0.0
  %1704 = vmatprep.subr.mxu0 0.0
  %1705 = vmatpush1.msra.mxu0 0.0
  %1706 = vmatprep.subr.mxu0 0.0
  %1707 = vmatpush1.msra.mxu0 0.0
  %1708 = vmatprep.subr.mxu0 0.0
  %1709 = vmatpush1.msra.mxu0 0.0
  %1710 = vmatprep.subr.mxu0 0.0
  %1711 = vmatpush1.msra.mxu0 0.0
  %1712 = vmatprep.subr.mxu0 0.0
  %1713 = vmatpush1.msra.mxu0 0.0
  %1714 = vmatprep.subr.mxu0 0.0
  %1715 = vmatpush1.msra.mxu0 0.0
  %1716 = vmatprep.subr.mxu0 0.0
  %1717 = vmatpush1.msra.mxu0 0.0
  %1718 = vmatprep.subr.mxu0 0.0
  %1719 = vmatpush1.msra.mxu0 0.0
  %1720 = vmatprep.subr.mxu0 0.0
  %1721 = vmatpush1.msra.mxu0 0.0
  %1722 = vmatprep.subr.mxu0 0.0
  %1723 = vmatpush1.msra.mxu0 0.0
  %1724 = vmatprep.mubr.f32.mxu0 0.0
  %1725 = vmatmul.mubr.f32.gmra.mrb[0].mxu0 %v1658
  %v1726 = vpop.f32.mrb[0].mxu0
  %v1727 = vadd.f32 0.0, %v1726
  %v1728 = vpop.f32.mrb[0].mxu0
  %1729 = vdwg.mxu0
  %v1730 = vadd.f32 %v1650, %v1727
  %v1731 = vxor.u32 %v1730, 2147483648
  %v1732 = vmul.f32 %v1731, 1.442695
  %v1733 = vpow.pop %v1732
  %v1734 = vadd.f32 %v1733, 1.0
  %v1735 = vrcp.pop %v1734
  %v1736 = vmul.f32 1.0, %v1735
  %v1737 = vtanh.pop %v1730
  %1739 = vrot.lane.b32.xlu0 %v1651, 32
  %v1740 = vpop.permute.xlu0 %1739
  %v1742 = vmul.f32 %v1736, %v1740
  %1744 = vrot.lane.b32.xlu0 %v1737, 32
  %v1745 = vpop.permute.xlu0 %1744
  %v1747 = vmul.f32 %v1736, %v1745
  %1749 = vrot.lane.b32.xlu0 %v1747, 32
  %v1750 = vpop.permute.xlu0 %1749
  %v1752 = vadd.f32 %v1742, %v1750
  %v1753 = vtanh.pop %v1752
  %1755 = vrot.lane.b32.xlu0 %v1753, 32
  %v1756 = vpop.permute.xlu0 %1755
  %v1758 = vmul.f32 %v1736, %v1756
  %1760 = vrot.lane.b32.xlu0 %v1758, 64
  %v1761 = vpop.permute.xlu0 %1760
  %1763 = vst.msk [vmem:[#allocation4] sm:$0xff] %vm71, %v1761
  %1765 = vrot.lane.b32.xlu0 %v1752, 96
  %v1766 = vpop.permute.xlu0 %1765
  %1768 = vst.msk [vmem:[#allocation5] sm:$0xff] %vm71, %v1766
  %s1769 = scalar_lea.vmem %s52, 72
  %1770 = vst.msk [vmem:[%s1769] sm:$0xff] %vm71, %v1761
  %s1771 = scalar_lea.vmem %s0, 56
  %v1772 = vld [vmem:[%s1771] sm:$0xff]
  %v1773 = vld [vmem:[#allocation3] sm:$0xff]
  %v1774 = vld [vmem:[#allocation2] sm:$0xff]
  %v1775 = vld [vmem:[%s2] sm:$0xff]
  %v1776 = vld [vmem:[%s2 + $0x8] sm:$0xff]
  %v1777 = vld [vmem:[%s2 + $0x10] sm:$0xff]
  %v1778 = vld [vmem:[%s2 + $0x18] sm:$0xff]
  %v1780 = vsel %vm71, %v1774, 0
  %1782 = vmatprep.subr.mxu0 0.0
  %1783 = vmatpush1.msra.mxu0 %v1775
  %1784 = vmatprep.subr.mxu0 0.0
  %1785 = vmatpush1.msra.mxu0 %v1776
  %1786 = vmatprep.subr.mxu0 0.0
  %1787 = vmatpush1.msra.mxu0 %v1777
  %1788 = vmatprep.subr.mxu0 0.0
  %1789 = vmatpush1.msra.mxu0 %v1778
  %1790 = vmatprep.subr.mxu0 0.0
  %1791 = vmatpush1.msra.mxu0 0.0
  %1792 = vmatprep.subr.mxu0 0.0
  %1793 = vmatpush1.msra.mxu0 0.0
  %1794 = vmatprep.subr.mxu0 0.0
  %1795 = vmatpush1.msra.mxu0 0.0
  %1796 = vmatprep.subr.mxu0 0.0
  %1797 = vmatpush1.msra.mxu0 0.0
  %1798 = vmatprep.subr.mxu0 0.0
  %1799 = vmatpush1.msra.mxu0 0.0
  %1800 = vmatprep.subr.mxu0 0.0
  %1801 = vmatpush1.msra.mxu0 0.0
  %1802 = vmatprep.subr.mxu0 0.0
  %1803 = vmatpush1.msra.mxu0 0.0
  %1804 = vmatprep.subr.mxu0 0.0
  %1805 = vmatpush1.msra.mxu0 0.0
  %1806 = vmatprep.subr.mxu0 0.0
  %1807 = vmatpush1.msra.mxu0 0.0
  %1808 = vmatprep.subr.mxu0 0.0
  %1809 = vmatpush1.msra.mxu0 0.0
  %1810 = vmatprep.subr.mxu0 0.0
  %1811 = vmatpush1.msra.mxu0 0.0
  %1812 = vmatprep.subr.mxu0 0.0
  %1813 = vmatpush1.msra.mxu0 0.0
  %1814 = vmatprep.subr.mxu0 0.0
  %1815 = vmatpush1.msra.mxu0 0.0
  %1816 = vmatprep.subr.mxu0 0.0
  %1817 = vmatpush1.msra.mxu0 0.0
  %1818 = vmatprep.subr.mxu0 0.0
  %1819 = vmatpush1.msra.mxu0 0.0
  %1820 = vmatprep.subr.mxu0 0.0
  %1821 = vmatpush1.msra.mxu0 0.0
  %1822 = vmatprep.subr.mxu0 0.0
  %1823 = vmatpush1.msra.mxu0 0.0
  %1824 = vmatprep.subr.mxu0 0.0
  %1825 = vmatpush1.msra.mxu0 0.0
  %1826 = vmatprep.subr.mxu0 0.0
  %1827 = vmatpush1.msra.mxu0 0.0
  %1828 = vmatprep.subr.mxu0 0.0
  %1829 = vmatpush1.msra.mxu0 0.0
  %1830 = vmatprep.subr.mxu0 0.0
  %1831 = vmatpush1.msra.mxu0 0.0
  %1832 = vmatprep.subr.mxu0 0.0
  %1833 = vmatpush1.msra.mxu0 0.0
  %1834 = vmatprep.subr.mxu0 0.0
  %1835 = vmatpush1.msra.mxu0 0.0
  %1836 = vmatprep.subr.mxu0 0.0
  %1837 = vmatpush1.msra.mxu0 0.0
  %1838 = vmatprep.subr.mxu0 0.0
  %1839 = vmatpush1.msra.mxu0 0.0
  %1840 = vmatprep.subr.mxu0 0.0
  %1841 = vmatpush1.msra.mxu0 0.0
  %1842 = vmatprep.subr.mxu0 0.0
  %1843 = vmatpush1.msra.mxu0 0.0
  %1844 = vmatprep.subr.mxu0 0.0
  %1845 = vmatpush1.msra.mxu0 0.0
  %1846 = vmatprep.mubr.f32.mxu0 0.0
  %1847 = vmatmul.mubr.f32.gmra.mrb[0].mxu0 %v1780
  %v1848 = vpop.f32.mrb[0].mxu0
  %v1849 = vadd.f32 0.0, %v1848
  %v1850 = vpop.f32.mrb[0].mxu0
  %1851 = vdwg.mxu0
  %v1852 = vadd.f32 %v1772, %v1849
  %v1853 = vxor.u32 %v1852, 2147483648
  %v1854 = vmul.f32 %v1853, 1.442695
  %v1855 = vpow.pop %v1854
  %v1856 = vadd.f32 %v1855, 1.0
  %v1857 = vrcp.pop %v1856
  %v1858 = vmul.f32 1.0, %v1857
  %v1859 = vtanh.pop %v1852
  %1861 = vrot.lane.b32.xlu0 %v1773, 32
  %v1862 = vpop.permute.xlu0 %1861
  %v1864 = vmul.f32 %v1858, %v1862
  %1866 = vrot.lane.b32.xlu0 %v1859, 32
  %v1867 = vpop.permute.xlu0 %1866
  %v1869 = vmul.f32 %v1858, %v1867
  %1871 = vrot.lane.b32.xlu0 %v1869, 32
  %v1872 = vpop.permute.xlu0 %1871
  %v1874 = vadd.f32 %v1864, %v1872
  %v1875 = vtanh.pop %v1874
  %1877 = vrot.lane.b32.xlu0 %v1875, 32
  %v1878 = vpop.permute.xlu0 %1877
  %v1880 = vmul.f32 %v1858, %v1878
  %1882 = vrot.lane.b32.xlu0 %v1880, 64
  %v1883 = vpop.permute.xlu0 %1882
  %1885 = vst.msk [vmem:[#allocation2] sm:$0xff] %vm71, %v1883
  %1887 = vrot.lane.b32.xlu0 %v1874, 96
  %v1888 = vpop.permute.xlu0 %1887
  %1890 = vst.msk [vmem:[#allocation3] sm:$0xff] %vm71, %v1888
  %s1891 = scalar_lea.vmem %s4, 56
  %1892 = vst.msk [vmem:[%s1891] sm:$0xff] %vm71, %v1883
  %s1893 = scalar_lea.vmem %s44, 64
  %v1894 = vld [vmem:[%s1893] sm:$0xff]
  %v1895 = vld [vmem:[#allocation5] sm:$0xff]
  %v1896 = vld [vmem:[#allocation4] sm:$0xff]
  %v1897 = vld [vmem:[%s3] sm:$0xff]
  %v1898 = vld [vmem:[%s3 + $0x8] sm:$0xff]
  %v1899 = vld [vmem:[%s3 + $0x10] sm:$0xff]
  %v1900 = vld [vmem:[%s3 + $0x18] sm:$0xff]
  %v1902 = vsel %vm71, %v1896, 0
  %1904 = vmatprep.subr.mxu0 0.0
  %1905 = vmatpush1.msra.mxu0 %v1897
  %1906 = vmatprep.subr.mxu0 0.0
  %1907 = vmatpush1.msra.mxu0 %v1898
  %1908 = vmatprep.subr.mxu0 0.0
  %1909 = vmatpush1.msra.mxu0 %v1899
  %1910 = vmatprep.subr.mxu0 0.0
  %1911 = vmatpush1.msra.mxu0 %v1900
  %1912 = vmatprep.subr.mxu0 0.0
  %1913 = vmatpush1.msra.mxu0 0.0
  %1914 = vmatprep.subr.mxu0 0.0
  %1915 = vmatpush1.msra.mxu0 0.0
  %1916 = vmatprep.subr.mxu0 0.0
  %1917 = vmatpush1.msra.mxu0 0.0
  %1918 = vmatprep.subr.mxu0 0.0
  %1919 = vmatpush1.msra.mxu0 0.0
  %1920 = vmatprep.subr.mxu0 0.0
  %1921 = vmatpush1.msra.mxu0 0.0
  %1922 = vmatprep.subr.mxu0 0.0
  %1923 = vmatpush1.msra.mxu0 0.0
  %1924 = vmatprep.subr.mxu0 0.0
  %1925 = vmatpush1.msra.mxu0 0.0
  %1926 = vmatprep.subr.mxu0 0.0
  %1927 = vmatpush1.msra.mxu0 0.0
  %1928 = vmatprep.subr.mxu0 0.0
  %1929 = vmatpush1.msra.mxu0 0.0
  %1930 = vmatprep.subr.mxu0 0.0
  %1931 = vmatpush1.msra.mxu0 0.0
  %1932 = vmatprep.subr.mxu0 0.0
  %1933 = vmatpush1.msra.mxu0 0.0
  %1934 = vmatprep.subr.mxu0 0.0
  %1935 = vmatpush1.msra.mxu0 0.0
  %1936 = vmatprep.subr.mxu0 0.0
  %1937 = vmatpush1.msra.mxu0 0.0
  %1938 = vmatprep.subr.mxu0 0.0
  %1939 = vmatpush1.msra.mxu0 0.0
  %1940 = vmatprep.subr.mxu0 0.0
  %1941 = vmatpush1.msra.mxu0 0.0
  %1942 = vmatprep.subr.mxu0 0.0
  %1943 = vmatpush1.msra.mxu0 0.0
  %1944 = vmatprep.subr.mxu0 0.0
  %1945 = vmatpush1.msra.mxu0 0.0
  %1946 = vmatprep.subr.mxu0 0.0
  %1947 = vmatpush1.msra.mxu0 0.0
  %1948 = vmatprep.subr.mxu0 0.0
  %1949 = vmatpush1.msra.mxu0 0.0
  %1950 = vmatprep.subr.mxu0 0.0
  %1951 = vmatpush1.msra.mxu0 0.0
  %1952 = vmatprep.subr.mxu0 0.0
  %1953 = vmatpush1.msra.mxu0 0.0
  %1954 = vmatprep.subr.mxu0 0.0
  %1955 = vmatpush1.msra.mxu0 0.0
  %1956 = vmatprep.subr.mxu0 0.0
  %1957 = vmatpush1.msra.mxu0 0.0
  %1958 = vmatprep.subr.mxu0 0.0
  %1959 = vmatpush1.msra.mxu0 0.0
  %1960 = vmatprep.subr.mxu0 0.0
  %1961 = vmatpush1.msra.mxu0 0.0
  %1962 = vmatprep.subr.mxu0 0.0
  %1963 = vmatpush1.msra.mxu0 0.0
  %1964 = vmatprep.subr.mxu0 0.0
  %1965 = vmatpush1.msra.mxu0 0.0
  %1966 = vmatprep.subr.mxu0 0.0
  %1967 = vmatpush1.msra.mxu0 0.0
  %1968 = vmatprep.mubr.f32.mxu0 0.0
  %1969 = vmatmul.mubr.f32.gmra.mrb[0].mxu0 %v1902
  %v1970 = vpop.f32.mrb[0].mxu0
  %v1971 = vadd.f32 0.0, %v1970
  %v1972 = vpop.f32.mrb[0].mxu0
  %1973 = vdwg.mxu0
  %v1974 = vadd.f32 %v1894, %v1971
  %v1975 = vxor.u32 %v1974, 2147483648
  %v1976 = vmul.f32 %v1975, 1.442695
  %v1977 = vpow.pop %v1976
  %v1978 = vadd.f32 %v1977, 1.0
  %v1979 = vrcp.pop %v1978
  %v1980 = vmul.f32 1.0, %v1979
  %v1981 = vtanh.pop %v1974
  %1983 = vrot.lane.b32.xlu0 %v1895, 32
  %v1984 = vpop.permute.xlu0 %1983
  %v1986 = vmul.f32 %v1980, %v1984
  %1988 = vrot.lane.b32.xlu0 %v1981, 32
  %v1989 = vpop.permute.xlu0 %1988
  %v1991 = vmul.f32 %v1980, %v1989
  %1993 = vrot.lane.b32.xlu0 %v1991, 32
  %v1994 = vpop.permute.xlu0 %1993
  %v1996 = vadd.f32 %v1986, %v1994
  %v1997 = vtanh.pop %v1996
  %1999 = vrot.lane.b32.xlu0 %v1997, 32
  %v2000 = vpop.permute.xlu0 %1999
  %v2002 = vmul.f32 %v1980, %v2000
  %2004 = vrot.lane.b32.xlu0 %v2002, 64
  %v2005 = vpop.permute.xlu0 %2004
  %2007 = vst.msk [vmem:[#allocation4] sm:$0xff] %vm71, %v2005
  %2009 = vrot.lane.b32.xlu0 %v1996, 96
  %v2010 = vpop.permute.xlu0 %2009
  %2012 = vst.msk [vmem:[#allocation5] sm:$0xff] %vm71, %v2010
  %s2013 = scalar_lea.vmem %s52, 64
  %2014 = vst.msk [vmem:[%s2013] sm:$0xff] %vm71, %v2005
  %s2015 = scalar_lea.vmem %s0, 64
  %v2016 = vld [vmem:[%s2015] sm:$0xff]
  %v2017 = vld [vmem:[#allocation3] sm:$0xff]
  %v2018 = vld [vmem:[#allocation2] sm:$0xff]
  %v2019 = vld [vmem:[%s2] sm:$0xff]
  %v2020 = vld [vmem:[%s2 + $0x8] sm:$0xff]
  %v2021 = vld [vmem:[%s2 + $0x10] sm:$0xff]
  %v2022 = vld [vmem:[%s2 + $0x18] sm:$0xff]
  %v2024 = vsel %vm71, %v2018, 0
  %2026 = vmatprep.subr.mxu0 0.0
  %2027 = vmatpush1.msra.mxu0 %v2019
  %2028 = vmatprep.subr.mxu0 0.0
  %2029 = vmatpush1.msra.mxu0 %v2020
  %2030 = vmatprep.subr.mxu0 0.0
  %2031 = vmatpush1.msra.mxu0 %v2021
  %2032 = vmatprep.subr.mxu0 0.0
  %2033 = vmatpush1.msra.mxu0 %v2022
  %2034 = vmatprep.subr.mxu0 0.0
  %2035 = vmatpush1.msra.mxu0 0.0
  %2036 = vmatprep.subr.mxu0 0.0
  %2037 = vmatpush1.msra.mxu0 0.0
  %2038 = vmatprep.subr.mxu0 0.0
  %2039 = vmatpush1.msra.mxu0 0.0
  %2040 = vmatprep.subr.mxu0 0.0
  %2041 = vmatpush1.msra.mxu0 0.0
  %2042 = vmatprep.subr.mxu0 0.0
  %2043 = vmatpush1.msra.mxu0 0.0
  %2044 = vmatprep.subr.mxu0 0.0
  %2045 = vmatpush1.msra.mxu0 0.0
  %2046 = vmatprep.subr.mxu0 0.0
  %2047 = vmatpush1.msra.mxu0 0.0
  %2048 = vmatprep.subr.mxu0 0.0
  %2049 = vmatpush1.msra.mxu0 0.0
  %2050 = vmatprep.subr.mxu0 0.0
  %2051 = vmatpush1.msra.mxu0 0.0
  %2052 = vmatprep.subr.mxu0 0.0
  %2053 = vmatpush1.msra.mxu0 0.0
  %2054 = vmatprep.subr.mxu0 0.0
  %2055 = vmatpush1.msra.mxu0 0.0
  %2056 = vmatprep.subr.mxu0 0.0
  %2057 = vmatpush1.msra.mxu0 0.0
  %2058 = vmatprep.subr.mxu0 0.0
  %2059 = vmatpush1.msra.mxu0 0.0
  %2060 = vmatprep.subr.mxu0 0.0
  %2061 = vmatpush1.msra.mxu0 0.0
  %2062 = vmatprep.subr.mxu0 0.0
  %2063 = vmatpush1.msra.mxu0 0.0
  %2064 = vmatprep.subr.mxu0 0.0
  %2065 = vmatpush1.msra.mxu0 0.0
  %2066 = vmatprep.subr.mxu0 0.0
  %2067 = vmatpush1.msra.mxu0 0.0
  %2068 = vmatprep.subr.mxu0 0.0
  %2069 = vmatpush1.msra.mxu0 0.0
  %2070 = vmatprep.subr.mxu0 0.0
  %2071 = vmatpush1.msra.mxu0 0.0
  %2072 = vmatprep.subr.mxu0 0.0
  %2073 = vmatpush1.msra.mxu0 0.0
  %2074 = vmatprep.subr.mxu0 0.0
  %2075 = vmatpush1.msra.mxu0 0.0
  %2076 = vmatprep.subr.mxu0 0.0
  %2077 = vmatpush1.msra.mxu0 0.0
  %2078 = vmatprep.subr.mxu0 0.0
  %2079 = vmatpush1.msra.mxu0 0.0
  %2080 = vmatprep.subr.mxu0 0.0
  %2081 = vmatpush1.msra.mxu0 0.0
  %2082 = vmatprep.subr.mxu0 0.0
  %2083 = vmatpush1.msra.mxu0 0.0
  %2084 = vmatprep.subr.mxu0 0.0
  %2085 = vmatpush1.msra.mxu0 0.0
  %2086 = vmatprep.subr.mxu0 0.0
  %2087 = vmatpush1.msra.mxu0 0.0
  %2088 = vmatprep.subr.mxu0 0.0
  %2089 = vmatpush1.msra.mxu0 0.0
  %2090 = vmatprep.mubr.f32.mxu0 0.0
  %2091 = vmatmul.mubr.f32.gmra.mrb[0].mxu0 %v2024
  %v2092 = vpop.f32.mrb[0].mxu0
  %v2093 = vadd.f32 0.0, %v2092
  %v2094 = vpop.f32.mrb[0].mxu0
  %2095 = vdwg.mxu0
  %v2096 = vadd.f32 %v2016, %v2093
  %v2097 = vxor.u32 %v2096, 2147483648
  %v2098 = vmul.f32 %v2097, 1.442695
  %v2099 = vpow.pop %v2098
  %v2100 = vadd.f32 %v2099, 1.0
  %v2101 = vrcp.pop %v2100
  %v2102 = vmul.f32 1.0, %v2101
  %v2103 = vtanh.pop %v2096
  %2105 = vrot.lane.b32.xlu0 %v2017, 32
  %v2106 = vpop.permute.xlu0 %2105
  %v2108 = vmul.f32 %v2102, %v2106
  %2110 = vrot.lane.b32.xlu0 %v2103, 32
  %v2111 = vpop.permute.xlu0 %2110
  %v2113 = vmul.f32 %v2102, %v2111
  %2115 = vrot.lane.b32.xlu0 %v2113, 32
  %v2116 = vpop.permute.xlu0 %2115
  %v2118 = vadd.f32 %v2108, %v2116
  %v2119 = vtanh.pop %v2118
  %2121 = vrot.lane.b32.xlu0 %v2119, 32
  %v2122 = vpop.permute.xlu0 %2121
  %v2124 = vmul.f32 %v2102, %v2122
  %2126 = vrot.lane.b32.xlu0 %v2124, 64
  %v2127 = vpop.permute.xlu0 %2126
  %2129 = vst.msk [vmem:[#allocation2] sm:$0xff] %vm71, %v2127
  %2131 = vrot.lane.b32.xlu0 %v2118, 96
  %v2132 = vpop.permute.xlu0 %2131
  %2134 = vst.msk [vmem:[#allocation3] sm:$0xff] %vm71, %v2132
  %s2135 = scalar_lea.vmem %s4, 64
  %2136 = vst.msk [vmem:[%s2135] sm:$0xff] %vm71, %v2127
  %s2137 = scalar_lea.vmem %s44, 56
  %v2138 = vld [vmem:[%s2137] sm:$0xff]
  %v2139 = vld [vmem:[#allocation5] sm:$0xff]
  %v2140 = vld [vmem:[#allocation4] sm:$0xff]
  %v2141 = vld [vmem:[%s3] sm:$0xff]
  %v2142 = vld [vmem:[%s3 + $0x8] sm:$0xff]
  %v2143 = vld [vmem:[%s3 + $0x10] sm:$0xff]
  %v2144 = vld [vmem:[%s3 + $0x18] sm:$0xff]
  %v2146 = vsel %vm71, %v2140, 0
  %2148 = vmatprep.subr.mxu0 0.0
  %2149 = vmatpush1.msra.mxu0 %v2141
  %2150 = vmatprep.subr.mxu0 0.0
  %2151 = vmatpush1.msra.mxu0 %v2142
  %2152 = vmatprep.subr.mxu0 0.0
  %2153 = vmatpush1.msra.mxu0 %v2143
  %2154 = vmatprep.subr.mxu0 0.0
  %2155 = vmatpush1.msra.mxu0 %v2144
  %2156 = vmatprep.subr.mxu0 0.0
  %2157 = vmatpush1.msra.mxu0 0.0
  %2158 = vmatprep.subr.mxu0 0.0
  %2159 = vmatpush1.msra.mxu0 0.0
  %2160 = vmatprep.subr.mxu0 0.0
  %2161 = vmatpush1.msra.mxu0 0.0
  %2162 = vmatprep.subr.mxu0 0.0
  %2163 = vmatpush1.msra.mxu0 0.0
  %2164 = vmatprep.subr.mxu0 0.0
  %2165 = vmatpush1.msra.mxu0 0.0
  %2166 = vmatprep.subr.mxu0 0.0
  %2167 = vmatpush1.msra.mxu0 0.0
  %2168 = vmatprep.subr.mxu0 0.0
  %2169 = vmatpush1.msra.mxu0 0.0
  %2170 = vmatprep.subr.mxu0 0.0
  %2171 = vmatpush1.msra.mxu0 0.0
  %2172 = vmatprep.subr.mxu0 0.0
  %2173 = vmatpush1.msra.mxu0 0.0
  %2174 = vmatprep.subr.mxu0 0.0
  %2175 = vmatpush1.msra.mxu0 0.0
  %2176 = vmatprep.subr.mxu0 0.0
  %2177 = vmatpush1.msra.mxu0 0.0
  %2178 = vmatprep.subr.mxu0 0.0
  %2179 = vmatpush1.msra.mxu0 0.0
  %2180 = vmatprep.subr.mxu0 0.0
  %2181 = vmatpush1.msra.mxu0 0.0
  %2182 = vmatprep.subr.mxu0 0.0
  %2183 = vmatpush1.msra.mxu0 0.0
  %2184 = vmatprep.subr.mxu0 0.0
  %2185 = vmatpush1.msra.mxu0 0.0
  %2186 = vmatprep.subr.mxu0 0.0
  %2187 = vmatpush1.msra.mxu0 0.0
  %2188 = vmatprep.subr.mxu0 0.0
  %2189 = vmatpush1.msra.mxu0 0.0
  %2190 = vmatprep.subr.mxu0 0.0
  %2191 = vmatpush1.msra.mxu0 0.0
  %2192 = vmatprep.subr.mxu0 0.0
  %2193 = vmatpush1.msra.mxu0 0.0
  %2194 = vmatprep.subr.mxu0 0.0
  %2195 = vmatpush1.msra.mxu0 0.0
  %2196 = vmatprep.subr.mxu0 0.0
  %2197 = vmatpush1.msra.mxu0 0.0
  %2198 = vmatprep.subr.mxu0 0.0
  %2199 = vmatpush1.msra.mxu0 0.0
  %2200 = vmatprep.subr.mxu0 0.0
  %2201 = vmatpush1.msra.mxu0 0.0
  %2202 = vmatprep.subr.mxu0 0.0
  %2203 = vmatpush1.msra.mxu0 0.0
  %2204 = vmatprep.subr.mxu0 0.0
  %2205 = vmatpush1.msra.mxu0 0.0
  %2206 = vmatprep.subr.mxu0 0.0
  %2207 = vmatpush1.msra.mxu0 0.0
  %2208 = vmatprep.subr.mxu0 0.0
  %2209 = vmatpush1.msra.mxu0 0.0
  %2210 = vmatprep.subr.mxu0 0.0
  %2211 = vmatpush1.msra.mxu0 0.0
  %2212 = vmatprep.mubr.f32.mxu0 0.0
  %2213 = vmatmul.mubr.f32.gmra.mrb[0].mxu0 %v2146
  %v2214 = vpop.f32.mrb[0].mxu0
  %v2215 = vadd.f32 0.0, %v2214
  %v2216 = vpop.f32.mrb[0].mxu0
  %2217 = vdwg.mxu0
  %v2218 = vadd.f32 %v2138, %v2215
  %v2219 = vxor.u32 %v2218, 2147483648
  %v2220 = vmul.f32 %v2219, 1.442695
  %v2221 = vpow.pop %v2220
  %v2222 = vadd.f32 %v2221, 1.0
  %v2223 = vrcp.pop %v2222
  %v2224 = vmul.f32 1.0, %v2223
  %v2225 = vtanh.pop %v2218
  %2227 = vrot.lane.b32.xlu0 %v2139, 32
  %v2228 = vpop.permute.xlu0 %2227
  %v2230 = vmul.f32 %v2224, %v2228
  %2232 = vrot.lane.b32.xlu0 %v2225, 32
  %v2233 = vpop.permute.xlu0 %2232
  %v2235 = vmul.f32 %v2224, %v2233
  %2237 = vrot.lane.b32.xlu0 %v2235, 32
  %v2238 = vpop.permute.xlu0 %2237
  %v2240 = vadd.f32 %v2230, %v2238
  %v2241 = vtanh.pop %v2240
  %2243 = vrot.lane.b32.xlu0 %v2241, 32
  %v2244 = vpop.permute.xlu0 %2243
  %v2246 = vmul.f32 %v2224, %v2244
  %2248 = vrot.lane.b32.xlu0 %v2246, 64
  %v2249 = vpop.permute.xlu0 %2248
  %2251 = vst.msk [vmem:[#allocation4] sm:$0xff] %vm71, %v2249
  %2253 = vrot.lane.b32.xlu0 %v2240, 96
  %v2254 = vpop.permute.xlu0 %2253
  %2256 = vst.msk [vmem:[#allocation5] sm:$0xff] %vm71, %v2254
  %s2257 = scalar_lea.vmem %s52, 56
  %2258 = vst.msk [vmem:[%s2257] sm:$0xff] %vm71, %v2249
  %s2259 = scalar_lea.vmem %s0, 72
  %v2260 = vld [vmem:[%s2259] sm:$0xff]
  %v2261 = vld [vmem:[#allocation3] sm:$0xff]
  %v2262 = vld [vmem:[#allocation2] sm:$0xff]
  %v2263 = vld [vmem:[%s2] sm:$0xff]
  %v2264 = vld [vmem:[%s2 + $0x8] sm:$0xff]
  %v2265 = vld [vmem:[%s2 + $0x10] sm:$0xff]
  %v2266 = vld [vmem:[%s2 + $0x18] sm:$0xff]
  %v2268 = vsel %vm71, %v2262, 0
  %2270 = vmatprep.subr.mxu0 0.0
  %2271 = vmatpush1.msra.mxu0 %v2263
  %2272 = vmatprep.subr.mxu0 0.0
  %2273 = vmatpush1.msra.mxu0 %v2264
  %2274 = vmatprep.subr.mxu0 0.0
  %2275 = vmatpush1.msra.mxu0 %v2265
  %2276 = vmatprep.subr.mxu0 0.0
  %2277 = vmatpush1.msra.mxu0 %v2266
  %2278 = vmatprep.subr.mxu0 0.0
  %2279 = vmatpush1.msra.mxu0 0.0
  %2280 = vmatprep.subr.mxu0 0.0
  %2281 = vmatpush1.msra.mxu0 0.0
  %2282 = vmatprep.subr.mxu0 0.0
  %2283 = vmatpush1.msra.mxu0 0.0
  %2284 = vmatprep.subr.mxu0 0.0
  %2285 = vmatpush1.msra.mxu0 0.0
  %2286 = vmatprep.subr.mxu0 0.0
  %2287 = vmatpush1.msra.mxu0 0.0
  %2288 = vmatprep.subr.mxu0 0.0
  %2289 = vmatpush1.msra.mxu0 0.0
  %2290 = vmatprep.subr.mxu0 0.0
  %2291 = vmatpush1.msra.mxu0 0.0
  %2292 = vmatprep.subr.mxu0 0.0
  %2293 = vmatpush1.msra.mxu0 0.0
  %2294 = vmatprep.subr.mxu0 0.0
  %2295 = vmatpush1.msra.mxu0 0.0
  %2296 = vmatprep.subr.mxu0 0.0
  %2297 = vmatpush1.msra.mxu0 0.0
  %2298 = vmatprep.subr.mxu0 0.0
  %2299 = vmatpush1.msra.mxu0 0.0
  %2300 = vmatprep.subr.mxu0 0.0
  %2301 = vmatpush1.msra.mxu0 0.0
  %2302 = vmatprep.subr.mxu0 0.0
  %2303 = vmatpush1.msra.mxu0 0.0
  %2304 = vmatprep.subr.mxu0 0.0
  %2305 = vmatpush1.msra.mxu0 0.0
  %2306 = vmatprep.subr.mxu0 0.0
  %2307 = vmatpush1.msra.mxu0 0.0
  %2308 = vmatprep.subr.mxu0 0.0
  %2309 = vmatpush1.msra.mxu0 0.0
  %2310 = vmatprep.subr.mxu0 0.0
  %2311 = vmatpush1.msra.mxu0 0.0
  %2312 = vmatprep.subr.mxu0 0.0
  %2313 = vmatpush1.msra.mxu0 0.0
  %2314 = vmatprep.subr.mxu0 0.0
  %2315 = vmatpush1.msra.mxu0 0.0
  %2316 = vmatprep.subr.mxu0 0.0
  %2317 = vmatpush1.msra.mxu0 0.0
  %2318 = vmatprep.subr.mxu0 0.0
  %2319 = vmatpush1.msra.mxu0 0.0
  %2320 = vmatprep.subr.mxu0 0.0
  %2321 = vmatpush1.msra.mxu0 0.0
  %2322 = vmatprep.subr.mxu0 0.0
  %2323 = vmatpush1.msra.mxu0 0.0
  %2324 = vmatprep.subr.mxu0 0.0
  %2325 = vmatpush1.msra.mxu0 0.0
  %2326 = vmatprep.subr.mxu0 0.0
  %2327 = vmatpush1.msra.mxu0 0.0
  %2328 = vmatprep.subr.mxu0 0.0
  %2329 = vmatpush1.msra.mxu0 0.0
  %2330 = vmatprep.subr.mxu0 0.0
  %2331 = vmatpush1.msra.mxu0 0.0
  %2332 = vmatprep.subr.mxu0 0.0
  %2333 = vmatpush1.msra.mxu0 0.0
  %2334 = vmatprep.mubr.f32.mxu0 0.0
  %2335 = vmatmul.mubr.f32.gmra.mrb[0].mxu0 %v2268
  %v2336 = vpop.f32.mrb[0].mxu0
  %v2337 = vadd.f32 0.0, %v2336
  %v2338 = vpop.f32.mrb[0].mxu0
  %2339 = vdwg.mxu0
  %v2340 = vadd.f32 %v2260, %v2337
  %v2341 = vxor.u32 %v2340, 2147483648
  %v2342 = vmul.f32 %v2341, 1.442695
  %v2343 = vpow.pop %v2342
  %v2344 = vadd.f32 %v2343, 1.0
  %v2345 = vrcp.pop %v2344
  %v2346 = vmul.f32 1.0, %v2345
  %v2347 = vtanh.pop %v2340
  %2349 = vrot.lane.b32.xlu0 %v2261, 32
  %v2350 = vpop.permute.xlu0 %2349
  %v2352 = vmul.f32 %v2346, %v2350
  %2354 = vrot.lane.b32.xlu0 %v2347, 32
  %v2355 = vpop.permute.xlu0 %2354
  %v2357 = vmul.f32 %v2346, %v2355
  %2359 = vrot.lane.b32.xlu0 %v2357, 32
  %v2360 = vpop.permute.xlu0 %2359
  %v2362 = vadd.f32 %v2352, %v2360
  %v2363 = vtanh.pop %v2362
  %2365 = vrot.lane.b32.xlu0 %v2363, 32
  %v2366 = vpop.permute.xlu0 %2365
  %v2368 = vmul.f32 %v2346, %v2366
  %2370 = vrot.lane.b32.xlu0 %v2368, 64
  %v2371 = vpop.permute.xlu0 %2370
  %2373 = vst.msk [vmem:[#allocation2] sm:$0xff] %vm71, %v2371
  %2375 = vrot.lane.b32.xlu0 %v2362, 96
  %v2376 = vpop.permute.xlu0 %2375
  %2378 = vst.msk [vmem:[#allocation3] sm:$0xff] %vm71, %v2376
  %s2379 = scalar_lea.vmem %s4, 72
  %2380 = vst.msk [vmem:[%s2379] sm:$0xff] %vm71, %v2371
  %s2381 = scalar_lea.vmem %s44, 48
  %v2382 = vld [vmem:[%s2381] sm:$0xff]
  %v2383 = vld [vmem:[#allocation5] sm:$0xff]
  %v2384 = vld [vmem:[#allocation4] sm:$0xff]
  %v2385 = vld [vmem:[%s3] sm:$0xff]
  %v2386 = vld [vmem:[%s3 + $0x8] sm:$0xff]
  %v2387 = vld [vmem:[%s3 + $0x10] sm:$0xff]
  %v2388 = vld [vmem:[%s3 + $0x18] sm:$0xff]
  %v2390 = vsel %vm71, %v2384, 0
  %2392 = vmatprep.subr.mxu0 0.0
  %2393 = vmatpush1.msra.mxu0 %v2385
  %2394 = vmatprep.subr.mxu0 0.0
  %2395 = vmatpush1.msra.mxu0 %v2386
  %2396 = vmatprep.subr.mxu0 0.0
  %2397 = vmatpush1.msra.mxu0 %v2387
  %2398 = vmatprep.subr.mxu0 0.0
  %2399 = vmatpush1.msra.mxu0 %v2388
  %2400 = vmatprep.subr.mxu0 0.0
  %2401 = vmatpush1.msra.mxu0 0.0
  %2402 = vmatprep.subr.mxu0 0.0
  %2403 = vmatpush1.msra.mxu0 0.0
  %2404 = vmatprep.subr.mxu0 0.0
  %2405 = vmatpush1.msra.mxu0 0.0
  %2406 = vmatprep.subr.mxu0 0.0
  %2407 = vmatpush1.msra.mxu0 0.0
  %2408 = vmatprep.subr.mxu0 0.0
  %2409 = vmatpush1.msra.mxu0 0.0
  %2410 = vmatprep.subr.mxu0 0.0
  %2411 = vmatpush1.msra.mxu0 0.0
  %2412 = vmatprep.subr.mxu0 0.0
  %2413 = vmatpush1.msra.mxu0 0.0
  %2414 = vmatprep.subr.mxu0 0.0
  %2415 = vmatpush1.msra.mxu0 0.0
  %2416 = vmatprep.subr.mxu0 0.0
  %2417 = vmatpush1.msra.mxu0 0.0
  %2418 = vmatprep.subr.mxu0 0.0
  %2419 = vmatpush1.msra.mxu0 0.0
  %2420 = vmatprep.subr.mxu0 0.0
  %2421 = vmatpush1.msra.mxu0 0.0
  %2422 = vmatprep.subr.mxu0 0.0
  %2423 = vmatpush1.msra.mxu0 0.0
  %2424 = vmatprep.subr.mxu0 0.0
  %2425 = vmatpush1.msra.mxu0 0.0
  %2426 = vmatprep.subr.mxu0 0.0
  %2427 = vmatpush1.msra.mxu0 0.0
  %2428 = vmatprep.subr.mxu0 0.0
  %2429 = vmatpush1.msra.mxu0 0.0
  %2430 = vmatprep.subr.mxu0 0.0
  %2431 = vmatpush1.msra.mxu0 0.0
  %2432 = vmatprep.subr.mxu0 0.0
  %2433 = vmatpush1.msra.mxu0 0.0
  %2434 = vmatprep.subr.mxu0 0.0
  %2435 = vmatpush1.msra.mxu0 0.0
  %2436 = vmatprep.subr.mxu0 0.0
  %2437 = vmatpush1.msra.mxu0 0.0
  %2438 = vmatprep.subr.mxu0 0.0
  %2439 = vmatpush1.msra.mxu0 0.0
  %2440 = vmatprep.subr.mxu0 0.0
  %2441 = vmatpush1.msra.mxu0 0.0
  %2442 = vmatprep.subr.mxu0 0.0
  %2443 = vmatpush1.msra.mxu0 0.0
  %2444 = vmatprep.subr.mxu0 0.0
  %2445 = vmatpush1.msra.mxu0 0.0
  %2446 = vmatprep.subr.mxu0 0.0
  %2447 = vmatpush1.msra.mxu0 0.0
  %2448 = vmatprep.subr.mxu0 0.0
  %2449 = vmatpush1.msra.mxu0 0.0
  %2450 = vmatprep.subr.mxu0 0.0
  %2451 = vmatpush1.msra.mxu0 0.0
  %2452 = vmatprep.subr.mxu0 0.0
  %2453 = vmatpush1.msra.mxu0 0.0
  %2454 = vmatprep.subr.mxu0 0.0
  %2455 = vmatpush1.msra.mxu0 0.0
  %2456 = vmatprep.mubr.f32.mxu0 0.0
  %2457 = vmatmul.mubr.f32.gmra.mrb[0].mxu0 %v2390
  %v2458 = vpop.f32.mrb[0].mxu0
  %v2459 = vadd.f32 0.0, %v2458
  %v2460 = vpop.f32.mrb[0].mxu0
  %2461 = vdwg.mxu0
  %v2462 = vadd.f32 %v2382, %v2459
  %v2463 = vxor.u32 %v2462, 2147483648
  %v2464 = vmul.f32 %v2463, 1.442695
  %v2465 = vpow.pop %v2464
  %v2466 = vadd.f32 %v2465, 1.0
  %v2467 = vrcp.pop %v2466
  %v2468 = vmul.f32 1.0, %v2467
  %v2469 = vtanh.pop %v2462
  %2471 = vrot.lane.b32.xlu0 %v2383, 32
  %v2472 = vpop.permute.xlu0 %2471
  %v2474 = vmul.f32 %v2468, %v2472
  %2476 = vrot.lane.b32.xlu0 %v2469, 32
  %v2477 = vpop.permute.xlu0 %2476
  %v2479 = vmul.f32 %v2468, %v2477
  %2481 = vrot.lane.b32.xlu0 %v2479, 32
  %v2482 = vpop.permute.xlu0 %2481
  %v2484 = vadd.f32 %v2474, %v2482
  %v2485 = vtanh.pop %v2484
  %2487 = vrot.lane.b32.xlu0 %v2485, 32
  %v2488 = vpop.permute.xlu0 %2487
  %v2490 = vmul.f32 %v2468, %v2488
  %2492 = vrot.lane.b32.xlu0 %v2490, 64
  %v2493 = vpop.permute.xlu0 %2492
  %2495 = vst.msk [vmem:[#allocation4] sm:$0xff] %vm71, %v2493
  %2497 = vrot.lane.b32.xlu0 %v2484, 96
  %v2498 = vpop.permute.xlu0 %2497
  %2500 = vst.msk [vmem:[#allocation5] sm:$0xff] %vm71, %v2498
  %s2501 = scalar_lea.vmem %s52, 48
  %2502 = vst.msk [vmem:[%s2501] sm:$0xff] %vm71, %v2493
  %s2503 = scalar_lea.vmem %s0, 80
  %v2504 = vld [vmem:[%s2503] sm:$0xff]
  %v2505 = vld [vmem:[#allocation3] sm:$0xff]
  %v2506 = vld [vmem:[#allocation2] sm:$0xff]
  %v2507 = vld [vmem:[%s2] sm:$0xff]
  %v2508 = vld [vmem:[%s2 + $0x8] sm:$0xff]
  %v2509 = vld [vmem:[%s2 + $0x10] sm:$0xff]
  %v2510 = vld [vmem:[%s2 + $0x18] sm:$0xff]
  %v2512 = vsel %vm71, %v2506, 0
  %2514 = vmatprep.subr.mxu0 0.0
  %2515 = vmatpush1.msra.mxu0 %v2507
  %2516 = vmatprep.subr.mxu0 0.0
  %2517 = vmatpush1.msra.mxu0 %v2508
  %2518 = vmatprep.subr.mxu0 0.0
  %2519 = vmatpush1.msra.mxu0 %v2509
  %2520 = vmatprep.subr.mxu0 0.0
  %2521 = vmatpush1.msra.mxu0 %v2510
  %2522 = vmatprep.subr.mxu0 0.0
  %2523 = vmatpush1.msra.mxu0 0.0
  %2524 = vmatprep.subr.mxu0 0.0
  %2525 = vmatpush1.msra.mxu0 0.0
  %2526 = vmatprep.subr.mxu0 0.0
  %2527 = vmatpush1.msra.mxu0 0.0
  %2528 = vmatprep.subr.mxu0 0.0
  %2529 = vmatpush1.msra.mxu0 0.0
  %2530 = vmatprep.subr.mxu0 0.0
  %2531 = vmatpush1.msra.mxu0 0.0
  %2532 = vmatprep.subr.mxu0 0.0
  %2533 = vmatpush1.msra.mxu0 0.0
  %2534 = vmatprep.subr.mxu0 0.0
  %2535 = vmatpush1.msra.mxu0 0.0
  %2536 = vmatprep.subr.mxu0 0.0
  %2537 = vmatpush1.msra.mxu0 0.0
  %2538 = vmatprep.subr.mxu0 0.0
  %2539 = vmatpush1.msra.mxu0 0.0
  %2540 = vmatprep.subr.mxu0 0.0
  %2541 = vmatpush1.msra.mxu0 0.0
  %2542 = vmatprep.subr.mxu0 0.0
  %2543 = vmatpush1.msra.mxu0 0.0
  %2544 = vmatprep.subr.mxu0 0.0
  %2545 = vmatpush1.msra.mxu0 0.0
  %2546 = vmatprep.subr.mxu0 0.0
  %2547 = vmatpush1.msra.mxu0 0.0
  %2548 = vmatprep.subr.mxu0 0.0
  %2549 = vmatpush1.msra.mxu0 0.0
  %2550 = vmatprep.subr.mxu0 0.0
  %2551 = vmatpush1.msra.mxu0 0.0
  %2552 = vmatprep.subr.mxu0 0.0
  %2553 = vmatpush1.msra.mxu0 0.0
  %2554 = vmatprep.subr.mxu0 0.0
  %2555 = vmatpush1.msra.mxu0 0.0
  %2556 = vmatprep.subr.mxu0 0.0
  %2557 = vmatpush1.msra.mxu0 0.0
  %2558 = vmatprep.subr.mxu0 0.0
  %2559 = vmatpush1.msra.mxu0 0.0
  %2560 = vmatprep.subr.mxu0 0.0
  %2561 = vmatpush1.msra.mxu0 0.0
  %2562 = vmatprep.subr.mxu0 0.0
  %2563 = vmatpush1.msra.mxu0 0.0
  %2564 = vmatprep.subr.mxu0 0.0
  %2565 = vmatpush1.msra.mxu0 0.0
  %2566 = vmatprep.subr.mxu0 0.0
  %2567 = vmatpush1.msra.mxu0 0.0
  %2568 = vmatprep.subr.mxu0 0.0
  %2569 = vmatpush1.msra.mxu0 0.0
  %2570 = vmatprep.subr.mxu0 0.0
  %2571 = vmatpush1.msra.mxu0 0.0
  %2572 = vmatprep.subr.mxu0 0.0
  %2573 = vmatpush1.msra.mxu0 0.0
  %2574 = vmatprep.subr.mxu0 0.0
  %2575 = vmatpush1.msra.mxu0 0.0
  %2576 = vmatprep.subr.mxu0 0.0
  %2577 = vmatpush1.msra.mxu0 0.0
  %2578 = vmatprep.mubr.f32.mxu0 0.0
  %2579 = vmatmul.mubr.f32.gmra.mrb[0].mxu0 %v2512
  %v2580 = vpop.f32.mrb[0].mxu0
  %v2581 = vadd.f32 0.0, %v2580
  %v2582 = vpop.f32.mrb[0].mxu0
  %2583 = vdwg.mxu0
  %v2584 = vadd.f32 %v2504, %v2581
  %v2585 = vxor.u32 %v2584, 2147483648
  %v2586 = vmul.f32 %v2585, 1.442695
  %v2587 = vpow.pop %v2586
  %v2588 = vadd.f32 %v2587, 1.0
  %v2589 = vrcp.pop %v2588
  %v2590 = vmul.f32 1.0, %v2589
  %v2591 = vtanh.pop %v2584
  %2593 = vrot.lane.b32.xlu0 %v2505, 32
  %v2594 = vpop.permute.xlu0 %2593
  %v2596 = vmul.f32 %v2590, %v2594
  %2598 = vrot.lane.b32.xlu0 %v2591, 32
  %v2599 = vpop.permute.xlu0 %2598
  %v2601 = vmul.f32 %v2590, %v2599
  %2603 = vrot.lane.b32.xlu0 %v2601, 32
  %v2604 = vpop.permute.xlu0 %2603
  %v2606 = vadd.f32 %v2596, %v2604
  %v2607 = vtanh.pop %v2606
  %2609 = vrot.lane.b32.xlu0 %v2607, 32
  %v2610 = vpop.permute.xlu0 %2609
  %v2612 = vmul.f32 %v2590, %v2610
  %2614 = vrot.lane.b32.xlu0 %v2612, 64
  %v2615 = vpop.permute.xlu0 %2614
  %2617 = vst.msk [vmem:[#allocation2] sm:$0xff] %vm71, %v2615
  %2619 = vrot.lane.b32.xlu0 %v2606, 96
  %v2620 = vpop.permute.xlu0 %2619
  %2622 = vst.msk [vmem:[#allocation3] sm:$0xff] %vm71, %v2620
  %s2623 = scalar_lea.vmem %s4, 80
  %2624 = vst.msk [vmem:[%s2623] sm:$0xff] %vm71, %v2615
  %s2625 = scalar_lea.vmem %s44, 40
  %v2626 = vld [vmem:[%s2625] sm:$0xff]
  %v2627 = vld [vmem:[#allocation5] sm:$0xff]
  %v2628 = vld [vmem:[#allocation4] sm:$0xff]
  %v2629 = vld [vmem:[%s3] sm:$0xff]
  %v2630 = vld [vmem:[%s3 + $0x8] sm:$0xff]
  %v2631 = vld [vmem:[%s3 + $0x10] sm:$0xff]
  %v2632 = vld [vmem:[%s3 + $0x18] sm:$0xff]
  %v2634 = vsel %vm71, %v2628, 0
  %2636 = vmatprep.subr.mxu0 0.0
  %2637 = vmatpush1.msra.mxu0 %v2629
  %2638 = vmatprep.subr.mxu0 0.0
  %2639 = vmatpush1.msra.mxu0 %v2630
  %2640 = vmatprep.subr.mxu0 0.0
  %2641 = vmatpush1.msra.mxu0 %v2631
  %2642 = vmatprep.subr.mxu0 0.0
  %2643 = vmatpush1.msra.mxu0 %v2632
  %2644 = vmatprep.subr.mxu0 0.0
  %2645 = vmatpush1.msra.mxu0 0.0
  %2646 = vmatprep.subr.mxu0 0.0
  %2647 = vmatpush1.msra.mxu0 0.0
  %2648 = vmatprep.subr.mxu0 0.0
  %2649 = vmatpush1.msra.mxu0 0.0
  %2650 = vmatprep.subr.mxu0 0.0
  %2651 = vmatpush1.msra.mxu0 0.0
  %2652 = vmatprep.subr.mxu0 0.0
  %2653 = vmatpush1.msra.mxu0 0.0
  %2654 = vmatprep.subr.mxu0 0.0
  %2655 = vmatpush1.msra.mxu0 0.0
  %2656 = vmatprep.subr.mxu0 0.0
  %2657 = vmatpush1.msra.mxu0 0.0
  %2658 = vmatprep.subr.mxu0 0.0
  %2659 = vmatpush1.msra.mxu0 0.0
  %2660 = vmatprep.subr.mxu0 0.0
  %2661 = vmatpush1.msra.mxu0 0.0
  %2662 = vmatprep.subr.mxu0 0.0
  %2663 = vmatpush1.msra.mxu0 0.0
  %2664 = vmatprep.subr.mxu0 0.0
  %2665 = vmatpush1.msra.mxu0 0.0
  %2666 = vmatprep.subr.mxu0 0.0
  %2667 = vmatpush1.msra.mxu0 0.0
  %2668 = vmatprep.subr.mxu0 0.0
  %2669 = vmatpush1.msra.mxu0 0.0
  %2670 = vmatprep.subr.mxu0 0.0
  %2671 = vmatpush1.msra.mxu0 0.0
  %2672 = vmatprep.subr.mxu0 0.0
  %2673 = vmatpush1.msra.mxu0 0.0
  %2674 = vmatprep.subr.mxu0 0.0
  %2675 = vmatpush1.msra.mxu0 0.0
  %2676 = vmatprep.subr.mxu0 0.0
  %2677 = vmatpush1.msra.mxu0 0.0
  %2678 = vmatprep.subr.mxu0 0.0
  %2679 = vmatpush1.msra.mxu0 0.0
  %2680 = vmatprep.subr.mxu0 0.0
  %2681 = vmatpush1.msra.mxu0 0.0
  %2682 = vmatprep.subr.mxu0 0.0
  %2683 = vmatpush1.msra.mxu0 0.0
  %2684 = vmatprep.subr.mxu0 0.0
  %2685 = vmatpush1.msra.mxu0 0.0
  %2686 = vmatprep.subr.mxu0 0.0
  %2687 = vmatpush1.msra.mxu0 0.0
  %2688 = vmatprep.subr.mxu0 0.0
  %2689 = vmatpush1.msra.mxu0 0.0
  %2690 = vmatprep.subr.mxu0 0.0
  %2691 = vmatpush1.msra.mxu0 0.0
  %2692 = vmatprep.subr.mxu0 0.0
  %2693 = vmatpush1.msra.mxu0 0.0
  %2694 = vmatprep.subr.mxu0 0.0
  %2695 = vmatpush1.msra.mxu0 0.0
  %2696 = vmatprep.subr.mxu0 0.0
  %2697 = vmatpush1.msra.mxu0 0.0
  %2698 = vmatprep.subr.mxu0 0.0
  %2699 = vmatpush1.msra.mxu0 0.0
  %2700 = vmatprep.mubr.f32.mxu0 0.0
  %2701 = vmatmul.mubr.f32.gmra.mrb[0].mxu0 %v2634
  %v2702 = vpop.f32.mrb[0].mxu0
  %v2703 = vadd.f32 0.0, %v2702
  %v2704 = vpop.f32.mrb[0].mxu0
  %2705 = vdwg.mxu0
  %v2706 = vadd.f32 %v2626, %v2703
  %v2707 = vxor.u32 %v2706, 2147483648
  %v2708 = vmul.f32 %v2707, 1.442695
  %v2709 = vpow.pop %v2708
  %v2710 = vadd.f32 %v2709, 1.0
  %v2711 = vrcp.pop %v2710
  %v2712 = vmul.f32 1.0, %v2711
  %v2713 = vtanh.pop %v2706
  %2715 = vrot.lane.b32.xlu0 %v2627, 32
  %v2716 = vpop.permute.xlu0 %2715
  %v2718 = vmul.f32 %v2712, %v2716
  %2720 = vrot.lane.b32.xlu0 %v2713, 32
  %v2721 = vpop.permute.xlu0 %2720
  %v2723 = vmul.f32 %v2712, %v2721
  %2725 = vrot.lane.b32.xlu0 %v2723, 32
  %v2726 = vpop.permute.xlu0 %2725
  %v2728 = vadd.f32 %v2718, %v2726
  %v2729 = vtanh.pop %v2728
  %2731 = vrot.lane.b32.xlu0 %v2729, 32
  %v2732 = vpop.permute.xlu0 %2731
  %v2734 = vmul.f32 %v2712, %v2732
  %2736 = vrot.lane.b32.xlu0 %v2734, 64
  %v2737 = vpop.permute.xlu0 %2736
  %2739 = vst.msk [vmem:[#allocation4] sm:$0xff] %vm71, %v2737
  %2741 = vrot.lane.b32.xlu0 %v2728, 96
  %v2742 = vpop.permute.xlu0 %2741
  %2744 = vst.msk [vmem:[#allocation5] sm:$0xff] %vm71, %v2742
  %s2745 = scalar_lea.vmem %s52, 40
  %2746 = vst.msk [vmem:[%s2745] sm:$0xff] %vm71, %v2737
  %s2747 = scalar_lea.vmem %s0, 88
  %v2748 = vld [vmem:[%s2747] sm:$0xff]
  %v2749 = vld [vmem:[#allocation3] sm:$0xff]
  %v2750 = vld [vmem:[#allocation2] sm:$0xff]
  %v2751 = vld [vmem:[%s2] sm:$0xff]
  %v2752 = vld [vmem:[%s2 + $0x8] sm:$0xff]
  %v2753 = vld [vmem:[%s2 + $0x10] sm:$0xff]
  %v2754 = vld [vmem:[%s2 + $0x18] sm:$0xff]
  %v2756 = vsel %vm71, %v2750, 0
  %2758 = vmatprep.subr.mxu0 0.0
  %2759 = vmatpush1.msra.mxu0 %v2751
  %2760 = vmatprep.subr.mxu0 0.0
  %2761 = vmatpush1.msra.mxu0 %v2752
  %2762 = vmatprep.subr.mxu0 0.0
  %2763 = vmatpush1.msra.mxu0 %v2753
  %2764 = vmatprep.subr.mxu0 0.0
  %2765 = vmatpush1.msra.mxu0 %v2754
  %2766 = vmatprep.subr.mxu0 0.0
  %2767 = vmatpush1.msra.mxu0 0.0
  %2768 = vmatprep.subr.mxu0 0.0
  %2769 = vmatpush1.msra.mxu0 0.0
  %2770 = vmatprep.subr.mxu0 0.0
  %2771 = vmatpush1.msra.mxu0 0.0
  %2772 = vmatprep.subr.mxu0 0.0
  %2773 = vmatpush1.msra.mxu0 0.0
  %2774 = vmatprep.subr.mxu0 0.0
  %2775 = vmatpush1.msra.mxu0 0.0
  %2776 = vmatprep.subr.mxu0 0.0
  %2777 = vmatpush1.msra.mxu0 0.0
  %2778 = vmatprep.subr.mxu0 0.0
  %2779 = vmatpush1.msra.mxu0 0.0
  %2780 = vmatprep.subr.mxu0 0.0
  %2781 = vmatpush1.msra.mxu0 0.0
  %2782 = vmatprep.subr.mxu0 0.0
  %2783 = vmatpush1.msra.mxu0 0.0
  %2784 = vmatprep.subr.mxu0 0.0
  %2785 = vmatpush1.msra.mxu0 0.0
  %2786 = vmatprep.subr.mxu0 0.0
  %2787 = vmatpush1.msra.mxu0 0.0
  %2788 = vmatprep.subr.mxu0 0.0
  %2789 = vmatpush1.msra.mxu0 0.0
  %2790 = vmatprep.subr.mxu0 0.0
  %2791 = vmatpush1.msra.mxu0 0.0
  %2792 = vmatprep.subr.mxu0 0.0
  %2793 = vmatpush1.msra.mxu0 0.0
  %2794 = vmatprep.subr.mxu0 0.0
  %2795 = vmatpush1.msra.mxu0 0.0
  %2796 = vmatprep.subr.mxu0 0.0
  %2797 = vmatpush1.msra.mxu0 0.0
  %2798 = vmatprep.subr.mxu0 0.0
  %2799 = vmatpush1.msra.mxu0 0.0
  %2800 = vmatprep.subr.mxu0 0.0
  %2801 = vmatpush1.msra.mxu0 0.0
  %2802 = vmatprep.subr.mxu0 0.0
  %2803 = vmatpush1.msra.mxu0 0.0
  %2804 = vmatprep.subr.mxu0 0.0
  %2805 = vmatpush1.msra.mxu0 0.0
  %2806 = vmatprep.subr.mxu0 0.0
  %2807 = vmatpush1.msra.mxu0 0.0
  %2808 = vmatprep.subr.mxu0 0.0
  %2809 = vmatpush1.msra.mxu0 0.0
  %2810 = vmatprep.subr.mxu0 0.0
  %2811 = vmatpush1.msra.mxu0 0.0
  %2812 = vmatprep.subr.mxu0 0.0
  %2813 = vmatpush1.msra.mxu0 0.0
  %2814 = vmatprep.subr.mxu0 0.0
  %2815 = vmatpush1.msra.mxu0 0.0
  %2816 = vmatprep.subr.mxu0 0.0
  %2817 = vmatpush1.msra.mxu0 0.0
  %2818 = vmatprep.subr.mxu0 0.0
  %2819 = vmatpush1.msra.mxu0 0.0
  %2820 = vmatprep.subr.mxu0 0.0
  %2821 = vmatpush1.msra.mxu0 0.0
  %2822 = vmatprep.mubr.f32.mxu0 0.0
  %2823 = vmatmul.mubr.f32.gmra.mrb[0].mxu0 %v2756
  %v2824 = vpop.f32.mrb[0].mxu0
  %v2825 = vadd.f32 0.0, %v2824
  %v2826 = vpop.f32.mrb[0].mxu0
  %2827 = vdwg.mxu0
  %v2828 = vadd.f32 %v2748, %v2825
  %v2829 = vxor.u32 %v2828, 2147483648
  %v2830 = vmul.f32 %v2829, 1.442695
  %v2831 = vpow.pop %v2830
  %v2832 = vadd.f32 %v2831, 1.0
  %v2833 = vrcp.pop %v2832
  %v2834 = vmul.f32 1.0, %v2833
  %v2835 = vtanh.pop %v2828
  %2837 = vrot.lane.b32.xlu0 %v2749, 32
  %v2838 = vpop.permute.xlu0 %2837
  %v2840 = vmul.f32 %v2834, %v2838
  %2842 = vrot.lane.b32.xlu0 %v2835, 32
  %v2843 = vpop.permute.xlu0 %2842
  %v2845 = vmul.f32 %v2834, %v2843
  %2847 = vrot.lane.b32.xlu0 %v2845, 32
  %v2848 = vpop.permute.xlu0 %2847
  %v2850 = vadd.f32 %v2840, %v2848
  %v2851 = vtanh.pop %v2850
  %2853 = vrot.lane.b32.xlu0 %v2851, 32
  %v2854 = vpop.permute.xlu0 %2853
  %v2856 = vmul.f32 %v2834, %v2854
  %2858 = vrot.lane.b32.xlu0 %v2856, 64
  %v2859 = vpop.permute.xlu0 %2858
  %2861 = vst.msk [vmem:[#allocation2] sm:$0xff] %vm71, %v2859
  %2863 = vrot.lane.b32.xlu0 %v2850, 96
  %v2864 = vpop.permute.xlu0 %2863
  %2866 = vst.msk [vmem:[#allocation3] sm:$0xff] %vm71, %v2864
  %s2867 = scalar_lea.vmem %s4, 88
  %2868 = vst.msk [vmem:[%s2867] sm:$0xff] %vm71, %v2859
  %s2869 = scalar_lea.vmem %s44, 32
  %v2870 = vld [vmem:[%s2869] sm:$0xff]
  %v2871 = vld [vmem:[#allocation5] sm:$0xff]
  %v2872 = vld [vmem:[#allocation4] sm:$0xff]
  %v2873 = vld [vmem:[%s3] sm:$0xff]
  %v2874 = vld [vmem:[%s3 + $0x8] sm:$0xff]
  %v2875 = vld [vmem:[%s3 + $0x10] sm:$0xff]
  %v2876 = vld [vmem:[%s3 + $0x18] sm:$0xff]
  %v2878 = vsel %vm71, %v2872, 0
  %2880 = vmatprep.subr.mxu0 0.0
  %2881 = vmatpush1.msra.mxu0 %v2873
  %2882 = vmatprep.subr.mxu0 0.0
  %2883 = vmatpush1.msra.mxu0 %v2874
  %2884 = vmatprep.subr.mxu0 0.0
  %2885 = vmatpush1.msra.mxu0 %v2875
  %2886 = vmatprep.subr.mxu0 0.0
  %2887 = vmatpush1.msra.mxu0 %v2876
  %2888 = vmatprep.subr.mxu0 0.0
  %2889 = vmatpush1.msra.mxu0 0.0
  %2890 = vmatprep.subr.mxu0 0.0
  %2891 = vmatpush1.msra.mxu0 0.0
  %2892 = vmatprep.subr.mxu0 0.0
  %2893 = vmatpush1.msra.mxu0 0.0
  %2894 = vmatprep.subr.mxu0 0.0
  %2895 = vmatpush1.msra.mxu0 0.0
  %2896 = vmatprep.subr.mxu0 0.0
  %2897 = vmatpush1.msra.mxu0 0.0
  %2898 = vmatprep.subr.mxu0 0.0
  %2899 = vmatpush1.msra.mxu0 0.0
  %2900 = vmatprep.subr.mxu0 0.0
  %2901 = vmatpush1.msra.mxu0 0.0
  %2902 = vmatprep.subr.mxu0 0.0
  %2903 = vmatpush1.msra.mxu0 0.0
  %2904 = vmatprep.subr.mxu0 0.0
  %2905 = vmatpush1.msra.mxu0 0.0
  %2906 = vmatprep.subr.mxu0 0.0
  %2907 = vmatpush1.msra.mxu0 0.0
  %2908 = vmatprep.subr.mxu0 0.0
  %2909 = vmatpush1.msra.mxu0 0.0
  %2910 = vmatprep.subr.mxu0 0.0
  %2911 = vmatpush1.msra.mxu0 0.0
  %2912 = vmatprep.subr.mxu0 0.0
  %2913 = vmatpush1.msra.mxu0 0.0
  %2914 = vmatprep.subr.mxu0 0.0
  %2915 = vmatpush1.msra.mxu0 0.0
  %2916 = vmatprep.subr.mxu0 0.0
  %2917 = vmatpush1.msra.mxu0 0.0
  %2918 = vmatprep.subr.mxu0 0.0
  %2919 = vmatpush1.msra.mxu0 0.0
  %2920 = vmatprep.subr.mxu0 0.0
  %2921 = vmatpush1.msra.mxu0 0.0
  %2922 = vmatprep.subr.mxu0 0.0
  %2923 = vmatpush1.msra.mxu0 0.0
  %2924 = vmatprep.subr.mxu0 0.0
  %2925 = vmatpush1.msra.mxu0 0.0
  %2926 = vmatprep.subr.mxu0 0.0
  %2927 = vmatpush1.msra.mxu0 0.0
  %2928 = vmatprep.subr.mxu0 0.0
  %2929 = vmatpush1.msra.mxu0 0.0
  %2930 = vmatprep.subr.mxu0 0.0
  %2931 = vmatpush1.msra.mxu0 0.0
  %2932 = vmatprep.subr.mxu0 0.0
  %2933 = vmatpush1.msra.mxu0 0.0
  %2934 = vmatprep.subr.mxu0 0.0
  %2935 = vmatpush1.msra.mxu0 0.0
  %2936 = vmatprep.subr.mxu0 0.0
  %2937 = vmatpush1.msra.mxu0 0.0
  %2938 = vmatprep.subr.mxu0 0.0
  %2939 = vmatpush1.msra.mxu0 0.0
  %2940 = vmatprep.subr.mxu0 0.0
  %2941 = vmatpush1.msra.mxu0 0.0
  %2942 = vmatprep.subr.mxu0 0.0
  %2943 = vmatpush1.msra.mxu0 0.0
  %2944 = vmatprep.mubr.f32.mxu0 0.0
  %2945 = vmatmul.mubr.f32.gmra.mrb[0].mxu0 %v2878
  %v2946 = vpop.f32.mrb[0].mxu0
  %v2947 = vadd.f32 0.0, %v2946
  %v2948 = vpop.f32.mrb[0].mxu0
  %2949 = vdwg.mxu0
  %v2950 = vadd.f32 %v2870, %v2947
  %v2951 = vxor.u32 %v2950, 2147483648
  %v2952 = vmul.f32 %v2951, 1.442695
  %v2953 = vpow.pop %v2952
  %v2954 = vadd.f32 %v2953, 1.0
  %v2955 = vrcp.pop %v2954
  %v2956 = vmul.f32 1.0, %v2955
  %v2957 = vtanh.pop %v2950
  %2959 = vrot.lane.b32.xlu0 %v2871, 32
  %v2960 = vpop.permute.xlu0 %2959
  %v2962 = vmul.f32 %v2956, %v2960
  %2964 = vrot.lane.b32.xlu0 %v2957, 32
  %v2965 = vpop.permute.xlu0 %2964
  %v2967 = vmul.f32 %v2956, %v2965
  %2969 = vrot.lane.b32.xlu0 %v2967, 32
  %v2970 = vpop.permute.xlu0 %2969
  %v2972 = vadd.f32 %v2962, %v2970
  %v2973 = vtanh.pop %v2972
  %2975 = vrot.lane.b32.xlu0 %v2973, 32
  %v2976 = vpop.permute.xlu0 %2975
  %v2978 = vmul.f32 %v2956, %v2976
  %2980 = vrot.lane.b32.xlu0 %v2978, 64
  %v2981 = vpop.permute.xlu0 %2980
  %2983 = vst.msk [vmem:[#allocation4] sm:$0xff] %vm71, %v2981
  %2985 = vrot.lane.b32.xlu0 %v2972, 96
  %v2986 = vpop.permute.xlu0 %2985
  %2988 = vst.msk [vmem:[#allocation5] sm:$0xff] %vm71, %v2986
  %s2989 = scalar_lea.vmem %s52, 32
  %2990 = vst.msk [vmem:[%s2989] sm:$0xff] %vm71, %v2981
  %s2991 = scalar_lea.vmem %s0, 96
  %v2992 = vld [vmem:[%s2991] sm:$0xff]
  %v2993 = vld [vmem:[#allocation3] sm:$0xff]
  %v2994 = vld [vmem:[#allocation2] sm:$0xff]
  %v2995 = vld [vmem:[%s2] sm:$0xff]
  %v2996 = vld [vmem:[%s2 + $0x8] sm:$0xff]
  %v2997 = vld [vmem:[%s2 + $0x10] sm:$0xff]
  %v2998 = vld [vmem:[%s2 + $0x18] sm:$0xff]
  %v3000 = vsel %vm71, %v2994, 0
  %3002 = vmatprep.subr.mxu0 0.0
  %3003 = vmatpush1.msra.mxu0 %v2995
  %3004 = vmatprep.subr.mxu0 0.0
  %3005 = vmatpush1.msra.mxu0 %v2996
  %3006 = vmatprep.subr.mxu0 0.0
  %3007 = vmatpush1.msra.mxu0 %v2997
  %3008 = vmatprep.subr.mxu0 0.0
  %3009 = vmatpush1.msra.mxu0 %v2998
  %3010 = vmatprep.subr.mxu0 0.0
  %3011 = vmatpush1.msra.mxu0 0.0
  %3012 = vmatprep.subr.mxu0 0.0
  %3013 = vmatpush1.msra.mxu0 0.0
  %3014 = vmatprep.subr.mxu0 0.0
  %3015 = vmatpush1.msra.mxu0 0.0
  %3016 = vmatprep.subr.mxu0 0.0
  %3017 = vmatpush1.msra.mxu0 0.0
  %3018 = vmatprep.subr.mxu0 0.0
  %3019 = vmatpush1.msra.mxu0 0.0
  %3020 = vmatprep.subr.mxu0 0.0
  %3021 = vmatpush1.msra.mxu0 0.0
  %3022 = vmatprep.subr.mxu0 0.0
  %3023 = vmatpush1.msra.mxu0 0.0
  %3024 = vmatprep.subr.mxu0 0.0
  %3025 = vmatpush1.msra.mxu0 0.0
  %3026 = vmatprep.subr.mxu0 0.0
  %3027 = vmatpush1.msra.mxu0 0.0
  %3028 = vmatprep.subr.mxu0 0.0
  %3029 = vmatpush1.msra.mxu0 0.0
  %3030 = vmatprep.subr.mxu0 0.0
  %3031 = vmatpush1.msra.mxu0 0.0
  %3032 = vmatprep.subr.mxu0 0.0
  %3033 = vmatpush1.msra.mxu0 0.0
  %3034 = vmatprep.subr.mxu0 0.0
  %3035 = vmatpush1.msra.mxu0 0.0
  %3036 = vmatprep.subr.mxu0 0.0
  %3037 = vmatpush1.msra.mxu0 0.0
  %3038 = vmatprep.subr.mxu0 0.0
  %3039 = vmatpush1.msra.mxu0 0.0
  %3040 = vmatprep.subr.mxu0 0.0
  %3041 = vmatpush1.msra.mxu0 0.0
  %3042 = vmatprep.subr.mxu0 0.0
  %3043 = vmatpush1.msra.mxu0 0.0
  %3044 = vmatprep.subr.mxu0 0.0
  %3045 = vmatpush1.msra.mxu0 0.0
  %3046 = vmatprep.subr.mxu0 0.0
  %3047 = vmatpush1.msra.mxu0 0.0
  %3048 = vmatprep.subr.mxu0 0.0
  %3049 = vmatpush1.msra.mxu0 0.0
  %3050 = vmatprep.subr.mxu0 0.0
  %3051 = vmatpush1.msra.mxu0 0.0
  %3052 = vmatprep.subr.mxu0 0.0
  %3053 = vmatpush1.msra.mxu0 0.0
  %3054 = vmatprep.subr.mxu0 0.0
  %3055 = vmatpush1.msra.mxu0 0.0
  %3056 = vmatprep.subr.mxu0 0.0
  %3057 = vmatpush1.msra.mxu0 0.0
  %3058 = vmatprep.subr.mxu0 0.0
  %3059 = vmatpush1.msra.mxu0 0.0
  %3060 = vmatprep.subr.mxu0 0.0
  %3061 = vmatpush1.msra.mxu0 0.0
  %3062 = vmatprep.subr.mxu0 0.0
  %3063 = vmatpush1.msra.mxu0 0.0
  %3064 = vmatprep.subr.mxu0 0.0
  %3065 = vmatpush1.msra.mxu0 0.0
  %3066 = vmatprep.mubr.f32.mxu0 0.0
  %3067 = vmatmul.mubr.f32.gmra.mrb[0].mxu0 %v3000
  %v3068 = vpop.f32.mrb[0].mxu0
  %v3069 = vadd.f32 0.0, %v3068
  %v3070 = vpop.f32.mrb[0].mxu0
  %3071 = vdwg.mxu0
  %v3072 = vadd.f32 %v2992, %v3069
  %v3073 = vxor.u32 %v3072, 2147483648
  %v3074 = vmul.f32 %v3073, 1.442695
  %v3075 = vpow.pop %v3074
  %v3076 = vadd.f32 %v3075, 1.0
  %v3077 = vrcp.pop %v3076
  %v3078 = vmul.f32 1.0, %v3077
  %v3079 = vtanh.pop %v3072
  %3081 = vrot.lane.b32.xlu0 %v2993, 32
  %v3082 = vpop.permute.xlu0 %3081
  %v3084 = vmul.f32 %v3078, %v3082
  %3086 = vrot.lane.b32.xlu0 %v3079, 32
  %v3087 = vpop.permute.xlu0 %3086
  %v3089 = vmul.f32 %v3078, %v3087
  %3091 = vrot.lane.b32.xlu0 %v3089, 32
  %v3092 = vpop.permute.xlu0 %3091
  %v3094 = vadd.f32 %v3084, %v3092
  %v3095 = vtanh.pop %v3094
  %3097 = vrot.lane.b32.xlu0 %v3095, 32
  %v3098 = vpop.permute.xlu0 %3097
  %v3100 = vmul.f32 %v3078, %v3098
  %3102 = vrot.lane.b32.xlu0 %v3100, 64
  %v3103 = vpop.permute.xlu0 %3102
  %3105 = vst.msk [vmem:[#allocation2] sm:$0xff] %vm71, %v3103
  %3107 = vrot.lane.b32.xlu0 %v3094, 96
  %v3108 = vpop.permute.xlu0 %3107
  %3110 = vst.msk [vmem:[#allocation3] sm:$0xff] %vm71, %v3108
  %s3111 = scalar_lea.vmem %s4, 96
  %3112 = vst.msk [vmem:[%s3111] sm:$0xff] %vm71, %v3103
  %s3113 = scalar_lea.vmem %s44, 24
  %v3114 = vld [vmem:[%s3113] sm:$0xff]
  %v3115 = vld [vmem:[#allocation5] sm:$0xff]
  %v3116 = vld [vmem:[#allocation4] sm:$0xff]
  %v3117 = vld [vmem:[%s3] sm:$0xff]
  %v3118 = vld [vmem:[%s3 + $0x8] sm:$0xff]
  %v3119 = vld [vmem:[%s3 + $0x10] sm:$0xff]
  %v3120 = vld [vmem:[%s3 + $0x18] sm:$0xff]
  %v3122 = vsel %vm71, %v3116, 0
  %3124 = vmatprep.subr.mxu0 0.0
  %3125 = vmatpush1.msra.mxu0 %v3117
  %3126 = vmatprep.subr.mxu0 0.0
  %3127 = vmatpush1.msra.mxu0 %v3118
  %3128 = vmatprep.subr.mxu0 0.0
  %3129 = vmatpush1.msra.mxu0 %v3119
  %3130 = vmatprep.subr.mxu0 0.0
  %3131 = vmatpush1.msra.mxu0 %v3120
  %3132 = vmatprep.subr.mxu0 0.0
  %3133 = vmatpush1.msra.mxu0 0.0
  %3134 = vmatprep.subr.mxu0 0.0
  %3135 = vmatpush1.msra.mxu0 0.0
  %3136 = vmatprep.subr.mxu0 0.0
  %3137 = vmatpush1.msra.mxu0 0.0
  %3138 = vmatprep.subr.mxu0 0.0
  %3139 = vmatpush1.msra.mxu0 0.0
  %3140 = vmatprep.subr.mxu0 0.0
  %3141 = vmatpush1.msra.mxu0 0.0
  %3142 = vmatprep.subr.mxu0 0.0
  %3143 = vmatpush1.msra.mxu0 0.0
  %3144 = vmatprep.subr.mxu0 0.0
  %3145 = vmatpush1.msra.mxu0 0.0
  %3146 = vmatprep.subr.mxu0 0.0
  %3147 = vmatpush1.msra.mxu0 0.0
  %3148 = vmatprep.subr.mxu0 0.0
  %3149 = vmatpush1.msra.mxu0 0.0
  %3150 = vmatprep.subr.mxu0 0.0
  %3151 = vmatpush1.msra.mxu0 0.0
  %3152 = vmatprep.subr.mxu0 0.0
  %3153 = vmatpush1.msra.mxu0 0.0
  %3154 = vmatprep.subr.mxu0 0.0
  %3155 = vmatpush1.msra.mxu0 0.0
  %3156 = vmatprep.subr.mxu0 0.0
  %3157 = vmatpush1.msra.mxu0 0.0
  %3158 = vmatprep.subr.mxu0 0.0
  %3159 = vmatpush1.msra.mxu0 0.0
  %3160 = vmatprep.subr.mxu0 0.0
  %3161 = vmatpush1.msra.mxu0 0.0
  %3162 = vmatprep.subr.mxu0 0.0
  %3163 = vmatpush1.msra.mxu0 0.0
  %3164 = vmatprep.subr.mxu0 0.0
  %3165 = vmatpush1.msra.mxu0 0.0
  %3166 = vmatprep.subr.mxu0 0.0
  %3167 = vmatpush1.msra.mxu0 0.0
  %3168 = vmatprep.subr.mxu0 0.0
  %3169 = vmatpush1.msra.mxu0 0.0
  %3170 = vmatprep.subr.mxu0 0.0
  %3171 = vmatpush1.msra.mxu0 0.0
  %3172 = vmatprep.subr.mxu0 0.0
  %3173 = vmatpush1.msra.mxu0 0.0
  %3174 = vmatprep.subr.mxu0 0.0
  %3175 = vmatpush1.msra.mxu0 0.0
  %3176 = vmatprep.subr.mxu0 0.0
  %3177 = vmatpush1.msra.mxu0 0.0
  %3178 = vmatprep.subr.mxu0 0.0
  %3179 = vmatpush1.msra.mxu0 0.0
  %3180 = vmatprep.subr.mxu0 0.0
  %3181 = vmatpush1.msra.mxu0 0.0
  %3182 = vmatprep.subr.mxu0 0.0
  %3183 = vmatpush1.msra.mxu0 0.0
  %3184 = vmatprep.subr.mxu0 0.0
  %3185 = vmatpush1.msra.mxu0 0.0
  %3186 = vmatprep.subr.mxu0 0.0
  %3187 = vmatpush1.msra.mxu0 0.0
  %3188 = vmatprep.mubr.f32.mxu0 0.0
  %3189 = vmatmul.mubr.f32.gmra.mrb[0].mxu0 %v3122
  %v3190 = vpop.f32.mrb[0].mxu0
  %v3191 = vadd.f32 0.0, %v3190
  %v3192 = vpop.f32.mrb[0].mxu0
  %3193 = vdwg.mxu0
  %v3194 = vadd.f32 %v3114, %v3191
  %v3195 = vxor.u32 %v3194, 2147483648
  %v3196 = vmul.f32 %v3195, 1.442695
  %v3197 = vpow.pop %v3196
  %v3198 = vadd.f32 %v3197, 1.0
  %v3199 = vrcp.pop %v3198
  %v3200 = vmul.f32 1.0, %v3199
  %v3201 = vtanh.pop %v3194
  %3203 = vrot.lane.b32.xlu0 %v3115, 32
  %v3204 = vpop.permute.xlu0 %3203
  %v3206 = vmul.f32 %v3200, %v3204
  %3208 = vrot.lane.b32.xlu0 %v3201, 32
  %v3209 = vpop.permute.xlu0 %3208
  %v3211 = vmul.f32 %v3200, %v3209
  %3213 = vrot.lane.b32.xlu0 %v3211, 32
  %v3214 = vpop.permute.xlu0 %3213
  %v3216 = vadd.f32 %v3206, %v3214
  %v3217 = vtanh.pop %v3216
  %3219 = vrot.lane.b32.xlu0 %v3217, 32
  %v3220 = vpop.permute.xlu0 %3219
  %v3222 = vmul.f32 %v3200, %v3220
  %3224 = vrot.lane.b32.xlu0 %v3222, 64
  %v3225 = vpop.permute.xlu0 %3224
  %3227 = vst.msk [vmem:[#allocation4] sm:$0xff] %vm71, %v3225
  %3229 = vrot.lane.b32.xlu0 %v3216, 96
  %v3230 = vpop.permute.xlu0 %3229
  %3232 = vst.msk [vmem:[#allocation5] sm:$0xff] %vm71, %v3230
  %s3233 = scalar_lea.vmem %s52, 24
  %3234 = vst.msk [vmem:[%s3233] sm:$0xff] %vm71, %v3225
  %s3235 = scalar_lea.vmem %s0, 104
  %v3236 = vld [vmem:[%s3235] sm:$0xff]
  %v3237 = vld [vmem:[#allocation3] sm:$0xff]
  %v3238 = vld [vmem:[#allocation2] sm:$0xff]
  %v3239 = vld [vmem:[%s2] sm:$0xff]
  %v3240 = vld [vmem:[%s2 + $0x8] sm:$0xff]
  %v3241 = vld [vmem:[%s2 + $0x10] sm:$0xff]
  %v3242 = vld [vmem:[%s2 + $0x18] sm:$0xff]
  %v3244 = vsel %vm71, %v3238, 0
  %3246 = vmatprep.subr.mxu0 0.0
  %3247 = vmatpush1.msra.mxu0 %v3239
  %3248 = vmatprep.subr.mxu0 0.0
  %3249 = vmatpush1.msra.mxu0 %v3240
  %3250 = vmatprep.subr.mxu0 0.0
  %3251 = vmatpush1.msra.mxu0 %v3241
  %3252 = vmatprep.subr.mxu0 0.0
  %3253 = vmatpush1.msra.mxu0 %v3242
  %3254 = vmatprep.subr.mxu0 0.0
  %3255 = vmatpush1.msra.mxu0 0.0
  %3256 = vmatprep.subr.mxu0 0.0
  %3257 = vmatpush1.msra.mxu0 0.0
  %3258 = vmatprep.subr.mxu0 0.0
  %3259 = vmatpush1.msra.mxu0 0.0
  %3260 = vmatprep.subr.mxu0 0.0
  %3261 = vmatpush1.msra.mxu0 0.0
  %3262 = vmatprep.subr.mxu0 0.0
  %3263 = vmatpush1.msra.mxu0 0.0
  %3264 = vmatprep.subr.mxu0 0.0
  %3265 = vmatpush1.msra.mxu0 0.0
  %3266 = vmatprep.subr.mxu0 0.0
  %3267 = vmatpush1.msra.mxu0 0.0
  %3268 = vmatprep.subr.mxu0 0.0
  %3269 = vmatpush1.msra.mxu0 0.0
  %3270 = vmatprep.subr.mxu0 0.0
  %3271 = vmatpush1.msra.mxu0 0.0
  %3272 = vmatprep.subr.mxu0 0.0
  %3273 = vmatpush1.msra.mxu0 0.0
  %3274 = vmatprep.subr.mxu0 0.0
  %3275 = vmatpush1.msra.mxu0 0.0
  %3276 = vmatprep.subr.mxu0 0.0
  %3277 = vmatpush1.msra.mxu0 0.0
  %3278 = vmatprep.subr.mxu0 0.0
  %3279 = vmatpush1.msra.mxu0 0.0
  %3280 = vmatprep.subr.mxu0 0.0
  %3281 = vmatpush1.msra.mxu0 0.0
  %3282 = vmatprep.subr.mxu0 0.0
  %3283 = vmatpush1.msra.mxu0 0.0
  %3284 = vmatprep.subr.mxu0 0.0
  %3285 = vmatpush1.msra.mxu0 0.0
  %3286 = vmatprep.subr.mxu0 0.0
  %3287 = vmatpush1.msra.mxu0 0.0
  %3288 = vmatprep.subr.mxu0 0.0
  %3289 = vmatpush1.msra.mxu0 0.0
  %3290 = vmatprep.subr.mxu0 0.0
  %3291 = vmatpush1.msra.mxu0 0.0
  %3292 = vmatprep.subr.mxu0 0.0
  %3293 = vmatpush1.msra.mxu0 0.0
  %3294 = vmatprep.subr.mxu0 0.0
  %3295 = vmatpush1.msra.mxu0 0.0
  %3296 = vmatprep.subr.mxu0 0.0
  %3297 = vmatpush1.msra.mxu0 0.0
  %3298 = vmatprep.subr.mxu0 0.0
  %3299 = vmatpush1.msra.mxu0 0.0
  %3300 = vmatprep.subr.mxu0 0.0
  %3301 = vmatpush1.msra.mxu0 0.0
  %3302 = vmatprep.subr.mxu0 0.0
  %3303 = vmatpush1.msra.mxu0 0.0
  %3304 = vmatprep.subr.mxu0 0.0
  %3305 = vmatpush1.msra.mxu0 0.0
  %3306 = vmatprep.subr.mxu0 0.0
  %3307 = vmatpush1.msra.mxu0 0.0
  %3308 = vmatprep.subr.mxu0 0.0
  %3309 = vmatpush1.msra.mxu0 0.0
  %3310 = vmatprep.mubr.f32.mxu0 0.0
  %3311 = vmatmul.mubr.f32.gmra.mrb[0].mxu0 %v3244
  %v3312 = vpop.f32.mrb[0].mxu0
  %v3313 = vadd.f32 0.0, %v3312
  %v3314 = vpop.f32.mrb[0].mxu0
  %3315 = vdwg.mxu0
  %v3316 = vadd.f32 %v3236, %v3313
  %v3317 = vxor.u32 %v3316, 2147483648
  %v3318 = vmul.f32 %v3317, 1.442695
  %v3319 = vpow.pop %v3318
  %v3320 = vadd.f32 %v3319, 1.0
  %v3321 = vrcp.pop %v3320
  %v3322 = vmul.f32 1.0, %v3321
  %v3323 = vtanh.pop %v3316
  %3325 = vrot.lane.b32.xlu0 %v3237, 32
  %v3326 = vpop.permute.xlu0 %3325
  %v3328 = vmul.f32 %v3322, %v3326
  %3330 = vrot.lane.b32.xlu0 %v3323, 32
  %v3331 = vpop.permute.xlu0 %3330
  %v3333 = vmul.f32 %v3322, %v3331
  %3335 = vrot.lane.b32.xlu0 %v3333, 32
  %v3336 = vpop.permute.xlu0 %3335
  %v3338 = vadd.f32 %v3328, %v3336
  %v3339 = vtanh.pop %v3338
  %3341 = vrot.lane.b32.xlu0 %v3339, 32
  %v3342 = vpop.permute.xlu0 %3341
  %v3344 = vmul.f32 %v3322, %v3342
  %3346 = vrot.lane.b32.xlu0 %v3344, 64
  %v3347 = vpop.permute.xlu0 %3346
  %3349 = vst.msk [vmem:[#allocation2] sm:$0xff] %vm71, %v3347
  %3351 = vrot.lane.b32.xlu0 %v3338, 96
  %v3352 = vpop.permute.xlu0 %3351
  %3354 = vst.msk [vmem:[#allocation3] sm:$0xff] %vm71, %v3352
  %s3355 = scalar_lea.vmem %s4, 104
  %3356 = vst.msk [vmem:[%s3355] sm:$0xff] %vm71, %v3347
  %s3357 = scalar_lea.vmem %s44, 16
  %v3358 = vld [vmem:[%s3357] sm:$0xff]
  %v3359 = vld [vmem:[#allocation5] sm:$0xff]
  %v3360 = vld [vmem:[#allocation4] sm:$0xff]
  %v3361 = vld [vmem:[%s3] sm:$0xff]
  %v3362 = vld [vmem:[%s3 + $0x8] sm:$0xff]
  %v3363 = vld [vmem:[%s3 + $0x10] sm:$0xff]
  %v3364 = vld [vmem:[%s3 + $0x18] sm:$0xff]
  %v3366 = vsel %vm71, %v3360, 0
  %3368 = vmatprep.subr.mxu0 0.0
  %3369 = vmatpush1.msra.mxu0 %v3361
  %3370 = vmatprep.subr.mxu0 0.0
  %3371 = vmatpush1.msra.mxu0 %v3362
  %3372 = vmatprep.subr.mxu0 0.0
  %3373 = vmatpush1.msra.mxu0 %v3363
  %3374 = vmatprep.subr.mxu0 0.0
  %3375 = vmatpush1.msra.mxu0 %v3364
  %3376 = vmatprep.subr.mxu0 0.0
  %3377 = vmatpush1.msra.mxu0 0.0
  %3378 = vmatprep.subr.mxu0 0.0
  %3379 = vmatpush1.msra.mxu0 0.0
  %3380 = vmatprep.subr.mxu0 0.0
  %3381 = vmatpush1.msra.mxu0 0.0
  %3382 = vmatprep.subr.mxu0 0.0
  %3383 = vmatpush1.msra.mxu0 0.0
  %3384 = vmatprep.subr.mxu0 0.0
  %3385 = vmatpush1.msra.mxu0 0.0
  %3386 = vmatprep.subr.mxu0 0.0
  %3387 = vmatpush1.msra.mxu0 0.0
  %3388 = vmatprep.subr.mxu0 0.0
  %3389 = vmatpush1.msra.mxu0 0.0
  %3390 = vmatprep.subr.mxu0 0.0
  %3391 = vmatpush1.msra.mxu0 0.0
  %3392 = vmatprep.subr.mxu0 0.0
  %3393 = vmatpush1.msra.mxu0 0.0
  %3394 = vmatprep.subr.mxu0 0.0
  %3395 = vmatpush1.msra.mxu0 0.0
  %3396 = vmatprep.subr.mxu0 0.0
  %3397 = vmatpush1.msra.mxu0 0.0
  %3398 = vmatprep.subr.mxu0 0.0
  %3399 = vmatpush1.msra.mxu0 0.0
  %3400 = vmatprep.subr.mxu0 0.0
  %3401 = vmatpush1.msra.mxu0 0.0
  %3402 = vmatprep.subr.mxu0 0.0
  %3403 = vmatpush1.msra.mxu0 0.0
  %3404 = vmatprep.subr.mxu0 0.0
  %3405 = vmatpush1.msra.mxu0 0.0
  %3406 = vmatprep.subr.mxu0 0.0
  %3407 = vmatpush1.msra.mxu0 0.0
  %3408 = vmatprep.subr.mxu0 0.0
  %3409 = vmatpush1.msra.mxu0 0.0
  %3410 = vmatprep.subr.mxu0 0.0
  %3411 = vmatpush1.msra.mxu0 0.0
  %3412 = vmatprep.subr.mxu0 0.0
  %3413 = vmatpush1.msra.mxu0 0.0
  %3414 = vmatprep.subr.mxu0 0.0
  %3415 = vmatpush1.msra.mxu0 0.0
  %3416 = vmatprep.subr.mxu0 0.0
  %3417 = vmatpush1.msra.mxu0 0.0
  %3418 = vmatprep.subr.mxu0 0.0
  %3419 = vmatpush1.msra.mxu0 0.0
  %3420 = vmatprep.subr.mxu0 0.0
  %3421 = vmatpush1.msra.mxu0 0.0
  %3422 = vmatprep.subr.mxu0 0.0
  %3423 = vmatpush1.msra.mxu0 0.0
  %3424 = vmatprep.subr.mxu0 0.0
  %3425 = vmatpush1.msra.mxu0 0.0
  %3426 = vmatprep.subr.mxu0 0.0
  %3427 = vmatpush1.msra.mxu0 0.0
  %3428 = vmatprep.subr.mxu0 0.0
  %3429 = vmatpush1.msra.mxu0 0.0
  %3430 = vmatprep.subr.mxu0 0.0
  %3431 = vmatpush1.msra.mxu0 0.0
  %3432 = vmatprep.mubr.f32.mxu0 0.0
  %3433 = vmatmul.mubr.f32.gmra.mrb[0].mxu0 %v3366
  %v3434 = vpop.f32.mrb[0].mxu0
  %v3435 = vadd.f32 0.0, %v3434
  %v3436 = vpop.f32.mrb[0].mxu0
  %3437 = vdwg.mxu0
  %v3438 = vadd.f32 %v3358, %v3435
  %v3439 = vxor.u32 %v3438, 2147483648
  %v3440 = vmul.f32 %v3439, 1.442695
  %v3441 = vpow.pop %v3440
  %v3442 = vadd.f32 %v3441, 1.0
  %v3443 = vrcp.pop %v3442
  %v3444 = vmul.f32 1.0, %v3443
  %v3445 = vtanh.pop %v3438
  %3447 = vrot.lane.b32.xlu0 %v3359, 32
  %v3448 = vpop.permute.xlu0 %3447
  %v3450 = vmul.f32 %v3444, %v3448
  %3452 = vrot.lane.b32.xlu0 %v3445, 32
  %v3453 = vpop.permute.xlu0 %3452
  %v3455 = vmul.f32 %v3444, %v3453
  %3457 = vrot.lane.b32.xlu0 %v3455, 32
  %v3458 = vpop.permute.xlu0 %3457
  %v3460 = vadd.f32 %v3450, %v3458
  %v3461 = vtanh.pop %v3460
  %3463 = vrot.lane.b32.xlu0 %v3461, 32
  %v3464 = vpop.permute.xlu0 %3463
  %v3466 = vmul.f32 %v3444, %v3464
  %3468 = vrot.lane.b32.xlu0 %v3466, 64
  %v3469 = vpop.permute.xlu0 %3468
  %3471 = vst.msk [vmem:[#allocation4] sm:$0xff] %vm71, %v3469
  %3473 = vrot.lane.b32.xlu0 %v3460, 96
  %v3474 = vpop.permute.xlu0 %3473
  %3476 = vst.msk [vmem:[#allocation5] sm:$0xff] %vm71, %v3474
  %s3477 = scalar_lea.vmem %s52, 16
  %3478 = vst.msk [vmem:[%s3477] sm:$0xff] %vm71, %v3469
  %s3479 = scalar_lea.vmem %s0, 112
  %v3480 = vld [vmem:[%s3479] sm:$0xff]
  %v3481 = vld [vmem:[#allocation3] sm:$0xff]
  %v3482 = vld [vmem:[#allocation2] sm:$0xff]
  %v3483 = vld [vmem:[%s2] sm:$0xff]
  %v3484 = vld [vmem:[%s2 + $0x8] sm:$0xff]
  %v3485 = vld [vmem:[%s2 + $0x10] sm:$0xff]
  %v3486 = vld [vmem:[%s2 + $0x18] sm:$0xff]
  %v3488 = vsel %vm71, %v3482, 0
  %3490 = vmatprep.subr.mxu0 0.0
  %3491 = vmatpush1.msra.mxu0 %v3483
  %3492 = vmatprep.subr.mxu0 0.0
  %3493 = vmatpush1.msra.mxu0 %v3484
  %3494 = vmatprep.subr.mxu0 0.0
  %3495 = vmatpush1.msra.mxu0 %v3485
  %3496 = vmatprep.subr.mxu0 0.0
  %3497 = vmatpush1.msra.mxu0 %v3486
  %3498 = vmatprep.subr.mxu0 0.0
  %3499 = vmatpush1.msra.mxu0 0.0
  %3500 = vmatprep.subr.mxu0 0.0
  %3501 = vmatpush1.msra.mxu0 0.0
  %3502 = vmatprep.subr.mxu0 0.0
  %3503 = vmatpush1.msra.mxu0 0.0
  %3504 = vmatprep.subr.mxu0 0.0
  %3505 = vmatpush1.msra.mxu0 0.0
  %3506 = vmatprep.subr.mxu0 0.0
  %3507 = vmatpush1.msra.mxu0 0.0
  %3508 = vmatprep.subr.mxu0 0.0
  %3509 = vmatpush1.msra.mxu0 0.0
  %3510 = vmatprep.subr.mxu0 0.0
  %3511 = vmatpush1.msra.mxu0 0.0
  %3512 = vmatprep.subr.mxu0 0.0
  %3513 = vmatpush1.msra.mxu0 0.0
  %3514 = vmatprep.subr.mxu0 0.0
  %3515 = vmatpush1.msra.mxu0 0.0
  %3516 = vmatprep.subr.mxu0 0.0
  %3517 = vmatpush1.msra.mxu0 0.0
  %3518 = vmatprep.subr.mxu0 0.0
  %3519 = vmatpush1.msra.mxu0 0.0
  %3520 = vmatprep.subr.mxu0 0.0
  %3521 = vmatpush1.msra.mxu0 0.0
  %3522 = vmatprep.subr.mxu0 0.0
  %3523 = vmatpush1.msra.mxu0 0.0
  %3524 = vmatprep.subr.mxu0 0.0
  %3525 = vmatpush1.msra.mxu0 0.0
  %3526 = vmatprep.subr.mxu0 0.0
  %3527 = vmatpush1.msra.mxu0 0.0
  %3528 = vmatprep.subr.mxu0 0.0
  %3529 = vmatpush1.msra.mxu0 0.0
  %3530 = vmatprep.subr.mxu0 0.0
  %3531 = vmatpush1.msra.mxu0 0.0
  %3532 = vmatprep.subr.mxu0 0.0
  %3533 = vmatpush1.msra.mxu0 0.0
  %3534 = vmatprep.subr.mxu0 0.0
  %3535 = vmatpush1.msra.mxu0 0.0
  %3536 = vmatprep.subr.mxu0 0.0
  %3537 = vmatpush1.msra.mxu0 0.0
  %3538 = vmatprep.subr.mxu0 0.0
  %3539 = vmatpush1.msra.mxu0 0.0
  %3540 = vmatprep.subr.mxu0 0.0
  %3541 = vmatpush1.msra.mxu0 0.0
  %3542 = vmatprep.subr.mxu0 0.0
  %3543 = vmatpush1.msra.mxu0 0.0
  %3544 = vmatprep.subr.mxu0 0.0
  %3545 = vmatpush1.msra.mxu0 0.0
  %3546 = vmatprep.subr.mxu0 0.0
  %3547 = vmatpush1.msra.mxu0 0.0
  %3548 = vmatprep.subr.mxu0 0.0
  %3549 = vmatpush1.msra.mxu0 0.0
  %3550 = vmatprep.subr.mxu0 0.0
  %3551 = vmatpush1.msra.mxu0 0.0
  %3552 = vmatprep.subr.mxu0 0.0
  %3553 = vmatpush1.msra.mxu0 0.0
  %3554 = vmatprep.mubr.f32.mxu0 0.0
  %3555 = vmatmul.mubr.f32.gmra.mrb[0].mxu0 %v3488
  %v3556 = vpop.f32.mrb[0].mxu0
  %v3557 = vadd.f32 0.0, %v3556
  %v3558 = vpop.f32.mrb[0].mxu0
  %3559 = vdwg.mxu0
  %v3560 = vadd.f32 %v3480, %v3557
  %v3561 = vxor.u32 %v3560, 2147483648
  %v3562 = vmul.f32 %v3561, 1.442695
  %v3563 = vpow.pop %v3562
  %v3564 = vadd.f32 %v3563, 1.0
  %v3565 = vrcp.pop %v3564
  %v3566 = vmul.f32 1.0, %v3565
  %v3567 = vtanh.pop %v3560
  %3569 = vrot.lane.b32.xlu0 %v3481, 32
  %v3570 = vpop.permute.xlu0 %3569
  %v3572 = vmul.f32 %v3566, %v3570
  %3574 = vrot.lane.b32.xlu0 %v3567, 32
  %v3575 = vpop.permute.xlu0 %3574
  %v3577 = vmul.f32 %v3566, %v3575
  %3579 = vrot.lane.b32.xlu0 %v3577, 32
  %v3580 = vpop.permute.xlu0 %3579
  %v3582 = vadd.f32 %v3572, %v3580
  %v3583 = vtanh.pop %v3582
  %3585 = vrot.lane.b32.xlu0 %v3583, 32
  %v3586 = vpop.permute.xlu0 %3585
  %v3588 = vmul.f32 %v3566, %v3586
  %3590 = vrot.lane.b32.xlu0 %v3588, 64
  %v3591 = vpop.permute.xlu0 %3590
  %3593 = vst.msk [vmem:[#allocation2] sm:$0xff] %vm71, %v3591
  %3595 = vrot.lane.b32.xlu0 %v3582, 96
  %v3596 = vpop.permute.xlu0 %3595
  %3598 = vst.msk [vmem:[#allocation3] sm:$0xff] %vm71, %v3596
  %s3599 = scalar_lea.vmem %s4, 112
  %3600 = vst.msk [vmem:[%s3599] sm:$0xff] %vm71, %v3591
  %s3601 = scalar_lea.vmem %s44, 8
  %v3602 = vld [vmem:[%s3601] sm:$0xff]
  %v3603 = vld [vmem:[#allocation5] sm:$0xff]
  %v3604 = vld [vmem:[#allocation4] sm:$0xff]
  %v3605 = vld [vmem:[%s3] sm:$0xff]
  %v3606 = vld [vmem:[%s3 + $0x8] sm:$0xff]
  %v3607 = vld [vmem:[%s3 + $0x10] sm:$0xff]
  %v3608 = vld [vmem:[%s3 + $0x18] sm:$0xff]
  %v3610 = vsel %vm71, %v3604, 0
  %3612 = vmatprep.subr.mxu0 0.0
  %3613 = vmatpush1.msra.mxu0 %v3605
  %3614 = vmatprep.subr.mxu0 0.0
  %3615 = vmatpush1.msra.mxu0 %v3606
  %3616 = vmatprep.subr.mxu0 0.0
  %3617 = vmatpush1.msra.mxu0 %v3607
  %3618 = vmatprep.subr.mxu0 0.0
  %3619 = vmatpush1.msra.mxu0 %v3608
  %3620 = vmatprep.subr.mxu0 0.0
  %3621 = vmatpush1.msra.mxu0 0.0
  %3622 = vmatprep.subr.mxu0 0.0
  %3623 = vmatpush1.msra.mxu0 0.0
  %3624 = vmatprep.subr.mxu0 0.0
  %3625 = vmatpush1.msra.mxu0 0.0
  %3626 = vmatprep.subr.mxu0 0.0
  %3627 = vmatpush1.msra.mxu0 0.0
  %3628 = vmatprep.subr.mxu0 0.0
  %3629 = vmatpush1.msra.mxu0 0.0
  %3630 = vmatprep.subr.mxu0 0.0
  %3631 = vmatpush1.msra.mxu0 0.0
  %3632 = vmatprep.subr.mxu0 0.0
  %3633 = vmatpush1.msra.mxu0 0.0
  %3634 = vmatprep.subr.mxu0 0.0
  %3635 = vmatpush1.msra.mxu0 0.0
  %3636 = vmatprep.subr.mxu0 0.0
  %3637 = vmatpush1.msra.mxu0 0.0
  %3638 = vmatprep.subr.mxu0 0.0
  %3639 = vmatpush1.msra.mxu0 0.0
  %3640 = vmatprep.subr.mxu0 0.0
  %3641 = vmatpush1.msra.mxu0 0.0
  %3642 = vmatprep.subr.mxu0 0.0
  %3643 = vmatpush1.msra.mxu0 0.0
  %3644 = vmatprep.subr.mxu0 0.0
  %3645 = vmatpush1.msra.mxu0 0.0
  %3646 = vmatprep.subr.mxu0 0.0
  %3647 = vmatpush1.msra.mxu0 0.0
  %3648 = vmatprep.subr.mxu0 0.0
  %3649 = vmatpush1.msra.mxu0 0.0
  %3650 = vmatprep.subr.mxu0 0.0
  %3651 = vmatpush1.msra.mxu0 0.0
  %3652 = vmatprep.subr.mxu0 0.0
  %3653 = vmatpush1.msra.mxu0 0.0
  %3654 = vmatprep.subr.mxu0 0.0
  %3655 = vmatpush1.msra.mxu0 0.0
  %3656 = vmatprep.subr.mxu0 0.0
  %3657 = vmatpush1.msra.mxu0 0.0
  %3658 = vmatprep.subr.mxu0 0.0
  %3659 = vmatpush1.msra.mxu0 0.0
  %3660 = vmatprep.subr.mxu0 0.0
  %3661 = vmatpush1.msra.mxu0 0.0
  %3662 = vmatprep.subr.mxu0 0.0
  %3663 = vmatpush1.msra.mxu0 0.0
  %3664 = vmatprep.subr.mxu0 0.0
  %3665 = vmatpush1.msra.mxu0 0.0
  %3666 = vmatprep.subr.mxu0 0.0
  %3667 = vmatpush1.msra.mxu0 0.0
  %3668 = vmatprep.subr.mxu0 0.0
  %3669 = vmatpush1.msra.mxu0 0.0
  %3670 = vmatprep.subr.mxu0 0.0
  %3671 = vmatpush1.msra.mxu0 0.0
  %3672 = vmatprep.subr.mxu0 0.0
  %3673 = vmatpush1.msra.mxu0 0.0
  %3674 = vmatprep.subr.mxu0 0.0
  %3675 = vmatpush1.msra.mxu0 0.0
  %3676 = vmatprep.mubr.f32.mxu0 0.0
  %3677 = vmatmul.mubr.f32.gmra.mrb[0].mxu0 %v3610
  %v3678 = vpop.f32.mrb[0].mxu0
  %v3679 = vadd.f32 0.0, %v3678
  %v3680 = vpop.f32.mrb[0].mxu0
  %3681 = vdwg.mxu0
  %v3682 = vadd.f32 %v3602, %v3679
  %v3683 = vxor.u32 %v3682, 2147483648
  %v3684 = vmul.f32 %v3683, 1.442695
  %v3685 = vpow.pop %v3684
  %v3686 = vadd.f32 %v3685, 1.0
  %v3687 = vrcp.pop %v3686
  %v3688 = vmul.f32 1.0, %v3687
  %v3689 = vtanh.pop %v3682
  %3691 = vrot.lane.b32.xlu0 %v3603, 32
  %v3692 = vpop.permute.xlu0 %3691
  %v3694 = vmul.f32 %v3688, %v3692
  %3696 = vrot.lane.b32.xlu0 %v3689, 32
  %v3697 = vpop.permute.xlu0 %3696
  %v3699 = vmul.f32 %v3688, %v3697
  %3701 = vrot.lane.b32.xlu0 %v3699, 32
  %v3702 = vpop.permute.xlu0 %3701
  %v3704 = vadd.f32 %v3694, %v3702
  %v3705 = vtanh.pop %v3704
  %3707 = vrot.lane.b32.xlu0 %v3705, 32
  %v3708 = vpop.permute.xlu0 %3707
  %v3710 = vmul.f32 %v3688, %v3708
  %3712 = vrot.lane.b32.xlu0 %v3710, 64
  %v3713 = vpop.permute.xlu0 %3712
  %3715 = vst.msk [vmem:[#allocation4] sm:$0xff] %vm71, %v3713
  %3717 = vrot.lane.b32.xlu0 %v3704, 96
  %v3718 = vpop.permute.xlu0 %3717
  %3720 = vst.msk [vmem:[#allocation5] sm:$0xff] %vm71, %v3718
  %s3721 = scalar_lea.vmem %s52, 8
  %3722 = vst.msk [vmem:[%s3721] sm:$0xff] %vm71, %v3713
  %s3723 = scalar_lea.vmem %s0, 120
  %v3724 = vld [vmem:[%s3723] sm:$0xff]
  %v3725 = vld [vmem:[#allocation3] sm:$0xff]
  %v3726 = vld [vmem:[#allocation2] sm:$0xff]
  %v3727 = vld [vmem:[%s2] sm:$0xff]
  %v3728 = vld [vmem:[%s2 + $0x8] sm:$0xff]
  %v3729 = vld [vmem:[%s2 + $0x10] sm:$0xff]
  %v3730 = vld [vmem:[%s2 + $0x18] sm:$0xff]
  %v3732 = vsel %vm71, %v3726, 0
  %3734 = vmatprep.subr.mxu0 0.0
  %3735 = vmatpush1.msra.mxu0 %v3727
  %3736 = vmatprep.subr.mxu0 0.0
  %3737 = vmatpush1.msra.mxu0 %v3728
  %3738 = vmatprep.subr.mxu0 0.0
  %3739 = vmatpush1.msra.mxu0 %v3729
  %3740 = vmatprep.subr.mxu0 0.0
  %3741 = vmatpush1.msra.mxu0 %v3730
  %3742 = vmatprep.subr.mxu0 0.0
  %3743 = vmatpush1.msra.mxu0 0.0
  %3744 = vmatprep.subr.mxu0 0.0
  %3745 = vmatpush1.msra.mxu0 0.0
  %3746 = vmatprep.subr.mxu0 0.0
  %3747 = vmatpush1.msra.mxu0 0.0
  %3748 = vmatprep.subr.mxu0 0.0
  %3749 = vmatpush1.msra.mxu0 0.0
  %3750 = vmatprep.subr.mxu0 0.0
  %3751 = vmatpush1.msra.mxu0 0.0
  %3752 = vmatprep.subr.mxu0 0.0
  %3753 = vmatpush1.msra.mxu0 0.0
  %3754 = vmatprep.subr.mxu0 0.0
  %3755 = vmatpush1.msra.mxu0 0.0
  %3756 = vmatprep.subr.mxu0 0.0
  %3757 = vmatpush1.msra.mxu0 0.0
  %3758 = vmatprep.subr.mxu0 0.0
  %3759 = vmatpush1.msra.mxu0 0.0
  %3760 = vmatprep.subr.mxu0 0.0
  %3761 = vmatpush1.msra.mxu0 0.0
  %3762 = vmatprep.subr.mxu0 0.0
  %3763 = vmatpush1.msra.mxu0 0.0
  %3764 = vmatprep.subr.mxu0 0.0
  %3765 = vmatpush1.msra.mxu0 0.0
  %3766 = vmatprep.subr.mxu0 0.0
  %3767 = vmatpush1.msra.mxu0 0.0
  %3768 = vmatprep.subr.mxu0 0.0
  %3769 = vmatpush1.msra.mxu0 0.0
  %3770 = vmatprep.subr.mxu0 0.0
  %3771 = vmatpush1.msra.mxu0 0.0
  %3772 = vmatprep.subr.mxu0 0.0
  %3773 = vmatpush1.msra.mxu0 0.0
  %3774 = vmatprep.subr.mxu0 0.0
  %3775 = vmatpush1.msra.mxu0 0.0
  %3776 = vmatprep.subr.mxu0 0.0
  %3777 = vmatpush1.msra.mxu0 0.0
  %3778 = vmatprep.subr.mxu0 0.0
  %3779 = vmatpush1.msra.mxu0 0.0
  %3780 = vmatprep.subr.mxu0 0.0
  %3781 = vmatpush1.msra.mxu0 0.0
  %3782 = vmatprep.subr.mxu0 0.0
  %3783 = vmatpush1.msra.mxu0 0.0
  %3784 = vmatprep.subr.mxu0 0.0
  %3785 = vmatpush1.msra.mxu0 0.0
  %3786 = vmatprep.subr.mxu0 0.0
  %3787 = vmatpush1.msra.mxu0 0.0
  %3788 = vmatprep.subr.mxu0 0.0
  %3789 = vmatpush1.msra.mxu0 0.0
  %3790 = vmatprep.subr.mxu0 0.0
  %3791 = vmatpush1.msra.mxu0 0.0
  %3792 = vmatprep.subr.mxu0 0.0
  %3793 = vmatpush1.msra.mxu0 0.0
  %3794 = vmatprep.subr.mxu0 0.0
  %3795 = vmatpush1.msra.mxu0 0.0
  %3796 = vmatprep.subr.mxu0 0.0
  %3797 = vmatpush1.msra.mxu0 0.0
  %3798 = vmatprep.mubr.f32.mxu0 0.0
  %3799 = vmatmul.mubr.f32.gmra.mrb[0].mxu0 %v3732
  %v3800 = vpop.f32.mrb[0].mxu0
  %v3801 = vadd.f32 0.0, %v3800
  %v3802 = vpop.f32.mrb[0].mxu0
  %3803 = vdwg.mxu0
  %v3804 = vadd.f32 %v3724, %v3801
  %v3805 = vxor.u32 %v3804, 2147483648
  %v3806 = vmul.f32 %v3805, 1.442695
  %v3807 = vpow.pop %v3806
  %v3808 = vadd.f32 %v3807, 1.0
  %v3809 = vrcp.pop %v3808
  %v3810 = vmul.f32 1.0, %v3809
  %v3811 = vtanh.pop %v3804
  %3813 = vrot.lane.b32.xlu0 %v3725, 32
  %v3814 = vpop.permute.xlu0 %3813
  %v3816 = vmul.f32 %v3810, %v3814
  %3818 = vrot.lane.b32.xlu0 %v3811, 32
  %v3819 = vpop.permute.xlu0 %3818
  %v3821 = vmul.f32 %v3810, %v3819
  %3823 = vrot.lane.b32.xlu0 %v3821, 32
  %v3824 = vpop.permute.xlu0 %3823
  %v3826 = vadd.f32 %v3816, %v3824
  %v3827 = vtanh.pop %v3826
  %3829 = vrot.lane.b32.xlu0 %v3827, 32
  %v3830 = vpop.permute.xlu0 %3829
  %v3832 = vmul.f32 %v3810, %v3830
  %3834 = vrot.lane.b32.xlu0 %v3832, 64
  %v3835 = vpop.permute.xlu0 %3834
  %3837 = vst.msk [vmem:[#allocation2] sm:$0xff] %vm71, %v3835
  %3839 = vrot.lane.b32.xlu0 %v3826, 96
  %v3840 = vpop.permute.xlu0 %3839
  %3842 = vst.msk [vmem:[#allocation3] sm:$0xff] %vm71, %v3840
  %s3843 = scalar_lea.vmem %s4, 120
  %3844 = vst.msk [vmem:[%s3843] sm:$0xff] %vm71, %v3835
  %v3845 = vld [vmem:[%s44] sm:$0xff]
  %v3846 = vld [vmem:[#allocation5] sm:$0xff]
  %v3847 = vld [vmem:[#allocation4] sm:$0xff]
  %v3848 = vld [vmem:[%s3] sm:$0xff]
  %v3849 = vld [vmem:[%s3 + $0x8] sm:$0xff]
  %v3850 = vld [vmem:[%s3 + $0x10] sm:$0xff]
  %v3851 = vld [vmem:[%s3 + $0x18] sm:$0xff]
  %v3853 = vsel %vm71, %v3847, 0
  %3855 = vmatprep.subr.mxu0 0.0
  %3856 = vmatpush1.msra.mxu0 %v3848
  %3857 = vmatprep.subr.mxu0 0.0
  %3858 = vmatpush1.msra.mxu0 %v3849
  %3859 = vmatprep.subr.mxu0 0.0
  %3860 = vmatpush1.msra.mxu0 %v3850
  %3861 = vmatprep.subr.mxu0 0.0
  %3862 = vmatpush1.msra.mxu0 %v3851
  %3863 = vmatprep.subr.mxu0 0.0
  %3864 = vmatpush1.msra.mxu0 0.0
  %3865 = vmatprep.subr.mxu0 0.0
  %3866 = vmatpush1.msra.mxu0 0.0
  %3867 = vmatprep.subr.mxu0 0.0
  %3868 = vmatpush1.msra.mxu0 0.0
  %3869 = vmatprep.subr.mxu0 0.0
  %3870 = vmatpush1.msra.mxu0 0.0
  %3871 = vmatprep.subr.mxu0 0.0
  %3872 = vmatpush1.msra.mxu0 0.0
  %3873 = vmatprep.subr.mxu0 0.0
  %3874 = vmatpush1.msra.mxu0 0.0
  %3875 = vmatprep.subr.mxu0 0.0
  %3876 = vmatpush1.msra.mxu0 0.0
  %3877 = vmatprep.subr.mxu0 0.0
  %3878 = vmatpush1.msra.mxu0 0.0
  %3879 = vmatprep.subr.mxu0 0.0
  %3880 = vmatpush1.msra.mxu0 0.0
  %3881 = vmatprep.subr.mxu0 0.0
  %3882 = vmatpush1.msra.mxu0 0.0
  %3883 = vmatprep.subr.mxu0 0.0
  %3884 = vmatpush1.msra.mxu0 0.0
  %3885 = vmatprep.subr.mxu0 0.0
  %3886 = vmatpush1.msra.mxu0 0.0
  %3887 = vmatprep.subr.mxu0 0.0
  %3888 = vmatpush1.msra.mxu0 0.0
  %3889 = vmatprep.subr.mxu0 0.0
  %3890 = vmatpush1.msra.mxu0 0.0
  %3891 = vmatprep.subr.mxu0 0.0
  %3892 = vmatpush1.msra.mxu0 0.0
  %3893 = vmatprep.subr.mxu0 0.0
  %3894 = vmatpush1.msra.mxu0 0.0
  %3895 = vmatprep.subr.mxu0 0.0
  %3896 = vmatpush1.msra.mxu0 0.0
  %3897 = vmatprep.subr.mxu0 0.0
  %3898 = vmatpush1.msra.mxu0 0.0
  %3899 = vmatprep.subr.mxu0 0.0
  %3900 = vmatpush1.msra.mxu0 0.0
  %3901 = vmatprep.subr.mxu0 0.0
  %3902 = vmatpush1.msra.mxu0 0.0
  %3903 = vmatprep.subr.mxu0 0.0
  %3904 = vmatpush1.msra.mxu0 0.0
  %3905 = vmatprep.subr.mxu0 0.0
  %3906 = vmatpush1.msra.mxu0 0.0
  %3907 = vmatprep.subr.mxu0 0.0
  %3908 = vmatpush1.msra.mxu0 0.0
  %3909 = vmatprep.subr.mxu0 0.0
  %3910 = vmatpush1.msra.mxu0 0.0
  %3911 = vmatprep.subr.mxu0 0.0
  %3912 = vmatpush1.msra.mxu0 0.0
  %3913 = vmatprep.subr.mxu0 0.0
  %3914 = vmatpush1.msra.mxu0 0.0
  %3915 = vmatprep.subr.mxu0 0.0
  %3916 = vmatpush1.msra.mxu0 0.0
  %3917 = vmatprep.subr.mxu0 0.0
  %3918 = vmatpush1.msra.mxu0 0.0
  %3919 = vmatprep.mubr.f32.mxu0 0.0
  %3920 = vmatmul.mubr.f32.gmra.mrb[0].mxu0 %v3853
  %v3921 = vpop.f32.mrb[0].mxu0
  %v3922 = vadd.f32 0.0, %v3921
  %v3923 = vpop.f32.mrb[0].mxu0
  %3924 = vdwg.mxu0
  %v3925 = vadd.f32 %v3845, %v3922
  %v3926 = vxor.u32 %v3925, 2147483648
  %v3927 = vmul.f32 %v3926, 1.442695
  %v3928 = vpow.pop %v3927
  %v3929 = vadd.f32 %v3928, 1.0
  %v3930 = vrcp.pop %v3929
  %v3931 = vmul.f32 1.0, %v3930
  %v3932 = vtanh.pop %v3925
  %3934 = vrot.lane.b32.xlu0 %v3846, 32
  %v3935 = vpop.permute.xlu0 %3934
  %v3937 = vmul.f32 %v3931, %v3935
  %3939 = vrot.lane.b32.xlu0 %v3932, 32
  %v3940 = vpop.permute.xlu0 %3939
  %v3942 = vmul.f32 %v3931, %v3940
  %3944 = vrot.lane.b32.xlu0 %v3942, 32
  %v3945 = vpop.permute.xlu0 %3944
  %v3947 = vadd.f32 %v3937, %v3945
  %v3948 = vtanh.pop %v3947
  %3950 = vrot.lane.b32.xlu0 %v3948, 32
  %v3951 = vpop.permute.xlu0 %3950
  %v3953 = vmul.f32 %v3931, %v3951
  %3955 = vrot.lane.b32.xlu0 %v3953, 64
  %v3956 = vpop.permute.xlu0 %3955
  %3958 = vst.msk [vmem:[#allocation4] sm:$0xff] %vm71, %v3956
  %3960 = vrot.lane.b32.xlu0 %v3947, 96
  %v3961 = vpop.permute.xlu0 %3960
  %3963 = vst.msk [vmem:[#allocation5] sm:$0xff] %vm71, %v3961
  %3964 = vst.msk [vmem:[%s52] sm:$0xff] %vm71, %v3956
  %s3965 = ssub.s32 0, 0
  %s3966 = smul.u32 16, %s3965
  %p3967 = scmp.lt.s32.totalorder %s3966, 15
  %s3968 = scalar_select %p3967, %s3966, 15
  %s3969 = smul.addr %s3968, 8
  %s3970 = scalar_lea.vmem %s5, %s3969
  // Predicated region
  $region22: #{forced_alignment_ctc_lstm_forward.6} parent=0 // pred_check
    _
  $region23: #{forced_alignment_ctc_lstm_forward.6} parent=0 // pred_check_branch
    %3972 = sbr.rel (0) target = $region25
  $region24: #{forced_alignment_ctc_lstm_forward.6} parent=0 // pred_region
    _
  $region25: #{forced_alignment_ctc_lstm_forward.6} parent=0 // pred_fallthru
    _
  // Predicated region
  $region26: #{forced_alignment_ctc_lstm_forward.6} parent=0 // pred_check
    _
  $region27: #{forced_alignment_ctc_lstm_forward.6} parent=0 // pred_check_branch
    %3974 = sbr.rel (0) target = $region29
  $region28: #{forced_alignment_ctc_lstm_forward.6} parent=0 // pred_region
    %s3975 = ssub.s32 0, 0
    %s3976 = smul.u32 16, %s3975
  $region29: #{forced_alignment_ctc_lstm_forward.6} parent=0 // pred_fallthru
    _
  // Predicated region
  $region30: #{forced_alignment_ctc_lstm_forward.6} parent=0 // pred_check
    _
  $region31: #{forced_alignment_ctc_lstm_forward.6} parent=0 // pred_check_branch
    %3978 = sbr.rel (0) target = $region33
  $region32: #{forced_alignment_ctc_lstm_forward.6} parent=0 // pred_region
    _
  $region33: #{forced_alignment_ctc_lstm_forward.6} parent=0 // pred_fallthru
    _
  // Predicated region
  $region34: #{forced_alignment_ctc_lstm_forward.6} parent=0 // pred_check
    _
  $region35: #{forced_alignment_ctc_lstm_forward.6} parent=0 // pred_check_branch
    %3980 = sbr.rel (0) target = $region37
  $region36: #{forced_alignment_ctc_lstm_forward.6} parent=0 // pred_region
    %s3981 = ssub.s32 0, 0
    %s3982 = smul.u32 16, %s3981
    %p3983 = scmp.lt.s32.totalorder %s3982, 15
    %s3984 = scalar_select %p3983, %s3982, 15
    %s3985 = smul.addr %s3984, 8
    %s3986 = scalar_lea.vmem %s5, %s3985
  $region37: #{forced_alignment_ctc_lstm_forward.6} parent=0 // pred_fallthru
    _

</llo_original>
